<compile_context>
chip_gen: v7x
topology: tpu7x:2x2x1
jax: 0.10.0
libtpu: 0.0.40
codegen_flags: <defaults>
</compile_context>

<pallas_src>
import math

import jax
import jax.numpy as jnp
from jax.experimental import pallas as pl
from jax.experimental.pallas import tpu as pltpu

_LANE = 128      # f32 lane width
_SUBLANE = 8     # f32 sublane count
_T_GRAN = 16     # time-chunk granularity (bf16 sublane tile of the xp block)


def _round_up(n, m):
    return ((n + m - 1) // m) * m


def _physical_vmem_bytes():
    """Per-core physical VMEM; conservative 64 MiB (v7x) if the query fails."""
    try:
        info = pltpu.get_tpu_info()
        vm = getattr(info, "vmem_capacity_bytes", None)
        if vm:
            return int(vm)
    except Exception:
        pass
    return 64 * 1024 * 1024


def _working_set_bytes(b_tile, t_chunk, hg):
    xp = 2 * b_tile * t_chunk * 4 * hg * 2    # bf16 gate pre-activations, double-buffered
    seq = 2 * b_tile * t_chunk * hg * 4       # f32 hidden-sequence output, double-buffered
    wh = 2 * hg * 4 * hg * 2                  # bf16 recurrent weights (counted x2, worst case)
    c_out = 2 * b_tile * hg * 4               # f32 final-cell output
    scratch = 2 * b_tile * hg * 4             # f32 h/c carries
    return xp + seq + wh + c_out + scratch


def _choose_tiles(batch, seq_len, hg, budget_bytes):
    """Pick (B_tile, t_chunk) under the VMEM budget; >=2 batch tiles when possible."""
    b_pad = _round_up(max(batch, 1), _SUBLANE)
    if b_pad >= 16:
        # Guarantee at least two batch tiles so the "parallel" grid axis can
        # actually shard across v7x's two TensorCores.
        b_tile = min(_round_up((b_pad + 1) // 2, _SUBLANE), 128)
    else:
        b_tile = b_pad
    t_cap = min(128, _round_up(max(seq_len, 1), _T_GRAN))

    while True:
        fits = [tc for tc in range(_T_GRAN, t_cap + 1, _T_GRAN)
                if _working_set_bytes(b_tile, tc, hg) <= budget_bytes]
        if fits:
            # fewest padded timesteps first, then the largest chunk (fewest grid steps)
            t_chunk = min(fits, key=lambda tc: (_round_up(seq_len, tc), -tc))
            return b_tile, t_chunk
        if b_tile > _SUBLANE:
            b_tile = max(_SUBLANE, _round_up(b_tile // 2, _SUBLANE))
        else:
            # TODO(synk): for hidden sizes whose (Hg, 4Hg) weights exceed VMEM,
            # tile the recurrent matmul over Hg instead of this best-effort fallback.
            return b_tile, _T_GRAN


def from_scratch_lstm(x, gate_params, init_states=None):
    """Forward pass of fromScratchLSTM.

    x:           (B, T, I) float32
    gate_params: dict with keys 'i','f','g','o'; each value a tuple
                 (W_in (I, H), W_h (H, H), b (H,)) matching the torch module.
    Returns (hidden_sequence (B, T, H), (h_final (B, H), c_final (B, H))).
    """
    if init_states is not None:
        # TODO(synk): non-zero initial (h, c) not plumbed into the kernel; module default is zeros.
        raise NotImplementedError("init_states is not supported (zeros assumed)")

    x = jnp.asarray(x, jnp.float32)
    B, T, I = x.shape
    H = gate_params["i"][1].shape[0]

    # Per-gate padded hidden size Hg:
    #  * H >= 128: pad to a multiple of 128 -> lane-aligned gate slices.
    #  * small H: pad only to a multiple of 32 (so 4*Hg is a lane multiple),
    #    avoiding (128/H)^2 matmul inflation; slices become sub-lane but cheap.
    if H % _LANE == 0 or H >= _LANE:
        Hg = _round_up(H, _LANE)
    else:
        Hg = _round_up(H, 32)

    phys_vmem = _physical_vmem_bytes()
    budget = max(int(phys_vmem * 0.5), 24 << 20)
    B_tile, t_chunk = _choose_tiles(B, T, Hg, budget)
    Bp = _round_up(B, B_tile)
    Tp = _round_up(T, t_chunk)
    n_b_tiles = Bp // B_tile
    n_chunks = Tp // t_chunk
    last_chunk = (T - 1) // t_chunk       # chunk holding the last REAL timestep
    last_t = (T - 1) % t_chunk            # its static position inside that chunk

    # ---- parameter packing: (i | f | o | g), each gate zero-padded H -> Hg ----
    def pad_cols(w):
        return jnp.pad(w.astype(jnp.float32), ((0, 0), (0, Hg - H)))

    order = ("i", "f", "o", "g")
    wx_p = jnp.concatenate([pad_cols(gate_params[k][0]) for k in order], axis=1)   # (I, 4Hg)
    wh_p = jnp.concatenate([pad_cols(gate_params[k][1]) for k in order], axis=1)   # (H, 4Hg)
    wh_p = jnp.pad(wh_p, ((0, Hg - H), (0, 0)))                                    # (Hg, 4Hg)
    b_p = jnp.concatenate(
        [jnp.pad(gate_params[k][2].astype(jnp.float32), ((0, Hg - H),)) for k in order])
    wh_bf16 = wh_p.astype(jnp.bfloat16)     # bf16-in / f32-accumulate on the MXU

    # ---- hoisted input projection: one big XLA matmul (f32 compute, bf16 store) ----
    x_pad = jnp.pad(x, ((0, Bp - B), (0, Tp - T), (0, 0)))                 # (Bp, Tp, I)
    x_proj = (x_pad.reshape(Bp * Tp, I) @ wx_p + b_p).reshape(Bp, Tp, 4 * Hg)
    x_proj = x_proj.astype(jnp.bfloat16)

    ws = _working_set_bytes(B_tile, t_chunk, Hg)
    vmem_limit = min(int(phys_vmem * 0.9), max(ws + (8 << 20), 32 << 20))

    def kernel(xp_ref, wh_ref, seq_ref, c_out_ref, h_scr, c_scr):
        @pl.when(pl.program_id(1) == 0)
        def _():
            h_scr[...] = jnp.zeros_like(h_scr)
            c_scr[...] = jnp.zeros_like(c_scr)

        h = h_scr[...]
        c = c_scr[...]
        # Fully unrolled with static indices; wh_ref is re-read each step so the
        # weight's live range stays bounded across the unrolled iterations.
        for t in range(t_chunk):
            z = xp_ref[:, t, :].astype(jnp.float32) + jnp.dot(
                h.astype(jnp.bfloat16), wh_ref[...],
                preferred_element_type=jnp.float32)
            # sigmoid via tanh identity: a single EUP op/element (no exp + divide)
            sig = 0.5 * jnp.tanh(0.5 * z[:, : 3 * Hg]) + 0.5      # i | f | o
            g = jnp.tanh(z[:, 3 * Hg:])                           # g
            c = sig[:, Hg: 2 * Hg] * c + sig[:, : Hg] * g
            h = sig[:, 2 * Hg: 3 * Hg] * jnp.tanh(c)
            seq_ref[:, t, :] = h
            if t == last_t:
                # Final cell state is written exactly once, at the last REAL
                # timestep, so time padding cannot corrupt c_final.
                @pl.when(pl.program_id(1) == last_chunk)
                def _(c_final=c):
                    c_out_ref[...] = c_final
        h_scr[...] = h
        c_scr[...] = c

    def run(wh_spec):
        return pl.pallas_call(
            kernel,
            out_shape=(
                jax.ShapeDtypeStruct((Bp, Tp, Hg), jnp.float32),
                jax.ShapeDtypeStruct((Bp, Hg), jnp.float32),
            ),
            grid_spec=pltpu.PrefetchScalarGridSpec(
                num_scalar_prefetch=0,
                grid=(n_b_tiles, n_chunks),
                in_specs=[
                    # precomputed gate pre-activations for this (batch tile, time chunk)
                    pl.BlockSpec((B_tile, t_chunk, 4 * Hg), lambda bi, ti: (bi, ti, 0)),
                    # resident recurrent weights
                    wh_spec,
                ],
                out_specs=[
                    pl.BlockSpec((B_tile, t_chunk, Hg), lambda bi, ti: (bi, ti, 0)),
                    pl.BlockSpec((B_tile, Hg), lambda bi, ti: (bi, 0)),
                ],
                scratch_shapes=[
                    pltpu.VMEM((B_tile, Hg), jnp.float32),   # h carry
                    pltpu.VMEM((B_tile, Hg), jnp.float32),   # c carry
                ],
            ),
            compiler_params=pltpu.CompilerParams(
                # batch tiles are independent (megacore-shardable); time is the recurrence
                dimension_semantics=("parallel", "arbitrary"),
                vmem_limit_bytes=int(vmem_limit),
            ),
        )(x_proj, wh_bf16)

    wh_idx = lambda bi, ti: (0, 0)
    try:
        # Weights never change across the grid: request single buffering to free VMEM.
        seq_p, c_p = run(
            pl.BlockSpec((Hg, 4 * Hg), wh_idx, pipeline_mode=pl.Buffered(1)))
    except Exception:
        # Fallback to default double buffering if single-buffering is unsupported.
        seq_p, c_p = run(pl.BlockSpec((Hg, 4 * Hg), wh_idx))

    hidden_sequence = seq_p[:B, :T, :H]
    h_final = hidden_sequence[:, -1, :]
    c_final = c_p[:B, :H]
    return hidden_sequence, (h_final, c_final)


def _ref_lstm(x, gate_params):
    """Pure-JAX f32 reference matching the torch module semantics exactly."""
    B, T, I = x.shape
    H = gate_params["i"][1].shape[0]
    h = jnp.zeros((B, H), jnp.float32)
    c = jnp.zeros((B, H), jnp.float32)
    outs = []
    for t in range(T):
        xt = x[:, t, :]
        wi, whi, bi = gate_params["i"]
        wf, whf, bf = gate_params["f"]
        wg, whg, bg = gate_params["g"]
        wo, who, bo = gate_params["o"]
        i_g = jax.nn.sigmoid(xt @ wi + h @ whi + bi)
        f_g = jax.nn.sigmoid(xt @ wf + h @ whf + bf)
        g_g = jnp.tanh(xt @ wg + h @ whg + bg)
        o_g = jax.nn.sigmoid(xt @ wo + h @ who + bo)
        c = f_g * c + i_g * g_g
        h = o_g * jnp.tanh(c)
        outs.append(h)
    return jnp.stack(outs, axis=1), (h, c)


if __name__ == "__main__":
    # Small shapes consistent with the module's forward.
    batch = 2
    seq = 8
    input_size = 16
    hidden = 32

    key = jax.random.PRNGKey(0)
    keys = jax.random.split(key, 13)
    stdv = 1.0 / math.sqrt(hidden)

    def u(k, shape):
        return jax.random.uniform(k, shape, jnp.float32, minval=-stdv, maxval=stdv)

    # Per-gate parameters, mirroring torch's uniform_(-stdv, stdv) init.
    gate_params = {}
    for idx, gate in enumerate(("i", "f", "g", "o")):
        w_in = u(keys[1 + 3 * idx], (input_size, hidden))
        w_h = u(keys[2 + 3 * idx], (hidden, hidden))
        b = u(keys[3 + 3 * idx], (hidden,))
        gate_params[gate] = (w_in, w_h, b)

    x = jax.random.normal(keys[0], (batch, seq, input_size), jnp.float32)

    hidden_seq, (h_n, c_n) = from_scratch_lstm(x, gate_params)
    jax.block_until_ready((hidden_seq, h_n, c_n))

    # Correctness check (tolerance loosened for the bf16 matmul operands /
    # bf16-stored input projection; f32 accumulation keeps errors ~1e-3).
    ref_seq, (ref_h, ref_c) = _ref_lstm(x, gate_params)
    assert hidden_seq.shape == (batch, seq, hidden)
    assert h_n.shape == (batch, hidden) and c_n.shape == (batch, hidden)
    assert jnp.allclose(hidden_seq, ref_seq, atol=2e-2, rtol=2e-2)
    assert jnp.allclose(h_n, ref_h, atol=2e-2, rtol=2e-2)
    assert jnp.allclose(c_n, ref_c, atol=2e-2, rtol=2e-2)

    print("KERNEL_OK")
</pallas_src>

<mosaic_0001>
module attributes {stable_mosaic.version = 11 : i64} {
  func.func @kernel(%arg0: i32, %arg1: i32, %arg2: memref<8x16x128xbf16, #tpu.memory_space<vmem>>, %arg3: memref<32x128xbf16, #tpu.memory_space<vmem>>, %arg4: memref<8x16x32xf32, #tpu.memory_space<vmem>>, %arg5: memref<8x32xf32, #tpu.memory_space<vmem>>, %arg6: memref<8x32xf32, #tpu.memory_space<vmem>>, %arg7: memref<8x32xf32, #tpu.memory_space<vmem>>) attributes {dimension_semantics = [#tpu.dimension_semantics<parallel>, #tpu.dimension_semantics<arbitrary>], iteration_bounds = array<i64: 1, 1>, scalar_prefetch = 0 : i64, scratch_operands = 2 : i64, tpu.core_type = #tpu.core_type<tc>, window_params = [{transform_indices = @transform_0, window_bounds = array<i64: 8, 16, 128>}, {pipeline_mode = #tpu.pipeline_mode<synchronous>, transform_indices = @transform_1, window_bounds = array<i64: 32, 128>}, {transform_indices = @transform_2, window_bounds = array<i64: 8, 16, 32>}, {transform_indices = @transform_3, window_bounds = array<i64: 8, 32>}]} {
    %c0_i32 = arith.constant 0 : i32
    %0 = arith.cmpi eq, %arg1, %c0_i32 : i32
    %1 = arith.extui %0 : i1 to i32
    %c0_i32_0 = arith.constant 0 : i32
    %2 = arith.cmpi ne, %1, %c0_i32_0 : i32
    scf.if %2 {
      %cst_186 = arith.constant 0.000000e+00 : f32
      %458 = vector.broadcast %cst_186 : f32 to vector<8x32xf32>
      %c0_187 = arith.constant 0 : index
      %c0_188 = arith.constant 0 : index
      %459 = vector.load %arg6[%c0_187, %c0_188] : memref<8x32xf32, #tpu.memory_space<vmem>>, vector<8x32xf32>
      tpu.vector_store %arg6[%c0_187, %c0_188], %458 {strides = array<i32>} : memref<8x32xf32, #tpu.memory_space<vmem>>, vector<8x32xf32>,
      %cst_189 = arith.constant 0.000000e+00 : f32
      %460 = vector.broadcast %cst_189 : f32 to vector<8x32xf32>
      %c0_190 = arith.constant 0 : index
      %c0_191 = arith.constant 0 : index
      %461 = vector.load %arg7[%c0_190, %c0_191] : memref<8x32xf32, #tpu.memory_space<vmem>>, vector<8x32xf32>
      tpu.vector_store %arg7[%c0_190, %c0_191], %460 {strides = array<i32>} : memref<8x32xf32, #tpu.memory_space<vmem>>, vector<8x32xf32>,
    } else {
    }
    %c0 = arith.constant 0 : index
    %c0_1 = arith.constant 0 : index
    %3 = vector.load %arg6[%c0, %c0_1] : memref<8x32xf32, #tpu.memory_space<vmem>>, vector<8x32xf32>
    %c0_2 = arith.constant 0 : index
    %c0_3 = arith.constant 0 : index
    %4 = vector.load %arg7[%c0_2, %c0_3] : memref<8x32xf32, #tpu.memory_space<vmem>>, vector<8x32xf32>
    %c0_4 = arith.constant 0 : index
    %c0_5 = arith.constant 0 : index
    %c0_6 = arith.constant 0 : index
    %5 = vector.load %arg2[%c0_4, %c0_5, %c0_6] : memref<8x16x128xbf16, #tpu.memory_space<vmem>>, vector<8x1x128xbf16>
    %6 = vector.shape_cast %5 : vector<8x1x128xbf16> to vector<8x128xbf16>
    %7 = arith.extf %6 : vector<8x128xbf16> to vector<8x128xf32>
    %8 = arith.truncf %3 : vector<8x32xf32> to vector<8x32xbf16>
    %c0_7 = arith.constant 0 : index
    %c0_8 = arith.constant 0 : index
    %9 = vector.load %arg3[%c0_7, %c0_8] : memref<32x128xbf16, #tpu.memory_space<vmem>>, vector<32x128xbf16>
    %cst = arith.constant dense<0.000000e+00> : vector<8x128xf32>
    %10 = tpu.matmul %8, %9, %cst {dimension_numbers = #tpu.dot_dimension_numbers<[1], [0], [0], [1], [0, 0, 1, 1], [], []>} : vector<8x32xbf16>, vector<32x128xbf16>, vector<8x128xf32> -> vector<8x128xf32>
    %11 = arith.addf %7, %10 : vector<8x128xf32>
    %12 = vector.extract_strided_slice %11 {offsets = [0, 0], sizes = [8, 96], strides = [1, 1]} : vector<8x128xf32> to vector<8x96xf32>
    %cst_9 = arith.constant 5.000000e-01 : f32
    %13 = vector.broadcast %cst_9 : f32 to vector<8x96xf32>
    %14 = arith.mulf %13, %12 : vector<8x96xf32>
    %15 = math.tanh %14 : vector<8x96xf32>
    %cst_10 = arith.constant 5.000000e-01 : f32
    %16 = vector.broadcast %cst_10 : f32 to vector<8x96xf32>
    %17 = arith.mulf %16, %15 : vector<8x96xf32>
    %cst_11 = arith.constant 5.000000e-01 : f32
    %18 = vector.broadcast %cst_11 : f32 to vector<8x96xf32>
    %19 = arith.addf %17, %18 : vector<8x96xf32>
    %20 = vector.extract_strided_slice %11 {offsets = [0, 96], sizes = [8, 32], strides = [1, 1]} : vector<8x128xf32> to vector<8x32xf32>
    %21 = math.tanh %20 : vector<8x32xf32>
    %22 = vector.extract_strided_slice %19 {offsets = [0, 32], sizes = [8, 32], strides = [1, 1]} : vector<8x96xf32> to vector<8x32xf32>
    %23 = arith.mulf %22, %4 : vector<8x32xf32>
    %24 = vector.extract_strided_slice %19 {offsets = [0, 0], sizes = [8, 32], strides = [1, 1]} : vector<8x96xf32> to vector<8x32xf32>
    %25 = arith.mulf %24, %21 : vector<8x32xf32>
    %26 = arith.addf %23, %25 : vector<8x32xf32>
    %27 = vector.extract_strided_slice %19 {offsets = [0, 64], sizes = [8, 32], strides = [1, 1]} : vector<8x96xf32> to vector<8x32xf32>
    %28 = math.tanh %26 : vector<8x32xf32>
    %29 = arith.mulf %27, %28 : vector<8x32xf32>
    %c0_12 = arith.constant 0 : index
    %c0_13 = arith.constant 0 : index
    %c0_14 = arith.constant 0 : index
    %30 = vector.load %arg4[%c0_12, %c0_13, %c0_14] : memref<8x16x32xf32, #tpu.memory_space<vmem>>, vector<8x1x32xf32>
    %31 = vector.shape_cast %30 : vector<8x1x32xf32> to vector<8x32xf32>
    %32 = vector.shape_cast %29 : vector<8x32xf32> to vector<8x1x32xf32>
    tpu.vector_store %arg4[%c0_12, %c0_13, %c0_14], %32 {strides = array<i32>} : memref<8x16x32xf32, #tpu.memory_space<vmem>>, vector<8x1x32xf32>,
    %c0_15 = arith.constant 0 : index
    %c1 = arith.constant 1 : index
    %c0_16 = arith.constant 0 : index
    %33 = vector.load %arg2[%c0_15, %c1, %c0_16] : memref<8x16x128xbf16, #tpu.memory_space<vmem>>, vector<8x1x128xbf16>
    %34 = vector.shape_cast %33 : vector<8x1x128xbf16> to vector<8x128xbf16>
    %35 = arith.extf %34 : vector<8x128xbf16> to vector<8x128xf32>
    %36 = arith.truncf %29 : vector<8x32xf32> to vector<8x32xbf16>
    %c0_17 = arith.constant 0 : index
    %c0_18 = arith.constant 0 : index
    %37 = vector.load %arg3[%c0_17, %c0_18] : memref<32x128xbf16, #tpu.memory_space<vmem>>, vector<32x128xbf16>
    %cst_19 = arith.constant dense<0.000000e+00> : vector<8x128xf32>
    %38 = tpu.matmul %36, %37, %cst_19 {dimension_numbers = #tpu.dot_dimension_numbers<[1], [0], [0], [1], [0, 0, 1, 1], [], []>} : vector<8x32xbf16>, vector<32x128xbf16>, vector<8x128xf32> -> vector<8x128xf32>
    %39 = arith.addf %35, %38 : vector<8x128xf32>
    %40 = vector.extract_strided_slice %39 {offsets = [0, 0], sizes = [8, 96], strides = [1, 1]} : vector<8x128xf32> to vector<8x96xf32>
    %cst_20 = arith.constant 5.000000e-01 : f32
    %41 = vector.broadcast %cst_20 : f32 to vector<8x96xf32>
    %42 = arith.mulf %41, %40 : vector<8x96xf32>
    %43 = math.tanh %42 : vector<8x96xf32>
    %cst_21 = arith.constant 5.000000e-01 : f32
    %44 = vector.broadcast %cst_21 : f32 to vector<8x96xf32>
    %45 = arith.mulf %44, %43 : vector<8x96xf32>
    %cst_22 = arith.constant 5.000000e-01 : f32
    %46 = vector.broadcast %cst_22 : f32 to vector<8x96xf32>
    %47 = arith.addf %45, %46 : vector<8x96xf32>
    %48 = vector.extract_strided_slice %39 {offsets = [0, 96], sizes = [8, 32], strides = [1, 1]} : vector<8x128xf32> to vector<8x32xf32>
    %49 = math.tanh %48 : vector<8x32xf32>
    %50 = vector.extract_strided_slice %47 {offsets = [0, 32], sizes = [8, 32], strides = [1, 1]} : vector<8x96xf32> to vector<8x32xf32>
    %51 = arith.mulf %50, %26 : vector<8x32xf32>
    %52 = vector.extract_strided_slice %47 {offsets = [0, 0], sizes = [8, 32], strides = [1, 1]} : vector<8x96xf32> to vector<8x32xf32>
    %53 = arith.mulf %52, %49 : vector<8x32xf32>
    %54 = arith.addf %51, %53 : vector<8x32xf32>
    %55 = vector.extract_strided_slice %47 {offsets = [0, 64], sizes = [8, 32], strides = [1, 1]} : vector<8x96xf32> to vector<8x32xf32>
    %56 = math.tanh %54 : vector<8x32xf32>
    %57 = arith.mulf %55, %56 : vector<8x32xf32>
    %c0_23 = arith.constant 0 : index
    %c1_24 = arith.constant 1 : index
    %c0_25 = arith.constant 0 : index
    %58 = vector.load %arg4[%c0_23, %c1_24, %c0_25] : memref<8x16x32xf32, #tpu.memory_space<vmem>>, vector<8x1x32xf32>
    %59 = vector.shape_cast %58 : vector<8x1x32xf32> to vector<8x32xf32>
    %60 = vector.shape_cast %57 : vector<8x32xf32> to vector<8x1x32xf32>
    tpu.vector_store %arg4[%c0_23, %c1_24, %c0_25], %60 {strides = array<i32>} : memref<8x16x32xf32, #tpu.memory_space<vmem>>, vector<8x1x32xf32>,
    %c0_26 = arith.constant 0 : index
    %c2 = arith.constant 2 : index
    %c0_27 = arith.constant 0 : index
    %61 = vector.load %arg2[%c0_26, %c2, %c0_27] : memref<8x16x128xbf16, #tpu.memory_space<vmem>>, vector<8x1x128xbf16>
    %62 = vector.shape_cast %61 : vector<8x1x128xbf16> to vector<8x128xbf16>
    %63 = arith.extf %62 : vector<8x128xbf16> to vector<8x128xf32>
    %64 = arith.truncf %57 : vector<8x32xf32> to vector<8x32xbf16>
    %c0_28 = arith.constant 0 : index
    %c0_29 = arith.constant 0 : index
    %65 = vector.load %arg3[%c0_28, %c0_29] : memref<32x128xbf16, #tpu.memory_space<vmem>>, vector<32x128xbf16>
    %cst_30 = arith.constant dense<0.000000e+00> : vector<8x128xf32>
    %66 = tpu.matmul %64, %65, %cst_30 {dimension_numbers = #tpu.dot_dimension_numbers<[1], [0], [0], [1], [0, 0, 1, 1], [], []>} : vector<8x32xbf16>, vector<32x128xbf16>, vector<8x128xf32> -> vector<8x128xf32>
    %67 = arith.addf %63, %66 : vector<8x128xf32>
    %68 = vector.extract_strided_slice %67 {offsets = [0, 0], sizes = [8, 96], strides = [1, 1]} : vector<8x128xf32> to vector<8x96xf32>
    %cst_31 = arith.constant 5.000000e-01 : f32
    %69 = vector.broadcast %cst_31 : f32 to vector<8x96xf32>
    %70 = arith.mulf %69, %68 : vector<8x96xf32>
    %71 = math.tanh %70 : vector<8x96xf32>
    %cst_32 = arith.constant 5.000000e-01 : f32
    %72 = vector.broadcast %cst_32 : f32 to vector<8x96xf32>
    %73 = arith.mulf %72, %71 : vector<8x96xf32>
    %cst_33 = arith.constant 5.000000e-01 : f32
    %74 = vector.broadcast %cst_33 : f32 to vector<8x96xf32>
    %75 = arith.addf %73, %74 : vector<8x96xf32>
    %76 = vector.extract_strided_slice %67 {offsets = [0, 96], sizes = [8, 32], strides = [1, 1]} : vector<8x128xf32> to vector<8x32xf32>
    %77 = math.tanh %76 : vector<8x32xf32>
    %78 = vector.extract_strided_slice %75 {offsets = [0, 32], sizes = [8, 32], strides = [1, 1]} : vector<8x96xf32> to vector<8x32xf32>
    %79 = arith.mulf %78, %54 : vector<8x32xf32>
    %80 = vector.extract_strided_slice %75 {offsets = [0, 0], sizes = [8, 32], strides = [1, 1]} : vector<8x96xf32> to vector<8x32xf32>
    %81 = arith.mulf %80, %77 : vector<8x32xf32>
    %82 = arith.addf %79, %81 : vector<8x32xf32>
    %83 = vector.extract_strided_slice %75 {offsets = [0, 64], sizes = [8, 32], strides = [1, 1]} : vector<8x96xf32> to vector<8x32xf32>
    %84 = math.tanh %82 : vector<8x32xf32>
    %85 = arith.mulf %83, %84 : vector<8x32xf32>
    %c0_34 = arith.constant 0 : index
    %c2_35 = arith.constant 2 : index
    %c0_36 = arith.constant 0 : index
    %86 = vector.load %arg4[%c0_34, %c2_35, %c0_36] : memref<8x16x32xf32, #tpu.memory_space<vmem>>, vector<8x1x32xf32>
    %87 = vector.shape_cast %86 : vector<8x1x32xf32> to vector<8x32xf32>
    %88 = vector.shape_cast %85 : vector<8x32xf32> to vector<8x1x32xf32>
    tpu.vector_store %arg4[%c0_34, %c2_35, %c0_36], %88 {strides = array<i32>} : memref<8x16x32xf32, #tpu.memory_space<vmem>>, vector<8x1x32xf32>,
    %c0_37 = arith.constant 0 : index
    %c3 = arith.constant 3 : index
    %c0_38 = arith.constant 0 : index
    %89 = vector.load %arg2[%c0_37, %c3, %c0_38] : memref<8x16x128xbf16, #tpu.memory_space<vmem>>, vector<8x1x128xbf16>
    %90 = vector.shape_cast %89 : vector<8x1x128xbf16> to vector<8x128xbf16>
    %91 = arith.extf %90 : vector<8x128xbf16> to vector<8x128xf32>
    %92 = arith.truncf %85 : vector<8x32xf32> to vector<8x32xbf16>
    %c0_39 = arith.constant 0 : index
    %c0_40 = arith.constant 0 : index
    %93 = vector.load %arg3[%c0_39, %c0_40] : memref<32x128xbf16, #tpu.memory_space<vmem>>, vector<32x128xbf16>
    %cst_41 = arith.constant dense<0.000000e+00> : vector<8x128xf32>
    %94 = tpu.matmul %92, %93, %cst_41 {dimension_numbers = #tpu.dot_dimension_numbers<[1], [0], [0], [1], [0, 0, 1, 1], [], []>} : vector<8x32xbf16>, vector<32x128xbf16>, vector<8x128xf32> -> vector<8x128xf32>
    %95 = arith.addf %91, %94 : vector<8x128xf32>
    %96 = vector.extract_strided_slice %95 {offsets = [0, 0], sizes = [8, 96], strides = [1, 1]} : vector<8x128xf32> to vector<8x96xf32>
    %cst_42 = arith.constant 5.000000e-01 : f32
    %97 = vector.broadcast %cst_42 : f32 to vector<8x96xf32>
    %98 = arith.mulf %97, %96 : vector<8x96xf32>
    %99 = math.tanh %98 : vector<8x96xf32>
    %cst_43 = arith.constant 5.000000e-01 : f32
    %100 = vector.broadcast %cst_43 : f32 to vector<8x96xf32>
    %101 = arith.mulf %100, %99 : vector<8x96xf32>
    %cst_44 = arith.constant 5.000000e-01 : f32
    %102 = vector.broadcast %cst_44 : f32 to vector<8x96xf32>
    %103 = arith.addf %101, %102 : vector<8x96xf32>
    %104 = vector.extract_strided_slice %95 {offsets = [0, 96], sizes = [8, 32], strides = [1, 1]} : vector<8x128xf32> to vector<8x32xf32>
    %105 = math.tanh %104 : vector<8x32xf32>
    %106 = vector.extract_strided_slice %103 {offsets = [0, 32], sizes = [8, 32], strides = [1, 1]} : vector<8x96xf32> to vector<8x32xf32>
    %107 = arith.mulf %106, %82 : vector<8x32xf32>
    %108 = vector.extract_strided_slice %103 {offsets = [0, 0], sizes = [8, 32], strides = [1, 1]} : vector<8x96xf32> to vector<8x32xf32>
    %109 = arith.mulf %108, %105 : vector<8x32xf32>
    %110 = arith.addf %107, %109 : vector<8x32xf32>
    %111 = vector.extract_strided_slice %103 {offsets = [0, 64], sizes = [8, 32], strides = [1, 1]} : vector<8x96xf32> to vector<8x32xf32>
    %112 = math.tanh %110 : vector<8x32xf32>
    %113 = arith.mulf %111, %112 : vector<8x32xf32>
    %c0_45 = arith.constant 0 : index
    %c3_46 = arith.constant 3 : index
    %c0_47 = arith.constant 0 : index
    %114 = vector.load %arg4[%c0_45, %c3_46, %c0_47] : memref<8x16x32xf32, #tpu.memory_space<vmem>>, vector<8x1x32xf32>
    %115 = vector.shape_cast %114 : vector<8x1x32xf32> to vector<8x32xf32>
    %116 = vector.shape_cast %113 : vector<8x32xf32> to vector<8x1x32xf32>
    tpu.vector_store %arg4[%c0_45, %c3_46, %c0_47], %116 {strides = array<i32>} : memref<8x16x32xf32, #tpu.memory_space<vmem>>, vector<8x1x32xf32>,
    %c0_48 = arith.constant 0 : index
    %c4 = arith.constant 4 : index
    %c0_49 = arith.constant 0 : index
    %117 = vector.load %arg2[%c0_48, %c4, %c0_49] : memref<8x16x128xbf16, #tpu.memory_space<vmem>>, vector<8x1x128xbf16>
    %118 = vector.shape_cast %117 : vector<8x1x128xbf16> to vector<8x128xbf16>
    %119 = arith.extf %118 : vector<8x128xbf16> to vector<8x128xf32>
    %120 = arith.truncf %113 : vector<8x32xf32> to vector<8x32xbf16>
    %c0_50 = arith.constant 0 : index
    %c0_51 = arith.constant 0 : index
    %121 = vector.load %arg3[%c0_50, %c0_51] : memref<32x128xbf16, #tpu.memory_space<vmem>>, vector<32x128xbf16>
    %cst_52 = arith.constant dense<0.000000e+00> : vector<8x128xf32>
    %122 = tpu.matmul %120, %121, %cst_52 {dimension_numbers = #tpu.dot_dimension_numbers<[1], [0], [0], [1], [0, 0, 1, 1], [], []>} : vector<8x32xbf16>, vector<32x128xbf16>, vector<8x128xf32> -> vector<8x128xf32>
    %123 = arith.addf %119, %122 : vector<8x128xf32>
    %124 = vector.extract_strided_slice %123 {offsets = [0, 0], sizes = [8, 96], strides = [1, 1]} : vector<8x128xf32> to vector<8x96xf32>
    %cst_53 = arith.constant 5.000000e-01 : f32
    %125 = vector.broadcast %cst_53 : f32 to vector<8x96xf32>
    %126 = arith.mulf %125, %124 : vector<8x96xf32>
    %127 = math.tanh %126 : vector<8x96xf32>
    %cst_54 = arith.constant 5.000000e-01 : f32
    %128 = vector.broadcast %cst_54 : f32 to vector<8x96xf32>
    %129 = arith.mulf %128, %127 : vector<8x96xf32>
    %cst_55 = arith.constant 5.000000e-01 : f32
    %130 = vector.broadcast %cst_55 : f32 to vector<8x96xf32>
    %131 = arith.addf %129, %130 : vector<8x96xf32>
    %132 = vector.extract_strided_slice %123 {offsets = [0, 96], sizes = [8, 32], strides = [1, 1]} : vector<8x128xf32> to vector<8x32xf32>
    %133 = math.tanh %132 : vector<8x32xf32>
    %134 = vector.extract_strided_slice %131 {offsets = [0, 32], sizes = [8, 32], strides = [1, 1]} : vector<8x96xf32> to vector<8x32xf32>
    %135 = arith.mulf %134, %110 : vector<8x32xf32>
    %136 = vector.extract_strided_slice %131 {offsets = [0, 0], sizes = [8, 32], strides = [1, 1]} : vector<8x96xf32> to vector<8x32xf32>
    %137 = arith.mulf %136, %133 : vector<8x32xf32>
    %138 = arith.addf %135, %137 : vector<8x32xf32>
    %139 = vector.extract_strided_slice %131 {offsets = [0, 64], sizes = [8, 32], strides = [1, 1]} : vector<8x96xf32> to vector<8x32xf32>
    %140 = math.tanh %138 : vector<8x32xf32>
    %141 = arith.mulf %139, %140 : vector<8x32xf32>
    %c0_56 = arith.constant 0 : index
    %c4_57 = arith.constant 4 : index
    %c0_58 = arith.constant 0 : index
    %142 = vector.load %arg4[%c0_56, %c4_57, %c0_58] : memref<8x16x32xf32, #tpu.memory_space<vmem>>, vector<8x1x32xf32>
    %143 = vector.shape_cast %142 : vector<8x1x32xf32> to vector<8x32xf32>
    %144 = vector.shape_cast %141 : vector<8x32xf32> to vector<8x1x32xf32>
    tpu.vector_store %arg4[%c0_56, %c4_57, %c0_58], %144 {strides = array<i32>} : memref<8x16x32xf32, #tpu.memory_space<vmem>>, vector<8x1x32xf32>,
    %c0_59 = arith.constant 0 : index
    %c5 = arith.constant 5 : index
    %c0_60 = arith.constant 0 : index
    %145 = vector.load %arg2[%c0_59, %c5, %c0_60] : memref<8x16x128xbf16, #tpu.memory_space<vmem>>, vector<8x1x128xbf16>
    %146 = vector.shape_cast %145 : vector<8x1x128xbf16> to vector<8x128xbf16>
    %147 = arith.extf %146 : vector<8x128xbf16> to vector<8x128xf32>
    %148 = arith.truncf %141 : vector<8x32xf32> to vector<8x32xbf16>
    %c0_61 = arith.constant 0 : index
    %c0_62 = arith.constant 0 : index
    %149 = vector.load %arg3[%c0_61, %c0_62] : memref<32x128xbf16, #tpu.memory_space<vmem>>, vector<32x128xbf16>
    %cst_63 = arith.constant dense<0.000000e+00> : vector<8x128xf32>
    %150 = tpu.matmul %148, %149, %cst_63 {dimension_numbers = #tpu.dot_dimension_numbers<[1], [0], [0], [1], [0, 0, 1, 1], [], []>} : vector<8x32xbf16>, vector<32x128xbf16>, vector<8x128xf32> -> vector<8x128xf32>
    %151 = arith.addf %147, %150 : vector<8x128xf32>
    %152 = vector.extract_strided_slice %151 {offsets = [0, 0], sizes = [8, 96], strides = [1, 1]} : vector<8x128xf32> to vector<8x96xf32>
    %cst_64 = arith.constant 5.000000e-01 : f32
    %153 = vector.broadcast %cst_64 : f32 to vector<8x96xf32>
    %154 = arith.mulf %153, %152 : vector<8x96xf32>
    %155 = math.tanh %154 : vector<8x96xf32>
    %cst_65 = arith.constant 5.000000e-01 : f32
    %156 = vector.broadcast %cst_65 : f32 to vector<8x96xf32>
    %157 = arith.mulf %156, %155 : vector<8x96xf32>
    %cst_66 = arith.constant 5.000000e-01 : f32
    %158 = vector.broadcast %cst_66 : f32 to vector<8x96xf32>
    %159 = arith.addf %157, %158 : vector<8x96xf32>
    %160 = vector.extract_strided_slice %151 {offsets = [0, 96], sizes = [8, 32], strides = [1, 1]} : vector<8x128xf32> to vector<8x32xf32>
    %161 = math.tanh %160 : vector<8x32xf32>
    %162 = vector.extract_strided_slice %159 {offsets = [0, 32], sizes = [8, 32], strides = [1, 1]} : vector<8x96xf32> to vector<8x32xf32>
    %163 = arith.mulf %162, %138 : vector<8x32xf32>
    %164 = vector.extract_strided_slice %159 {offsets = [0, 0], sizes = [8, 32], strides = [1, 1]} : vector<8x96xf32> to vector<8x32xf32>
    %165 = arith.mulf %164, %161 : vector<8x32xf32>
    %166 = arith.addf %163, %165 : vector<8x32xf32>
    %167 = vector.extract_strided_slice %159 {offsets = [0, 64], sizes = [8, 32], strides = [1, 1]} : vector<8x96xf32> to vector<8x32xf32>
    %168 = math.tanh %166 : vector<8x32xf32>
    %169 = arith.mulf %167, %168 : vector<8x32xf32>
    %c0_67 = arith.constant 0 : index
    %c5_68 = arith.constant 5 : index
    %c0_69 = arith.constant 0 : index
    %170 = vector.load %arg4[%c0_67, %c5_68, %c0_69] : memref<8x16x32xf32, #tpu.memory_space<vmem>>, vector<8x1x32xf32>
    %171 = vector.shape_cast %170 : vector<8x1x32xf32> to vector<8x32xf32>
    %172 = vector.shape_cast %169 : vector<8x32xf32> to vector<8x1x32xf32>
    tpu.vector_store %arg4[%c0_67, %c5_68, %c0_69], %172 {strides = array<i32>} : memref<8x16x32xf32, #tpu.memory_space<vmem>>, vector<8x1x32xf32>,
    %c0_70 = arith.constant 0 : index
    %c6 = arith.constant 6 : index
    %c0_71 = arith.constant 0 : index
    %173 = vector.load %arg2[%c0_70, %c6, %c0_71] : memref<8x16x128xbf16, #tpu.memory_space<vmem>>, vector<8x1x128xbf16>
    %174 = vector.shape_cast %173 : vector<8x1x128xbf16> to vector<8x128xbf16>
    %175 = arith.extf %174 : vector<8x128xbf16> to vector<8x128xf32>
    %176 = arith.truncf %169 : vector<8x32xf32> to vector<8x32xbf16>
    %c0_72 = arith.constant 0 : index
    %c0_73 = arith.constant 0 : index
    %177 = vector.load %arg3[%c0_72, %c0_73] : memref<32x128xbf16, #tpu.memory_space<vmem>>, vector<32x128xbf16>
    %cst_74 = arith.constant dense<0.000000e+00> : vector<8x128xf32>
    %178 = tpu.matmul %176, %177, %cst_74 {dimension_numbers = #tpu.dot_dimension_numbers<[1], [0], [0], [1], [0, 0, 1, 1], [], []>} : vector<8x32xbf16>, vector<32x128xbf16>, vector<8x128xf32> -> vector<8x128xf32>
    %179 = arith.addf %175, %178 : vector<8x128xf32>
    %180 = vector.extract_strided_slice %179 {offsets = [0, 0], sizes = [8, 96], strides = [1, 1]} : vector<8x128xf32> to vector<8x96xf32>
    %cst_75 = arith.constant 5.000000e-01 : f32
    %181 = vector.broadcast %cst_75 : f32 to vector<8x96xf32>
    %182 = arith.mulf %181, %180 : vector<8x96xf32>
    %183 = math.tanh %182 : vector<8x96xf32>
    %cst_76 = arith.constant 5.000000e-01 : f32
    %184 = vector.broadcast %cst_76 : f32 to vector<8x96xf32>
    %185 = arith.mulf %184, %183 : vector<8x96xf32>
    %cst_77 = arith.constant 5.000000e-01 : f32
    %186 = vector.broadcast %cst_77 : f32 to vector<8x96xf32>
    %187 = arith.addf %185, %186 : vector<8x96xf32>
    %188 = vector.extract_strided_slice %179 {offsets = [0, 96], sizes = [8, 32], strides = [1, 1]} : vector<8x128xf32> to vector<8x32xf32>
    %189 = math.tanh %188 : vector<8x32xf32>
    %190 = vector.extract_strided_slice %187 {offsets = [0, 32], sizes = [8, 32], strides = [1, 1]} : vector<8x96xf32> to vector<8x32xf32>
    %191 = arith.mulf %190, %166 : vector<8x32xf32>
    %192 = vector.extract_strided_slice %187 {offsets = [0, 0], sizes = [8, 32], strides = [1, 1]} : vector<8x96xf32> to vector<8x32xf32>
    %193 = arith.mulf %192, %189 : vector<8x32xf32>
    %194 = arith.addf %191, %193 : vector<8x32xf32>
    %195 = vector.extract_strided_slice %187 {offsets = [0, 64], sizes = [8, 32], strides = [1, 1]} : vector<8x96xf32> to vector<8x32xf32>
    %196 = math.tanh %194 : vector<8x32xf32>
    %197 = arith.mulf %195, %196 : vector<8x32xf32>
    %c0_78 = arith.constant 0 : index
    %c6_79 = arith.constant 6 : index
    %c0_80 = arith.constant 0 : index
    %198 = vector.load %arg4[%c0_78, %c6_79, %c0_80] : memref<8x16x32xf32, #tpu.memory_space<vmem>>, vector<8x1x32xf32>
    %199 = vector.shape_cast %198 : vector<8x1x32xf32> to vector<8x32xf32>
    %200 = vector.shape_cast %197 : vector<8x32xf32> to vector<8x1x32xf32>
    tpu.vector_store %arg4[%c0_78, %c6_79, %c0_80], %200 {strides = array<i32>} : memref<8x16x32xf32, #tpu.memory_space<vmem>>, vector<8x1x32xf32>,
    %c0_81 = arith.constant 0 : index
    %c7 = arith.constant 7 : index
    %c0_82 = arith.constant 0 : index
    %201 = vector.load %arg2[%c0_81, %c7, %c0_82] : memref<8x16x128xbf16, #tpu.memory_space<vmem>>, vector<8x1x128xbf16>
    %202 = vector.shape_cast %201 : vector<8x1x128xbf16> to vector<8x128xbf16>
    %203 = arith.extf %202 : vector<8x128xbf16> to vector<8x128xf32>
    %204 = arith.truncf %197 : vector<8x32xf32> to vector<8x32xbf16>
    %c0_83 = arith.constant 0 : index
    %c0_84 = arith.constant 0 : index
    %205 = vector.load %arg3[%c0_83, %c0_84] : memref<32x128xbf16, #tpu.memory_space<vmem>>, vector<32x128xbf16>
    %cst_85 = arith.constant dense<0.000000e+00> : vector<8x128xf32>
    %206 = tpu.matmul %204, %205, %cst_85 {dimension_numbers = #tpu.dot_dimension_numbers<[1], [0], [0], [1], [0, 0, 1, 1], [], []>} : vector<8x32xbf16>, vector<32x128xbf16>, vector<8x128xf32> -> vector<8x128xf32>
    %207 = arith.addf %203, %206 : vector<8x128xf32>
    %208 = vector.extract_strided_slice %207 {offsets = [0, 0], sizes = [8, 96], strides = [1, 1]} : vector<8x128xf32> to vector<8x96xf32>
    %cst_86 = arith.constant 5.000000e-01 : f32
    %209 = vector.broadcast %cst_86 : f32 to vector<8x96xf32>
    %210 = arith.mulf %209, %208 : vector<8x96xf32>
    %211 = math.tanh %210 : vector<8x96xf32>
    %cst_87 = arith.constant 5.000000e-01 : f32
    %212 = vector.broadcast %cst_87 : f32 to vector<8x96xf32>
    %213 = arith.mulf %212, %211 : vector<8x96xf32>
    %cst_88 = arith.constant 5.000000e-01 : f32
    %214 = vector.broadcast %cst_88 : f32 to vector<8x96xf32>
    %215 = arith.addf %213, %214 : vector<8x96xf32>
    %216 = vector.extract_strided_slice %207 {offsets = [0, 96], sizes = [8, 32], strides = [1, 1]} : vector<8x128xf32> to vector<8x32xf32>
    %217 = math.tanh %216 : vector<8x32xf32>
    %218 = vector.extract_strided_slice %215 {offsets = [0, 32], sizes = [8, 32], strides = [1, 1]} : vector<8x96xf32> to vector<8x32xf32>
    %219 = arith.mulf %218, %194 : vector<8x32xf32>
    %220 = vector.extract_strided_slice %215 {offsets = [0, 0], sizes = [8, 32], strides = [1, 1]} : vector<8x96xf32> to vector<8x32xf32>
    %221 = arith.mulf %220, %217 : vector<8x32xf32>
    %222 = arith.addf %219, %221 : vector<8x32xf32>
    %223 = vector.extract_strided_slice %215 {offsets = [0, 64], sizes = [8, 32], strides = [1, 1]} : vector<8x96xf32> to vector<8x32xf32>
    %224 = math.tanh %222 : vector<8x32xf32>
    %225 = arith.mulf %223, %224 : vector<8x32xf32>
    %c0_89 = arith.constant 0 : index
    %c7_90 = arith.constant 7 : index
    %c0_91 = arith.constant 0 : index
    %226 = vector.load %arg4[%c0_89, %c7_90, %c0_91] : memref<8x16x32xf32, #tpu.memory_space<vmem>>, vector<8x1x32xf32>
    %227 = vector.shape_cast %226 : vector<8x1x32xf32> to vector<8x32xf32>
    %228 = vector.shape_cast %225 : vector<8x32xf32> to vector<8x1x32xf32>
    tpu.vector_store %arg4[%c0_89, %c7_90, %c0_91], %228 {strides = array<i32>} : memref<8x16x32xf32, #tpu.memory_space<vmem>>, vector<8x1x32xf32>,
    %c0_i32_92 = arith.constant 0 : i32
    %229 = arith.cmpi eq, %arg1, %c0_i32_92 : i32
    %230 = arith.extui %229 : i1 to i32
    %c0_i32_93 = arith.constant 0 : i32
    %231 = arith.cmpi ne, %230, %c0_i32_93 : i32
    scf.if %231 {
      %c0_186 = arith.constant 0 : index
      %c0_187 = arith.constant 0 : index
      %458 = vector.load %arg5[%c0_186, %c0_187] : memref<8x32xf32, #tpu.memory_space<vmem>>, vector<8x32xf32>
      tpu.vector_store %arg5[%c0_186, %c0_187], %222 {strides = array<i32>} : memref<8x32xf32, #tpu.memory_space<vmem>>, vector<8x32xf32>,
    } else {
    }
    %c0_94 = arith.constant 0 : index
    %c8 = arith.constant 8 : index
    %c0_95 = arith.constant 0 : index
    %232 = vector.load %arg2[%c0_94, %c8, %c0_95] : memref<8x16x128xbf16, #tpu.memory_space<vmem>>, vector<8x1x128xbf16>
    %233 = vector.shape_cast %232 : vector<8x1x128xbf16> to vector<8x128xbf16>
    %234 = arith.extf %233 : vector<8x128xbf16> to vector<8x128xf32>
    %235 = arith.truncf %225 : vector<8x32xf32> to vector<8x32xbf16>
    %c0_96 = arith.constant 0 : index
    %c0_97 = arith.constant 0 : index
    %236 = vector.load %arg3[%c0_96, %c0_97] : memref<32x128xbf16, #tpu.memory_space<vmem>>, vector<32x128xbf16>
    %cst_98 = arith.constant dense<0.000000e+00> : vector<8x128xf32>
    %237 = tpu.matmul %235, %236, %cst_98 {dimension_numbers = #tpu.dot_dimension_numbers<[1], [0], [0], [1], [0, 0, 1, 1], [], []>} : vector<8x32xbf16>, vector<32x128xbf16>, vector<8x128xf32> -> vector<8x128xf32>
    %238 = arith.addf %234, %237 : vector<8x128xf32>
    %239 = vector.extract_strided_slice %238 {offsets = [0, 0], sizes = [8, 96], strides = [1, 1]} : vector<8x128xf32> to vector<8x96xf32>
    %cst_99 = arith.constant 5.000000e-01 : f32
    %240 = vector.broadcast %cst_99 : f32 to vector<8x96xf32>
    %241 = arith.mulf %240, %239 : vector<8x96xf32>
    %242 = math.tanh %241 : vector<8x96xf32>
    %cst_100 = arith.constant 5.000000e-01 : f32
    %243 = vector.broadcast %cst_100 : f32 to vector<8x96xf32>
    %244 = arith.mulf %243, %242 : vector<8x96xf32>
    %cst_101 = arith.constant 5.000000e-01 : f32
    %245 = vector.broadcast %cst_101 : f32 to vector<8x96xf32>
    %246 = arith.addf %244, %245 : vector<8x96xf32>
    %247 = vector.extract_strided_slice %238 {offsets = [0, 96], sizes = [8, 32], strides = [1, 1]} : vector<8x128xf32> to vector<8x32xf32>
    %248 = math.tanh %247 : vector<8x32xf32>
    %249 = vector.extract_strided_slice %246 {offsets = [0, 32], sizes = [8, 32], strides = [1, 1]} : vector<8x96xf32> to vector<8x32xf32>
    %250 = arith.mulf %249, %222 : vector<8x32xf32>
    %251 = vector.extract_strided_slice %246 {offsets = [0, 0], sizes = [8, 32], strides = [1, 1]} : vector<8x96xf32> to vector<8x32xf32>
    %252 = arith.mulf %251, %248 : vector<8x32xf32>
    %253 = arith.addf %250, %252 : vector<8x32xf32>
    %254 = vector.extract_strided_slice %246 {offsets = [0, 64], sizes = [8, 32], strides = [1, 1]} : vector<8x96xf32> to vector<8x32xf32>
    %255 = math.tanh %253 : vector<8x32xf32>
    %256 = arith.mulf %254, %255 : vector<8x32xf32>
    %c0_102 = arith.constant 0 : index
    %c8_103 = arith.constant 8 : index
    %c0_104 = arith.constant 0 : index
    %257 = vector.load %arg4[%c0_102, %c8_103, %c0_104] : memref<8x16x32xf32, #tpu.memory_space<vmem>>, vector<8x1x32xf32>
    %258 = vector.shape_cast %257 : vector<8x1x32xf32> to vector<8x32xf32>
    %259 = vector.shape_cast %256 : vector<8x32xf32> to vector<8x1x32xf32>
    tpu.vector_store %arg4[%c0_102, %c8_103, %c0_104], %259 {strides = array<i32>} : memref<8x16x32xf32, #tpu.memory_space<vmem>>, vector<8x1x32xf32>,
    %c0_105 = arith.constant 0 : index
    %c9 = arith.constant 9 : index
    %c0_106 = arith.constant 0 : index
    %260 = vector.load %arg2[%c0_105, %c9, %c0_106] : memref<8x16x128xbf16, #tpu.memory_space<vmem>>, vector<8x1x128xbf16>
    %261 = vector.shape_cast %260 : vector<8x1x128xbf16> to vector<8x128xbf16>
    %262 = arith.extf %261 : vector<8x128xbf16> to vector<8x128xf32>
    %263 = arith.truncf %256 : vector<8x32xf32> to vector<8x32xbf16>
    %c0_107 = arith.constant 0 : index
    %c0_108 = arith.constant 0 : index
    %264 = vector.load %arg3[%c0_107, %c0_108] : memref<32x128xbf16, #tpu.memory_space<vmem>>, vector<32x128xbf16>
    %cst_109 = arith.constant dense<0.000000e+00> : vector<8x128xf32>
    %265 = tpu.matmul %263, %264, %cst_109 {dimension_numbers = #tpu.dot_dimension_numbers<[1], [0], [0], [1], [0, 0, 1, 1], [], []>} : vector<8x32xbf16>, vector<32x128xbf16>, vector<8x128xf32> -> vector<8x128xf32>
    %266 = arith.addf %262, %265 : vector<8x128xf32>
    %267 = vector.extract_strided_slice %266 {offsets = [0, 0], sizes = [8, 96], strides = [1, 1]} : vector<8x128xf32> to vector<8x96xf32>
    %cst_110 = arith.constant 5.000000e-01 : f32
    %268 = vector.broadcast %cst_110 : f32 to vector<8x96xf32>
    %269 = arith.mulf %268, %267 : vector<8x96xf32>
    %270 = math.tanh %269 : vector<8x96xf32>
    %cst_111 = arith.constant 5.000000e-01 : f32
    %271 = vector.broadcast %cst_111 : f32 to vector<8x96xf32>
    %272 = arith.mulf %271, %270 : vector<8x96xf32>
    %cst_112 = arith.constant 5.000000e-01 : f32
    %273 = vector.broadcast %cst_112 : f32 to vector<8x96xf32>
    %274 = arith.addf %272, %273 : vector<8x96xf32>
    %275 = vector.extract_strided_slice %266 {offsets = [0, 96], sizes = [8, 32], strides = [1, 1]} : vector<8x128xf32> to vector<8x32xf32>
    %276 = math.tanh %275 : vector<8x32xf32>
    %277 = vector.extract_strided_slice %274 {offsets = [0, 32], sizes = [8, 32], strides = [1, 1]} : vector<8x96xf32> to vector<8x32xf32>
    %278 = arith.mulf %277, %253 : vector<8x32xf32>
    %279 = vector.extract_strided_slice %274 {offsets = [0, 0], sizes = [8, 32], strides = [1, 1]} : vector<8x96xf32> to vector<8x32xf32>
    %280 = arith.mulf %279, %276 : vector<8x32xf32>
    %281 = arith.addf %278, %280 : vector<8x32xf32>
    %282 = vector.extract_strided_slice %274 {offsets = [0, 64], sizes = [8, 32], strides = [1, 1]} : vector<8x96xf32> to vector<8x32xf32>
    %283 = math.tanh %281 : vector<8x32xf32>
    %284 = arith.mulf %282, %283 : vector<8x32xf32>
    %c0_113 = arith.constant 0 : index
    %c9_114 = arith.constant 9 : index
    %c0_115 = arith.constant 0 : index
    %285 = vector.load %arg4[%c0_113, %c9_114, %c0_115] : memref<8x16x32xf32, #tpu.memory_space<vmem>>, vector<8x1x32xf32>
    %286 = vector.shape_cast %285 : vector<8x1x32xf32> to vector<8x32xf32>
    %287 = vector.shape_cast %284 : vector<8x32xf32> to vector<8x1x32xf32>
    tpu.vector_store %arg4[%c0_113, %c9_114, %c0_115], %287 {strides = array<i32>} : memref<8x16x32xf32, #tpu.memory_space<vmem>>, vector<8x1x32xf32>,
    %c0_116 = arith.constant 0 : index
    %c10 = arith.constant 10 : index
    %c0_117 = arith.constant 0 : index
    %288 = vector.load %arg2[%c0_116, %c10, %c0_117] : memref<8x16x128xbf16, #tpu.memory_space<vmem>>, vector<8x1x128xbf16>
    %289 = vector.shape_cast %288 : vector<8x1x128xbf16> to vector<8x128xbf16>
    %290 = arith.extf %289 : vector<8x128xbf16> to vector<8x128xf32>
    %291 = arith.truncf %284 : vector<8x32xf32> to vector<8x32xbf16>
    %c0_118 = arith.constant 0 : index
    %c0_119 = arith.constant 0 : index
    %292 = vector.load %arg3[%c0_118, %c0_119] : memref<32x128xbf16, #tpu.memory_space<vmem>>, vector<32x128xbf16>
    %cst_120 = arith.constant dense<0.000000e+00> : vector<8x128xf32>
    %293 = tpu.matmul %291, %292, %cst_120 {dimension_numbers = #tpu.dot_dimension_numbers<[1], [0], [0], [1], [0, 0, 1, 1], [], []>} : vector<8x32xbf16>, vector<32x128xbf16>, vector<8x128xf32> -> vector<8x128xf32>
    %294 = arith.addf %290, %293 : vector<8x128xf32>
    %295 = vector.extract_strided_slice %294 {offsets = [0, 0], sizes = [8, 96], strides = [1, 1]} : vector<8x128xf32> to vector<8x96xf32>
    %cst_121 = arith.constant 5.000000e-01 : f32
    %296 = vector.broadcast %cst_121 : f32 to vector<8x96xf32>
    %297 = arith.mulf %296, %295 : vector<8x96xf32>
    %298 = math.tanh %297 : vector<8x96xf32>
    %cst_122 = arith.constant 5.000000e-01 : f32
    %299 = vector.broadcast %cst_122 : f32 to vector<8x96xf32>
    %300 = arith.mulf %299, %298 : vector<8x96xf32>
    %cst_123 = arith.constant 5.000000e-01 : f32
    %301 = vector.broadcast %cst_123 : f32 to vector<8x96xf32>
    %302 = arith.addf %300, %301 : vector<8x96xf32>
    %303 = vector.extract_strided_slice %294 {offsets = [0, 96], sizes = [8, 32], strides = [1, 1]} : vector<8x128xf32> to vector<8x32xf32>
    %304 = math.tanh %303 : vector<8x32xf32>
    %305 = vector.extract_strided_slice %302 {offsets = [0, 32], sizes = [8, 32], strides = [1, 1]} : vector<8x96xf32> to vector<8x32xf32>
    %306 = arith.mulf %305, %281 : vector<8x32xf32>
    %307 = vector.extract_strided_slice %302 {offsets = [0, 0], sizes = [8, 32], strides = [1, 1]} : vector<8x96xf32> to vector<8x32xf32>
    %308 = arith.mulf %307, %304 : vector<8x32xf32>
    %309 = arith.addf %306, %308 : vector<8x32xf32>
    %310 = vector.extract_strided_slice %302 {offsets = [0, 64], sizes = [8, 32], strides = [1, 1]} : vector<8x96xf32> to vector<8x32xf32>
    %311 = math.tanh %309 : vector<8x32xf32>
    %312 = arith.mulf %310, %311 : vector<8x32xf32>
    %c0_124 = arith.constant 0 : index
    %c10_125 = arith.constant 10 : index
    %c0_126 = arith.constant 0 : index
    %313 = vector.load %arg4[%c0_124, %c10_125, %c0_126] : memref<8x16x32xf32, #tpu.memory_space<vmem>>, vector<8x1x32xf32>
    %314 = vector.shape_cast %313 : vector<8x1x32xf32> to vector<8x32xf32>
    %315 = vector.shape_cast %312 : vector<8x32xf32> to vector<8x1x32xf32>
    tpu.vector_store %arg4[%c0_124, %c10_125, %c0_126], %315 {strides = array<i32>} : memref<8x16x32xf32, #tpu.memory_space<vmem>>, vector<8x1x32xf32>,
    %c0_127 = arith.constant 0 : index
    %c11 = arith.constant 11 : index
    %c0_128 = arith.constant 0 : index
    %316 = vector.load %arg2[%c0_127, %c11, %c0_128] : memref<8x16x128xbf16, #tpu.memory_space<vmem>>, vector<8x1x128xbf16>
    %317 = vector.shape_cast %316 : vector<8x1x128xbf16> to vector<8x128xbf16>
    %318 = arith.extf %317 : vector<8x128xbf16> to vector<8x128xf32>
    %319 = arith.truncf %312 : vector<8x32xf32> to vector<8x32xbf16>
    %c0_129 = arith.constant 0 : index
    %c0_130 = arith.constant 0 : index
    %320 = vector.load %arg3[%c0_129, %c0_130] : memref<32x128xbf16, #tpu.memory_space<vmem>>, vector<32x128xbf16>
    %cst_131 = arith.constant dense<0.000000e+00> : vector<8x128xf32>
    %321 = tpu.matmul %319, %320, %cst_131 {dimension_numbers = #tpu.dot_dimension_numbers<[1], [0], [0], [1], [0, 0, 1, 1], [], []>} : vector<8x32xbf16>, vector<32x128xbf16>, vector<8x128xf32> -> vector<8x128xf32>
    %322 = arith.addf %318, %321 : vector<8x128xf32>
    %323 = vector.extract_strided_slice %322 {offsets = [0, 0], sizes = [8, 96], strides = [1, 1]} : vector<8x128xf32> to vector<8x96xf32>
    %cst_132 = arith.constant 5.000000e-01 : f32
    %324 = vector.broadcast %cst_132 : f32 to vector<8x96xf32>
    %325 = arith.mulf %324, %323 : vector<8x96xf32>
    %326 = math.tanh %325 : vector<8x96xf32>
    %cst_133 = arith.constant 5.000000e-01 : f32
    %327 = vector.broadcast %cst_133 : f32 to vector<8x96xf32>
    %328 = arith.mulf %327, %326 : vector<8x96xf32>
    %cst_134 = arith.constant 5.000000e-01 : f32
    %329 = vector.broadcast %cst_134 : f32 to vector<8x96xf32>
    %330 = arith.addf %328, %329 : vector<8x96xf32>
    %331 = vector.extract_strided_slice %322 {offsets = [0, 96], sizes = [8, 32], strides = [1, 1]} : vector<8x128xf32> to vector<8x32xf32>
    %332 = math.tanh %331 : vector<8x32xf32>
    %333 = vector.extract_strided_slice %330 {offsets = [0, 32], sizes = [8, 32], strides = [1, 1]} : vector<8x96xf32> to vector<8x32xf32>
    %334 = arith.mulf %333, %309 : vector<8x32xf32>
    %335 = vector.extract_strided_slice %330 {offsets = [0, 0], sizes = [8, 32], strides = [1, 1]} : vector<8x96xf32> to vector<8x32xf32>
    %336 = arith.mulf %335, %332 : vector<8x32xf32>
    %337 = arith.addf %334, %336 : vector<8x32xf32>
    %338 = vector.extract_strided_slice %330 {offsets = [0, 64], sizes = [8, 32], strides = [1, 1]} : vector<8x96xf32> to vector<8x32xf32>
    %339 = math.tanh %337 : vector<8x32xf32>
    %340 = arith.mulf %338, %339 : vector<8x32xf32>
    %c0_135 = arith.constant 0 : index
    %c11_136 = arith.constant 11 : index
    %c0_137 = arith.constant 0 : index
    %341 = vector.load %arg4[%c0_135, %c11_136, %c0_137] : memref<8x16x32xf32, #tpu.memory_space<vmem>>, vector<8x1x32xf32>
    %342 = vector.shape_cast %341 : vector<8x1x32xf32> to vector<8x32xf32>
    %343 = vector.shape_cast %340 : vector<8x32xf32> to vector<8x1x32xf32>
    tpu.vector_store %arg4[%c0_135, %c11_136, %c0_137], %343 {strides = array<i32>} : memref<8x16x32xf32, #tpu.memory_space<vmem>>, vector<8x1x32xf32>,
    %c0_138 = arith.constant 0 : index
    %c12 = arith.constant 12 : index
    %c0_139 = arith.constant 0 : index
    %344 = vector.load %arg2[%c0_138, %c12, %c0_139] : memref<8x16x128xbf16, #tpu.memory_space<vmem>>, vector<8x1x128xbf16>
    %345 = vector.shape_cast %344 : vector<8x1x128xbf16> to vector<8x128xbf16>
    %346 = arith.extf %345 : vector<8x128xbf16> to vector<8x128xf32>
    %347 = arith.truncf %340 : vector<8x32xf32> to vector<8x32xbf16>
    %c0_140 = arith.constant 0 : index
    %c0_141 = arith.constant 0 : index
    %348 = vector.load %arg3[%c0_140, %c0_141] : memref<32x128xbf16, #tpu.memory_space<vmem>>, vector<32x128xbf16>
    %cst_142 = arith.constant dense<0.000000e+00> : vector<8x128xf32>
    %349 = tpu.matmul %347, %348, %cst_142 {dimension_numbers = #tpu.dot_dimension_numbers<[1], [0], [0], [1], [0, 0, 1, 1], [], []>} : vector<8x32xbf16>, vector<32x128xbf16>, vector<8x128xf32> -> vector<8x128xf32>
    %350 = arith.addf %346, %349 : vector<8x128xf32>
    %351 = vector.extract_strided_slice %350 {offsets = [0, 0], sizes = [8, 96], strides = [1, 1]} : vector<8x128xf32> to vector<8x96xf32>
    %cst_143 = arith.constant 5.000000e-01 : f32
    %352 = vector.broadcast %cst_143 : f32 to vector<8x96xf32>
    %353 = arith.mulf %352, %351 : vector<8x96xf32>
    %354 = math.tanh %353 : vector<8x96xf32>
    %cst_144 = arith.constant 5.000000e-01 : f32
    %355 = vector.broadcast %cst_144 : f32 to vector<8x96xf32>
    %356 = arith.mulf %355, %354 : vector<8x96xf32>
    %cst_145 = arith.constant 5.000000e-01 : f32
    %357 = vector.broadcast %cst_145 : f32 to vector<8x96xf32>
    %358 = arith.addf %356, %357 : vector<8x96xf32>
    %359 = vector.extract_strided_slice %350 {offsets = [0, 96], sizes = [8, 32], strides = [1, 1]} : vector<8x128xf32> to vector<8x32xf32>
    %360 = math.tanh %359 : vector<8x32xf32>
    %361 = vector.extract_strided_slice %358 {offsets = [0, 32], sizes = [8, 32], strides = [1, 1]} : vector<8x96xf32> to vector<8x32xf32>
    %362 = arith.mulf %361, %337 : vector<8x32xf32>
    %363 = vector.extract_strided_slice %358 {offsets = [0, 0], sizes = [8, 32], strides = [1, 1]} : vector<8x96xf32> to vector<8x32xf32>
    %364 = arith.mulf %363, %360 : vector<8x32xf32>
    %365 = arith.addf %362, %364 : vector<8x32xf32>
    %366 = vector.extract_strided_slice %358 {offsets = [0, 64], sizes = [8, 32], strides = [1, 1]} : vector<8x96xf32> to vector<8x32xf32>
    %367 = math.tanh %365 : vector<8x32xf32>
    %368 = arith.mulf %366, %367 : vector<8x32xf32>
    %c0_146 = arith.constant 0 : index
    %c12_147 = arith.constant 12 : index
    %c0_148 = arith.constant 0 : index
    %369 = vector.load %arg4[%c0_146, %c12_147, %c0_148] : memref<8x16x32xf32, #tpu.memory_space<vmem>>, vector<8x1x32xf32>
    %370 = vector.shape_cast %369 : vector<8x1x32xf32> to vector<8x32xf32>
    %371 = vector.shape_cast %368 : vector<8x32xf32> to vector<8x1x32xf32>
    tpu.vector_store %arg4[%c0_146, %c12_147, %c0_148], %371 {strides = array<i32>} : memref<8x16x32xf32, #tpu.memory_space<vmem>>, vector<8x1x32xf32>,
    %c0_149 = arith.constant 0 : index
    %c13 = arith.constant 13 : index
    %c0_150 = arith.constant 0 : index
    %372 = vector.load %arg2[%c0_149, %c13, %c0_150] : memref<8x16x128xbf16, #tpu.memory_space<vmem>>, vector<8x1x128xbf16>
    %373 = vector.shape_cast %372 : vector<8x1x128xbf16> to vector<8x128xbf16>
    %374 = arith.extf %373 : vector<8x128xbf16> to vector<8x128xf32>
    %375 = arith.truncf %368 : vector<8x32xf32> to vector<8x32xbf16>
    %c0_151 = arith.constant 0 : index
    %c0_152 = arith.constant 0 : index
    %376 = vector.load %arg3[%c0_151, %c0_152] : memref<32x128xbf16, #tpu.memory_space<vmem>>, vector<32x128xbf16>
    %cst_153 = arith.constant dense<0.000000e+00> : vector<8x128xf32>
    %377 = tpu.matmul %375, %376, %cst_153 {dimension_numbers = #tpu.dot_dimension_numbers<[1], [0], [0], [1], [0, 0, 1, 1], [], []>} : vector<8x32xbf16>, vector<32x128xbf16>, vector<8x128xf32> -> vector<8x128xf32>
    %378 = arith.addf %374, %377 : vector<8x128xf32>
    %379 = vector.extract_strided_slice %378 {offsets = [0, 0], sizes = [8, 96], strides = [1, 1]} : vector<8x128xf32> to vector<8x96xf32>
    %cst_154 = arith.constant 5.000000e-01 : f32
    %380 = vector.broadcast %cst_154 : f32 to vector<8x96xf32>
    %381 = arith.mulf %380, %379 : vector<8x96xf32>
    %382 = math.tanh %381 : vector<8x96xf32>
    %cst_155 = arith.constant 5.000000e-01 : f32
    %383 = vector.broadcast %cst_155 : f32 to vector<8x96xf32>
    %384 = arith.mulf %383, %382 : vector<8x96xf32>
    %cst_156 = arith.constant 5.000000e-01 : f32
    %385 = vector.broadcast %cst_156 : f32 to vector<8x96xf32>
    %386 = arith.addf %384, %385 : vector<8x96xf32>
    %387 = vector.extract_strided_slice %378 {offsets = [0, 96], sizes = [8, 32], strides = [1, 1]} : vector<8x128xf32> to vector<8x32xf32>
    %388 = math.tanh %387 : vector<8x32xf32>
    %389 = vector.extract_strided_slice %386 {offsets = [0, 32], sizes = [8, 32], strides = [1, 1]} : vector<8x96xf32> to vector<8x32xf32>
    %390 = arith.mulf %389, %365 : vector<8x32xf32>
    %391 = vector.extract_strided_slice %386 {offsets = [0, 0], sizes = [8, 32], strides = [1, 1]} : vector<8x96xf32> to vector<8x32xf32>
    %392 = arith.mulf %391, %388 : vector<8x32xf32>
    %393 = arith.addf %390, %392 : vector<8x32xf32>
    %394 = vector.extract_strided_slice %386 {offsets = [0, 64], sizes = [8, 32], strides = [1, 1]} : vector<8x96xf32> to vector<8x32xf32>
    %395 = math.tanh %393 : vector<8x32xf32>
    %396 = arith.mulf %394, %395 : vector<8x32xf32>
    %c0_157 = arith.constant 0 : index
    %c13_158 = arith.constant 13 : index
    %c0_159 = arith.constant 0 : index
    %397 = vector.load %arg4[%c0_157, %c13_158, %c0_159] : memref<8x16x32xf32, #tpu.memory_space<vmem>>, vector<8x1x32xf32>
    %398 = vector.shape_cast %397 : vector<8x1x32xf32> to vector<8x32xf32>
    %399 = vector.shape_cast %396 : vector<8x32xf32> to vector<8x1x32xf32>
    tpu.vector_store %arg4[%c0_157, %c13_158, %c0_159], %399 {strides = array<i32>} : memref<8x16x32xf32, #tpu.memory_space<vmem>>, vector<8x1x32xf32>,
    %c0_160 = arith.constant 0 : index
    %c14 = arith.constant 14 : index
    %c0_161 = arith.constant 0 : index
    %400 = vector.load %arg2[%c0_160, %c14, %c0_161] : memref<8x16x128xbf16, #tpu.memory_space<vmem>>, vector<8x1x128xbf16>
    %401 = vector.shape_cast %400 : vector<8x1x128xbf16> to vector<8x128xbf16>
    %402 = arith.extf %401 : vector<8x128xbf16> to vector<8x128xf32>
    %403 = arith.truncf %396 : vector<8x32xf32> to vector<8x32xbf16>
    %c0_162 = arith.constant 0 : index
    %c0_163 = arith.constant 0 : index
    %404 = vector.load %arg3[%c0_162, %c0_163] : memref<32x128xbf16, #tpu.memory_space<vmem>>, vector<32x128xbf16>
    %cst_164 = arith.constant dense<0.000000e+00> : vector<8x128xf32>
    %405 = tpu.matmul %403, %404, %cst_164 {dimension_numbers = #tpu.dot_dimension_numbers<[1], [0], [0], [1], [0, 0, 1, 1], [], []>} : vector<8x32xbf16>, vector<32x128xbf16>, vector<8x128xf32> -> vector<8x128xf32>
    %406 = arith.addf %402, %405 : vector<8x128xf32>
    %407 = vector.extract_strided_slice %406 {offsets = [0, 0], sizes = [8, 96], strides = [1, 1]} : vector<8x128xf32> to vector<8x96xf32>
    %cst_165 = arith.constant 5.000000e-01 : f32
    %408 = vector.broadcast %cst_165 : f32 to vector<8x96xf32>
    %409 = arith.mulf %408, %407 : vector<8x96xf32>
    %410 = math.tanh %409 : vector<8x96xf32>
    %cst_166 = arith.constant 5.000000e-01 : f32
    %411 = vector.broadcast %cst_166 : f32 to vector<8x96xf32>
    %412 = arith.mulf %411, %410 : vector<8x96xf32>
    %cst_167 = arith.constant 5.000000e-01 : f32
    %413 = vector.broadcast %cst_167 : f32 to vector<8x96xf32>
    %414 = arith.addf %412, %413 : vector<8x96xf32>
    %415 = vector.extract_strided_slice %406 {offsets = [0, 96], sizes = [8, 32], strides = [1, 1]} : vector<8x128xf32> to vector<8x32xf32>
    %416 = math.tanh %415 : vector<8x32xf32>
    %417 = vector.extract_strided_slice %414 {offsets = [0, 32], sizes = [8, 32], strides = [1, 1]} : vector<8x96xf32> to vector<8x32xf32>
    %418 = arith.mulf %417, %393 : vector<8x32xf32>
    %419 = vector.extract_strided_slice %414 {offsets = [0, 0], sizes = [8, 32], strides = [1, 1]} : vector<8x96xf32> to vector<8x32xf32>
    %420 = arith.mulf %419, %416 : vector<8x32xf32>
    %421 = arith.addf %418, %420 : vector<8x32xf32>
    %422 = vector.extract_strided_slice %414 {offsets = [0, 64], sizes = [8, 32], strides = [1, 1]} : vector<8x96xf32> to vector<8x32xf32>
    %423 = math.tanh %421 : vector<8x32xf32>
    %424 = arith.mulf %422, %423 : vector<8x32xf32>
    %c0_168 = arith.constant 0 : index
    %c14_169 = arith.constant 14 : index
    %c0_170 = arith.constant 0 : index
    %425 = vector.load %arg4[%c0_168, %c14_169, %c0_170] : memref<8x16x32xf32, #tpu.memory_space<vmem>>, vector<8x1x32xf32>
    %426 = vector.shape_cast %425 : vector<8x1x32xf32> to vector<8x32xf32>
    %427 = vector.shape_cast %424 : vector<8x32xf32> to vector<8x1x32xf32>
    tpu.vector_store %arg4[%c0_168, %c14_169, %c0_170], %427 {strides = array<i32>} : memref<8x16x32xf32, #tpu.memory_space<vmem>>, vector<8x1x32xf32>,
    %c0_171 = arith.constant 0 : index
    %c15 = arith.constant 15 : index
    %c0_172 = arith.constant 0 : index
    %428 = vector.load %arg2[%c0_171, %c15, %c0_172] : memref<8x16x128xbf16, #tpu.memory_space<vmem>>, vector<8x1x128xbf16>
    %429 = vector.shape_cast %428 : vector<8x1x128xbf16> to vector<8x128xbf16>
    %430 = arith.extf %429 : vector<8x128xbf16> to vector<8x128xf32>
    %431 = arith.truncf %424 : vector<8x32xf32> to vector<8x32xbf16>
    %c0_173 = arith.constant 0 : index
    %c0_174 = arith.constant 0 : index
    %432 = vector.load %arg3[%c0_173, %c0_174] : memref<32x128xbf16, #tpu.memory_space<vmem>>, vector<32x128xbf16>
    %cst_175 = arith.constant dense<0.000000e+00> : vector<8x128xf32>
    %433 = tpu.matmul %431, %432, %cst_175 {dimension_numbers = #tpu.dot_dimension_numbers<[1], [0], [0], [1], [0, 0, 1, 1], [], []>} : vector<8x32xbf16>, vector<32x128xbf16>, vector<8x128xf32> -> vector<8x128xf32>
    %434 = arith.addf %430, %433 : vector<8x128xf32>
    %435 = vector.extract_strided_slice %434 {offsets = [0, 0], sizes = [8, 96], strides = [1, 1]} : vector<8x128xf32> to vector<8x96xf32>
    %cst_176 = arith.constant 5.000000e-01 : f32
    %436 = vector.broadcast %cst_176 : f32 to vector<8x96xf32>
    %437 = arith.mulf %436, %435 : vector<8x96xf32>
    %438 = math.tanh %437 : vector<8x96xf32>
    %cst_177 = arith.constant 5.000000e-01 : f32
    %439 = vector.broadcast %cst_177 : f32 to vector<8x96xf32>
    %440 = arith.mulf %439, %438 : vector<8x96xf32>
    %cst_178 = arith.constant 5.000000e-01 : f32
    %441 = vector.broadcast %cst_178 : f32 to vector<8x96xf32>
    %442 = arith.addf %440, %441 : vector<8x96xf32>
    %443 = vector.extract_strided_slice %434 {offsets = [0, 96], sizes = [8, 32], strides = [1, 1]} : vector<8x128xf32> to vector<8x32xf32>
    %444 = math.tanh %443 : vector<8x32xf32>
    %445 = vector.extract_strided_slice %442 {offsets = [0, 32], sizes = [8, 32], strides = [1, 1]} : vector<8x96xf32> to vector<8x32xf32>
    %446 = arith.mulf %445, %421 : vector<8x32xf32>
    %447 = vector.extract_strided_slice %442 {offsets = [0, 0], sizes = [8, 32], strides = [1, 1]} : vector<8x96xf32> to vector<8x32xf32>
    %448 = arith.mulf %447, %444 : vector<8x32xf32>
    %449 = arith.addf %446, %448 : vector<8x32xf32>
    %450 = vector.extract_strided_slice %442 {offsets = [0, 64], sizes = [8, 32], strides = [1, 1]} : vector<8x96xf32> to vector<8x32xf32>
    %451 = math.tanh %449 : vector<8x32xf32>
    %452 = arith.mulf %450, %451 : vector<8x32xf32>
    %c0_179 = arith.constant 0 : index
    %c15_180 = arith.constant 15 : index
    %c0_181 = arith.constant 0 : index
    %453 = vector.load %arg4[%c0_179, %c15_180, %c0_181] : memref<8x16x32xf32, #tpu.memory_space<vmem>>, vector<8x1x32xf32>
    %454 = vector.shape_cast %453 : vector<8x1x32xf32> to vector<8x32xf32>
    %455 = vector.shape_cast %452 : vector<8x32xf32> to vector<8x1x32xf32>
    tpu.vector_store %arg4[%c0_179, %c15_180, %c0_181], %455 {strides = array<i32>} : memref<8x16x32xf32, #tpu.memory_space<vmem>>, vector<8x1x32xf32>,
    %c0_182 = arith.constant 0 : index
    %c0_183 = arith.constant 0 : index
    %456 = vector.load %arg6[%c0_182, %c0_183] : memref<8x32xf32, #tpu.memory_space<vmem>>, vector<8x32xf32>
    tpu.vector_store %arg6[%c0_182, %c0_183], %452 {strides = array<i32>} : memref<8x32xf32, #tpu.memory_space<vmem>>, vector<8x32xf32>,
    %c0_184 = arith.constant 0 : index
    %c0_185 = arith.constant 0 : index
    %457 = vector.load %arg7[%c0_184, %c0_185] : memref<8x32xf32, #tpu.memory_space<vmem>>, vector<8x32xf32>
    tpu.vector_store %arg7[%c0_184, %c0_185], %449 {strides = array<i32>} : memref<8x32xf32, #tpu.memory_space<vmem>>, vector<8x32xf32>,
    return
  }
  func.func @transform_0(%arg0: i32, %arg1: i32) -> (i32, i32, i32) {
    %c0_i32 = arith.constant 0 : i32
    %c0_i32_0 = arith.constant 0 : i32
    return %arg0, %arg1, %c0_i32 : i32, i32, i32
  }
  func.func @transform_1(%arg0: i32, %arg1: i32) -> (i32, i32) {
    %c0_i32 = arith.constant 0 : i32
    %c0_i32_0 = arith.constant 0 : i32
    %c0_i32_1 = arith.constant 0 : i32
    return %c0_i32, %c0_i32_0 : i32, i32
  }
  func.func @transform_2(%arg0: i32, %arg1: i32) -> (i32, i32, i32) {
    %c0_i32 = arith.constant 0 : i32
    %c0_i32_0 = arith.constant 0 : i32
    return %arg0, %arg1, %c0_i32 : i32, i32, i32
  }
  func.func @transform_3(%arg0: i32, %arg1: i32) -> (i32, i32) {
    %c0_i32 = arith.constant 0 : i32
    %c0_i32_0 = arith.constant 0 : i32
    return %arg0, %c0_i32 : i32, i32
  }
}

module attributes {stable_mosaic.version = 11 : i64} {
  func.func @kernel(%arg0: i32, %arg1: i32, %arg2: memref<8x16x128xbf16, #tpu.memory_space<vmem>>, %arg3: memref<32x128xbf16, #tpu.memory_space<vmem>>, %arg4: memref<8x16x32xf32, #tpu.memory_space<vmem>>, %arg5: memref<8x32xf32, #tpu.memory_space<vmem>>, %arg6: memref<8x32xf32, #tpu.memory_space<vmem>>, %arg7: memref<8x32xf32, #tpu.memory_space<vmem>>) attributes {dimension_semantics = [#tpu.dimension_semantics<parallel>, #tpu.dimension_semantics<arbitrary>], iteration_bounds = array<i64: 1, 1>, scalar_prefetch = 0 : i64, scratch_operands = 2 : i64, tpu.core_type = #tpu.core_type<tc>, window_params = [{transform_indices = @transform_0, window_bounds = array<i64: 8, 16, 128>}, {pipeline_mode = #tpu.pipeline_mode<synchronous>, transform_indices = @transform_1, window_bounds = array<i64: 32, 128>}, {transform_indices = @transform_2, window_bounds = array<i64: 8, 16, 32>}, {transform_indices = @transform_3, window_bounds = array<i64: 8, 32>}]} {
    %c0_i32 = arith.constant 0 : i32
    %0 = arith.cmpi eq, %arg1, %c0_i32 : i32
    %1 = arith.extui %0 : i1 to i32
    %c0_i32_0 = arith.constant 0 : i32
    %2 = arith.cmpi ne, %1, %c0_i32_0 : i32
    scf.if %2 {
      %cst_186 = arith.constant 0.000000e+00 : f32
      %458 = vector.broadcast %cst_186 : f32 to vector<8x32xf32>
      %c0_187 = arith.constant 0 : index
      %c0_188 = arith.constant 0 : index
      %459 = vector.load %arg6[%c0_187, %c0_188] : memref<8x32xf32, #tpu.memory_space<vmem>>, vector<8x32xf32>
      tpu.vector_store %arg6[%c0_187, %c0_188], %458 {strides = array<i32>} : memref<8x32xf32, #tpu.memory_space<vmem>>, vector<8x32xf32>,
      %cst_189 = arith.constant 0.000000e+00 : f32
      %460 = vector.broadcast %cst_189 : f32 to vector<8x32xf32>
      %c0_190 = arith.constant 0 : index
      %c0_191 = arith.constant 0 : index
      %461 = vector.load %arg7[%c0_190, %c0_191] : memref<8x32xf32, #tpu.memory_space<vmem>>, vector<8x32xf32>
      tpu.vector_store %arg7[%c0_190, %c0_191], %460 {strides = array<i32>} : memref<8x32xf32, #tpu.memory_space<vmem>>, vector<8x32xf32>,
    } else {
    }
    %c0 = arith.constant 0 : index
    %c0_1 = arith.constant 0 : index
    %3 = vector.load %arg6[%c0, %c0_1] : memref<8x32xf32, #tpu.memory_space<vmem>>, vector<8x32xf32>
    %c0_2 = arith.constant 0 : index
    %c0_3 = arith.constant 0 : index
    %4 = vector.load %arg7[%c0_2, %c0_3] : memref<8x32xf32, #tpu.memory_space<vmem>>, vector<8x32xf32>
    %c0_4 = arith.constant 0 : index
    %c0_5 = arith.constant 0 : index
    %c0_6 = arith.constant 0 : index
    %5 = vector.load %arg2[%c0_4, %c0_5, %c0_6] : memref<8x16x128xbf16, #tpu.memory_space<vmem>>, vector<8x1x128xbf16>
    %6 = vector.shape_cast %5 : vector<8x1x128xbf16> to vector<8x128xbf16>
    %7 = arith.extf %6 : vector<8x128xbf16> to vector<8x128xf32>
    %8 = arith.truncf %3 : vector<8x32xf32> to vector<8x32xbf16>
    %c0_7 = arith.constant 0 : index
    %c0_8 = arith.constant 0 : index
    %9 = vector.load %arg3[%c0_7, %c0_8] : memref<32x128xbf16, #tpu.memory_space<vmem>>, vector<32x128xbf16>
    %cst = arith.constant dense<0.000000e+00> : vector<8x128xf32>
    %10 = tpu.matmul %8, %9, %cst {dimension_numbers = #tpu.dot_dimension_numbers<[1], [0], [0], [1], [0, 0, 1, 1], [], []>} : vector<8x32xbf16>, vector<32x128xbf16>, vector<8x128xf32> -> vector<8x128xf32>
    %11 = arith.addf %7, %10 : vector<8x128xf32>
    %12 = vector.extract_strided_slice %11 {offsets = [0, 0], sizes = [8, 96], strides = [1, 1]} : vector<8x128xf32> to vector<8x96xf32>
    %cst_9 = arith.constant 5.000000e-01 : f32
    %13 = vector.broadcast %cst_9 : f32 to vector<8x96xf32>
    %14 = arith.mulf %13, %12 : vector<8x96xf32>
    %15 = math.tanh %14 : vector<8x96xf32>
    %cst_10 = arith.constant 5.000000e-01 : f32
    %16 = vector.broadcast %cst_10 : f32 to vector<8x96xf32>
    %17 = arith.mulf %16, %15 : vector<8x96xf32>
    %cst_11 = arith.constant 5.000000e-01 : f32
    %18 = vector.broadcast %cst_11 : f32 to vector<8x96xf32>
    %19 = arith.addf %17, %18 : vector<8x96xf32>
    %20 = vector.extract_strided_slice %11 {offsets = [0, 96], sizes = [8, 32], strides = [1, 1]} : vector<8x128xf32> to vector<8x32xf32>
    %21 = math.tanh %20 : vector<8x32xf32>
    %22 = vector.extract_strided_slice %19 {offsets = [0, 32], sizes = [8, 32], strides = [1, 1]} : vector<8x96xf32> to vector<8x32xf32>
    %23 = arith.mulf %22, %4 : vector<8x32xf32>
    %24 = vector.extract_strided_slice %19 {offsets = [0, 0], sizes = [8, 32], strides = [1, 1]} : vector<8x96xf32> to vector<8x32xf32>
    %25 = arith.mulf %24, %21 : vector<8x32xf32>
    %26 = arith.addf %23, %25 : vector<8x32xf32>
    %27 = vector.extract_strided_slice %19 {offsets = [0, 64], sizes = [8, 32], strides = [1, 1]} : vector<8x96xf32> to vector<8x32xf32>
    %28 = math.tanh %26 : vector<8x32xf32>
    %29 = arith.mulf %27, %28 : vector<8x32xf32>
    %c0_12 = arith.constant 0 : index
    %c0_13 = arith.constant 0 : index
    %c0_14 = arith.constant 0 : index
    %30 = vector.load %arg4[%c0_12, %c0_13, %c0_14] : memref<8x16x32xf32, #tpu.memory_space<vmem>>, vector<8x1x32xf32>
    %31 = vector.shape_cast %30 : vector<8x1x32xf32> to vector<8x32xf32>
    %32 = vector.shape_cast %29 : vector<8x32xf32> to vector<8x1x32xf32>
    tpu.vector_store %arg4[%c0_12, %c0_13, %c0_14], %32 {strides = array<i32>} : memref<8x16x32xf32, #tpu.memory_space<vmem>>, vector<8x1x32xf32>,
    %c0_15 = arith.constant 0 : index
    %c1 = arith.constant 1 : index
    %c0_16 = arith.constant 0 : index
    %33 = vector.load %arg2[%c0_15, %c1, %c0_16] : memref<8x16x128xbf16, #tpu.memory_space<vmem>>, vector<8x1x128xbf16>
    %34 = vector.shape_cast %33 : vector<8x1x128xbf16> to vector<8x128xbf16>
    %35 = arith.extf %34 : vector<8x128xbf16> to vector<8x128xf32>
    %36 = arith.truncf %29 : vector<8x32xf32> to vector<8x32xbf16>
    %c0_17 = arith.constant 0 : index
    %c0_18 = arith.constant 0 : index
    %37 = vector.load %arg3[%c0_17, %c0_18] : memref<32x128xbf16, #tpu.memory_space<vmem>>, vector<32x128xbf16>
    %cst_19 = arith.constant dense<0.000000e+00> : vector<8x128xf32>
    %38 = tpu.matmul %36, %37, %cst_19 {dimension_numbers = #tpu.dot_dimension_numbers<[1], [0], [0], [1], [0, 0, 1, 1], [], []>} : vector<8x32xbf16>, vector<32x128xbf16>, vector<8x128xf32> -> vector<8x128xf32>
    %39 = arith.addf %35, %38 : vector<8x128xf32>
    %40 = vector.extract_strided_slice %39 {offsets = [0, 0], sizes = [8, 96], strides = [1, 1]} : vector<8x128xf32> to vector<8x96xf32>
    %cst_20 = arith.constant 5.000000e-01 : f32
    %41 = vector.broadcast %cst_20 : f32 to vector<8x96xf32>
    %42 = arith.mulf %41, %40 : vector<8x96xf32>
    %43 = math.tanh %42 : vector<8x96xf32>
    %cst_21 = arith.constant 5.000000e-01 : f32
    %44 = vector.broadcast %cst_21 : f32 to vector<8x96xf32>
    %45 = arith.mulf %44, %43 : vector<8x96xf32>
    %cst_22 = arith.constant 5.000000e-01 : f32
    %46 = vector.broadcast %cst_22 : f32 to vector<8x96xf32>
    %47 = arith.addf %45, %46 : vector<8x96xf32>
    %48 = vector.extract_strided_slice %39 {offsets = [0, 96], sizes = [8, 32], strides = [1, 1]} : vector<8x128xf32> to vector<8x32xf32>
    %49 = math.tanh %48 : vector<8x32xf32>
    %50 = vector.extract_strided_slice %47 {offsets = [0, 32], sizes = [8, 32], strides = [1, 1]} : vector<8x96xf32> to vector<8x32xf32>
    %51 = arith.mulf %50, %26 : vector<8x32xf32>
    %52 = vector.extract_strided_slice %47 {offsets = [0, 0], sizes = [8, 32], strides = [1, 1]} : vector<8x96xf32> to vector<8x32xf32>
    %53 = arith.mulf %52, %49 : vector<8x32xf32>
    %54 = arith.addf %51, %53 : vector<8x32xf32>
    %55 = vector.extract_strided_slice %47 {offsets = [0, 64], sizes = [8, 32], strides = [1, 1]} : vector<8x96xf32> to vector<8x32xf32>
    %56 = math.tanh %54 : vector<8x32xf32>
    %57 = arith.mulf %55, %56 : vector<8x32xf32>
    %c0_23 = arith.constant 0 : index
    %c1_24 = arith.constant 1 : index
    %c0_25 = arith.constant 0 : index
    %58 = vector.load %arg4[%c0_23, %c1_24, %c0_25] : memref<8x16x32xf32, #tpu.memory_space<vmem>>, vector<8x1x32xf32>
    %59 = vector.shape_cast %58 : vector<8x1x32xf32> to vector<8x32xf32>
    %60 = vector.shape_cast %57 : vector<8x32xf32> to vector<8x1x32xf32>
    tpu.vector_store %arg4[%c0_23, %c1_24, %c0_25], %60 {strides = array<i32>} : memref<8x16x32xf32, #tpu.memory_space<vmem>>, vector<8x1x32xf32>,
    %c0_26 = arith.constant 0 : index
    %c2 = arith.constant 2 : index
    %c0_27 = arith.constant 0 : index
    %61 = vector.load %arg2[%c0_26, %c2, %c0_27] : memref<8x16x128xbf16, #tpu.memory_space<vmem>>, vector<8x1x128xbf16>
    %62 = vector.shape_cast %61 : vector<8x1x128xbf16> to vector<8x128xbf16>
    %63 = arith.extf %62 : vector<8x128xbf16> to vector<8x128xf32>
    %64 = arith.truncf %57 : vector<8x32xf32> to vector<8x32xbf16>
    %c0_28 = arith.constant 0 : index
    %c0_29 = arith.constant 0 : index
    %65 = vector.load %arg3[%c0_28, %c0_29] : memref<32x128xbf16, #tpu.memory_space<vmem>>, vector<32x128xbf16>
    %cst_30 = arith.constant dense<0.000000e+00> : vector<8x128xf32>
    %66 = tpu.matmul %64, %65, %cst_30 {dimension_numbers = #tpu.dot_dimension_numbers<[1], [0], [0], [1], [0, 0, 1, 1], [], []>} : vector<8x32xbf16>, vector<32x128xbf16>, vector<8x128xf32> -> vector<8x128xf32>
    %67 = arith.addf %63, %66 : vector<8x128xf32>
    %68 = vector.extract_strided_slice %67 {offsets = [0, 0], sizes = [8, 96], strides = [1, 1]} : vector<8x128xf32> to vector<8x96xf32>
    %cst_31 = arith.constant 5.000000e-01 : f32
    %69 = vector.broadcast %cst_31 : f32 to vector<8x96xf32>
    %70 = arith.mulf %69, %68 : vector<8x96xf32>
    %71 = math.tanh %70 : vector<8x96xf32>
    %cst_32 = arith.constant 5.000000e-01 : f32
    %72 = vector.broadcast %cst_32 : f32 to vector<8x96xf32>
    %73 = arith.mulf %72, %71 : vector<8x96xf32>
    %cst_33 = arith.constant 5.000000e-01 : f32
    %74 = vector.broadcast %cst_33 : f32 to vector<8x96xf32>
    %75 = arith.addf %73, %74 : vector<8x96xf32>
    %76 = vector.extract_strided_slice %67 {offsets = [0, 96], sizes = [8, 32], strides = [1, 1]} : vector<8x128xf32> to vector<8x32xf32>
    %77 = math.tanh %76 : vector<8x32xf32>
    %78 = vector.extract_strided_slice %75 {offsets = [0, 32], sizes = [8, 32], strides = [1, 1]} : vector<8x96xf32> to vector<8x32xf32>
    %79 = arith.mulf %78, %54 : vector<8x32xf32>
    %80 = vector.extract_strided_slice %75 {offsets = [0, 0], sizes = [8, 32], strides = [1, 1]} : vector<8x96xf32> to vector<8x32xf32>
    %81 = arith.mulf %80, %77 : vector<8x32xf32>
    %82 = arith.addf %79, %81 : vector<8x32xf32>
    %83 = vector.extract_strided_slice %75 {offsets = [0, 64], sizes = [8, 32], strides = [1, 1]} : vector<8x96xf32> to vector<8x32xf32>
    %84 = math.tanh %82 : vector<8x32xf32>
    %85 = arith.mulf %83, %84 : vector<8x32xf32>
    %c0_34 = arith.constant 0 : index
    %c2_35 = arith.constant 2 : index
    %c0_36 = arith.constant 0 : index
    %86 = vector.load %arg4[%c0_34, %c2_35, %c0_36] : memref<8x16x32xf32, #tpu.memory_space<vmem>>, vector<8x1x32xf32>
    %87 = vector.shape_cast %86 : vector<8x1x32xf32> to vector<8x32xf32>
    %88 = vector.shape_cast %85 : vector<8x32xf32> to vector<8x1x32xf32>
    tpu.vector_store %arg4[%c0_34, %c2_35, %c0_36], %88 {strides = array<i32>} : memref<8x16x32xf32, #tpu.memory_space<vmem>>, vector<8x1x32xf32>,
    %c0_37 = arith.constant 0 : index
    %c3 = arith.constant 3 : index
    %c0_38 = arith.constant 0 : index
    %89 = vector.load %arg2[%c0_37, %c3, %c0_38] : memref<8x16x128xbf16, #tpu.memory_space<vmem>>, vector<8x1x128xbf16>
    %90 = vector.shape_cast %89 : vector<8x1x128xbf16> to vector<8x128xbf16>
    %91 = arith.extf %90 : vector<8x128xbf16> to vector<8x128xf32>
    %92 = arith.truncf %85 : vector<8x32xf32> to vector<8x32xbf16>
    %c0_39 = arith.constant 0 : index
    %c0_40 = arith.constant 0 : index
    %93 = vector.load %arg3[%c0_39, %c0_40] : memref<32x128xbf16, #tpu.memory_space<vmem>>, vector<32x128xbf16>
    %cst_41 = arith.constant dense<0.000000e+00> : vector<8x128xf32>
    %94 = tpu.matmul %92, %93, %cst_41 {dimension_numbers = #tpu.dot_dimension_numbers<[1], [0], [0], [1], [0, 0, 1, 1], [], []>} : vector<8x32xbf16>, vector<32x128xbf16>, vector<8x128xf32> -> vector<8x128xf32>
    %95 = arith.addf %91, %94 : vector<8x128xf32>
    %96 = vector.extract_strided_slice %95 {offsets = [0, 0], sizes = [8, 96], strides = [1, 1]} : vector<8x128xf32> to vector<8x96xf32>
    %cst_42 = arith.constant 5.000000e-01 : f32
    %97 = vector.broadcast %cst_42 : f32 to vector<8x96xf32>
    %98 = arith.mulf %97, %96 : vector<8x96xf32>
    %99 = math.tanh %98 : vector<8x96xf32>
    %cst_43 = arith.constant 5.000000e-01 : f32
    %100 = vector.broadcast %cst_43 : f32 to vector<8x96xf32>
    %101 = arith.mulf %100, %99 : vector<8x96xf32>
    %cst_44 = arith.constant 5.000000e-01 : f32
    %102 = vector.broadcast %cst_44 : f32 to vector<8x96xf32>
    %103 = arith.addf %101, %102 : vector<8x96xf32>
    %104 = vector.extract_strided_slice %95 {offsets = [0, 96], sizes = [8, 32], strides = [1, 1]} : vector<8x128xf32> to vector<8x32xf32>
    %105 = math.tanh %104 : vector<8x32xf32>
    %106 = vector.extract_strided_slice %103 {offsets = [0, 32], sizes = [8, 32], strides = [1, 1]} : vector<8x96xf32> to vector<8x32xf32>
    %107 = arith.mulf %106, %82 : vector<8x32xf32>
    %108 = vector.extract_strided_slice %103 {offsets = [0, 0], sizes = [8, 32], strides = [1, 1]} : vector<8x96xf32> to vector<8x32xf32>
    %109 = arith.mulf %108, %105 : vector<8x32xf32>
    %110 = arith.addf %107, %109 : vector<8x32xf32>
    %111 = vector.extract_strided_slice %103 {offsets = [0, 64], sizes = [8, 32], strides = [1, 1]} : vector<8x96xf32> to vector<8x32xf32>
    %112 = math.tanh %110 : vector<8x32xf32>
    %113 = arith.mulf %111, %112 : vector<8x32xf32>
    %c0_45 = arith.constant 0 : index
    %c3_46 = arith.constant 3 : index
    %c0_47 = arith.constant 0 : index
    %114 = vector.load %arg4[%c0_45, %c3_46, %c0_47] : memref<8x16x32xf32, #tpu.memory_space<vmem>>, vector<8x1x32xf32>
    %115 = vector.shape_cast %114 : vector<8x1x32xf32> to vector<8x32xf32>
    %116 = vector.shape_cast %113 : vector<8x32xf32> to vector<8x1x32xf32>
    tpu.vector_store %arg4[%c0_45, %c3_46, %c0_47], %116 {strides = array<i32>} : memref<8x16x32xf32, #tpu.memory_space<vmem>>, vector<8x1x32xf32>,
    %c0_48 = arith.constant 0 : index
    %c4 = arith.constant 4 : index
    %c0_49 = arith.constant 0 : index
    %117 = vector.load %arg2[%c0_48, %c4, %c0_49] : memref<8x16x128xbf16, #tpu.memory_space<vmem>>, vector<8x1x128xbf16>
    %118 = vector.shape_cast %117 : vector<8x1x128xbf16> to vector<8x128xbf16>
    %119 = arith.extf %118 : vector<8x128xbf16> to vector<8x128xf32>
    %120 = arith.truncf %113 : vector<8x32xf32> to vector<8x32xbf16>
    %c0_50 = arith.constant 0 : index
    %c0_51 = arith.constant 0 : index
    %121 = vector.load %arg3[%c0_50, %c0_51] : memref<32x128xbf16, #tpu.memory_space<vmem>>, vector<32x128xbf16>
    %cst_52 = arith.constant dense<0.000000e+00> : vector<8x128xf32>
    %122 = tpu.matmul %120, %121, %cst_52 {dimension_numbers = #tpu.dot_dimension_numbers<[1], [0], [0], [1], [0, 0, 1, 1], [], []>} : vector<8x32xbf16>, vector<32x128xbf16>, vector<8x128xf32> -> vector<8x128xf32>
    %123 = arith.addf %119, %122 : vector<8x128xf32>
    %124 = vector.extract_strided_slice %123 {offsets = [0, 0], sizes = [8, 96], strides = [1, 1]} : vector<8x128xf32> to vector<8x96xf32>
    %cst_53 = arith.constant 5.000000e-01 : f32
    %125 = vector.broadcast %cst_53 : f32 to vector<8x96xf32>
    %126 = arith.mulf %125, %124 : vector<8x96xf32>
    %127 = math.tanh %126 : vector<8x96xf32>
    %cst_54 = arith.constant 5.000000e-01 : f32
    %128 = vector.broadcast %cst_54 : f32 to vector<8x96xf32>
    %129 = arith.mulf %128, %127 : vector<8x96xf32>
    %cst_55 = arith.constant 5.000000e-01 : f32
    %130 = vector.broadcast %cst_55 : f32 to vector<8x96xf32>
    %131 = arith.addf %129, %130 : vector<8x96xf32>
    %132 = vector.extract_strided_slice %123 {offsets = [0, 96], sizes = [8, 32], strides = [1, 1]} : vector<8x128xf32> to vector<8x32xf32>
    %133 = math.tanh %132 : vector<8x32xf32>
    %134 = vector.extract_strided_slice %131 {offsets = [0, 32], sizes = [8, 32], strides = [1, 1]} : vector<8x96xf32> to vector<8x32xf32>
    %135 = arith.mulf %134, %110 : vector<8x32xf32>
    %136 = vector.extract_strided_slice %131 {offsets = [0, 0], sizes = [8, 32], strides = [1, 1]} : vector<8x96xf32> to vector<8x32xf32>
    %137 = arith.mulf %136, %133 : vector<8x32xf32>
    %138 = arith.addf %135, %137 : vector<8x32xf32>
    %139 = vector.extract_strided_slice %131 {offsets = [0, 64], sizes = [8, 32], strides = [1, 1]} : vector<8x96xf32> to vector<8x32xf32>
    %140 = math.tanh %138 : vector<8x32xf32>
    %141 = arith.mulf %139, %140 : vector<8x32xf32>
    %c0_56 = arith.constant 0 : index
    %c4_57 = arith.constant 4 : index
    %c0_58 = arith.constant 0 : index
    %142 = vector.load %arg4[%c0_56, %c4_57, %c0_58] : memref<8x16x32xf32, #tpu.memory_space<vmem>>, vector<8x1x32xf32>
    %143 = vector.shape_cast %142 : vector<8x1x32xf32> to vector<8x32xf32>
    %144 = vector.shape_cast %141 : vector<8x32xf32> to vector<8x1x32xf32>
    tpu.vector_store %arg4[%c0_56, %c4_57, %c0_58], %144 {strides = array<i32>} : memref<8x16x32xf32, #tpu.memory_space<vmem>>, vector<8x1x32xf32>,
    %c0_59 = arith.constant 0 : index
    %c5 = arith.constant 5 : index
    %c0_60 = arith.constant 0 : index
    %145 = vector.load %arg2[%c0_59, %c5, %c0_60] : memref<8x16x128xbf16, #tpu.memory_space<vmem>>, vector<8x1x128xbf16>
    %146 = vector.shape_cast %145 : vector<8x1x128xbf16> to vector<8x128xbf16>
    %147 = arith.extf %146 : vector<8x128xbf16> to vector<8x128xf32>
    %148 = arith.truncf %141 : vector<8x32xf32> to vector<8x32xbf16>
    %c0_61 = arith.constant 0 : index
    %c0_62 = arith.constant 0 : index
    %149 = vector.load %arg3[%c0_61, %c0_62] : memref<32x128xbf16, #tpu.memory_space<vmem>>, vector<32x128xbf16>
    %cst_63 = arith.constant dense<0.000000e+00> : vector<8x128xf32>
    %150 = tpu.matmul %148, %149, %cst_63 {dimension_numbers = #tpu.dot_dimension_numbers<[1], [0], [0], [1], [0, 0, 1, 1], [], []>} : vector<8x32xbf16>, vector<32x128xbf16>, vector<8x128xf32> -> vector<8x128xf32>
    %151 = arith.addf %147, %150 : vector<8x128xf32>
    %152 = vector.extract_strided_slice %151 {offsets = [0, 0], sizes = [8, 96], strides = [1, 1]} : vector<8x128xf32> to vector<8x96xf32>
    %cst_64 = arith.constant 5.000000e-01 : f32
    %153 = vector.broadcast %cst_64 : f32 to vector<8x96xf32>
    %154 = arith.mulf %153, %152 : vector<8x96xf32>
    %155 = math.tanh %154 : vector<8x96xf32>
    %cst_65 = arith.constant 5.000000e-01 : f32
    %156 = vector.broadcast %cst_65 : f32 to vector<8x96xf32>
    %157 = arith.mulf %156, %155 : vector<8x96xf32>
    %cst_66 = arith.constant 5.000000e-01 : f32
    %158 = vector.broadcast %cst_66 : f32 to vector<8x96xf32>
    %159 = arith.addf %157, %158 : vector<8x96xf32>
    %160 = vector.extract_strided_slice %151 {offsets = [0, 96], sizes = [8, 32], strides = [1, 1]} : vector<8x128xf32> to vector<8x32xf32>
    %161 = math.tanh %160 : vector<8x32xf32>
    %162 = vector.extract_strided_slice %159 {offsets = [0, 32], sizes = [8, 32], strides = [1, 1]} : vector<8x96xf32> to vector<8x32xf32>
    %163 = arith.mulf %162, %138 : vector<8x32xf32>
    %164 = vector.extract_strided_slice %159 {offsets = [0, 0], sizes = [8, 32], strides = [1, 1]} : vector<8x96xf32> to vector<8x32xf32>
    %165 = arith.mulf %164, %161 : vector<8x32xf32>
    %166 = arith.addf %163, %165 : vector<8x32xf32>
    %167 = vector.extract_strided_slice %159 {offsets = [0, 64], sizes = [8, 32], strides = [1, 1]} : vector<8x96xf32> to vector<8x32xf32>
    %168 = math.tanh %166 : vector<8x32xf32>
    %169 = arith.mulf %167, %168 : vector<8x32xf32>
    %c0_67 = arith.constant 0 : index
    %c5_68 = arith.constant 5 : index
    %c0_69 = arith.constant 0 : index
    %170 = vector.load %arg4[%c0_67, %c5_68, %c0_69] : memref<8x16x32xf32, #tpu.memory_space<vmem>>, vector<8x1x32xf32>
    %171 = vector.shape_cast %170 : vector<8x1x32xf32> to vector<8x32xf32>
    %172 = vector.shape_cast %169 : vector<8x32xf32> to vector<8x1x32xf32>
    tpu.vector_store %arg4[%c0_67, %c5_68, %c0_69], %172 {strides = array<i32>} : memref<8x16x32xf32, #tpu.memory_space<vmem>>, vector<8x1x32xf32>,
    %c0_70 = arith.constant 0 : index
    %c6 = arith.constant 6 : index
    %c0_71 = arith.constant 0 : index
    %173 = vector.load %arg2[%c0_70, %c6, %c0_71] : memref<8x16x128xbf16, #tpu.memory_space<vmem>>, vector<8x1x128xbf16>
    %174 = vector.shape_cast %173 : vector<8x1x128xbf16> to vector<8x128xbf16>
    %175 = arith.extf %174 : vector<8x128xbf16> to vector<8x128xf32>
    %176 = arith.truncf %169 : vector<8x32xf32> to vector<8x32xbf16>
    %c0_72 = arith.constant 0 : index
    %c0_73 = arith.constant 0 : index
    %177 = vector.load %arg3[%c0_72, %c0_73] : memref<32x128xbf16, #tpu.memory_space<vmem>>, vector<32x128xbf16>
    %cst_74 = arith.constant dense<0.000000e+00> : vector<8x128xf32>
    %178 = tpu.matmul %176, %177, %cst_74 {dimension_numbers = #tpu.dot_dimension_numbers<[1], [0], [0], [1], [0, 0, 1, 1], [], []>} : vector<8x32xbf16>, vector<32x128xbf16>, vector<8x128xf32> -> vector<8x128xf32>
    %179 = arith.addf %175, %178 : vector<8x128xf32>
    %180 = vector.extract_strided_slice %179 {offsets = [0, 0], sizes = [8, 96], strides = [1, 1]} : vector<8x128xf32> to vector<8x96xf32>
    %cst_75 = arith.constant 5.000000e-01 : f32
    %181 = vector.broadcast %cst_75 : f32 to vector<8x96xf32>
    %182 = arith.mulf %181, %180 : vector<8x96xf32>
    %183 = math.tanh %182 : vector<8x96xf32>
    %cst_76 = arith.constant 5.000000e-01 : f32
    %184 = vector.broadcast %cst_76 : f32 to vector<8x96xf32>
    %185 = arith.mulf %184, %183 : vector<8x96xf32>
    %cst_77 = arith.constant 5.000000e-01 : f32
    %186 = vector.broadcast %cst_77 : f32 to vector<8x96xf32>
    %187 = arith.addf %185, %186 : vector<8x96xf32>
    %188 = vector.extract_strided_slice %179 {offsets = [0, 96], sizes = [8, 32], strides = [1, 1]} : vector<8x128xf32> to vector<8x32xf32>
    %189 = math.tanh %188 : vector<8x32xf32>
    %190 = vector.extract_strided_slice %187 {offsets = [0, 32], sizes = [8, 32], strides = [1, 1]} : vector<8x96xf32> to vector<8x32xf32>
    %191 = arith.mulf %190, %166 : vector<8x32xf32>
    %192 = vector.extract_strided_slice %187 {offsets = [0, 0], sizes = [8, 32], strides = [1, 1]} : vector<8x96xf32> to vector<8x32xf32>
    %193 = arith.mulf %192, %189 : vector<8x32xf32>
    %194 = arith.addf %191, %193 : vector<8x32xf32>
    %195 = vector.extract_strided_slice %187 {offsets = [0, 64], sizes = [8, 32], strides = [1, 1]} : vector<8x96xf32> to vector<8x32xf32>
    %196 = math.tanh %194 : vector<8x32xf32>
    %197 = arith.mulf %195, %196 : vector<8x32xf32>
    %c0_78 = arith.constant 0 : index
    %c6_79 = arith.constant 6 : index
    %c0_80 = arith.constant 0 : index
    %198 = vector.load %arg4[%c0_78, %c6_79, %c0_80] : memref<8x16x32xf32, #tpu.memory_space<vmem>>, vector<8x1x32xf32>
    %199 = vector.shape_cast %198 : vector<8x1x32xf32> to vector<8x32xf32>
    %200 = vector.shape_cast %197 : vector<8x32xf32> to vector<8x1x32xf32>
    tpu.vector_store %arg4[%c0_78, %c6_79, %c0_80], %200 {strides = array<i32>} : memref<8x16x32xf32, #tpu.memory_space<vmem>>, vector<8x1x32xf32>,
    %c0_81 = arith.constant 0 : index
    %c7 = arith.constant 7 : index
    %c0_82 = arith.constant 0 : index
    %201 = vector.load %arg2[%c0_81, %c7, %c0_82] : memref<8x16x128xbf16, #tpu.memory_space<vmem>>, vector<8x1x128xbf16>
    %202 = vector.shape_cast %201 : vector<8x1x128xbf16> to vector<8x128xbf16>
    %203 = arith.extf %202 : vector<8x128xbf16> to vector<8x128xf32>
    %204 = arith.truncf %197 : vector<8x32xf32> to vector<8x32xbf16>
    %c0_83 = arith.constant 0 : index
    %c0_84 = arith.constant 0 : index
    %205 = vector.load %arg3[%c0_83, %c0_84] : memref<32x128xbf16, #tpu.memory_space<vmem>>, vector<32x128xbf16>
    %cst_85 = arith.constant dense<0.000000e+00> : vector<8x128xf32>
    %206 = tpu.matmul %204, %205, %cst_85 {dimension_numbers = #tpu.dot_dimension_numbers<[1], [0], [0], [1], [0, 0, 1, 1], [], []>} : vector<8x32xbf16>, vector<32x128xbf16>, vector<8x128xf32> -> vector<8x128xf32>
    %207 = arith.addf %203, %206 : vector<8x128xf32>
    %208 = vector.extract_strided_slice %207 {offsets = [0, 0], sizes = [8, 96], strides = [1, 1]} : vector<8x128xf32> to vector<8x96xf32>
    %cst_86 = arith.constant 5.000000e-01 : f32
    %209 = vector.broadcast %cst_86 : f32 to vector<8x96xf32>
    %210 = arith.mulf %209, %208 : vector<8x96xf32>
    %211 = math.tanh %210 : vector<8x96xf32>
    %cst_87 = arith.constant 5.000000e-01 : f32
    %212 = vector.broadcast %cst_87 : f32 to vector<8x96xf32>
    %213 = arith.mulf %212, %211 : vector<8x96xf32>
    %cst_88 = arith.constant 5.000000e-01 : f32
    %214 = vector.broadcast %cst_88 : f32 to vector<8x96xf32>
    %215 = arith.addf %213, %214 : vector<8x96xf32>
    %216 = vector.extract_strided_slice %207 {offsets = [0, 96], sizes = [8, 32], strides = [1, 1]} : vector<8x128xf32> to vector<8x32xf32>
    %217 = math.tanh %216 : vector<8x32xf32>
    %218 = vector.extract_strided_slice %215 {offsets = [0, 32], sizes = [8, 32], strides = [1, 1]} : vector<8x96xf32> to vector<8x32xf32>
    %219 = arith.mulf %218, %194 : vector<8x32xf32>
    %220 = vector.extract_strided_slice %215 {offsets = [0, 0], sizes = [8, 32], strides = [1, 1]} : vector<8x96xf32> to vector<8x32xf32>
    %221 = arith.mulf %220, %217 : vector<8x32xf32>
    %222 = arith.addf %219, %221 : vector<8x32xf32>
    %223 = vector.extract_strided_slice %215 {offsets = [0, 64], sizes = [8, 32], strides = [1, 1]} : vector<8x96xf32> to vector<8x32xf32>
    %224 = math.tanh %222 : vector<8x32xf32>
    %225 = arith.mulf %223, %224 : vector<8x32xf32>
    %c0_89 = arith.constant 0 : index
    %c7_90 = arith.constant 7 : index
    %c0_91 = arith.constant 0 : index
    %226 = vector.load %arg4[%c0_89, %c7_90, %c0_91] : memref<8x16x32xf32, #tpu.memory_space<vmem>>, vector<8x1x32xf32>
    %227 = vector.shape_cast %226 : vector<8x1x32xf32> to vector<8x32xf32>
    %228 = vector.shape_cast %225 : vector<8x32xf32> to vector<8x1x32xf32>
    tpu.vector_store %arg4[%c0_89, %c7_90, %c0_91], %228 {strides = array<i32>} : memref<8x16x32xf32, #tpu.memory_space<vmem>>, vector<8x1x32xf32>,
    %c0_i32_92 = arith.constant 0 : i32
    %229 = arith.cmpi eq, %arg1, %c0_i32_92 : i32
    %230 = arith.extui %229 : i1 to i32
    %c0_i32_93 = arith.constant 0 : i32
    %231 = arith.cmpi ne, %230, %c0_i32_93 : i32
    scf.if %231 {
      %c0_186 = arith.constant 0 : index
      %c0_187 = arith.constant 0 : index
      %458 = vector.load %arg5[%c0_186, %c0_187] : memref<8x32xf32, #tpu.memory_space<vmem>>, vector<8x32xf32>
      tpu.vector_store %arg5[%c0_186, %c0_187], %222 {strides = array<i32>} : memref<8x32xf32, #tpu.memory_space<vmem>>, vector<8x32xf32>,
    } else {
    }
    %c0_94 = arith.constant 0 : index
    %c8 = arith.constant 8 : index
    %c0_95 = arith.constant 0 : index
    %232 = vector.load %arg2[%c0_94, %c8, %c0_95] : memref<8x16x128xbf16, #tpu.memory_space<vmem>>, vector<8x1x128xbf16>
    %233 = vector.shape_cast %232 : vector<8x1x128xbf16> to vector<8x128xbf16>
    %234 = arith.extf %233 : vector<8x128xbf16> to vector<8x128xf32>
    %235 = arith.truncf %225 : vector<8x32xf32> to vector<8x32xbf16>
    %c0_96 = arith.constant 0 : index
    %c0_97 = arith.constant 0 : index
    %236 = vector.load %arg3[%c0_96, %c0_97] : memref<32x128xbf16, #tpu.memory_space<vmem>>, vector<32x128xbf16>
    %cst_98 = arith.constant dense<0.000000e+00> : vector<8x128xf32>
    %237 = tpu.matmul %235, %236, %cst_98 {dimension_numbers = #tpu.dot_dimension_numbers<[1], [0], [0], [1], [0, 0, 1, 1], [], []>} : vector<8x32xbf16>, vector<32x128xbf16>, vector<8x128xf32> -> vector<8x128xf32>
    %238 = arith.addf %234, %237 : vector<8x128xf32>
    %239 = vector.extract_strided_slice %238 {offsets = [0, 0], sizes = [8, 96], strides = [1, 1]} : vector<8x128xf32> to vector<8x96xf32>
    %cst_99 = arith.constant 5.000000e-01 : f32
    %240 = vector.broadcast %cst_99 : f32 to vector<8x96xf32>
    %241 = arith.mulf %240, %239 : vector<8x96xf32>
    %242 = math.tanh %241 : vector<8x96xf32>
    %cst_100 = arith.constant 5.000000e-01 : f32
    %243 = vector.broadcast %cst_100 : f32 to vector<8x96xf32>
    %244 = arith.mulf %243, %242 : vector<8x96xf32>
    %cst_101 = arith.constant 5.000000e-01 : f32
    %245 = vector.broadcast %cst_101 : f32 to vector<8x96xf32>
    %246 = arith.addf %244, %245 : vector<8x96xf32>
    %247 = vector.extract_strided_slice %238 {offsets = [0, 96], sizes = [8, 32], strides = [1, 1]} : vector<8x128xf32> to vector<8x32xf32>
    %248 = math.tanh %247 : vector<8x32xf32>
    %249 = vector.extract_strided_slice %246 {offsets = [0, 32], sizes = [8, 32], strides = [1, 1]} : vector<8x96xf32> to vector<8x32xf32>
    %250 = arith.mulf %249, %222 : vector<8x32xf32>
    %251 = vector.extract_strided_slice %246 {offsets = [0, 0], sizes = [8, 32], strides = [1, 1]} : vector<8x96xf32> to vector<8x32xf32>
    %252 = arith.mulf %251, %248 : vector<8x32xf32>
    %253 = arith.addf %250, %252 : vector<8x32xf32>
    %254 = vector.extract_strided_slice %246 {offsets = [0, 64], sizes = [8, 32], strides = [1, 1]} : vector<8x96xf32> to vector<8x32xf32>
    %255 = math.tanh %253 : vector<8x32xf32>
    %256 = arith.mulf %254, %255 : vector<8x32xf32>
    %c0_102 = arith.constant 0 : index
    %c8_103 = arith.constant 8 : index
    %c0_104 = arith.constant 0 : index
    %257 = vector.load %arg4[%c0_102, %c8_103, %c0_104] : memref<8x16x32xf32, #tpu.memory_space<vmem>>, vector<8x1x32xf32>
    %258 = vector.shape_cast %257 : vector<8x1x32xf32> to vector<8x32xf32>
    %259 = vector.shape_cast %256 : vector<8x32xf32> to vector<8x1x32xf32>
    tpu.vector_store %arg4[%c0_102, %c8_103, %c0_104], %259 {strides = array<i32>} : memref<8x16x32xf32, #tpu.memory_space<vmem>>, vector<8x1x32xf32>,
    %c0_105 = arith.constant 0 : index
    %c9 = arith.constant 9 : index
    %c0_106 = arith.constant 0 : index
    %260 = vector.load %arg2[%c0_105, %c9, %c0_106] : memref<8x16x128xbf16, #tpu.memory_space<vmem>>, vector<8x1x128xbf16>
    %261 = vector.shape_cast %260 : vector<8x1x128xbf16> to vector<8x128xbf16>
    %262 = arith.extf %261 : vector<8x128xbf16> to vector<8x128xf32>
    %263 = arith.truncf %256 : vector<8x32xf32> to vector<8x32xbf16>
    %c0_107 = arith.constant 0 : index
    %c0_108 = arith.constant 0 : index
    %264 = vector.load %arg3[%c0_107, %c0_108] : memref<32x128xbf16, #tpu.memory_space<vmem>>, vector<32x128xbf16>
    %cst_109 = arith.constant dense<0.000000e+00> : vector<8x128xf32>
    %265 = tpu.matmul %263, %264, %cst_109 {dimension_numbers = #tpu.dot_dimension_numbers<[1], [0], [0], [1], [0, 0, 1, 1], [], []>} : vector<8x32xbf16>, vector<32x128xbf16>, vector<8x128xf32> -> vector<8x128xf32>
    %266 = arith.addf %262, %265 : vector<8x128xf32>
    %267 = vector.extract_strided_slice %266 {offsets = [0, 0], sizes = [8, 96], strides = [1, 1]} : vector<8x128xf32> to vector<8x96xf32>
    %cst_110 = arith.constant 5.000000e-01 : f32
    %268 = vector.broadcast %cst_110 : f32 to vector<8x96xf32>
    %269 = arith.mulf %268, %267 : vector<8x96xf32>
    %270 = math.tanh %269 : vector<8x96xf32>
    %cst_111 = arith.constant 5.000000e-01 : f32
    %271 = vector.broadcast %cst_111 : f32 to vector<8x96xf32>
    %272 = arith.mulf %271, %270 : vector<8x96xf32>
    %cst_112 = arith.constant 5.000000e-01 : f32
    %273 = vector.broadcast %cst_112 : f32 to vector<8x96xf32>
    %274 = arith.addf %272, %273 : vector<8x96xf32>
    %275 = vector.extract_strided_slice %266 {offsets = [0, 96], sizes = [8, 32], strides = [1, 1]} : vector<8x128xf32> to vector<8x32xf32>
    %276 = math.tanh %275 : vector<8x32xf32>
    %277 = vector.extract_strided_slice %274 {offsets = [0, 32], sizes = [8, 32], strides = [1, 1]} : vector<8x96xf32> to vector<8x32xf32>
    %278 = arith.mulf %277, %253 : vector<8x32xf32>
    %279 = vector.extract_strided_slice %274 {offsets = [0, 0], sizes = [8, 32], strides = [1, 1]} : vector<8x96xf32> to vector<8x32xf32>
    %280 = arith.mulf %279, %276 : vector<8x32xf32>
    %281 = arith.addf %278, %280 : vector<8x32xf32>
    %282 = vector.extract_strided_slice %274 {offsets = [0, 64], sizes = [8, 32], strides = [1, 1]} : vector<8x96xf32> to vector<8x32xf32>
    %283 = math.tanh %281 : vector<8x32xf32>
    %284 = arith.mulf %282, %283 : vector<8x32xf32>
    %c0_113 = arith.constant 0 : index
    %c9_114 = arith.constant 9 : index
    %c0_115 = arith.constant 0 : index
    %285 = vector.load %arg4[%c0_113, %c9_114, %c0_115] : memref<8x16x32xf32, #tpu.memory_space<vmem>>, vector<8x1x32xf32>
    %286 = vector.shape_cast %285 : vector<8x1x32xf32> to vector<8x32xf32>
    %287 = vector.shape_cast %284 : vector<8x32xf32> to vector<8x1x32xf32>
    tpu.vector_store %arg4[%c0_113, %c9_114, %c0_115], %287 {strides = array<i32>} : memref<8x16x32xf32, #tpu.memory_space<vmem>>, vector<8x1x32xf32>,
    %c0_116 = arith.constant 0 : index
    %c10 = arith.constant 10 : index
    %c0_117 = arith.constant 0 : index
    %288 = vector.load %arg2[%c0_116, %c10, %c0_117] : memref<8x16x128xbf16, #tpu.memory_space<vmem>>, vector<8x1x128xbf16>
    %289 = vector.shape_cast %288 : vector<8x1x128xbf16> to vector<8x128xbf16>
    %290 = arith.extf %289 : vector<8x128xbf16> to vector<8x128xf32>
    %291 = arith.truncf %284 : vector<8x32xf32> to vector<8x32xbf16>
    %c0_118 = arith.constant 0 : index
    %c0_119 = arith.constant 0 : index
    %292 = vector.load %arg3[%c0_118, %c0_119] : memref<32x128xbf16, #tpu.memory_space<vmem>>, vector<32x128xbf16>
    %cst_120 = arith.constant dense<0.000000e+00> : vector<8x128xf32>
    %293 = tpu.matmul %291, %292, %cst_120 {dimension_numbers = #tpu.dot_dimension_numbers<[1], [0], [0], [1], [0, 0, 1, 1], [], []>} : vector<8x32xbf16>, vector<32x128xbf16>, vector<8x128xf32> -> vector<8x128xf32>
    %294 = arith.addf %290, %293 : vector<8x128xf32>
    %295 = vector.extract_strided_slice %294 {offsets = [0, 0], sizes = [8, 96], strides = [1, 1]} : vector<8x128xf32> to vector<8x96xf32>
    %cst_121 = arith.constant 5.000000e-01 : f32
    %296 = vector.broadcast %cst_121 : f32 to vector<8x96xf32>
    %297 = arith.mulf %296, %295 : vector<8x96xf32>
    %298 = math.tanh %297 : vector<8x96xf32>
    %cst_122 = arith.constant 5.000000e-01 : f32
    %299 = vector.broadcast %cst_122 : f32 to vector<8x96xf32>
    %300 = arith.mulf %299, %298 : vector<8x96xf32>
    %cst_123 = arith.constant 5.000000e-01 : f32
    %301 = vector.broadcast %cst_123 : f32 to vector<8x96xf32>
    %302 = arith.addf %300, %301 : vector<8x96xf32>
    %303 = vector.extract_strided_slice %294 {offsets = [0, 96], sizes = [8, 32], strides = [1, 1]} : vector<8x128xf32> to vector<8x32xf32>
    %304 = math.tanh %303 : vector<8x32xf32>
    %305 = vector.extract_strided_slice %302 {offsets = [0, 32], sizes = [8, 32], strides = [1, 1]} : vector<8x96xf32> to vector<8x32xf32>
    %306 = arith.mulf %305, %281 : vector<8x32xf32>
    %307 = vector.extract_strided_slice %302 {offsets = [0, 0], sizes = [8, 32], strides = [1, 1]} : vector<8x96xf32> to vector<8x32xf32>
    %308 = arith.mulf %307, %304 : vector<8x32xf32>
    %309 = arith.addf %306, %308 : vector<8x32xf32>
    %310 = vector.extract_strided_slice %302 {offsets = [0, 64], sizes = [8, 32], strides = [1, 1]} : vector<8x96xf32> to vector<8x32xf32>
    %311 = math.tanh %309 : vector<8x32xf32>
    %312 = arith.mulf %310, %311 : vector<8x32xf32>
    %c0_124 = arith.constant 0 : index
    %c10_125 = arith.constant 10 : index
    %c0_126 = arith.constant 0 : index
    %313 = vector.load %arg4[%c0_124, %c10_125, %c0_126] : memref<8x16x32xf32, #tpu.memory_space<vmem>>, vector<8x1x32xf32>
    %314 = vector.shape_cast %313 : vector<8x1x32xf32> to vector<8x32xf32>
    %315 = vector.shape_cast %312 : vector<8x32xf32> to vector<8x1x32xf32>
    tpu.vector_store %arg4[%c0_124, %c10_125, %c0_126], %315 {strides = array<i32>} : memref<8x16x32xf32, #tpu.memory_space<vmem>>, vector<8x1x32xf32>,
    %c0_127 = arith.constant 0 : index
    %c11 = arith.constant 11 : index
    %c0_128 = arith.constant 0 : index
    %316 = vector.load %arg2[%c0_127, %c11, %c0_128] : memref<8x16x128xbf16, #tpu.memory_space<vmem>>, vector<8x1x128xbf16>
    %317 = vector.shape_cast %316 : vector<8x1x128xbf16> to vector<8x128xbf16>
    %318 = arith.extf %317 : vector<8x128xbf16> to vector<8x128xf32>
    %319 = arith.truncf %312 : vector<8x32xf32> to vector<8x32xbf16>
    %c0_129 = arith.constant 0 : index
    %c0_130 = arith.constant 0 : index
    %320 = vector.load %arg3[%c0_129, %c0_130] : memref<32x128xbf16, #tpu.memory_space<vmem>>, vector<32x128xbf16>
    %cst_131 = arith.constant dense<0.000000e+00> : vector<8x128xf32>
    %321 = tpu.matmul %319, %320, %cst_131 {dimension_numbers = #tpu.dot_dimension_numbers<[1], [0], [0], [1], [0, 0, 1, 1], [], []>} : vector<8x32xbf16>, vector<32x128xbf16>, vector<8x128xf32> -> vector<8x128xf32>
    %322 = arith.addf %318, %321 : vector<8x128xf32>
    %323 = vector.extract_strided_slice %322 {offsets = [0, 0], sizes = [8, 96], strides = [1, 1]} : vector<8x128xf32> to vector<8x96xf32>
    %cst_132 = arith.constant 5.000000e-01 : f32
    %324 = vector.broadcast %cst_132 : f32 to vector<8x96xf32>
    %325 = arith.mulf %324, %323 : vector<8x96xf32>
    %326 = math.tanh %325 : vector<8x96xf32>
    %cst_133 = arith.constant 5.000000e-01 : f32
    %327 = vector.broadcast %cst_133 : f32 to vector<8x96xf32>
    %328 = arith.mulf %327, %326 : vector<8x96xf32>
    %cst_134 = arith.constant 5.000000e-01 : f32
    %329 = vector.broadcast %cst_134 : f32 to vector<8x96xf32>
    %330 = arith.addf %328, %329 : vector<8x96xf32>
    %331 = vector.extract_strided_slice %322 {offsets = [0, 96], sizes = [8, 32], strides = [1, 1]} : vector<8x128xf32> to vector<8x32xf32>
    %332 = math.tanh %331 : vector<8x32xf32>
    %333 = vector.extract_strided_slice %330 {offsets = [0, 32], sizes = [8, 32], strides = [1, 1]} : vector<8x96xf32> to vector<8x32xf32>
    %334 = arith.mulf %333, %309 : vector<8x32xf32>
    %335 = vector.extract_strided_slice %330 {offsets = [0, 0], sizes = [8, 32], strides = [1, 1]} : vector<8x96xf32> to vector<8x32xf32>
    %336 = arith.mulf %335, %332 : vector<8x32xf32>
    %337 = arith.addf %334, %336 : vector<8x32xf32>
    %338 = vector.extract_strided_slice %330 {offsets = [0, 64], sizes = [8, 32], strides = [1, 1]} : vector<8x96xf32> to vector<8x32xf32>
    %339 = math.tanh %337 : vector<8x32xf32>
    %340 = arith.mulf %338, %339 : vector<8x32xf32>
    %c0_135 = arith.constant 0 : index
    %c11_136 = arith.constant 11 : index
    %c0_137 = arith.constant 0 : index
    %341 = vector.load %arg4[%c0_135, %c11_136, %c0_137] : memref<8x16x32xf32, #tpu.memory_space<vmem>>, vector<8x1x32xf32>
    %342 = vector.shape_cast %341 : vector<8x1x32xf32> to vector<8x32xf32>
    %343 = vector.shape_cast %340 : vector<8x32xf32> to vector<8x1x32xf32>
    tpu.vector_store %arg4[%c0_135, %c11_136, %c0_137], %343 {strides = array<i32>} : memref<8x16x32xf32, #tpu.memory_space<vmem>>, vector<8x1x32xf32>,
    %c0_138 = arith.constant 0 : index
    %c12 = arith.constant 12 : index
    %c0_139 = arith.constant 0 : index
    %344 = vector.load %arg2[%c0_138, %c12, %c0_139] : memref<8x16x128xbf16, #tpu.memory_space<vmem>>, vector<8x1x128xbf16>
    %345 = vector.shape_cast %344 : vector<8x1x128xbf16> to vector<8x128xbf16>
    %346 = arith.extf %345 : vector<8x128xbf16> to vector<8x128xf32>
    %347 = arith.truncf %340 : vector<8x32xf32> to vector<8x32xbf16>
    %c0_140 = arith.constant 0 : index
    %c0_141 = arith.constant 0 : index
    %348 = vector.load %arg3[%c0_140, %c0_141] : memref<32x128xbf16, #tpu.memory_space<vmem>>, vector<32x128xbf16>
    %cst_142 = arith.constant dense<0.000000e+00> : vector<8x128xf32>
    %349 = tpu.matmul %347, %348, %cst_142 {dimension_numbers = #tpu.dot_dimension_numbers<[1], [0], [0], [1], [0, 0, 1, 1], [], []>} : vector<8x32xbf16>, vector<32x128xbf16>, vector<8x128xf32> -> vector<8x128xf32>
    %350 = arith.addf %346, %349 : vector<8x128xf32>
    %351 = vector.extract_strided_slice %350 {offsets = [0, 0], sizes = [8, 96], strides = [1, 1]} : vector<8x128xf32> to vector<8x96xf32>
    %cst_143 = arith.constant 5.000000e-01 : f32
    %352 = vector.broadcast %cst_143 : f32 to vector<8x96xf32>
    %353 = arith.mulf %352, %351 : vector<8x96xf32>
    %354 = math.tanh %353 : vector<8x96xf32>
    %cst_144 = arith.constant 5.000000e-01 : f32
    %355 = vector.broadcast %cst_144 : f32 to vector<8x96xf32>
    %356 = arith.mulf %355, %354 : vector<8x96xf32>
    %cst_145 = arith.constant 5.000000e-01 : f32
    %357 = vector.broadcast %cst_145 : f32 to vector<8x96xf32>
    %358 = arith.addf %356, %357 : vector<8x96xf32>
    %359 = vector.extract_strided_slice %350 {offsets = [0, 96], sizes = [8, 32], strides = [1, 1]} : vector<8x128xf32> to vector<8x32xf32>
    %360 = math.tanh %359 : vector<8x32xf32>
    %361 = vector.extract_strided_slice %358 {offsets = [0, 32], sizes = [8, 32], strides = [1, 1]} : vector<8x96xf32> to vector<8x32xf32>
    %362 = arith.mulf %361, %337 : vector<8x32xf32>
    %363 = vector.extract_strided_slice %358 {offsets = [0, 0], sizes = [8, 32], strides = [1, 1]} : vector<8x96xf32> to vector<8x32xf32>
    %364 = arith.mulf %363, %360 : vector<8x32xf32>
    %365 = arith.addf %362, %364 : vector<8x32xf32>
    %366 = vector.extract_strided_slice %358 {offsets = [0, 64], sizes = [8, 32], strides = [1, 1]} : vector<8x96xf32> to vector<8x32xf32>
    %367 = math.tanh %365 : vector<8x32xf32>
    %368 = arith.mulf %366, %367 : vector<8x32xf32>
    %c0_146 = arith.constant 0 : index
    %c12_147 = arith.constant 12 : index
    %c0_148 = arith.constant 0 : index
    %369 = vector.load %arg4[%c0_146, %c12_147, %c0_148] : memref<8x16x32xf32, #tpu.memory_space<vmem>>, vector<8x1x32xf32>
    %370 = vector.shape_cast %369 : vector<8x1x32xf32> to vector<8x32xf32>
    %371 = vector.shape_cast %368 : vector<8x32xf32> to vector<8x1x32xf32>
    tpu.vector_store %arg4[%c0_146, %c12_147, %c0_148], %371 {strides = array<i32>} : memref<8x16x32xf32, #tpu.memory_space<vmem>>, vector<8x1x32xf32>,
    %c0_149 = arith.constant 0 : index
    %c13 = arith.constant 13 : index
    %c0_150 = arith.constant 0 : index
    %372 = vector.load %arg2[%c0_149, %c13, %c0_150] : memref<8x16x128xbf16, #tpu.memory_space<vmem>>, vector<8x1x128xbf16>
    %373 = vector.shape_cast %372 : vector<8x1x128xbf16> to vector<8x128xbf16>
    %374 = arith.extf %373 : vector<8x128xbf16> to vector<8x128xf32>
    %375 = arith.truncf %368 : vector<8x32xf32> to vector<8x32xbf16>
    %c0_151 = arith.constant 0 : index
    %c0_152 = arith.constant 0 : index
    %376 = vector.load %arg3[%c0_151, %c0_152] : memref<32x128xbf16, #tpu.memory_space<vmem>>, vector<32x128xbf16>
    %cst_153 = arith.constant dense<0.000000e+00> : vector<8x128xf32>
    %377 = tpu.matmul %375, %376, %cst_153 {dimension_numbers = #tpu.dot_dimension_numbers<[1], [0], [0], [1], [0, 0, 1, 1], [], []>} : vector<8x32xbf16>, vector<32x128xbf16>, vector<8x128xf32> -> vector<8x128xf32>
    %378 = arith.addf %374, %377 : vector<8x128xf32>
    %379 = vector.extract_strided_slice %378 {offsets = [0, 0], sizes = [8, 96], strides = [1, 1]} : vector<8x128xf32> to vector<8x96xf32>
    %cst_154 = arith.constant 5.000000e-01 : f32
    %380 = vector.broadcast %cst_154 : f32 to vector<8x96xf32>
    %381 = arith.mulf %380, %379 : vector<8x96xf32>
    %382 = math.tanh %381 : vector<8x96xf32>
    %cst_155 = arith.constant 5.000000e-01 : f32
    %383 = vector.broadcast %cst_155 : f32 to vector<8x96xf32>
    %384 = arith.mulf %383, %382 : vector<8x96xf32>
    %cst_156 = arith.constant 5.000000e-01 : f32
    %385 = vector.broadcast %cst_156 : f32 to vector<8x96xf32>
    %386 = arith.addf %384, %385 : vector<8x96xf32>
    %387 = vector.extract_strided_slice %378 {offsets = [0, 96], sizes = [8, 32], strides = [1, 1]} : vector<8x128xf32> to vector<8x32xf32>
    %388 = math.tanh %387 : vector<8x32xf32>
    %389 = vector.extract_strided_slice %386 {offsets = [0, 32], sizes = [8, 32], strides = [1, 1]} : vector<8x96xf32> to vector<8x32xf32>
    %390 = arith.mulf %389, %365 : vector<8x32xf32>
    %391 = vector.extract_strided_slice %386 {offsets = [0, 0], sizes = [8, 32], strides = [1, 1]} : vector<8x96xf32> to vector<8x32xf32>
    %392 = arith.mulf %391, %388 : vector<8x32xf32>
    %393 = arith.addf %390, %392 : vector<8x32xf32>
    %394 = vector.extract_strided_slice %386 {offsets = [0, 64], sizes = [8, 32], strides = [1, 1]} : vector<8x96xf32> to vector<8x32xf32>
    %395 = math.tanh %393 : vector<8x32xf32>
    %396 = arith.mulf %394, %395 : vector<8x32xf32>
    %c0_157 = arith.constant 0 : index
    %c13_158 = arith.constant 13 : index
    %c0_159 = arith.constant 0 : index
    %397 = vector.load %arg4[%c0_157, %c13_158, %c0_159] : memref<8x16x32xf32, #tpu.memory_space<vmem>>, vector<8x1x32xf32>
    %398 = vector.shape_cast %397 : vector<8x1x32xf32> to vector<8x32xf32>
    %399 = vector.shape_cast %396 : vector<8x32xf32> to vector<8x1x32xf32>
    tpu.vector_store %arg4[%c0_157, %c13_158, %c0_159], %399 {strides = array<i32>} : memref<8x16x32xf32, #tpu.memory_space<vmem>>, vector<8x1x32xf32>,
    %c0_160 = arith.constant 0 : index
    %c14 = arith.constant 14 : index
    %c0_161 = arith.constant 0 : index
    %400 = vector.load %arg2[%c0_160, %c14, %c0_161] : memref<8x16x128xbf16, #tpu.memory_space<vmem>>, vector<8x1x128xbf16>
    %401 = vector.shape_cast %400 : vector<8x1x128xbf16> to vector<8x128xbf16>
    %402 = arith.extf %401 : vector<8x128xbf16> to vector<8x128xf32>
    %403 = arith.truncf %396 : vector<8x32xf32> to vector<8x32xbf16>
    %c0_162 = arith.constant 0 : index
    %c0_163 = arith.constant 0 : index
    %404 = vector.load %arg3[%c0_162, %c0_163] : memref<32x128xbf16, #tpu.memory_space<vmem>>, vector<32x128xbf16>
    %cst_164 = arith.constant dense<0.000000e+00> : vector<8x128xf32>
    %405 = tpu.matmul %403, %404, %cst_164 {dimension_numbers = #tpu.dot_dimension_numbers<[1], [0], [0], [1], [0, 0, 1, 1], [], []>} : vector<8x32xbf16>, vector<32x128xbf16>, vector<8x128xf32> -> vector<8x128xf32>
    %406 = arith.addf %402, %405 : vector<8x128xf32>
    %407 = vector.extract_strided_slice %406 {offsets = [0, 0], sizes = [8, 96], strides = [1, 1]} : vector<8x128xf32> to vector<8x96xf32>
    %cst_165 = arith.constant 5.000000e-01 : f32
    %408 = vector.broadcast %cst_165 : f32 to vector<8x96xf32>
    %409 = arith.mulf %408, %407 : vector<8x96xf32>
    %410 = math.tanh %409 : vector<8x96xf32>
    %cst_166 = arith.constant 5.000000e-01 : f32
    %411 = vector.broadcast %cst_166 : f32 to vector<8x96xf32>
    %412 = arith.mulf %411, %410 : vector<8x96xf32>
    %cst_167 = arith.constant 5.000000e-01 : f32
    %413 = vector.broadcast %cst_167 : f32 to vector<8x96xf32>
    %414 = arith.addf %412, %413 : vector<8x96xf32>
    %415 = vector.extract_strided_slice %406 {offsets = [0, 96], sizes = [8, 32], strides = [1, 1]} : vector<8x128xf32> to vector<8x32xf32>
    %416 = math.tanh %415 : vector<8x32xf32>
    %417 = vector.extract_strided_slice %414 {offsets = [0, 32], sizes = [8, 32], strides = [1, 1]} : vector<8x96xf32> to vector<8x32xf32>
    %418 = arith.mulf %417, %393 : vector<8x32xf32>
    %419 = vector.extract_strided_slice %414 {offsets = [0, 0], sizes = [8, 32], strides = [1, 1]} : vector<8x96xf32> to vector<8x32xf32>
    %420 = arith.mulf %419, %416 : vector<8x32xf32>
    %421 = arith.addf %418, %420 : vector<8x32xf32>
    %422 = vector.extract_strided_slice %414 {offsets = [0, 64], sizes = [8, 32], strides = [1, 1]} : vector<8x96xf32> to vector<8x32xf32>
    %423 = math.tanh %421 : vector<8x32xf32>
    %424 = arith.mulf %422, %423 : vector<8x32xf32>
    %c0_168 = arith.constant 0 : index
    %c14_169 = arith.constant 14 : index
    %c0_170 = arith.constant 0 : index
    %425 = vector.load %arg4[%c0_168, %c14_169, %c0_170] : memref<8x16x32xf32, #tpu.memory_space<vmem>>, vector<8x1x32xf32>
    %426 = vector.shape_cast %425 : vector<8x1x32xf32> to vector<8x32xf32>
    %427 = vector.shape_cast %424 : vector<8x32xf32> to vector<8x1x32xf32>
    tpu.vector_store %arg4[%c0_168, %c14_169, %c0_170], %427 {strides = array<i32>} : memref<8x16x32xf32, #tpu.memory_space<vmem>>, vector<8x1x32xf32>,
    %c0_171 = arith.constant 0 : index
    %c15 = arith.constant 15 : index
    %c0_172 = arith.constant 0 : index
    %428 = vector.load %arg2[%c0_171, %c15, %c0_172] : memref<8x16x128xbf16, #tpu.memory_space<vmem>>, vector<8x1x128xbf16>
    %429 = vector.shape_cast %428 : vector<8x1x128xbf16> to vector<8x128xbf16>
    %430 = arith.extf %429 : vector<8x128xbf16> to vector<8x128xf32>
    %431 = arith.truncf %424 : vector<8x32xf32> to vector<8x32xbf16>
    %c0_173 = arith.constant 0 : index
    %c0_174 = arith.constant 0 : index
    %432 = vector.load %arg3[%c0_173, %c0_174] : memref<32x128xbf16, #tpu.memory_space<vmem>>, vector<32x128xbf16>
    %cst_175 = arith.constant dense<0.000000e+00> : vector<8x128xf32>
    %433 = tpu.matmul %431, %432, %cst_175 {dimension_numbers = #tpu.dot_dimension_numbers<[1], [0], [0], [1], [0, 0, 1, 1], [], []>} : vector<8x32xbf16>, vector<32x128xbf16>, vector<8x128xf32> -> vector<8x128xf32>
    %434 = arith.addf %430, %433 : vector<8x128xf32>
    %435 = vector.extract_strided_slice %434 {offsets = [0, 0], sizes = [8, 96], strides = [1, 1]} : vector<8x128xf32> to vector<8x96xf32>
    %cst_176 = arith.constant 5.000000e-01 : f32
    %436 = vector.broadcast %cst_176 : f32 to vector<8x96xf32>
    %437 = arith.mulf %436, %435 : vector<8x96xf32>
    %438 = math.tanh %437 : vector<8x96xf32>
    %cst_177 = arith.constant 5.000000e-01 : f32
    %439 = vector.broadcast %cst_177 : f32 to vector<8x96xf32>
    %440 = arith.mulf %439, %438 : vector<8x96xf32>
    %cst_178 = arith.constant 5.000000e-01 : f32
    %441 = vector.broadcast %cst_178 : f32 to vector<8x96xf32>
    %442 = arith.addf %440, %441 : vector<8x96xf32>
    %443 = vector.extract_strided_slice %434 {offsets = [0, 96], sizes = [8, 32], strides = [1, 1]} : vector<8x128xf32> to vector<8x32xf32>
    %444 = math.tanh %443 : vector<8x32xf32>
    %445 = vector.extract_strided_slice %442 {offsets = [0, 32], sizes = [8, 32], strides = [1, 1]} : vector<8x96xf32> to vector<8x32xf32>
    %446 = arith.mulf %445, %421 : vector<8x32xf32>
    %447 = vector.extract_strided_slice %442 {offsets = [0, 0], sizes = [8, 32], strides = [1, 1]} : vector<8x96xf32> to vector<8x32xf32>
    %448 = arith.mulf %447, %444 : vector<8x32xf32>
    %449 = arith.addf %446, %448 : vector<8x32xf32>
    %450 = vector.extract_strided_slice %442 {offsets = [0, 64], sizes = [8, 32], strides = [1, 1]} : vector<8x96xf32> to vector<8x32xf32>
    %451 = math.tanh %449 : vector<8x32xf32>
    %452 = arith.mulf %450, %451 : vector<8x32xf32>
    %c0_179 = arith.constant 0 : index
    %c15_180 = arith.constant 15 : index
    %c0_181 = arith.constant 0 : index
    %453 = vector.load %arg4[%c0_179, %c15_180, %c0_181] : memref<8x16x32xf32, #tpu.memory_space<vmem>>, vector<8x1x32xf32>
    %454 = vector.shape_cast %453 : vector<8x1x32xf32> to vector<8x32xf32>
    %455 = vector.shape_cast %452 : vector<8x32xf32> to vector<8x1x32xf32>
    tpu.vector_store %arg4[%c0_179, %c15_180, %c0_181], %455 {strides = array<i32>} : memref<8x16x32xf32, #tpu.memory_space<vmem>>, vector<8x1x32xf32>,
    %c0_182 = arith.constant 0 : index
    %c0_183 = arith.constant 0 : index
    %456 = vector.load %arg6[%c0_182, %c0_183] : memref<8x32xf32, #tpu.memory_space<vmem>>, vector<8x32xf32>
    tpu.vector_store %arg6[%c0_182, %c0_183], %452 {strides = array<i32>} : memref<8x32xf32, #tpu.memory_space<vmem>>, vector<8x32xf32>,
    %c0_184 = arith.constant 0 : index
    %c0_185 = arith.constant 0 : index
    %457 = vector.load %arg7[%c0_184, %c0_185] : memref<8x32xf32, #tpu.memory_space<vmem>>, vector<8x32xf32>
    tpu.vector_store %arg7[%c0_184, %c0_185], %449 {strides = array<i32>} : memref<8x32xf32, #tpu.memory_space<vmem>>, vector<8x32xf32>,
    return
  }
  func.func @transform_0(%arg0: i32, %arg1: i32) -> (i32, i32, i32) {
    %c0_i32 = arith.constant 0 : i32
    %c0_i32_0 = arith.constant 0 : i32
    return %arg0, %arg1, %c0_i32 : i32, i32, i32
  }
  func.func @transform_1(%arg0: i32, %arg1: i32) -> (i32, i32) {
    %c0_i32 = arith.constant 0 : i32
    %c0_i32_0 = arith.constant 0 : i32
    %c0_i32_1 = arith.constant 0 : i32
    return %c0_i32, %c0_i32_0 : i32, i32
  }
  func.func @transform_2(%arg0: i32, %arg1: i32) -> (i32, i32, i32) {
    %c0_i32 = arith.constant 0 : i32
    %c0_i32_0 = arith.constant 0 : i32
    return %arg0, %arg1, %c0_i32 : i32, i32, i32
  }
  func.func @transform_3(%arg0: i32, %arg1: i32) -> (i32, i32) {
    %c0_i32 = arith.constant 0 : i32
    %c0_i32_0 = arith.constant 0 : i32
    return %arg0, %c0_i32 : i32, i32
  }
}

</mosaic_0001>

<llo_original>
// kernel: tpu_custom_call.1
$region0: #{tpu_custom_call.1}
  #allocation0 [shape = 'u32[]', space=smem, size = 0x4, offset = 0x4, fixed_abs, tag = 'smem constant byte address 0x4 - core index']
  #allocation1 [shape = 'u32[144,128]{1,0:T(1,128)}', space=vmem, size = 0x12000, scoped, tag = 'internal scratch']
  #allocation2 [shape = 'f32[8,32]{1,0:T(8,128)}', space=vmem, size = 0x1000, scoped, tag = 'scratch operand']
  #allocation3 [shape = 'f32[8,32]{1,0:T(8,128)}', space=vmem, size = 0x1000, scoped, tag = 'scratch operand']
  %s0 = inlined_call_operand.hbm [shape: bf16[8,16,128], index: 0, kind: input, shape index: {}]
  %s1 = inlined_call_operand.hbm [shape: bf16[32,128], index: 1, kind: input, shape index: {}]
  %s2 = inlined_call_operand.hbm [shape: f32[8,16,32], index: 2, kind: output, shape index: {0}]
  %s3 = inlined_call_operand.hbm [shape: f32[8,32], index: 3, kind: output, shape index: {1}]
  %4 = xla_tuple %s2, %s3
  %s5 = sld [smem:[#allocation0]]
  $region42: #{tpu_custom_call.1} parent=0
    _
  %s7 = ssub.s32 1, %s5
  %s8 = scalar_select 0, %s7, %s5
  $region1: #{tpu_custom_call.1} parent=0
    #allocation4 [shape = 'u8[32768]{0}', space=vmem, size = 0x8000, scoped, tag = 'input window, operand 0, single buffered']
    #allocation5 [shape = 's32[1]{0}', space=sflag, size = 0x4, scoped, tag = 'scoped memory for tpu_custom_call.1']
    #allocation6 [shape = 's32[1]{0}', space=sflag, size = 0x4, scoped, tag = 'scoped memory for tpu_custom_call.1']
    #allocation7 [shape = 'u8[8192]{0}', space=vmem, size = 0x2000, scoped, tag = 'input window, operand 1, single buffered']
    #allocation8 [shape = 's32[1]{0}', space=sflag, size = 0x4, scoped, tag = 'scoped memory for tpu_custom_call.1']
    #allocation9 [shape = 'u8[65536]{0}', space=vmem, size = 0x10000, scoped, tag = 'output window, operand 0, single buffered']
    #allocation10 [shape = 'u8[4096]{0}', space=vmem, size = 0x1000, scoped, tag = 'output window, operand 1, single buffered']
    #allocation11 [shape = 's32[1]{0}', space=sflag, size = 0x4, scoped, tag = 'scoped memory for tpu_custom_call.1']
    %9 = vsyncpa [#allocation5], 0
    %10 = vsyncpa [#allocation8], 0
    %11 = vsyncpa [#allocation6], 0
    %12 = vsyncpa [#allocation11], 0
    // Predicated region
    $region2: #{tpu_custom_call.1} parent=1 // pred_check
      _
    $region3: #{tpu_custom_call.1} parent=1 // pred_check_branch
      %14 = sbr.rel (0) target = $region5
    $region4: #{tpu_custom_call.1} parent=1 // pred_region
      %s16 = ssub.s32 1024, 1024
      %17 = vsyncadd [#allocation5], %s16
      %s18 = sshll.u32 [#allocation4], 4
      %s19 = int_to_ptr.vmem [resolvable:$true] %s18
      %24 = dma.hbm_to_vmem [thread:$0]  %s0, 1024, %s19, [#allocation5], 64, 64, 4
    $region5: #{tpu_custom_call.1} parent=1 // pred_fallthru
      _
    // Predicated region
    $region6: #{tpu_custom_call.1} parent=1 // pred_check
      _
    $region7: #{tpu_custom_call.1} parent=1 // pred_check_branch
      %26 = sbr.rel (0) target = $region9
    $region8: #{tpu_custom_call.1} parent=1 // pred_region
      %s28 = ssub.s32 256, 256
      %29 = vsyncadd [#allocation8], %s28
      %s30 = sshll.u32 [#allocation7], 4
      %s31 = int_to_ptr.vmem [resolvable:$true] %s30
      %36 = dma.hbm_to_vmem [thread:$0]  %s1, 256, %s31, [#allocation8], 64, 64, 4
    $region9: #{tpu_custom_call.1} parent=1 // pred_fallthru
      _
    // Predicated region
    $region10: #{tpu_custom_call.1} parent=1 // pred_check
      _
    $region11: #{tpu_custom_call.1} parent=1 // pred_check_branch
      %38 = sbr.rel (0) target = $region13
    $region12: #{tpu_custom_call.1} parent=1 // pred_region
      %39 = dma.done [#allocation5], 1024
    $region13: #{tpu_custom_call.1} parent=1 // pred_fallthru
      _
    // Predicated region
    $region14: #{tpu_custom_call.1} parent=1 // pred_check
      _
    $region15: #{tpu_custom_call.1} parent=1 // pred_check_branch
      %41 = sbr.rel (0) target = $region17
    $region16: #{tpu_custom_call.1} parent=1 // pred_region
      %42 = dma.done [#allocation8], 256
    $region17: #{tpu_custom_call.1} parent=1 // pred_fallthru
      _
    %p44 = scmp.eq.s32.totalorder 0, 0
    // Predicated region
    $region18: #{tpu_custom_call.1} parent=1 // pred_check
      %p45 = pneg %p44
    $region19: #{tpu_custom_call.1} parent=1 // pred_check_branch
      %47 = sbr.rel (%p45) target = $region21
    $region20: #{tpu_custom_call.1} parent=1 // pred_region
      %vm48 = vcmask 261120
      %49 = vst.msk [vmem:[#allocation2] sm:$0xff] %vm48, 0.0
      %50 = vst.msk [vmem:[#allocation3] sm:$0xff] %vm48, 0.0
    $region21: #{tpu_custom_call.1} parent=1 // pred_fallthru
      _
    %v51 = vld [vmem:[#allocation2] sm:$0xff]
    %v52 = vld [vmem:[#allocation3] sm:$0xff]
    %v53 = vld [vmem:[#allocation4] sm:$0x1]
    %v54 = vld [vmem:[#allocation4 + $0x8] sm:$0x1]
    %v55 = vld [vmem:[#allocation4 + $0x10] sm:$0x1]
    %v56 = vld [vmem:[#allocation4 + $0x18] sm:$0x1]
    %v57 = vld [vmem:[#allocation4 + $0x20] sm:$0x1]
    %v58 = vld [vmem:[#allocation4 + $0x28] sm:$0x1]
    %v59 = vld [vmem:[#allocation4 + $0x30] sm:$0x1]
    %v60 = vld [vmem:[#allocation4 + $0x38] sm:$0x1]
    %v61 = vunpack.c.l.bf16 %v53
    %v62 = vunpack.c.l.bf16 %v54
    %v63 = vunpack.c.l.bf16 %v55
    %v64 = vunpack.c.l.bf16 %v56
    %v65 = vunpack.c.l.bf16 %v57
    %v66 = vunpack.c.l.bf16 %v58
    %v67 = vunpack.c.l.bf16 %v59
    %v68 = vunpack.c.l.bf16 %v60
    %v69 = vpack.c.bf16 %v51, %v51
    %v70 = vld [vmem:[#allocation7] sm:$0xf]
    %v71 = vld [vmem:[#allocation7 + $0x4] sm:$0xf]
    %v72 = vld [vmem:[#allocation7 + $0x8] sm:$0xf]
    %v73 = vld [vmem:[#allocation7 + $0xc] sm:$0xf]
    %v78 = vunpack.c.l.b16 %v70
    %v79 = vunpack.c.l.b16 %v71
    %v80 = vunpack.c.l.b16 %v72
    %v81 = vunpack.c.l.b16 %v73
    %v82 = vpack.c.b16 %v79, %v78
    %v83 = vpack.c.b16 %v81, %v80
    %vm86 = vcmask 261120
    %v88 = vsel %vm86, %v69, 0
    %90 = vmatprep.subr.bf16.mxu0 0
    %91 = vmatpush1.bf16.msra.mxu0 %v82
    %92 = vmatprep.subr.bf16.mxu0 0
    %93 = vmatpush1.bf16.msra.mxu0 %v83
    %94 = vmatprep.subr.bf16.mxu0 0
    %95 = vmatpush1.bf16.msra.mxu0 0
    %96 = vmatprep.subr.bf16.mxu0 0
    %97 = vmatpush1.bf16.msra.mxu0 0
    %98 = vmatprep.subr.bf16.mxu0 0
    %99 = vmatpush1.bf16.msra.mxu0 0
    %100 = vmatprep.subr.bf16.mxu0 0
    %101 = vmatpush1.bf16.msra.mxu0 0
    %102 = vmatprep.subr.bf16.mxu0 0
    %103 = vmatpush1.bf16.msra.mxu0 0
    %104 = vmatprep.subr.bf16.mxu0 0
    %105 = vmatpush1.bf16.msra.mxu0 0
    %106 = vmatprep.subr.bf16.mxu0 0
    %107 = vmatpush1.bf16.msra.mxu0 0
    %108 = vmatprep.subr.bf16.mxu0 0
    %109 = vmatpush1.bf16.msra.mxu0 0
    %110 = vmatprep.subr.bf16.mxu0 0
    %111 = vmatpush1.bf16.msra.mxu0 0
    %112 = vmatprep.subr.bf16.mxu0 0
    %113 = vmatpush1.bf16.msra.mxu0 0
    %114 = vmatprep.subr.bf16.mxu0 0
    %115 = vmatpush1.bf16.msra.mxu0 0
    %116 = vmatprep.subr.bf16.mxu0 0
    %117 = vmatpush1.bf16.msra.mxu0 0
    %118 = vmatprep.subr.bf16.mxu0 0
    %119 = vmatpush1.bf16.msra.mxu0 0
    %120 = vmatprep.subr.bf16.mxu0 0
    %121 = vmatpush1.bf16.msra.mxu0 0
    %122 = vmatprep.mubr.bf16.mxu0 0
    %123 = vmatmul.mubr.bf16.gmra.mrb[0].mxu0 %v88
    %v124 = vpop.f32.mrb[0].mxu0
    %v125 = vadd.f32 0.0, %v124
    %v126 = vpop.f32.mrb[0].mxu0
    %v127 = vpop.f32.mrb[0].mxu0
    %v128 = vpop.f32.mrb[0].mxu0
    %129 = vdwg.mxu0
    %v131 = vrot.slane %v125, 1
    %v132 = vrot.slane %v125, 2
    %v133 = vrot.slane %v125, 3
    %v134 = vrot.slane %v125, 4
    %v135 = vrot.slane %v125, 5
    %v136 = vrot.slane %v125, 6
    %v137 = vrot.slane %v125, 7
    %v146 = vadd.f32 %v61, %v125
    %v147 = vadd.f32 %v62, %v131
    %v148 = vadd.f32 %v63, %v132
    %v149 = vadd.f32 %v64, %v133
    %v150 = vadd.f32 %v65, %v134
    %v151 = vadd.f32 %v66, %v135
    %v152 = vadd.f32 %v67, %v136
    %v153 = vadd.f32 %v68, %v137
    %v154 = vmul.f32 %v146, 0.5
    %v155 = vmul.f32 %v147, 0.5
    %v156 = vmul.f32 %v148, 0.5
    %v157 = vmul.f32 %v149, 0.5
    %v158 = vmul.f32 %v150, 0.5
    %v159 = vmul.f32 %v151, 0.5
    %v160 = vmul.f32 %v152, 0.5
    %v161 = vmul.f32 %v153, 0.5
    %v162 = vtanh.pop %v154
    %v163 = vtanh.pop %v155
    %v164 = vtanh.pop %v156
    %v165 = vtanh.pop %v157
    %v166 = vtanh.pop %v158
    %v167 = vtanh.pop %v159
    %v168 = vtanh.pop %v160
    %v169 = vtanh.pop %v161
    %v170 = vmul.f32 %v162, 0.5
    %v171 = vmul.f32 %v163, 0.5
    %v172 = vmul.f32 %v164, 0.5
    %v173 = vmul.f32 %v165, 0.5
    %v174 = vmul.f32 %v166, 0.5
    %v175 = vmul.f32 %v167, 0.5
    %v176 = vmul.f32 %v168, 0.5
    %v177 = vmul.f32 %v169, 0.5
    %v178 = vadd.f32 %v170, 0.5
    %v179 = vadd.f32 %v171, 0.5
    %v180 = vadd.f32 %v172, 0.5
    %v181 = vadd.f32 %v173, 0.5
    %v182 = vadd.f32 %v174, 0.5
    %v183 = vadd.f32 %v175, 0.5
    %v184 = vadd.f32 %v176, 0.5
    %v185 = vadd.f32 %v177, 0.5
    %v186 = vtanh.pop %v146
    %v187 = vtanh.pop %v147
    %v188 = vtanh.pop %v148
    %v189 = vtanh.pop %v149
    %v190 = vtanh.pop %v150
    %v191 = vtanh.pop %v151
    %v192 = vtanh.pop %v152
    %v193 = vtanh.pop %v153
    %v195 = vrot.slane %v52, 1
    %v196 = vrot.slane %v52, 2
    %v197 = vrot.slane %v52, 3
    %v198 = vrot.slane %v52, 4
    %v199 = vrot.slane %v52, 5
    %v200 = vrot.slane %v52, 6
    %v201 = vrot.slane %v52, 7
    %202 = vrot.lane.b32.xlu0 %v52, 32
    %v203 = vpop.permute.xlu0 %202
    %204 = vrot.lane.b32.xlu0 %v195, 32
    %v205 = vpop.permute.xlu0 %204
    %206 = vrot.lane.b32.xlu0 %v196, 32
    %v207 = vpop.permute.xlu0 %206
    %208 = vrot.lane.b32.xlu0 %v197, 32
    %v209 = vpop.permute.xlu0 %208
    %210 = vrot.lane.b32.xlu0 %v198, 32
    %v211 = vpop.permute.xlu0 %210
    %212 = vrot.lane.b32.xlu0 %v199, 32
    %v213 = vpop.permute.xlu0 %212
    %214 = vrot.lane.b32.xlu0 %v200, 32
    %v215 = vpop.permute.xlu0 %214
    %216 = vrot.lane.b32.xlu0 %v201, 32
    %v217 = vpop.permute.xlu0 %216
    %v226 = vmul.f32 %v178, %v203
    %v227 = vmul.f32 %v179, %v205
    %v228 = vmul.f32 %v180, %v207
    %v229 = vmul.f32 %v181, %v209
    %v230 = vmul.f32 %v182, %v211
    %v231 = vmul.f32 %v183, %v213
    %v232 = vmul.f32 %v184, %v215
    %v233 = vmul.f32 %v185, %v217
    %242 = vrot.lane.b32.xlu0 %v186, 32
    %v243 = vpop.permute.xlu0 %242
    %244 = vrot.lane.b32.xlu0 %v187, 32
    %v245 = vpop.permute.xlu0 %244
    %246 = vrot.lane.b32.xlu0 %v188, 32
    %v247 = vpop.permute.xlu0 %246
    %248 = vrot.lane.b32.xlu0 %v189, 32
    %v249 = vpop.permute.xlu0 %248
    %250 = vrot.lane.b32.xlu0 %v190, 32
    %v251 = vpop.permute.xlu0 %250
    %252 = vrot.lane.b32.xlu0 %v191, 32
    %v253 = vpop.permute.xlu0 %252
    %254 = vrot.lane.b32.xlu0 %v192, 32
    %v255 = vpop.permute.xlu0 %254
    %256 = vrot.lane.b32.xlu0 %v193, 32
    %v257 = vpop.permute.xlu0 %256
    %v266 = vmul.f32 %v178, %v243
    %v267 = vmul.f32 %v179, %v245
    %v268 = vmul.f32 %v180, %v247
    %v269 = vmul.f32 %v181, %v249
    %v270 = vmul.f32 %v182, %v251
    %v271 = vmul.f32 %v183, %v253
    %v272 = vmul.f32 %v184, %v255
    %v273 = vmul.f32 %v185, %v257
    %282 = vrot.lane.b32.xlu0 %v266, 32
    %v283 = vpop.permute.xlu0 %282
    %284 = vrot.lane.b32.xlu0 %v267, 32
    %v285 = vpop.permute.xlu0 %284
    %286 = vrot.lane.b32.xlu0 %v268, 32
    %v287 = vpop.permute.xlu0 %286
    %288 = vrot.lane.b32.xlu0 %v269, 32
    %v289 = vpop.permute.xlu0 %288
    %290 = vrot.lane.b32.xlu0 %v270, 32
    %v291 = vpop.permute.xlu0 %290
    %292 = vrot.lane.b32.xlu0 %v271, 32
    %v293 = vpop.permute.xlu0 %292
    %294 = vrot.lane.b32.xlu0 %v272, 32
    %v295 = vpop.permute.xlu0 %294
    %296 = vrot.lane.b32.xlu0 %v273, 32
    %v297 = vpop.permute.xlu0 %296
    %v306 = vadd.f32 %v226, %v283
    %v307 = vadd.f32 %v227, %v285
    %v308 = vadd.f32 %v228, %v287
    %v309 = vadd.f32 %v229, %v289
    %v310 = vadd.f32 %v230, %v291
    %v311 = vadd.f32 %v231, %v293
    %v312 = vadd.f32 %v232, %v295
    %v313 = vadd.f32 %v233, %v297
    %v314 = vtanh.pop %v306
    %v315 = vtanh.pop %v307
    %v316 = vtanh.pop %v308
    %v317 = vtanh.pop %v309
    %v318 = vtanh.pop %v310
    %v319 = vtanh.pop %v311
    %v320 = vtanh.pop %v312
    %v321 = vtanh.pop %v313
    %330 = vrot.lane.b32.xlu0 %v314, 32
    %v331 = vpop.permute.xlu0 %330
    %332 = vrot.lane.b32.xlu0 %v315, 32
    %v333 = vpop.permute.xlu0 %332
    %334 = vrot.lane.b32.xlu0 %v316, 32
    %v335 = vpop.permute.xlu0 %334
    %336 = vrot.lane.b32.xlu0 %v317, 32
    %v337 = vpop.permute.xlu0 %336
    %338 = vrot.lane.b32.xlu0 %v318, 32
    %v339 = vpop.permute.xlu0 %338
    %340 = vrot.lane.b32.xlu0 %v319, 32
    %v341 = vpop.permute.xlu0 %340
    %342 = vrot.lane.b32.xlu0 %v320, 32
    %v343 = vpop.permute.xlu0 %342
    %344 = vrot.lane.b32.xlu0 %v321, 32
    %v345 = vpop.permute.xlu0 %344
    %v354 = vmul.f32 %v178, %v331
    %v355 = vmul.f32 %v179, %v333
    %v356 = vmul.f32 %v180, %v335
    %v357 = vmul.f32 %v181, %v337
    %v358 = vmul.f32 %v182, %v339
    %v359 = vmul.f32 %v183, %v341
    %v360 = vmul.f32 %v184, %v343
    %v361 = vmul.f32 %v185, %v345
    %370 = vrot.lane.b32.xlu0 %v354, 64
    %v371 = vpop.permute.xlu0 %370
    %372 = vrot.lane.b32.xlu0 %v355, 64
    %v373 = vpop.permute.xlu0 %372
    %374 = vrot.lane.b32.xlu0 %v356, 64
    %v375 = vpop.permute.xlu0 %374
    %376 = vrot.lane.b32.xlu0 %v357, 64
    %v377 = vpop.permute.xlu0 %376
    %378 = vrot.lane.b32.xlu0 %v358, 64
    %v379 = vpop.permute.xlu0 %378
    %380 = vrot.lane.b32.xlu0 %v359, 64
    %v381 = vpop.permute.xlu0 %380
    %382 = vrot.lane.b32.xlu0 %v360, 64
    %v383 = vpop.permute.xlu0 %382
    %384 = vrot.lane.b32.xlu0 %v361, 64
    %v385 = vpop.permute.xlu0 %384
    %vm394 = vcmask 253952
    %395 = vst.msk [vmem:[#allocation9] sm:$0x1] %vm394, %v371
    %396 = vst.msk [vmem:[#allocation9 + $0x10] sm:$0x1] %vm394, %v373
    %397 = vst.msk [vmem:[#allocation9 + $0x20] sm:$0x1] %vm394, %v375
    %398 = vst.msk [vmem:[#allocation9 + $0x30] sm:$0x1] %vm394, %v377
    %399 = vst.msk [vmem:[#allocation9 + $0x40] sm:$0x1] %vm394, %v379
    %400 = vst.msk [vmem:[#allocation9 + $0x50] sm:$0x1] %vm394, %v381
    %401 = vst.msk [vmem:[#allocation9 + $0x60] sm:$0x1] %vm394, %v383
    %402 = vst.msk [vmem:[#allocation9 + $0x70] sm:$0x1] %vm394, %v385
    %v403 = vld [vmem:[#allocation4] sm:$0x1]
    %v404 = vld [vmem:[#allocation4 + $0x8] sm:$0x1]
    %v405 = vld [vmem:[#allocation4 + $0x10] sm:$0x1]
    %v406 = vld [vmem:[#allocation4 + $0x18] sm:$0x1]
    %v407 = vld [vmem:[#allocation4 + $0x20] sm:$0x1]
    %v408 = vld [vmem:[#allocation4 + $0x28] sm:$0x1]
    %v409 = vld [vmem:[#allocation4 + $0x30] sm:$0x1]
    %v410 = vld [vmem:[#allocation4 + $0x38] sm:$0x1]
    %v411 = vunpack.c.l.bf16 %v403
    %v412 = vunpack.c.l.bf16 %v404
    %v413 = vunpack.c.l.bf16 %v405
    %v414 = vunpack.c.l.bf16 %v406
    %v415 = vunpack.c.l.bf16 %v407
    %v416 = vunpack.c.l.bf16 %v408
    %v417 = vunpack.c.l.bf16 %v409
    %v418 = vunpack.c.l.bf16 %v410
    %v419 = vpack.c.bf16 %v354, %v354
    %v420 = vpack.c.bf16 %v355, %v355
    %v421 = vpack.c.bf16 %v356, %v356
    %v422 = vpack.c.bf16 %v357, %v357
    %v423 = vpack.c.bf16 %v358, %v358
    %v424 = vpack.c.bf16 %v359, %v359
    %v425 = vpack.c.bf16 %v360, %v360
    %v426 = vpack.c.bf16 %v361, %v361
    %v427 = vld [vmem:[#allocation7] sm:$0xf]
    %v428 = vld [vmem:[#allocation7 + $0x4] sm:$0xf]
    %v429 = vld [vmem:[#allocation7 + $0x8] sm:$0xf]
    %v430 = vld [vmem:[#allocation7 + $0xc] sm:$0xf]
    %v439 = vunpack.c.l.b16 %v419
    %v440 = vunpack.c.l.b16 %v420
    %v441 = vunpack.c.l.b16 %v421
    %v442 = vunpack.c.l.b16 %v422
    %v443 = vunpack.c.l.b16 %v423
    %v444 = vunpack.c.l.b16 %v424
    %v445 = vunpack.c.l.b16 %v425
    %v446 = vunpack.c.l.b16 %v426
    %v447 = vrot.slane %v440, 7
    %vm448 = vcmask 1041409
    %v449 = vsel %vm448, %v447, %v439
    %v450 = vrot.slane %v441, 6
    %vm451 = vcmask 1042434
    %v452 = vsel %vm451, %v450, %v449
    %v453 = vrot.slane %v442, 5
    %vm454 = vcmask 1043459
    %v455 = vsel %vm454, %v453, %v452
    %v456 = vrot.slane %v443, 4
    %vm457 = vcmask 1044484
    %v458 = vsel %vm457, %v456, %v455
    %v459 = vrot.slane %v444, 3
    %vm460 = vcmask 1045509
    %v461 = vsel %vm460, %v459, %v458
    %v462 = vrot.slane %v445, 2
    %vm463 = vcmask 1046534
    %v464 = vsel %vm463, %v462, %v461
    %v465 = vrot.slane %v446, 1
    %vm466 = vcmask 1047559
    %v467 = vsel %vm466, %v465, %v464
    %v468 = vpack.c.b16 %v467, %v467
    %469 = vrot.lane.b32.xlu0 %v468, 64
    %v470 = vpop.permute.xlu0 %469
    %v475 = vunpack.c.l.b16 %v427
    %v476 = vunpack.c.l.b16 %v428
    %v477 = vunpack.c.l.b16 %v429
    %v478 = vunpack.c.l.b16 %v430
    %v479 = vpack.c.b16 %v476, %v475
    %v480 = vpack.c.b16 %v478, %v477
    %v484 = vsel %vm86, %v470, 0
    %486 = vmatprep.subr.bf16.mxu0 0
    %487 = vmatpush1.bf16.msra.mxu0 %v479
    %488 = vmatprep.subr.bf16.mxu0 0
    %489 = vmatpush1.bf16.msra.mxu0 %v480
    %490 = vmatprep.subr.bf16.mxu0 0
    %491 = vmatpush1.bf16.msra.mxu0 0
    %492 = vmatprep.subr.bf16.mxu0 0
    %493 = vmatpush1.bf16.msra.mxu0 0
    %494 = vmatprep.subr.bf16.mxu0 0
    %495 = vmatpush1.bf16.msra.mxu0 0
    %496 = vmatprep.subr.bf16.mxu0 0
    %497 = vmatpush1.bf16.msra.mxu0 0
    %498 = vmatprep.subr.bf16.mxu0 0
    %499 = vmatpush1.bf16.msra.mxu0 0
    %500 = vmatprep.subr.bf16.mxu0 0
    %501 = vmatpush1.bf16.msra.mxu0 0
    %502 = vmatprep.subr.bf16.mxu0 0
    %503 = vmatpush1.bf16.msra.mxu0 0
    %504 = vmatprep.subr.bf16.mxu0 0
    %505 = vmatpush1.bf16.msra.mxu0 0
    %506 = vmatprep.subr.bf16.mxu0 0
    %507 = vmatpush1.bf16.msra.mxu0 0
    %508 = vmatprep.subr.bf16.mxu0 0
    %509 = vmatpush1.bf16.msra.mxu0 0
    %510 = vmatprep.subr.bf16.mxu0 0
    %511 = vmatpush1.bf16.msra.mxu0 0
    %512 = vmatprep.subr.bf16.mxu0 0
    %513 = vmatpush1.bf16.msra.mxu0 0
    %514 = vmatprep.subr.bf16.mxu0 0
    %515 = vmatpush1.bf16.msra.mxu0 0
    %516 = vmatprep.subr.bf16.mxu0 0
    %517 = vmatpush1.bf16.msra.mxu0 0
    %518 = vmatprep.mubr.bf16.mxu0 0
    %519 = vmatmul.mubr.bf16.gmra.mrb[0].mxu0 %v484
    %v520 = vpop.f32.mrb[0].mxu0
    %v521 = vadd.f32 0.0, %v520
    %v522 = vpop.f32.mrb[0].mxu0
    %v523 = vpop.f32.mrb[0].mxu0
    %v524 = vpop.f32.mrb[0].mxu0
    %525 = vdwg.mxu0
    %v527 = vrot.slane %v521, 7
    %v528 = vrot.slane %v521, 1
    %v529 = vrot.slane %v521, 2
    %v530 = vrot.slane %v521, 3
    %v531 = vrot.slane %v521, 4
    %v532 = vrot.slane %v521, 5
    %v533 = vrot.slane %v521, 6
    %v542 = vadd.f32 %v411, %v527
    %v543 = vadd.f32 %v412, %v521
    %v544 = vadd.f32 %v413, %v528
    %v545 = vadd.f32 %v414, %v529
    %v546 = vadd.f32 %v415, %v530
    %v547 = vadd.f32 %v416, %v531
    %v548 = vadd.f32 %v417, %v532
    %v549 = vadd.f32 %v418, %v533
    %v550 = vmul.f32 %v542, 0.5
    %v551 = vmul.f32 %v543, 0.5
    %v552 = vmul.f32 %v544, 0.5
    %v553 = vmul.f32 %v545, 0.5
    %v554 = vmul.f32 %v546, 0.5
    %v555 = vmul.f32 %v547, 0.5
    %v556 = vmul.f32 %v548, 0.5
    %v557 = vmul.f32 %v549, 0.5
    %v558 = vtanh.pop %v550
    %v559 = vtanh.pop %v551
    %v560 = vtanh.pop %v552
    %v561 = vtanh.pop %v553
    %v562 = vtanh.pop %v554
    %v563 = vtanh.pop %v555
    %v564 = vtanh.pop %v556
    %v565 = vtanh.pop %v557
    %v566 = vmul.f32 %v558, 0.5
    %v567 = vmul.f32 %v559, 0.5
    %v568 = vmul.f32 %v560, 0.5
    %v569 = vmul.f32 %v561, 0.5
    %v570 = vmul.f32 %v562, 0.5
    %v571 = vmul.f32 %v563, 0.5
    %v572 = vmul.f32 %v564, 0.5
    %v573 = vmul.f32 %v565, 0.5
    %v574 = vadd.f32 %v566, 0.5
    %v575 = vadd.f32 %v567, 0.5
    %v576 = vadd.f32 %v568, 0.5
    %v577 = vadd.f32 %v569, 0.5
    %v578 = vadd.f32 %v570, 0.5
    %v579 = vadd.f32 %v571, 0.5
    %v580 = vadd.f32 %v572, 0.5
    %v581 = vadd.f32 %v573, 0.5
    %v582 = vtanh.pop %v542
    %v583 = vtanh.pop %v543
    %v584 = vtanh.pop %v544
    %v585 = vtanh.pop %v545
    %v586 = vtanh.pop %v546
    %v587 = vtanh.pop %v547
    %v588 = vtanh.pop %v548
    %v589 = vtanh.pop %v549
    %v598 = vrot.slane %v306, 7
    %v599 = vrot.slane %v307, 7
    %v600 = vrot.slane %v308, 7
    %v601 = vrot.slane %v309, 7
    %v602 = vrot.slane %v310, 7
    %v603 = vrot.slane %v311, 7
    %v604 = vrot.slane %v312, 7
    %v605 = vrot.slane %v313, 7
    %v614 = vmul.f32 %v574, %v598
    %v615 = vmul.f32 %v575, %v599
    %v616 = vmul.f32 %v576, %v600
    %v617 = vmul.f32 %v577, %v601
    %v618 = vmul.f32 %v578, %v602
    %v619 = vmul.f32 %v579, %v603
    %v620 = vmul.f32 %v580, %v604
    %v621 = vmul.f32 %v581, %v605
    %630 = vrot.lane.b32.xlu0 %v582, 32
    %v631 = vpop.permute.xlu0 %630
    %632 = vrot.lane.b32.xlu0 %v583, 32
    %v633 = vpop.permute.xlu0 %632
    %634 = vrot.lane.b32.xlu0 %v584, 32
    %v635 = vpop.permute.xlu0 %634
    %636 = vrot.lane.b32.xlu0 %v585, 32
    %v637 = vpop.permute.xlu0 %636
    %638 = vrot.lane.b32.xlu0 %v586, 32
    %v639 = vpop.permute.xlu0 %638
    %640 = vrot.lane.b32.xlu0 %v587, 32
    %v641 = vpop.permute.xlu0 %640
    %642 = vrot.lane.b32.xlu0 %v588, 32
    %v643 = vpop.permute.xlu0 %642
    %644 = vrot.lane.b32.xlu0 %v589, 32
    %v645 = vpop.permute.xlu0 %644
    %v654 = vmul.f32 %v574, %v631
    %v655 = vmul.f32 %v575, %v633
    %v656 = vmul.f32 %v576, %v635
    %v657 = vmul.f32 %v577, %v637
    %v658 = vmul.f32 %v578, %v639
    %v659 = vmul.f32 %v579, %v641
    %v660 = vmul.f32 %v580, %v643
    %v661 = vmul.f32 %v581, %v645
    %670 = vrot.lane.b32.xlu0 %v654, 32
    %v671 = vpop.permute.xlu0 %670
    %672 = vrot.lane.b32.xlu0 %v655, 32
    %v673 = vpop.permute.xlu0 %672
    %674 = vrot.lane.b32.xlu0 %v656, 32
    %v675 = vpop.permute.xlu0 %674
    %676 = vrot.lane.b32.xlu0 %v657, 32
    %v677 = vpop.permute.xlu0 %676
    %678 = vrot.lane.b32.xlu0 %v658, 32
    %v679 = vpop.permute.xlu0 %678
    %680 = vrot.lane.b32.xlu0 %v659, 32
    %v681 = vpop.permute.xlu0 %680
    %682 = vrot.lane.b32.xlu0 %v660, 32
    %v683 = vpop.permute.xlu0 %682
    %684 = vrot.lane.b32.xlu0 %v661, 32
    %v685 = vpop.permute.xlu0 %684
    %v694 = vadd.f32 %v614, %v671
    %v695 = vadd.f32 %v615, %v673
    %v696 = vadd.f32 %v616, %v675
    %v697 = vadd.f32 %v617, %v677
    %v698 = vadd.f32 %v618, %v679
    %v699 = vadd.f32 %v619, %v681
    %v700 = vadd.f32 %v620, %v683
    %v701 = vadd.f32 %v621, %v685
    %v702 = vtanh.pop %v694
    %v703 = vtanh.pop %v695
    %v704 = vtanh.pop %v696
    %v705 = vtanh.pop %v697
    %v706 = vtanh.pop %v698
    %v707 = vtanh.pop %v699
    %v708 = vtanh.pop %v700
    %v709 = vtanh.pop %v701
    %718 = vrot.lane.b32.xlu0 %v702, 32
    %v719 = vpop.permute.xlu0 %718
    %720 = vrot.lane.b32.xlu0 %v703, 32
    %v721 = vpop.permute.xlu0 %720
    %722 = vrot.lane.b32.xlu0 %v704, 32
    %v723 = vpop.permute.xlu0 %722
    %724 = vrot.lane.b32.xlu0 %v705, 32
    %v725 = vpop.permute.xlu0 %724
    %726 = vrot.lane.b32.xlu0 %v706, 32
    %v727 = vpop.permute.xlu0 %726
    %728 = vrot.lane.b32.xlu0 %v707, 32
    %v729 = vpop.permute.xlu0 %728
    %730 = vrot.lane.b32.xlu0 %v708, 32
    %v731 = vpop.permute.xlu0 %730
    %732 = vrot.lane.b32.xlu0 %v709, 32
    %v733 = vpop.permute.xlu0 %732
    %v742 = vmul.f32 %v574, %v719
    %v743 = vmul.f32 %v575, %v721
    %v744 = vmul.f32 %v576, %v723
    %v745 = vmul.f32 %v577, %v725
    %v746 = vmul.f32 %v578, %v727
    %v747 = vmul.f32 %v579, %v729
    %v748 = vmul.f32 %v580, %v731
    %v749 = vmul.f32 %v581, %v733
    %758 = vrot.lane.b32.xlu0 %v742, 64
    %v759 = vpop.permute.xlu0 %758
    %760 = vrot.lane.b32.xlu0 %v743, 64
    %v761 = vpop.permute.xlu0 %760
    %762 = vrot.lane.b32.xlu0 %v744, 64
    %v763 = vpop.permute.xlu0 %762
    %764 = vrot.lane.b32.xlu0 %v745, 64
    %v765 = vpop.permute.xlu0 %764
    %766 = vrot.lane.b32.xlu0 %v746, 64
    %v767 = vpop.permute.xlu0 %766
    %768 = vrot.lane.b32.xlu0 %v747, 64
    %v769 = vpop.permute.xlu0 %768
    %770 = vrot.lane.b32.xlu0 %v748, 64
    %v771 = vpop.permute.xlu0 %770
    %772 = vrot.lane.b32.xlu0 %v749, 64
    %v773 = vpop.permute.xlu0 %772
    %vm782 = vcmask 254977
    %783 = vst.msk [vmem:[#allocation9] sm:$0x2] %vm782, %v759
    %784 = vst.msk [vmem:[#allocation9 + $0x10] sm:$0x2] %vm782, %v761
    %785 = vst.msk [vmem:[#allocation9 + $0x20] sm:$0x2] %vm782, %v763
    %786 = vst.msk [vmem:[#allocation9 + $0x30] sm:$0x2] %vm782, %v765
    %787 = vst.msk [vmem:[#allocation9 + $0x40] sm:$0x2] %vm782, %v767
    %788 = vst.msk [vmem:[#allocation9 + $0x50] sm:$0x2] %vm782, %v769
    %789 = vst.msk [vmem:[#allocation9 + $0x60] sm:$0x2] %vm782, %v771
    %790 = vst.msk [vmem:[#allocation9 + $0x70] sm:$0x2] %vm782, %v773
    %v791 = vld [vmem:[#allocation4] sm:$0x2]
    %v792 = vld [vmem:[#allocation4 + $0x8] sm:$0x2]
    %v793 = vld [vmem:[#allocation4 + $0x10] sm:$0x2]
    %v794 = vld [vmem:[#allocation4 + $0x18] sm:$0x2]
    %v795 = vld [vmem:[#allocation4 + $0x20] sm:$0x2]
    %v796 = vld [vmem:[#allocation4 + $0x28] sm:$0x2]
    %v797 = vld [vmem:[#allocation4 + $0x30] sm:$0x2]
    %v798 = vld [vmem:[#allocation4 + $0x38] sm:$0x2]
    %v799 = vunpack.c.l.bf16 %v791
    %v800 = vunpack.c.l.bf16 %v792
    %v801 = vunpack.c.l.bf16 %v793
    %v802 = vunpack.c.l.bf16 %v794
    %v803 = vunpack.c.l.bf16 %v795
    %v804 = vunpack.c.l.bf16 %v796
    %v805 = vunpack.c.l.bf16 %v797
    %v806 = vunpack.c.l.bf16 %v798
    %v807 = vpack.c.bf16 %v742, %v742
    %v808 = vpack.c.bf16 %v743, %v743
    %v809 = vpack.c.bf16 %v744, %v744
    %v810 = vpack.c.bf16 %v745, %v745
    %v811 = vpack.c.bf16 %v746, %v746
    %v812 = vpack.c.bf16 %v747, %v747
    %v813 = vpack.c.bf16 %v748, %v748
    %v814 = vpack.c.bf16 %v749, %v749
    %v815 = vld [vmem:[#allocation7] sm:$0xf]
    %v816 = vld [vmem:[#allocation7 + $0x4] sm:$0xf]
    %v817 = vld [vmem:[#allocation7 + $0x8] sm:$0xf]
    %v818 = vld [vmem:[#allocation7 + $0xc] sm:$0xf]
    %v827 = vunpack.c.l.b16 %v807
    %v828 = vunpack.c.l.b16 %v808
    %v829 = vunpack.c.l.b16 %v809
    %v830 = vunpack.c.l.b16 %v810
    %v831 = vunpack.c.l.b16 %v811
    %v832 = vunpack.c.l.b16 %v812
    %v833 = vunpack.c.l.b16 %v813
    %v834 = vunpack.c.l.b16 %v814
    %v835 = vrot.slane %v827, 1
    %v836 = vsel %vm448, %v828, %v835
    %v837 = vrot.slane %v829, 7
    %v838 = vsel %vm451, %v837, %v836
    %v839 = vrot.slane %v830, 6
    %v840 = vsel %vm454, %v839, %v838
    %v841 = vrot.slane %v831, 5
    %v842 = vsel %vm457, %v841, %v840
    %v843 = vrot.slane %v832, 4
    %v844 = vsel %vm460, %v843, %v842
    %v845 = vrot.slane %v833, 3
    %v846 = vsel %vm463, %v845, %v844
    %v847 = vrot.slane %v834, 2
    %v848 = vsel %vm466, %v847, %v846
    %v849 = vpack.c.b16 %v848, %v848
    %850 = vrot.lane.b32.xlu0 %v849, 64
    %v851 = vpop.permute.xlu0 %850
    %v856 = vunpack.c.l.b16 %v815
    %v857 = vunpack.c.l.b16 %v816
    %v858 = vunpack.c.l.b16 %v817
    %v859 = vunpack.c.l.b16 %v818
    %v860 = vpack.c.b16 %v857, %v856
    %v861 = vpack.c.b16 %v859, %v858
    %v865 = vsel %vm86, %v851, 0
    %867 = vmatprep.subr.bf16.mxu0 0
    %868 = vmatpush1.bf16.msra.mxu0 %v860
    %869 = vmatprep.subr.bf16.mxu0 0
    %870 = vmatpush1.bf16.msra.mxu0 %v861
    %871 = vmatprep.subr.bf16.mxu0 0
    %872 = vmatpush1.bf16.msra.mxu0 0
    %873 = vmatprep.subr.bf16.mxu0 0
    %874 = vmatpush1.bf16.msra.mxu0 0
    %875 = vmatprep.subr.bf16.mxu0 0
    %876 = vmatpush1.bf16.msra.mxu0 0
    %877 = vmatprep.subr.bf16.mxu0 0
    %878 = vmatpush1.bf16.msra.mxu0 0
    %879 = vmatprep.subr.bf16.mxu0 0
    %880 = vmatpush1.bf16.msra.mxu0 0
    %881 = vmatprep.subr.bf16.mxu0 0
    %882 = vmatpush1.bf16.msra.mxu0 0
    %883 = vmatprep.subr.bf16.mxu0 0
    %884 = vmatpush1.bf16.msra.mxu0 0
    %885 = vmatprep.subr.bf16.mxu0 0
    %886 = vmatpush1.bf16.msra.mxu0 0
    %887 = vmatprep.subr.bf16.mxu0 0
    %888 = vmatpush1.bf16.msra.mxu0 0
    %889 = vmatprep.subr.bf16.mxu0 0
    %890 = vmatpush1.bf16.msra.mxu0 0
    %891 = vmatprep.subr.bf16.mxu0 0
    %892 = vmatpush1.bf16.msra.mxu0 0
    %893 = vmatprep.subr.bf16.mxu0 0
    %894 = vmatpush1.bf16.msra.mxu0 0
    %895 = vmatprep.subr.bf16.mxu0 0
    %896 = vmatpush1.bf16.msra.mxu0 0
    %897 = vmatprep.subr.bf16.mxu0 0
    %898 = vmatpush1.bf16.msra.mxu0 0
    %899 = vmatprep.mubr.bf16.mxu0 0
    %900 = vmatmul.mubr.bf16.gmra.mrb[0].mxu0 %v865
    %v901 = vpop.f32.mrb[0].mxu0
    %v902 = vadd.f32 0.0, %v901
    %v903 = vpop.f32.mrb[0].mxu0
    %v904 = vpop.f32.mrb[0].mxu0
    %v905 = vpop.f32.mrb[0].mxu0
    %906 = vdwg.mxu0
    %v908 = vrot.slane %v902, 6
    %v909 = vrot.slane %v902, 7
    %v910 = vrot.slane %v902, 1
    %v911 = vrot.slane %v902, 2
    %v912 = vrot.slane %v902, 3
    %v913 = vrot.slane %v902, 4
    %v914 = vrot.slane %v902, 5
    %v923 = vadd.f32 %v799, %v908
    %v924 = vadd.f32 %v800, %v909
    %v925 = vadd.f32 %v801, %v902
    %v926 = vadd.f32 %v802, %v910
    %v927 = vadd.f32 %v803, %v911
    %v928 = vadd.f32 %v804, %v912
    %v929 = vadd.f32 %v805, %v913
    %v930 = vadd.f32 %v806, %v914
    %v931 = vmul.f32 %v923, 0.5
    %v932 = vmul.f32 %v924, 0.5
    %v933 = vmul.f32 %v925, 0.5
    %v934 = vmul.f32 %v926, 0.5
    %v935 = vmul.f32 %v927, 0.5
    %v936 = vmul.f32 %v928, 0.5
    %v937 = vmul.f32 %v929, 0.5
    %v938 = vmul.f32 %v930, 0.5
    %v939 = vtanh.pop %v931
    %v940 = vtanh.pop %v932
    %v941 = vtanh.pop %v933
    %v942 = vtanh.pop %v934
    %v943 = vtanh.pop %v935
    %v944 = vtanh.pop %v936
    %v945 = vtanh.pop %v937
    %v946 = vtanh.pop %v938
    %v947 = vmul.f32 %v939, 0.5
    %v948 = vmul.f32 %v940, 0.5
    %v949 = vmul.f32 %v941, 0.5
    %v950 = vmul.f32 %v942, 0.5
    %v951 = vmul.f32 %v943, 0.5
    %v952 = vmul.f32 %v944, 0.5
    %v953 = vmul.f32 %v945, 0.5
    %v954 = vmul.f32 %v946, 0.5
    %v955 = vadd.f32 %v947, 0.5
    %v956 = vadd.f32 %v948, 0.5
    %v957 = vadd.f32 %v949, 0.5
    %v958 = vadd.f32 %v950, 0.5
    %v959 = vadd.f32 %v951, 0.5
    %v960 = vadd.f32 %v952, 0.5
    %v961 = vadd.f32 %v953, 0.5
    %v962 = vadd.f32 %v954, 0.5
    %v963 = vtanh.pop %v923
    %v964 = vtanh.pop %v924
    %v965 = vtanh.pop %v925
    %v966 = vtanh.pop %v926
    %v967 = vtanh.pop %v927
    %v968 = vtanh.pop %v928
    %v969 = vtanh.pop %v929
    %v970 = vtanh.pop %v930
    %v979 = vrot.slane %v694, 7
    %v980 = vrot.slane %v695, 7
    %v981 = vrot.slane %v696, 7
    %v982 = vrot.slane %v697, 7
    %v983 = vrot.slane %v698, 7
    %v984 = vrot.slane %v699, 7
    %v985 = vrot.slane %v700, 7
    %v986 = vrot.slane %v701, 7
    %v995 = vmul.f32 %v955, %v979
    %v996 = vmul.f32 %v956, %v980
    %v997 = vmul.f32 %v957, %v981
    %v998 = vmul.f32 %v958, %v982
    %v999 = vmul.f32 %v959, %v983
    %v1000 = vmul.f32 %v960, %v984
    %v1001 = vmul.f32 %v961, %v985
    %v1002 = vmul.f32 %v962, %v986
    %1011 = vrot.lane.b32.xlu0 %v963, 32
    %v1012 = vpop.permute.xlu0 %1011
    %1013 = vrot.lane.b32.xlu0 %v964, 32
    %v1014 = vpop.permute.xlu0 %1013
    %1015 = vrot.lane.b32.xlu0 %v965, 32
    %v1016 = vpop.permute.xlu0 %1015
    %1017 = vrot.lane.b32.xlu0 %v966, 32
    %v1018 = vpop.permute.xlu0 %1017
    %1019 = vrot.lane.b32.xlu0 %v967, 32
    %v1020 = vpop.permute.xlu0 %1019
    %1021 = vrot.lane.b32.xlu0 %v968, 32
    %v1022 = vpop.permute.xlu0 %1021
    %1023 = vrot.lane.b32.xlu0 %v969, 32
    %v1024 = vpop.permute.xlu0 %1023
    %1025 = vrot.lane.b32.xlu0 %v970, 32
    %v1026 = vpop.permute.xlu0 %1025
    %v1035 = vmul.f32 %v955, %v1012
    %v1036 = vmul.f32 %v956, %v1014
    %v1037 = vmul.f32 %v957, %v1016
    %v1038 = vmul.f32 %v958, %v1018
    %v1039 = vmul.f32 %v959, %v1020
    %v1040 = vmul.f32 %v960, %v1022
    %v1041 = vmul.f32 %v961, %v1024
    %v1042 = vmul.f32 %v962, %v1026
    %1051 = vrot.lane.b32.xlu0 %v1035, 32
    %v1052 = vpop.permute.xlu0 %1051
    %1053 = vrot.lane.b32.xlu0 %v1036, 32
    %v1054 = vpop.permute.xlu0 %1053
    %1055 = vrot.lane.b32.xlu0 %v1037, 32
    %v1056 = vpop.permute.xlu0 %1055
    %1057 = vrot.lane.b32.xlu0 %v1038, 32
    %v1058 = vpop.permute.xlu0 %1057
    %1059 = vrot.lane.b32.xlu0 %v1039, 32
    %v1060 = vpop.permute.xlu0 %1059
    %1061 = vrot.lane.b32.xlu0 %v1040, 32
    %v1062 = vpop.permute.xlu0 %1061
    %1063 = vrot.lane.b32.xlu0 %v1041, 32
    %v1064 = vpop.permute.xlu0 %1063
    %1065 = vrot.lane.b32.xlu0 %v1042, 32
    %v1066 = vpop.permute.xlu0 %1065
    %v1075 = vadd.f32 %v995, %v1052
    %v1076 = vadd.f32 %v996, %v1054
    %v1077 = vadd.f32 %v997, %v1056
    %v1078 = vadd.f32 %v998, %v1058
    %v1079 = vadd.f32 %v999, %v1060
    %v1080 = vadd.f32 %v1000, %v1062
    %v1081 = vadd.f32 %v1001, %v1064
    %v1082 = vadd.f32 %v1002, %v1066
    %v1083 = vtanh.pop %v1075
    %v1084 = vtanh.pop %v1076
    %v1085 = vtanh.pop %v1077
    %v1086 = vtanh.pop %v1078
    %v1087 = vtanh.pop %v1079
    %v1088 = vtanh.pop %v1080
    %v1089 = vtanh.pop %v1081
    %v1090 = vtanh.pop %v1082
    %1099 = vrot.lane.b32.xlu0 %v1083, 32
    %v1100 = vpop.permute.xlu0 %1099
    %1101 = vrot.lane.b32.xlu0 %v1084, 32
    %v1102 = vpop.permute.xlu0 %1101
    %1103 = vrot.lane.b32.xlu0 %v1085, 32
    %v1104 = vpop.permute.xlu0 %1103
    %1105 = vrot.lane.b32.xlu0 %v1086, 32
    %v1106 = vpop.permute.xlu0 %1105
    %1107 = vrot.lane.b32.xlu0 %v1087, 32
    %v1108 = vpop.permute.xlu0 %1107
    %1109 = vrot.lane.b32.xlu0 %v1088, 32
    %v1110 = vpop.permute.xlu0 %1109
    %1111 = vrot.lane.b32.xlu0 %v1089, 32
    %v1112 = vpop.permute.xlu0 %1111
    %1113 = vrot.lane.b32.xlu0 %v1090, 32
    %v1114 = vpop.permute.xlu0 %1113
    %v1123 = vmul.f32 %v955, %v1100
    %v1124 = vmul.f32 %v956, %v1102
    %v1125 = vmul.f32 %v957, %v1104
    %v1126 = vmul.f32 %v958, %v1106
    %v1127 = vmul.f32 %v959, %v1108
    %v1128 = vmul.f32 %v960, %v1110
    %v1129 = vmul.f32 %v961, %v1112
    %v1130 = vmul.f32 %v962, %v1114
    %1139 = vrot.lane.b32.xlu0 %v1123, 64
    %v1140 = vpop.permute.xlu0 %1139
    %1141 = vrot.lane.b32.xlu0 %v1124, 64
    %v1142 = vpop.permute.xlu0 %1141
    %1143 = vrot.lane.b32.xlu0 %v1125, 64
    %v1144 = vpop.permute.xlu0 %1143
    %1145 = vrot.lane.b32.xlu0 %v1126, 64
    %v1146 = vpop.permute.xlu0 %1145
    %1147 = vrot.lane.b32.xlu0 %v1127, 64
    %v1148 = vpop.permute.xlu0 %1147
    %1149 = vrot.lane.b32.xlu0 %v1128, 64
    %v1150 = vpop.permute.xlu0 %1149
    %1151 = vrot.lane.b32.xlu0 %v1129, 64
    %v1152 = vpop.permute.xlu0 %1151
    %1153 = vrot.lane.b32.xlu0 %v1130, 64
    %v1154 = vpop.permute.xlu0 %1153
    %vm1163 = vcmask 256002
    %1164 = vst.msk [vmem:[#allocation9] sm:$0x4] %vm1163, %v1140
    %1165 = vst.msk [vmem:[#allocation9 + $0x10] sm:$0x4] %vm1163, %v1142
    %1166 = vst.msk [vmem:[#allocation9 + $0x20] sm:$0x4] %vm1163, %v1144
    %1167 = vst.msk [vmem:[#allocation9 + $0x30] sm:$0x4] %vm1163, %v1146
    %1168 = vst.msk [vmem:[#allocation9 + $0x40] sm:$0x4] %vm1163, %v1148
    %1169 = vst.msk [vmem:[#allocation9 + $0x50] sm:$0x4] %vm1163, %v1150
    %1170 = vst.msk [vmem:[#allocation9 + $0x60] sm:$0x4] %vm1163, %v1152
    %1171 = vst.msk [vmem:[#allocation9 + $0x70] sm:$0x4] %vm1163, %v1154
    %v1172 = vld [vmem:[#allocation4] sm:$0x2]
    %v1173 = vld [vmem:[#allocation4 + $0x8] sm:$0x2]
    %v1174 = vld [vmem:[#allocation4 + $0x10] sm:$0x2]
    %v1175 = vld [vmem:[#allocation4 + $0x18] sm:$0x2]
    %v1176 = vld [vmem:[#allocation4 + $0x20] sm:$0x2]
    %v1177 = vld [vmem:[#allocation4 + $0x28] sm:$0x2]
    %v1178 = vld [vmem:[#allocation4 + $0x30] sm:$0x2]
    %v1179 = vld [vmem:[#allocation4 + $0x38] sm:$0x2]
    %v1180 = vunpack.c.l.bf16 %v1172
    %v1181 = vunpack.c.l.bf16 %v1173
    %v1182 = vunpack.c.l.bf16 %v1174
    %v1183 = vunpack.c.l.bf16 %v1175
    %v1184 = vunpack.c.l.bf16 %v1176
    %v1185 = vunpack.c.l.bf16 %v1177
    %v1186 = vunpack.c.l.bf16 %v1178
    %v1187 = vunpack.c.l.bf16 %v1179
    %v1188 = vpack.c.bf16 %v1123, %v1123
    %v1189 = vpack.c.bf16 %v1124, %v1124
    %v1190 = vpack.c.bf16 %v1125, %v1125
    %v1191 = vpack.c.bf16 %v1126, %v1126
    %v1192 = vpack.c.bf16 %v1127, %v1127
    %v1193 = vpack.c.bf16 %v1128, %v1128
    %v1194 = vpack.c.bf16 %v1129, %v1129
    %v1195 = vpack.c.bf16 %v1130, %v1130
    %v1196 = vld [vmem:[#allocation7] sm:$0xf]
    %v1197 = vld [vmem:[#allocation7 + $0x4] sm:$0xf]
    %v1198 = vld [vmem:[#allocation7 + $0x8] sm:$0xf]
    %v1199 = vld [vmem:[#allocation7 + $0xc] sm:$0xf]
    %v1208 = vunpack.c.l.b16 %v1188
    %v1209 = vunpack.c.l.b16 %v1189
    %v1210 = vunpack.c.l.b16 %v1190
    %v1211 = vunpack.c.l.b16 %v1191
    %v1212 = vunpack.c.l.b16 %v1192
    %v1213 = vunpack.c.l.b16 %v1193
    %v1214 = vunpack.c.l.b16 %v1194
    %v1215 = vunpack.c.l.b16 %v1195
    %v1216 = vrot.slane %v1208, 2
    %v1217 = vrot.slane %v1209, 1
    %v1218 = vsel %vm448, %v1217, %v1216
    %v1219 = vsel %vm451, %v1210, %v1218
    %v1220 = vrot.slane %v1211, 7
    %v1221 = vsel %vm454, %v1220, %v1219
    %v1222 = vrot.slane %v1212, 6
    %v1223 = vsel %vm457, %v1222, %v1221
    %v1224 = vrot.slane %v1213, 5
    %v1225 = vsel %vm460, %v1224, %v1223
    %v1226 = vrot.slane %v1214, 4
    %v1227 = vsel %vm463, %v1226, %v1225
    %v1228 = vrot.slane %v1215, 3
    %v1229 = vsel %vm466, %v1228, %v1227
    %v1230 = vpack.c.b16 %v1229, %v1229
    %1231 = vrot.lane.b32.xlu0 %v1230, 64
    %v1232 = vpop.permute.xlu0 %1231
    %v1237 = vunpack.c.l.b16 %v1196
    %v1238 = vunpack.c.l.b16 %v1197
    %v1239 = vunpack.c.l.b16 %v1198
    %v1240 = vunpack.c.l.b16 %v1199
    %v1241 = vpack.c.b16 %v1238, %v1237
    %v1242 = vpack.c.b16 %v1240, %v1239
    %v1246 = vsel %vm86, %v1232, 0
    %1248 = vmatprep.subr.bf16.mxu0 0
    %1249 = vmatpush1.bf16.msra.mxu0 %v1241
    %1250 = vmatprep.subr.bf16.mxu0 0
    %1251 = vmatpush1.bf16.msra.mxu0 %v1242
    %1252 = vmatprep.subr.bf16.mxu0 0
    %1253 = vmatpush1.bf16.msra.mxu0 0
    %1254 = vmatprep.subr.bf16.mxu0 0
    %1255 = vmatpush1.bf16.msra.mxu0 0
    %1256 = vmatprep.subr.bf16.mxu0 0
    %1257 = vmatpush1.bf16.msra.mxu0 0
    %1258 = vmatprep.subr.bf16.mxu0 0
    %1259 = vmatpush1.bf16.msra.mxu0 0
    %1260 = vmatprep.subr.bf16.mxu0 0
    %1261 = vmatpush1.bf16.msra.mxu0 0
    %1262 = vmatprep.subr.bf16.mxu0 0
    %1263 = vmatpush1.bf16.msra.mxu0 0
    %1264 = vmatprep.subr.bf16.mxu0 0
    %1265 = vmatpush1.bf16.msra.mxu0 0
    %1266 = vmatprep.subr.bf16.mxu0 0
    %1267 = vmatpush1.bf16.msra.mxu0 0
    %1268 = vmatprep.subr.bf16.mxu0 0
    %1269 = vmatpush1.bf16.msra.mxu0 0
    %1270 = vmatprep.subr.bf16.mxu0 0
    %1271 = vmatpush1.bf16.msra.mxu0 0
    %1272 = vmatprep.subr.bf16.mxu0 0
    %1273 = vmatpush1.bf16.msra.mxu0 0
    %1274 = vmatprep.subr.bf16.mxu0 0
    %1275 = vmatpush1.bf16.msra.mxu0 0
    %1276 = vmatprep.subr.bf16.mxu0 0
    %1277 = vmatpush1.bf16.msra.mxu0 0
    %1278 = vmatprep.subr.bf16.mxu0 0
    %1279 = vmatpush1.bf16.msra.mxu0 0
    %1280 = vmatprep.mubr.bf16.mxu0 0
    %1281 = vmatmul.mubr.bf16.gmra.mrb[0].mxu0 %v1246
    %v1282 = vpop.f32.mrb[0].mxu0
    %v1283 = vadd.f32 0.0, %v1282
    %v1284 = vpop.f32.mrb[0].mxu0
    %v1285 = vpop.f32.mrb[0].mxu0
    %v1286 = vpop.f32.mrb[0].mxu0
    %1287 = vdwg.mxu0
    %v1289 = vrot.slane %v1283, 5
    %v1290 = vrot.slane %v1283, 6
    %v1291 = vrot.slane %v1283, 7
    %v1292 = vrot.slane %v1283, 1
    %v1293 = vrot.slane %v1283, 2
    %v1294 = vrot.slane %v1283, 3
    %v1295 = vrot.slane %v1283, 4
    %v1304 = vadd.f32 %v1180, %v1289
    %v1305 = vadd.f32 %v1181, %v1290
    %v1306 = vadd.f32 %v1182, %v1291
    %v1307 = vadd.f32 %v1183, %v1283
    %v1308 = vadd.f32 %v1184, %v1292
    %v1309 = vadd.f32 %v1185, %v1293
    %v1310 = vadd.f32 %v1186, %v1294
    %v1311 = vadd.f32 %v1187, %v1295
    %v1312 = vmul.f32 %v1304, 0.5
    %v1313 = vmul.f32 %v1305, 0.5
    %v1314 = vmul.f32 %v1306, 0.5
    %v1315 = vmul.f32 %v1307, 0.5
    %v1316 = vmul.f32 %v1308, 0.5
    %v1317 = vmul.f32 %v1309, 0.5
    %v1318 = vmul.f32 %v1310, 0.5
    %v1319 = vmul.f32 %v1311, 0.5
    %v1320 = vtanh.pop %v1312
    %v1321 = vtanh.pop %v1313
    %v1322 = vtanh.pop %v1314
    %v1323 = vtanh.pop %v1315
    %v1324 = vtanh.pop %v1316
    %v1325 = vtanh.pop %v1317
    %v1326 = vtanh.pop %v1318
    %v1327 = vtanh.pop %v1319
    %v1328 = vmul.f32 %v1320, 0.5
    %v1329 = vmul.f32 %v1321, 0.5
    %v1330 = vmul.f32 %v1322, 0.5
    %v1331 = vmul.f32 %v1323, 0.5
    %v1332 = vmul.f32 %v1324, 0.5
    %v1333 = vmul.f32 %v1325, 0.5
    %v1334 = vmul.f32 %v1326, 0.5
    %v1335 = vmul.f32 %v1327, 0.5
    %v1336 = vadd.f32 %v1328, 0.5
    %v1337 = vadd.f32 %v1329, 0.5
    %v1338 = vadd.f32 %v1330, 0.5
    %v1339 = vadd.f32 %v1331, 0.5
    %v1340 = vadd.f32 %v1332, 0.5
    %v1341 = vadd.f32 %v1333, 0.5
    %v1342 = vadd.f32 %v1334, 0.5
    %v1343 = vadd.f32 %v1335, 0.5
    %v1344 = vtanh.pop %v1304
    %v1345 = vtanh.pop %v1305
    %v1346 = vtanh.pop %v1306
    %v1347 = vtanh.pop %v1307
    %v1348 = vtanh.pop %v1308
    %v1349 = vtanh.pop %v1309
    %v1350 = vtanh.pop %v1310
    %v1351 = vtanh.pop %v1311
    %v1360 = vrot.slane %v1075, 7
    %v1361 = vrot.slane %v1076, 7
    %v1362 = vrot.slane %v1077, 7
    %v1363 = vrot.slane %v1078, 7
    %v1364 = vrot.slane %v1079, 7
    %v1365 = vrot.slane %v1080, 7
    %v1366 = vrot.slane %v1081, 7
    %v1367 = vrot.slane %v1082, 7
    %v1376 = vmul.f32 %v1336, %v1360
    %v1377 = vmul.f32 %v1337, %v1361
    %v1378 = vmul.f32 %v1338, %v1362
    %v1379 = vmul.f32 %v1339, %v1363
    %v1380 = vmul.f32 %v1340, %v1364
    %v1381 = vmul.f32 %v1341, %v1365
    %v1382 = vmul.f32 %v1342, %v1366
    %v1383 = vmul.f32 %v1343, %v1367
    %1392 = vrot.lane.b32.xlu0 %v1344, 32
    %v1393 = vpop.permute.xlu0 %1392
    %1394 = vrot.lane.b32.xlu0 %v1345, 32
    %v1395 = vpop.permute.xlu0 %1394
    %1396 = vrot.lane.b32.xlu0 %v1346, 32
    %v1397 = vpop.permute.xlu0 %1396
    %1398 = vrot.lane.b32.xlu0 %v1347, 32
    %v1399 = vpop.permute.xlu0 %1398
    %1400 = vrot.lane.b32.xlu0 %v1348, 32
    %v1401 = vpop.permute.xlu0 %1400
    %1402 = vrot.lane.b32.xlu0 %v1349, 32
    %v1403 = vpop.permute.xlu0 %1402
    %1404 = vrot.lane.b32.xlu0 %v1350, 32
    %v1405 = vpop.permute.xlu0 %1404
    %1406 = vrot.lane.b32.xlu0 %v1351, 32
    %v1407 = vpop.permute.xlu0 %1406
    %v1416 = vmul.f32 %v1336, %v1393
    %v1417 = vmul.f32 %v1337, %v1395
    %v1418 = vmul.f32 %v1338, %v1397
    %v1419 = vmul.f32 %v1339, %v1399
    %v1420 = vmul.f32 %v1340, %v1401
    %v1421 = vmul.f32 %v1341, %v1403
    %v1422 = vmul.f32 %v1342, %v1405
    %v1423 = vmul.f32 %v1343, %v1407
    %1432 = vrot.lane.b32.xlu0 %v1416, 32
    %v1433 = vpop.permute.xlu0 %1432
    %1434 = vrot.lane.b32.xlu0 %v1417, 32
    %v1435 = vpop.permute.xlu0 %1434
    %1436 = vrot.lane.b32.xlu0 %v1418, 32
    %v1437 = vpop.permute.xlu0 %1436
    %1438 = vrot.lane.b32.xlu0 %v1419, 32
    %v1439 = vpop.permute.xlu0 %1438
    %1440 = vrot.lane.b32.xlu0 %v1420, 32
    %v1441 = vpop.permute.xlu0 %1440
    %1442 = vrot.lane.b32.xlu0 %v1421, 32
    %v1443 = vpop.permute.xlu0 %1442
    %1444 = vrot.lane.b32.xlu0 %v1422, 32
    %v1445 = vpop.permute.xlu0 %1444
    %1446 = vrot.lane.b32.xlu0 %v1423, 32
    %v1447 = vpop.permute.xlu0 %1446
    %v1456 = vadd.f32 %v1376, %v1433
    %v1457 = vadd.f32 %v1377, %v1435
    %v1458 = vadd.f32 %v1378, %v1437
    %v1459 = vadd.f32 %v1379, %v1439
    %v1460 = vadd.f32 %v1380, %v1441
    %v1461 = vadd.f32 %v1381, %v1443
    %v1462 = vadd.f32 %v1382, %v1445
    %v1463 = vadd.f32 %v1383, %v1447
    %v1464 = vtanh.pop %v1456
    %v1465 = vtanh.pop %v1457
    %v1466 = vtanh.pop %v1458
    %v1467 = vtanh.pop %v1459
    %v1468 = vtanh.pop %v1460
    %v1469 = vtanh.pop %v1461
    %v1470 = vtanh.pop %v1462
    %v1471 = vtanh.pop %v1463
    %1480 = vrot.lane.b32.xlu0 %v1464, 32
    %v1481 = vpop.permute.xlu0 %1480
    %1482 = vrot.lane.b32.xlu0 %v1465, 32
    %v1483 = vpop.permute.xlu0 %1482
    %1484 = vrot.lane.b32.xlu0 %v1466, 32
    %v1485 = vpop.permute.xlu0 %1484
    %1486 = vrot.lane.b32.xlu0 %v1467, 32
    %v1487 = vpop.permute.xlu0 %1486
    %1488 = vrot.lane.b32.xlu0 %v1468, 32
    %v1489 = vpop.permute.xlu0 %1488
    %1490 = vrot.lane.b32.xlu0 %v1469, 32
    %v1491 = vpop.permute.xlu0 %1490
    %1492 = vrot.lane.b32.xlu0 %v1470, 32
    %v1493 = vpop.permute.xlu0 %1492
    %1494 = vrot.lane.b32.xlu0 %v1471, 32
    %v1495 = vpop.permute.xlu0 %1494
    %v1504 = vmul.f32 %v1336, %v1481
    %v1505 = vmul.f32 %v1337, %v1483
    %v1506 = vmul.f32 %v1338, %v1485
    %v1507 = vmul.f32 %v1339, %v1487
    %v1508 = vmul.f32 %v1340, %v1489
    %v1509 = vmul.f32 %v1341, %v1491
    %v1510 = vmul.f32 %v1342, %v1493
    %v1511 = vmul.f32 %v1343, %v1495
    %1520 = vrot.lane.b32.xlu0 %v1504, 64
    %v1521 = vpop.permute.xlu0 %1520
    %1522 = vrot.lane.b32.xlu0 %v1505, 64
    %v1523 = vpop.permute.xlu0 %1522
    %1524 = vrot.lane.b32.xlu0 %v1506, 64
    %v1525 = vpop.permute.xlu0 %1524
    %1526 = vrot.lane.b32.xlu0 %v1507, 64
    %v1527 = vpop.permute.xlu0 %1526
    %1528 = vrot.lane.b32.xlu0 %v1508, 64
    %v1529 = vpop.permute.xlu0 %1528
    %1530 = vrot.lane.b32.xlu0 %v1509, 64
    %v1531 = vpop.permute.xlu0 %1530
    %1532 = vrot.lane.b32.xlu0 %v1510, 64
    %v1533 = vpop.permute.xlu0 %1532
    %1534 = vrot.lane.b32.xlu0 %v1511, 64
    %v1535 = vpop.permute.xlu0 %1534
    %vm1544 = vcmask 257027
    %1545 = vst.msk [vmem:[#allocation9] sm:$0x8] %vm1544, %v1521
    %1546 = vst.msk [vmem:[#allocation9 + $0x10] sm:$0x8] %vm1544, %v1523
    %1547 = vst.msk [vmem:[#allocation9 + $0x20] sm:$0x8] %vm1544, %v1525
    %1548 = vst.msk [vmem:[#allocation9 + $0x30] sm:$0x8] %vm1544, %v1527
    %1549 = vst.msk [vmem:[#allocation9 + $0x40] sm:$0x8] %vm1544, %v1529
    %1550 = vst.msk [vmem:[#allocation9 + $0x50] sm:$0x8] %vm1544, %v1531
    %1551 = vst.msk [vmem:[#allocation9 + $0x60] sm:$0x8] %vm1544, %v1533
    %1552 = vst.msk [vmem:[#allocation9 + $0x70] sm:$0x8] %vm1544, %v1535
    %v1553 = vld [vmem:[#allocation4] sm:$0x4]
    %v1554 = vld [vmem:[#allocation4 + $0x8] sm:$0x4]
    %v1555 = vld [vmem:[#allocation4 + $0x10] sm:$0x4]
    %v1556 = vld [vmem:[#allocation4 + $0x18] sm:$0x4]
    %v1557 = vld [vmem:[#allocation4 + $0x20] sm:$0x4]
    %v1558 = vld [vmem:[#allocation4 + $0x28] sm:$0x4]
    %v1559 = vld [vmem:[#allocation4 + $0x30] sm:$0x4]
    %v1560 = vld [vmem:[#allocation4 + $0x38] sm:$0x4]
    %v1561 = vunpack.c.l.bf16 %v1553
    %v1562 = vunpack.c.l.bf16 %v1554
    %v1563 = vunpack.c.l.bf16 %v1555
    %v1564 = vunpack.c.l.bf16 %v1556
    %v1565 = vunpack.c.l.bf16 %v1557
    %v1566 = vunpack.c.l.bf16 %v1558
    %v1567 = vunpack.c.l.bf16 %v1559
    %v1568 = vunpack.c.l.bf16 %v1560
    %v1569 = vpack.c.bf16 %v1504, %v1504
    %v1570 = vpack.c.bf16 %v1505, %v1505
    %v1571 = vpack.c.bf16 %v1506, %v1506
    %v1572 = vpack.c.bf16 %v1507, %v1507
    %v1573 = vpack.c.bf16 %v1508, %v1508
    %v1574 = vpack.c.bf16 %v1509, %v1509
    %v1575 = vpack.c.bf16 %v1510, %v1510
    %v1576 = vpack.c.bf16 %v1511, %v1511
    %v1577 = vld [vmem:[#allocation7] sm:$0xf]
    %v1578 = vld [vmem:[#allocation7 + $0x4] sm:$0xf]
    %v1579 = vld [vmem:[#allocation7 + $0x8] sm:$0xf]
    %v1580 = vld [vmem:[#allocation7 + $0xc] sm:$0xf]
    %v1589 = vunpack.c.l.b16 %v1569
    %v1590 = vunpack.c.l.b16 %v1570
    %v1591 = vunpack.c.l.b16 %v1571
    %v1592 = vunpack.c.l.b16 %v1572
    %v1593 = vunpack.c.l.b16 %v1573
    %v1594 = vunpack.c.l.b16 %v1574
    %v1595 = vunpack.c.l.b16 %v1575
    %v1596 = vunpack.c.l.b16 %v1576
    %v1597 = vrot.slane %v1589, 3
    %v1598 = vrot.slane %v1590, 2
    %v1599 = vsel %vm448, %v1598, %v1597
    %v1600 = vrot.slane %v1591, 1
    %v1601 = vsel %vm451, %v1600, %v1599
    %v1602 = vsel %vm454, %v1592, %v1601
    %v1603 = vrot.slane %v1593, 7
    %v1604 = vsel %vm457, %v1603, %v1602
    %v1605 = vrot.slane %v1594, 6
    %v1606 = vsel %vm460, %v1605, %v1604
    %v1607 = vrot.slane %v1595, 5
    %v1608 = vsel %vm463, %v1607, %v1606
    %v1609 = vrot.slane %v1596, 4
    %v1610 = vsel %vm466, %v1609, %v1608
    %v1611 = vpack.c.b16 %v1610, %v1610
    %1612 = vrot.lane.b32.xlu0 %v1611, 64
    %v1613 = vpop.permute.xlu0 %1612
    %v1618 = vunpack.c.l.b16 %v1577
    %v1619 = vunpack.c.l.b16 %v1578
    %v1620 = vunpack.c.l.b16 %v1579
    %v1621 = vunpack.c.l.b16 %v1580
    %v1622 = vpack.c.b16 %v1619, %v1618
    %v1623 = vpack.c.b16 %v1621, %v1620
    %v1627 = vsel %vm86, %v1613, 0
    %1629 = vmatprep.subr.bf16.mxu0 0
    %1630 = vmatpush1.bf16.msra.mxu0 %v1622
    %1631 = vmatprep.subr.bf16.mxu0 0
    %1632 = vmatpush1.bf16.msra.mxu0 %v1623
    %1633 = vmatprep.subr.bf16.mxu0 0
    %1634 = vmatpush1.bf16.msra.mxu0 0
    %1635 = vmatprep.subr.bf16.mxu0 0
    %1636 = vmatpush1.bf16.msra.mxu0 0
    %1637 = vmatprep.subr.bf16.mxu0 0
    %1638 = vmatpush1.bf16.msra.mxu0 0
    %1639 = vmatprep.subr.bf16.mxu0 0
    %1640 = vmatpush1.bf16.msra.mxu0 0
    %1641 = vmatprep.subr.bf16.mxu0 0
    %1642 = vmatpush1.bf16.msra.mxu0 0
    %1643 = vmatprep.subr.bf16.mxu0 0
    %1644 = vmatpush1.bf16.msra.mxu0 0
    %1645 = vmatprep.subr.bf16.mxu0 0
    %1646 = vmatpush1.bf16.msra.mxu0 0
    %1647 = vmatprep.subr.bf16.mxu0 0
    %1648 = vmatpush1.bf16.msra.mxu0 0
    %1649 = vmatprep.subr.bf16.mxu0 0
    %1650 = vmatpush1.bf16.msra.mxu0 0
    %1651 = vmatprep.subr.bf16.mxu0 0
    %1652 = vmatpush1.bf16.msra.mxu0 0
    %1653 = vmatprep.subr.bf16.mxu0 0
    %1654 = vmatpush1.bf16.msra.mxu0 0
    %1655 = vmatprep.subr.bf16.mxu0 0
    %1656 = vmatpush1.bf16.msra.mxu0 0
    %1657 = vmatprep.subr.bf16.mxu0 0
    %1658 = vmatpush1.bf16.msra.mxu0 0
    %1659 = vmatprep.subr.bf16.mxu0 0
    %1660 = vmatpush1.bf16.msra.mxu0 0
    %1661 = vmatprep.mubr.bf16.mxu0 0
    %1662 = vmatmul.mubr.bf16.gmra.mrb[0].mxu0 %v1627
    %v1663 = vpop.f32.mrb[0].mxu0
    %v1664 = vadd.f32 0.0, %v1663
    %v1665 = vpop.f32.mrb[0].mxu0
    %v1666 = vpop.f32.mrb[0].mxu0
    %v1667 = vpop.f32.mrb[0].mxu0
    %1668 = vdwg.mxu0
    %v1670 = vrot.slane %v1664, 4
    %v1671 = vrot.slane %v1664, 5
    %v1672 = vrot.slane %v1664, 6
    %v1673 = vrot.slane %v1664, 7
    %v1674 = vrot.slane %v1664, 1
    %v1675 = vrot.slane %v1664, 2
    %v1676 = vrot.slane %v1664, 3
    %v1685 = vadd.f32 %v1561, %v1670
    %v1686 = vadd.f32 %v1562, %v1671
    %v1687 = vadd.f32 %v1563, %v1672
    %v1688 = vadd.f32 %v1564, %v1673
    %v1689 = vadd.f32 %v1565, %v1664
    %v1690 = vadd.f32 %v1566, %v1674
    %v1691 = vadd.f32 %v1567, %v1675
    %v1692 = vadd.f32 %v1568, %v1676
    %v1693 = vmul.f32 %v1685, 0.5
    %v1694 = vmul.f32 %v1686, 0.5
    %v1695 = vmul.f32 %v1687, 0.5
    %v1696 = vmul.f32 %v1688, 0.5
    %v1697 = vmul.f32 %v1689, 0.5
    %v1698 = vmul.f32 %v1690, 0.5
    %v1699 = vmul.f32 %v1691, 0.5
    %v1700 = vmul.f32 %v1692, 0.5
    %v1701 = vtanh.pop %v1693
    %v1702 = vtanh.pop %v1694
    %v1703 = vtanh.pop %v1695
    %v1704 = vtanh.pop %v1696
    %v1705 = vtanh.pop %v1697
    %v1706 = vtanh.pop %v1698
    %v1707 = vtanh.pop %v1699
    %v1708 = vtanh.pop %v1700
    %v1709 = vmul.f32 %v1701, 0.5
    %v1710 = vmul.f32 %v1702, 0.5
    %v1711 = vmul.f32 %v1703, 0.5
    %v1712 = vmul.f32 %v1704, 0.5
    %v1713 = vmul.f32 %v1705, 0.5
    %v1714 = vmul.f32 %v1706, 0.5
    %v1715 = vmul.f32 %v1707, 0.5
    %v1716 = vmul.f32 %v1708, 0.5
    %v1717 = vadd.f32 %v1709, 0.5
    %v1718 = vadd.f32 %v1710, 0.5
    %v1719 = vadd.f32 %v1711, 0.5
    %v1720 = vadd.f32 %v1712, 0.5
    %v1721 = vadd.f32 %v1713, 0.5
    %v1722 = vadd.f32 %v1714, 0.5
    %v1723 = vadd.f32 %v1715, 0.5
    %v1724 = vadd.f32 %v1716, 0.5
    %v1725 = vtanh.pop %v1685
    %v1726 = vtanh.pop %v1686
    %v1727 = vtanh.pop %v1687
    %v1728 = vtanh.pop %v1688
    %v1729 = vtanh.pop %v1689
    %v1730 = vtanh.pop %v1690
    %v1731 = vtanh.pop %v1691
    %v1732 = vtanh.pop %v1692
    %v1741 = vrot.slane %v1456, 7
    %v1742 = vrot.slane %v1457, 7
    %v1743 = vrot.slane %v1458, 7
    %v1744 = vrot.slane %v1459, 7
    %v1745 = vrot.slane %v1460, 7
    %v1746 = vrot.slane %v1461, 7
    %v1747 = vrot.slane %v1462, 7
    %v1748 = vrot.slane %v1463, 7
    %v1757 = vmul.f32 %v1717, %v1741
    %v1758 = vmul.f32 %v1718, %v1742
    %v1759 = vmul.f32 %v1719, %v1743
    %v1760 = vmul.f32 %v1720, %v1744
    %v1761 = vmul.f32 %v1721, %v1745
    %v1762 = vmul.f32 %v1722, %v1746
    %v1763 = vmul.f32 %v1723, %v1747
    %v1764 = vmul.f32 %v1724, %v1748
    %1773 = vrot.lane.b32.xlu0 %v1725, 32
    %v1774 = vpop.permute.xlu0 %1773
    %1775 = vrot.lane.b32.xlu0 %v1726, 32
    %v1776 = vpop.permute.xlu0 %1775
    %1777 = vrot.lane.b32.xlu0 %v1727, 32
    %v1778 = vpop.permute.xlu0 %1777
    %1779 = vrot.lane.b32.xlu0 %v1728, 32
    %v1780 = vpop.permute.xlu0 %1779
    %1781 = vrot.lane.b32.xlu0 %v1729, 32
    %v1782 = vpop.permute.xlu0 %1781
    %1783 = vrot.lane.b32.xlu0 %v1730, 32
    %v1784 = vpop.permute.xlu0 %1783
    %1785 = vrot.lane.b32.xlu0 %v1731, 32
    %v1786 = vpop.permute.xlu0 %1785
    %1787 = vrot.lane.b32.xlu0 %v1732, 32
    %v1788 = vpop.permute.xlu0 %1787
    %v1797 = vmul.f32 %v1717, %v1774
    %v1798 = vmul.f32 %v1718, %v1776
    %v1799 = vmul.f32 %v1719, %v1778
    %v1800 = vmul.f32 %v1720, %v1780
    %v1801 = vmul.f32 %v1721, %v1782
    %v1802 = vmul.f32 %v1722, %v1784
    %v1803 = vmul.f32 %v1723, %v1786
    %v1804 = vmul.f32 %v1724, %v1788
    %1813 = vrot.lane.b32.xlu0 %v1797, 32
    %v1814 = vpop.permute.xlu0 %1813
    %1815 = vrot.lane.b32.xlu0 %v1798, 32
    %v1816 = vpop.permute.xlu0 %1815
    %1817 = vrot.lane.b32.xlu0 %v1799, 32
    %v1818 = vpop.permute.xlu0 %1817
    %1819 = vrot.lane.b32.xlu0 %v1800, 32
    %v1820 = vpop.permute.xlu0 %1819
    %1821 = vrot.lane.b32.xlu0 %v1801, 32
    %v1822 = vpop.permute.xlu0 %1821
    %1823 = vrot.lane.b32.xlu0 %v1802, 32
    %v1824 = vpop.permute.xlu0 %1823
    %1825 = vrot.lane.b32.xlu0 %v1803, 32
    %v1826 = vpop.permute.xlu0 %1825
    %1827 = vrot.lane.b32.xlu0 %v1804, 32
    %v1828 = vpop.permute.xlu0 %1827
    %v1837 = vadd.f32 %v1757, %v1814
    %v1838 = vadd.f32 %v1758, %v1816
    %v1839 = vadd.f32 %v1759, %v1818
    %v1840 = vadd.f32 %v1760, %v1820
    %v1841 = vadd.f32 %v1761, %v1822
    %v1842 = vadd.f32 %v1762, %v1824
    %v1843 = vadd.f32 %v1763, %v1826
    %v1844 = vadd.f32 %v1764, %v1828
    %v1845 = vtanh.pop %v1837
    %v1846 = vtanh.pop %v1838
    %v1847 = vtanh.pop %v1839
    %v1848 = vtanh.pop %v1840
    %v1849 = vtanh.pop %v1841
    %v1850 = vtanh.pop %v1842
    %v1851 = vtanh.pop %v1843
    %v1852 = vtanh.pop %v1844
    %1861 = vrot.lane.b32.xlu0 %v1845, 32
    %v1862 = vpop.permute.xlu0 %1861
    %1863 = vrot.lane.b32.xlu0 %v1846, 32
    %v1864 = vpop.permute.xlu0 %1863
    %1865 = vrot.lane.b32.xlu0 %v1847, 32
    %v1866 = vpop.permute.xlu0 %1865
    %1867 = vrot.lane.b32.xlu0 %v1848, 32
    %v1868 = vpop.permute.xlu0 %1867
    %1869 = vrot.lane.b32.xlu0 %v1849, 32
    %v1870 = vpop.permute.xlu0 %1869
    %1871 = vrot.lane.b32.xlu0 %v1850, 32
    %v1872 = vpop.permute.xlu0 %1871
    %1873 = vrot.lane.b32.xlu0 %v1851, 32
    %v1874 = vpop.permute.xlu0 %1873
    %1875 = vrot.lane.b32.xlu0 %v1852, 32
    %v1876 = vpop.permute.xlu0 %1875
    %v1885 = vmul.f32 %v1717, %v1862
    %v1886 = vmul.f32 %v1718, %v1864
    %v1887 = vmul.f32 %v1719, %v1866
    %v1888 = vmul.f32 %v1720, %v1868
    %v1889 = vmul.f32 %v1721, %v1870
    %v1890 = vmul.f32 %v1722, %v1872
    %v1891 = vmul.f32 %v1723, %v1874
    %v1892 = vmul.f32 %v1724, %v1876
    %1901 = vrot.lane.b32.xlu0 %v1885, 64
    %v1902 = vpop.permute.xlu0 %1901
    %1903 = vrot.lane.b32.xlu0 %v1886, 64
    %v1904 = vpop.permute.xlu0 %1903
    %1905 = vrot.lane.b32.xlu0 %v1887, 64
    %v1906 = vpop.permute.xlu0 %1905
    %1907 = vrot.lane.b32.xlu0 %v1888, 64
    %v1908 = vpop.permute.xlu0 %1907
    %1909 = vrot.lane.b32.xlu0 %v1889, 64
    %v1910 = vpop.permute.xlu0 %1909
    %1911 = vrot.lane.b32.xlu0 %v1890, 64
    %v1912 = vpop.permute.xlu0 %1911
    %1913 = vrot.lane.b32.xlu0 %v1891, 64
    %v1914 = vpop.permute.xlu0 %1913
    %1915 = vrot.lane.b32.xlu0 %v1892, 64
    %v1916 = vpop.permute.xlu0 %1915
    %vm1925 = vcmask 258052
    %1926 = vst.msk [vmem:[#allocation9] sm:$0x10] %vm1925, %v1902
    %1927 = vst.msk [vmem:[#allocation9 + $0x10] sm:$0x10] %vm1925, %v1904
    %1928 = vst.msk [vmem:[#allocation9 + $0x20] sm:$0x10] %vm1925, %v1906
    %1929 = vst.msk [vmem:[#allocation9 + $0x30] sm:$0x10] %vm1925, %v1908
    %1930 = vst.msk [vmem:[#allocation9 + $0x40] sm:$0x10] %vm1925, %v1910
    %1931 = vst.msk [vmem:[#allocation9 + $0x50] sm:$0x10] %vm1925, %v1912
    %1932 = vst.msk [vmem:[#allocation9 + $0x60] sm:$0x10] %vm1925, %v1914
    %1933 = vst.msk [vmem:[#allocation9 + $0x70] sm:$0x10] %vm1925, %v1916
    %v1934 = vld [vmem:[#allocation4] sm:$0x4]
    %v1935 = vld [vmem:[#allocation4 + $0x8] sm:$0x4]
    %v1936 = vld [vmem:[#allocation4 + $0x10] sm:$0x4]
    %v1937 = vld [vmem:[#allocation4 + $0x18] sm:$0x4]
    %v1938 = vld [vmem:[#allocation4 + $0x20] sm:$0x4]
    %v1939 = vld [vmem:[#allocation4 + $0x28] sm:$0x4]
    %v1940 = vld [vmem:[#allocation4 + $0x30] sm:$0x4]
    %v1941 = vld [vmem:[#allocation4 + $0x38] sm:$0x4]
    %v1942 = vunpack.c.l.bf16 %v1934
    %v1943 = vunpack.c.l.bf16 %v1935
    %v1944 = vunpack.c.l.bf16 %v1936
    %v1945 = vunpack.c.l.bf16 %v1937
    %v1946 = vunpack.c.l.bf16 %v1938
    %v1947 = vunpack.c.l.bf16 %v1939
    %v1948 = vunpack.c.l.bf16 %v1940
    %v1949 = vunpack.c.l.bf16 %v1941
    %v1950 = vpack.c.bf16 %v1885, %v1885
    %v1951 = vpack.c.bf16 %v1886, %v1886
    %v1952 = vpack.c.bf16 %v1887, %v1887
    %v1953 = vpack.c.bf16 %v1888, %v1888
    %v1954 = vpack.c.bf16 %v1889, %v1889
    %v1955 = vpack.c.bf16 %v1890, %v1890
    %v1956 = vpack.c.bf16 %v1891, %v1891
    %v1957 = vpack.c.bf16 %v1892, %v1892
    %v1958 = vld [vmem:[#allocation7] sm:$0xf]
    %v1959 = vld [vmem:[#allocation7 + $0x4] sm:$0xf]
    %v1960 = vld [vmem:[#allocation7 + $0x8] sm:$0xf]
    %v1961 = vld [vmem:[#allocation7 + $0xc] sm:$0xf]
    %v1970 = vunpack.c.l.b16 %v1950
    %v1971 = vunpack.c.l.b16 %v1951
    %v1972 = vunpack.c.l.b16 %v1952
    %v1973 = vunpack.c.l.b16 %v1953
    %v1974 = vunpack.c.l.b16 %v1954
    %v1975 = vunpack.c.l.b16 %v1955
    %v1976 = vunpack.c.l.b16 %v1956
    %v1977 = vunpack.c.l.b16 %v1957
    %v1978 = vrot.slane %v1970, 4
    %v1979 = vrot.slane %v1971, 3
    %v1980 = vsel %vm448, %v1979, %v1978
    %v1981 = vrot.slane %v1972, 2
    %v1982 = vsel %vm451, %v1981, %v1980
    %v1983 = vrot.slane %v1973, 1
    %v1984 = vsel %vm454, %v1983, %v1982
    %v1985 = vsel %vm457, %v1974, %v1984
    %v1986 = vrot.slane %v1975, 7
    %v1987 = vsel %vm460, %v1986, %v1985
    %v1988 = vrot.slane %v1976, 6
    %v1989 = vsel %vm463, %v1988, %v1987
    %v1990 = vrot.slane %v1977, 5
    %v1991 = vsel %vm466, %v1990, %v1989
    %v1992 = vpack.c.b16 %v1991, %v1991
    %1993 = vrot.lane.b32.xlu0 %v1992, 64
    %v1994 = vpop.permute.xlu0 %1993
    %v1999 = vunpack.c.l.b16 %v1958
    %v2000 = vunpack.c.l.b16 %v1959
    %v2001 = vunpack.c.l.b16 %v1960
    %v2002 = vunpack.c.l.b16 %v1961
    %v2003 = vpack.c.b16 %v2000, %v1999
    %v2004 = vpack.c.b16 %v2002, %v2001
    %v2008 = vsel %vm86, %v1994, 0
    %2010 = vmatprep.subr.bf16.mxu0 0
    %2011 = vmatpush1.bf16.msra.mxu0 %v2003
    %2012 = vmatprep.subr.bf16.mxu0 0
    %2013 = vmatpush1.bf16.msra.mxu0 %v2004
    %2014 = vmatprep.subr.bf16.mxu0 0
    %2015 = vmatpush1.bf16.msra.mxu0 0
    %2016 = vmatprep.subr.bf16.mxu0 0
    %2017 = vmatpush1.bf16.msra.mxu0 0
    %2018 = vmatprep.subr.bf16.mxu0 0
    %2019 = vmatpush1.bf16.msra.mxu0 0
    %2020 = vmatprep.subr.bf16.mxu0 0
    %2021 = vmatpush1.bf16.msra.mxu0 0
    %2022 = vmatprep.subr.bf16.mxu0 0
    %2023 = vmatpush1.bf16.msra.mxu0 0
    %2024 = vmatprep.subr.bf16.mxu0 0
    %2025 = vmatpush1.bf16.msra.mxu0 0
    %2026 = vmatprep.subr.bf16.mxu0 0
    %2027 = vmatpush1.bf16.msra.mxu0 0
    %2028 = vmatprep.subr.bf16.mxu0 0
    %2029 = vmatpush1.bf16.msra.mxu0 0
    %2030 = vmatprep.subr.bf16.mxu0 0
    %2031 = vmatpush1.bf16.msra.mxu0 0
    %2032 = vmatprep.subr.bf16.mxu0 0
    %2033 = vmatpush1.bf16.msra.mxu0 0
    %2034 = vmatprep.subr.bf16.mxu0 0
    %2035 = vmatpush1.bf16.msra.mxu0 0
    %2036 = vmatprep.subr.bf16.mxu0 0
    %2037 = vmatpush1.bf16.msra.mxu0 0
    %2038 = vmatprep.subr.bf16.mxu0 0
    %2039 = vmatpush1.bf16.msra.mxu0 0
    %2040 = vmatprep.subr.bf16.mxu0 0
    %2041 = vmatpush1.bf16.msra.mxu0 0
    %2042 = vmatprep.mubr.bf16.mxu0 0
    %2043 = vmatmul.mubr.bf16.gmra.mrb[0].mxu0 %v2008
    %v2044 = vpop.f32.mrb[0].mxu0
    %v2045 = vadd.f32 0.0, %v2044
    %v2046 = vpop.f32.mrb[0].mxu0
    %v2047 = vpop.f32.mrb[0].mxu0
    %v2048 = vpop.f32.mrb[0].mxu0
    %2049 = vdwg.mxu0
    %v2051 = vrot.slane %v2045, 3
    %v2052 = vrot.slane %v2045, 4
    %v2053 = vrot.slane %v2045, 5
    %v2054 = vrot.slane %v2045, 6
    %v2055 = vrot.slane %v2045, 7
    %v2056 = vrot.slane %v2045, 1
    %v2057 = vrot.slane %v2045, 2
    %v2066 = vadd.f32 %v1942, %v2051
    %v2067 = vadd.f32 %v1943, %v2052
    %v2068 = vadd.f32 %v1944, %v2053
    %v2069 = vadd.f32 %v1945, %v2054
    %v2070 = vadd.f32 %v1946, %v2055
    %v2071 = vadd.f32 %v1947, %v2045
    %v2072 = vadd.f32 %v1948, %v2056
    %v2073 = vadd.f32 %v1949, %v2057
    %v2074 = vmul.f32 %v2066, 0.5
    %v2075 = vmul.f32 %v2067, 0.5
    %v2076 = vmul.f32 %v2068, 0.5
    %v2077 = vmul.f32 %v2069, 0.5
    %v2078 = vmul.f32 %v2070, 0.5
    %v2079 = vmul.f32 %v2071, 0.5
    %v2080 = vmul.f32 %v2072, 0.5
    %v2081 = vmul.f32 %v2073, 0.5
    %v2082 = vtanh.pop %v2074
    %v2083 = vtanh.pop %v2075
    %v2084 = vtanh.pop %v2076
    %v2085 = vtanh.pop %v2077
    %v2086 = vtanh.pop %v2078
    %v2087 = vtanh.pop %v2079
    %v2088 = vtanh.pop %v2080
    %v2089 = vtanh.pop %v2081
    %v2090 = vmul.f32 %v2082, 0.5
    %v2091 = vmul.f32 %v2083, 0.5
    %v2092 = vmul.f32 %v2084, 0.5
    %v2093 = vmul.f32 %v2085, 0.5
    %v2094 = vmul.f32 %v2086, 0.5
    %v2095 = vmul.f32 %v2087, 0.5
    %v2096 = vmul.f32 %v2088, 0.5
    %v2097 = vmul.f32 %v2089, 0.5
    %v2098 = vadd.f32 %v2090, 0.5
    %v2099 = vadd.f32 %v2091, 0.5
    %v2100 = vadd.f32 %v2092, 0.5
    %v2101 = vadd.f32 %v2093, 0.5
    %v2102 = vadd.f32 %v2094, 0.5
    %v2103 = vadd.f32 %v2095, 0.5
    %v2104 = vadd.f32 %v2096, 0.5
    %v2105 = vadd.f32 %v2097, 0.5
    %v2106 = vtanh.pop %v2066
    %v2107 = vtanh.pop %v2067
    %v2108 = vtanh.pop %v2068
    %v2109 = vtanh.pop %v2069
    %v2110 = vtanh.pop %v2070
    %v2111 = vtanh.pop %v2071
    %v2112 = vtanh.pop %v2072
    %v2113 = vtanh.pop %v2073
    %v2122 = vrot.slane %v1837, 7
    %v2123 = vrot.slane %v1838, 7
    %v2124 = vrot.slane %v1839, 7
    %v2125 = vrot.slane %v1840, 7
    %v2126 = vrot.slane %v1841, 7
    %v2127 = vrot.slane %v1842, 7
    %v2128 = vrot.slane %v1843, 7
    %v2129 = vrot.slane %v1844, 7
    %v2138 = vmul.f32 %v2098, %v2122
    %v2139 = vmul.f32 %v2099, %v2123
    %v2140 = vmul.f32 %v2100, %v2124
    %v2141 = vmul.f32 %v2101, %v2125
    %v2142 = vmul.f32 %v2102, %v2126
    %v2143 = vmul.f32 %v2103, %v2127
    %v2144 = vmul.f32 %v2104, %v2128
    %v2145 = vmul.f32 %v2105, %v2129
    %2154 = vrot.lane.b32.xlu0 %v2106, 32
    %v2155 = vpop.permute.xlu0 %2154
    %2156 = vrot.lane.b32.xlu0 %v2107, 32
    %v2157 = vpop.permute.xlu0 %2156
    %2158 = vrot.lane.b32.xlu0 %v2108, 32
    %v2159 = vpop.permute.xlu0 %2158
    %2160 = vrot.lane.b32.xlu0 %v2109, 32
    %v2161 = vpop.permute.xlu0 %2160
    %2162 = vrot.lane.b32.xlu0 %v2110, 32
    %v2163 = vpop.permute.xlu0 %2162
    %2164 = vrot.lane.b32.xlu0 %v2111, 32
    %v2165 = vpop.permute.xlu0 %2164
    %2166 = vrot.lane.b32.xlu0 %v2112, 32
    %v2167 = vpop.permute.xlu0 %2166
    %2168 = vrot.lane.b32.xlu0 %v2113, 32
    %v2169 = vpop.permute.xlu0 %2168
    %v2178 = vmul.f32 %v2098, %v2155
    %v2179 = vmul.f32 %v2099, %v2157
    %v2180 = vmul.f32 %v2100, %v2159
    %v2181 = vmul.f32 %v2101, %v2161
    %v2182 = vmul.f32 %v2102, %v2163
    %v2183 = vmul.f32 %v2103, %v2165
    %v2184 = vmul.f32 %v2104, %v2167
    %v2185 = vmul.f32 %v2105, %v2169
    %2194 = vrot.lane.b32.xlu0 %v2178, 32
    %v2195 = vpop.permute.xlu0 %2194
    %2196 = vrot.lane.b32.xlu0 %v2179, 32
    %v2197 = vpop.permute.xlu0 %2196
    %2198 = vrot.lane.b32.xlu0 %v2180, 32
    %v2199 = vpop.permute.xlu0 %2198
    %2200 = vrot.lane.b32.xlu0 %v2181, 32
    %v2201 = vpop.permute.xlu0 %2200
    %2202 = vrot.lane.b32.xlu0 %v2182, 32
    %v2203 = vpop.permute.xlu0 %2202
    %2204 = vrot.lane.b32.xlu0 %v2183, 32
    %v2205 = vpop.permute.xlu0 %2204
    %2206 = vrot.lane.b32.xlu0 %v2184, 32
    %v2207 = vpop.permute.xlu0 %2206
    %2208 = vrot.lane.b32.xlu0 %v2185, 32
    %v2209 = vpop.permute.xlu0 %2208
    %v2218 = vadd.f32 %v2138, %v2195
    %v2219 = vadd.f32 %v2139, %v2197
    %v2220 = vadd.f32 %v2140, %v2199
    %v2221 = vadd.f32 %v2141, %v2201
    %v2222 = vadd.f32 %v2142, %v2203
    %v2223 = vadd.f32 %v2143, %v2205
    %v2224 = vadd.f32 %v2144, %v2207
    %v2225 = vadd.f32 %v2145, %v2209
    %v2226 = vtanh.pop %v2218
    %v2227 = vtanh.pop %v2219
    %v2228 = vtanh.pop %v2220
    %v2229 = vtanh.pop %v2221
    %v2230 = vtanh.pop %v2222
    %v2231 = vtanh.pop %v2223
    %v2232 = vtanh.pop %v2224
    %v2233 = vtanh.pop %v2225
    %2242 = vrot.lane.b32.xlu0 %v2226, 32
    %v2243 = vpop.permute.xlu0 %2242
    %2244 = vrot.lane.b32.xlu0 %v2227, 32
    %v2245 = vpop.permute.xlu0 %2244
    %2246 = vrot.lane.b32.xlu0 %v2228, 32
    %v2247 = vpop.permute.xlu0 %2246
    %2248 = vrot.lane.b32.xlu0 %v2229, 32
    %v2249 = vpop.permute.xlu0 %2248
    %2250 = vrot.lane.b32.xlu0 %v2230, 32
    %v2251 = vpop.permute.xlu0 %2250
    %2252 = vrot.lane.b32.xlu0 %v2231, 32
    %v2253 = vpop.permute.xlu0 %2252
    %2254 = vrot.lane.b32.xlu0 %v2232, 32
    %v2255 = vpop.permute.xlu0 %2254
    %2256 = vrot.lane.b32.xlu0 %v2233, 32
    %v2257 = vpop.permute.xlu0 %2256
    %v2266 = vmul.f32 %v2098, %v2243
    %v2267 = vmul.f32 %v2099, %v2245
    %v2268 = vmul.f32 %v2100, %v2247
    %v2269 = vmul.f32 %v2101, %v2249
    %v2270 = vmul.f32 %v2102, %v2251
    %v2271 = vmul.f32 %v2103, %v2253
    %v2272 = vmul.f32 %v2104, %v2255
    %v2273 = vmul.f32 %v2105, %v2257
    %2282 = vrot.lane.b32.xlu0 %v2266, 64
    %v2283 = vpop.permute.xlu0 %2282
    %2284 = vrot.lane.b32.xlu0 %v2267, 64
    %v2285 = vpop.permute.xlu0 %2284
    %2286 = vrot.lane.b32.xlu0 %v2268, 64
    %v2287 = vpop.permute.xlu0 %2286
    %2288 = vrot.lane.b32.xlu0 %v2269, 64
    %v2289 = vpop.permute.xlu0 %2288
    %2290 = vrot.lane.b32.xlu0 %v2270, 64
    %v2291 = vpop.permute.xlu0 %2290
    %2292 = vrot.lane.b32.xlu0 %v2271, 64
    %v2293 = vpop.permute.xlu0 %2292
    %2294 = vrot.lane.b32.xlu0 %v2272, 64
    %v2295 = vpop.permute.xlu0 %2294
    %2296 = vrot.lane.b32.xlu0 %v2273, 64
    %v2297 = vpop.permute.xlu0 %2296
    %vm2306 = vcmask 259077
    %2307 = vst.msk [vmem:[#allocation9] sm:$0x20] %vm2306, %v2283
    %2308 = vst.msk [vmem:[#allocation9 + $0x10] sm:$0x20] %vm2306, %v2285
    %2309 = vst.msk [vmem:[#allocation9 + $0x20] sm:$0x20] %vm2306, %v2287
    %2310 = vst.msk [vmem:[#allocation9 + $0x30] sm:$0x20] %vm2306, %v2289
    %2311 = vst.msk [vmem:[#allocation9 + $0x40] sm:$0x20] %vm2306, %v2291
    %2312 = vst.msk [vmem:[#allocation9 + $0x50] sm:$0x20] %vm2306, %v2293
    %2313 = vst.msk [vmem:[#allocation9 + $0x60] sm:$0x20] %vm2306, %v2295
    %2314 = vst.msk [vmem:[#allocation9 + $0x70] sm:$0x20] %vm2306, %v2297
    %v2315 = vld [vmem:[#allocation4] sm:$0x8]
    %v2316 = vld [vmem:[#allocation4 + $0x8] sm:$0x8]
    %v2317 = vld [vmem:[#allocation4 + $0x10] sm:$0x8]
    %v2318 = vld [vmem:[#allocation4 + $0x18] sm:$0x8]
    %v2319 = vld [vmem:[#allocation4 + $0x20] sm:$0x8]
    %v2320 = vld [vmem:[#allocation4 + $0x28] sm:$0x8]
    %v2321 = vld [vmem:[#allocation4 + $0x30] sm:$0x8]
    %v2322 = vld [vmem:[#allocation4 + $0x38] sm:$0x8]
    %v2323 = vunpack.c.l.bf16 %v2315
    %v2324 = vunpack.c.l.bf16 %v2316
    %v2325 = vunpack.c.l.bf16 %v2317
    %v2326 = vunpack.c.l.bf16 %v2318
    %v2327 = vunpack.c.l.bf16 %v2319
    %v2328 = vunpack.c.l.bf16 %v2320
    %v2329 = vunpack.c.l.bf16 %v2321
    %v2330 = vunpack.c.l.bf16 %v2322
    %v2331 = vpack.c.bf16 %v2266, %v2266
    %v2332 = vpack.c.bf16 %v2267, %v2267
    %v2333 = vpack.c.bf16 %v2268, %v2268
    %v2334 = vpack.c.bf16 %v2269, %v2269
    %v2335 = vpack.c.bf16 %v2270, %v2270
    %v2336 = vpack.c.bf16 %v2271, %v2271
    %v2337 = vpack.c.bf16 %v2272, %v2272
    %v2338 = vpack.c.bf16 %v2273, %v2273
    %v2339 = vld [vmem:[#allocation7] sm:$0xf]
    %v2340 = vld [vmem:[#allocation7 + $0x4] sm:$0xf]
    %v2341 = vld [vmem:[#allocation7 + $0x8] sm:$0xf]
    %v2342 = vld [vmem:[#allocation7 + $0xc] sm:$0xf]
    %v2351 = vunpack.c.l.b16 %v2331
    %v2352 = vunpack.c.l.b16 %v2332
    %v2353 = vunpack.c.l.b16 %v2333
    %v2354 = vunpack.c.l.b16 %v2334
    %v2355 = vunpack.c.l.b16 %v2335
    %v2356 = vunpack.c.l.b16 %v2336
    %v2357 = vunpack.c.l.b16 %v2337
    %v2358 = vunpack.c.l.b16 %v2338
    %v2359 = vrot.slane %v2351, 5
    %v2360 = vrot.slane %v2352, 4
    %v2361 = vsel %vm448, %v2360, %v2359
    %v2362 = vrot.slane %v2353, 3
    %v2363 = vsel %vm451, %v2362, %v2361
    %v2364 = vrot.slane %v2354, 2
    %v2365 = vsel %vm454, %v2364, %v2363
    %v2366 = vrot.slane %v2355, 1
    %v2367 = vsel %vm457, %v2366, %v2365
    %v2368 = vsel %vm460, %v2356, %v2367
    %v2369 = vrot.slane %v2357, 7
    %v2370 = vsel %vm463, %v2369, %v2368
    %v2371 = vrot.slane %v2358, 6
    %v2372 = vsel %vm466, %v2371, %v2370
    %v2373 = vpack.c.b16 %v2372, %v2372
    %2374 = vrot.lane.b32.xlu0 %v2373, 64
    %v2375 = vpop.permute.xlu0 %2374
    %v2380 = vunpack.c.l.b16 %v2339
    %v2381 = vunpack.c.l.b16 %v2340
    %v2382 = vunpack.c.l.b16 %v2341
    %v2383 = vunpack.c.l.b16 %v2342
    %v2384 = vpack.c.b16 %v2381, %v2380
    %v2385 = vpack.c.b16 %v2383, %v2382
    %v2389 = vsel %vm86, %v2375, 0
    %2391 = vmatprep.subr.bf16.mxu0 0
    %2392 = vmatpush1.bf16.msra.mxu0 %v2384
    %2393 = vmatprep.subr.bf16.mxu0 0
    %2394 = vmatpush1.bf16.msra.mxu0 %v2385
    %2395 = vmatprep.subr.bf16.mxu0 0
    %2396 = vmatpush1.bf16.msra.mxu0 0
    %2397 = vmatprep.subr.bf16.mxu0 0
    %2398 = vmatpush1.bf16.msra.mxu0 0
    %2399 = vmatprep.subr.bf16.mxu0 0
    %2400 = vmatpush1.bf16.msra.mxu0 0
    %2401 = vmatprep.subr.bf16.mxu0 0
    %2402 = vmatpush1.bf16.msra.mxu0 0
    %2403 = vmatprep.subr.bf16.mxu0 0
    %2404 = vmatpush1.bf16.msra.mxu0 0
    %2405 = vmatprep.subr.bf16.mxu0 0
    %2406 = vmatpush1.bf16.msra.mxu0 0
    %2407 = vmatprep.subr.bf16.mxu0 0
    %2408 = vmatpush1.bf16.msra.mxu0 0
    %2409 = vmatprep.subr.bf16.mxu0 0
    %2410 = vmatpush1.bf16.msra.mxu0 0
    %2411 = vmatprep.subr.bf16.mxu0 0
    %2412 = vmatpush1.bf16.msra.mxu0 0
    %2413 = vmatprep.subr.bf16.mxu0 0
    %2414 = vmatpush1.bf16.msra.mxu0 0
    %2415 = vmatprep.subr.bf16.mxu0 0
    %2416 = vmatpush1.bf16.msra.mxu0 0
    %2417 = vmatprep.subr.bf16.mxu0 0
    %2418 = vmatpush1.bf16.msra.mxu0 0
    %2419 = vmatprep.subr.bf16.mxu0 0
    %2420 = vmatpush1.bf16.msra.mxu0 0
    %2421 = vmatprep.subr.bf16.mxu0 0
    %2422 = vmatpush1.bf16.msra.mxu0 0
    %2423 = vmatprep.mubr.bf16.mxu0 0
    %2424 = vmatmul.mubr.bf16.gmra.mrb[0].mxu0 %v2389
    %v2425 = vpop.f32.mrb[0].mxu0
    %v2426 = vadd.f32 0.0, %v2425
    %v2427 = vpop.f32.mrb[0].mxu0
    %v2428 = vpop.f32.mrb[0].mxu0
    %v2429 = vpop.f32.mrb[0].mxu0
    %2430 = vdwg.mxu0
    %v2432 = vrot.slane %v2426, 2
    %v2433 = vrot.slane %v2426, 3
    %v2434 = vrot.slane %v2426, 4
    %v2435 = vrot.slane %v2426, 5
    %v2436 = vrot.slane %v2426, 6
    %v2437 = vrot.slane %v2426, 7
    %v2438 = vrot.slane %v2426, 1
    %v2447 = vadd.f32 %v2323, %v2432
    %v2448 = vadd.f32 %v2324, %v2433
    %v2449 = vadd.f32 %v2325, %v2434
    %v2450 = vadd.f32 %v2326, %v2435
    %v2451 = vadd.f32 %v2327, %v2436
    %v2452 = vadd.f32 %v2328, %v2437
    %v2453 = vadd.f32 %v2329, %v2426
    %v2454 = vadd.f32 %v2330, %v2438
    %v2455 = vmul.f32 %v2447, 0.5
    %v2456 = vmul.f32 %v2448, 0.5
    %v2457 = vmul.f32 %v2449, 0.5
    %v2458 = vmul.f32 %v2450, 0.5
    %v2459 = vmul.f32 %v2451, 0.5
    %v2460 = vmul.f32 %v2452, 0.5
    %v2461 = vmul.f32 %v2453, 0.5
    %v2462 = vmul.f32 %v2454, 0.5
    %v2463 = vtanh.pop %v2455
    %v2464 = vtanh.pop %v2456
    %v2465 = vtanh.pop %v2457
    %v2466 = vtanh.pop %v2458
    %v2467 = vtanh.pop %v2459
    %v2468 = vtanh.pop %v2460
    %v2469 = vtanh.pop %v2461
    %v2470 = vtanh.pop %v2462
    %v2471 = vmul.f32 %v2463, 0.5
    %v2472 = vmul.f32 %v2464, 0.5
    %v2473 = vmul.f32 %v2465, 0.5
    %v2474 = vmul.f32 %v2466, 0.5
    %v2475 = vmul.f32 %v2467, 0.5
    %v2476 = vmul.f32 %v2468, 0.5
    %v2477 = vmul.f32 %v2469, 0.5
    %v2478 = vmul.f32 %v2470, 0.5
    %v2479 = vadd.f32 %v2471, 0.5
    %v2480 = vadd.f32 %v2472, 0.5
    %v2481 = vadd.f32 %v2473, 0.5
    %v2482 = vadd.f32 %v2474, 0.5
    %v2483 = vadd.f32 %v2475, 0.5
    %v2484 = vadd.f32 %v2476, 0.5
    %v2485 = vadd.f32 %v2477, 0.5
    %v2486 = vadd.f32 %v2478, 0.5
    %v2487 = vtanh.pop %v2447
    %v2488 = vtanh.pop %v2448
    %v2489 = vtanh.pop %v2449
    %v2490 = vtanh.pop %v2450
    %v2491 = vtanh.pop %v2451
    %v2492 = vtanh.pop %v2452
    %v2493 = vtanh.pop %v2453
    %v2494 = vtanh.pop %v2454
    %v2503 = vrot.slane %v2218, 7
    %v2504 = vrot.slane %v2219, 7
    %v2505 = vrot.slane %v2220, 7
    %v2506 = vrot.slane %v2221, 7
    %v2507 = vrot.slane %v2222, 7
    %v2508 = vrot.slane %v2223, 7
    %v2509 = vrot.slane %v2224, 7
    %v2510 = vrot.slane %v2225, 7
    %v2519 = vmul.f32 %v2479, %v2503
    %v2520 = vmul.f32 %v2480, %v2504
    %v2521 = vmul.f32 %v2481, %v2505
    %v2522 = vmul.f32 %v2482, %v2506
    %v2523 = vmul.f32 %v2483, %v2507
    %v2524 = vmul.f32 %v2484, %v2508
    %v2525 = vmul.f32 %v2485, %v2509
    %v2526 = vmul.f32 %v2486, %v2510
    %2535 = vrot.lane.b32.xlu0 %v2487, 32
    %v2536 = vpop.permute.xlu0 %2535
    %2537 = vrot.lane.b32.xlu0 %v2488, 32
    %v2538 = vpop.permute.xlu0 %2537
    %2539 = vrot.lane.b32.xlu0 %v2489, 32
    %v2540 = vpop.permute.xlu0 %2539
    %2541 = vrot.lane.b32.xlu0 %v2490, 32
    %v2542 = vpop.permute.xlu0 %2541
    %2543 = vrot.lane.b32.xlu0 %v2491, 32
    %v2544 = vpop.permute.xlu0 %2543
    %2545 = vrot.lane.b32.xlu0 %v2492, 32
    %v2546 = vpop.permute.xlu0 %2545
    %2547 = vrot.lane.b32.xlu0 %v2493, 32
    %v2548 = vpop.permute.xlu0 %2547
    %2549 = vrot.lane.b32.xlu0 %v2494, 32
    %v2550 = vpop.permute.xlu0 %2549
    %v2559 = vmul.f32 %v2479, %v2536
    %v2560 = vmul.f32 %v2480, %v2538
    %v2561 = vmul.f32 %v2481, %v2540
    %v2562 = vmul.f32 %v2482, %v2542
    %v2563 = vmul.f32 %v2483, %v2544
    %v2564 = vmul.f32 %v2484, %v2546
    %v2565 = vmul.f32 %v2485, %v2548
    %v2566 = vmul.f32 %v2486, %v2550
    %2575 = vrot.lane.b32.xlu0 %v2559, 32
    %v2576 = vpop.permute.xlu0 %2575
    %2577 = vrot.lane.b32.xlu0 %v2560, 32
    %v2578 = vpop.permute.xlu0 %2577
    %2579 = vrot.lane.b32.xlu0 %v2561, 32
    %v2580 = vpop.permute.xlu0 %2579
    %2581 = vrot.lane.b32.xlu0 %v2562, 32
    %v2582 = vpop.permute.xlu0 %2581
    %2583 = vrot.lane.b32.xlu0 %v2563, 32
    %v2584 = vpop.permute.xlu0 %2583
    %2585 = vrot.lane.b32.xlu0 %v2564, 32
    %v2586 = vpop.permute.xlu0 %2585
    %2587 = vrot.lane.b32.xlu0 %v2565, 32
    %v2588 = vpop.permute.xlu0 %2587
    %2589 = vrot.lane.b32.xlu0 %v2566, 32
    %v2590 = vpop.permute.xlu0 %2589
    %v2599 = vadd.f32 %v2519, %v2576
    %v2600 = vadd.f32 %v2520, %v2578
    %v2601 = vadd.f32 %v2521, %v2580
    %v2602 = vadd.f32 %v2522, %v2582
    %v2603 = vadd.f32 %v2523, %v2584
    %v2604 = vadd.f32 %v2524, %v2586
    %v2605 = vadd.f32 %v2525, %v2588
    %v2606 = vadd.f32 %v2526, %v2590
    %v2607 = vtanh.pop %v2599
    %v2608 = vtanh.pop %v2600
    %v2609 = vtanh.pop %v2601
    %v2610 = vtanh.pop %v2602
    %v2611 = vtanh.pop %v2603
    %v2612 = vtanh.pop %v2604
    %v2613 = vtanh.pop %v2605
    %v2614 = vtanh.pop %v2606
    %2623 = vrot.lane.b32.xlu0 %v2607, 32
    %v2624 = vpop.permute.xlu0 %2623
    %2625 = vrot.lane.b32.xlu0 %v2608, 32
    %v2626 = vpop.permute.xlu0 %2625
    %2627 = vrot.lane.b32.xlu0 %v2609, 32
    %v2628 = vpop.permute.xlu0 %2627
    %2629 = vrot.lane.b32.xlu0 %v2610, 32
    %v2630 = vpop.permute.xlu0 %2629
    %2631 = vrot.lane.b32.xlu0 %v2611, 32
    %v2632 = vpop.permute.xlu0 %2631
    %2633 = vrot.lane.b32.xlu0 %v2612, 32
    %v2634 = vpop.permute.xlu0 %2633
    %2635 = vrot.lane.b32.xlu0 %v2613, 32
    %v2636 = vpop.permute.xlu0 %2635
    %2637 = vrot.lane.b32.xlu0 %v2614, 32
    %v2638 = vpop.permute.xlu0 %2637
    %v2647 = vmul.f32 %v2479, %v2624
    %v2648 = vmul.f32 %v2480, %v2626
    %v2649 = vmul.f32 %v2481, %v2628
    %v2650 = vmul.f32 %v2482, %v2630
    %v2651 = vmul.f32 %v2483, %v2632
    %v2652 = vmul.f32 %v2484, %v2634
    %v2653 = vmul.f32 %v2485, %v2636
    %v2654 = vmul.f32 %v2486, %v2638
    %2663 = vrot.lane.b32.xlu0 %v2647, 64
    %v2664 = vpop.permute.xlu0 %2663
    %2665 = vrot.lane.b32.xlu0 %v2648, 64
    %v2666 = vpop.permute.xlu0 %2665
    %2667 = vrot.lane.b32.xlu0 %v2649, 64
    %v2668 = vpop.permute.xlu0 %2667
    %2669 = vrot.lane.b32.xlu0 %v2650, 64
    %v2670 = vpop.permute.xlu0 %2669
    %2671 = vrot.lane.b32.xlu0 %v2651, 64
    %v2672 = vpop.permute.xlu0 %2671
    %2673 = vrot.lane.b32.xlu0 %v2652, 64
    %v2674 = vpop.permute.xlu0 %2673
    %2675 = vrot.lane.b32.xlu0 %v2653, 64
    %v2676 = vpop.permute.xlu0 %2675
    %2677 = vrot.lane.b32.xlu0 %v2654, 64
    %v2678 = vpop.permute.xlu0 %2677
    %vm2687 = vcmask 260102
    %2688 = vst.msk [vmem:[#allocation9] sm:$0x40] %vm2687, %v2664
    %2689 = vst.msk [vmem:[#allocation9 + $0x10] sm:$0x40] %vm2687, %v2666
    %2690 = vst.msk [vmem:[#allocation9 + $0x20] sm:$0x40] %vm2687, %v2668
    %2691 = vst.msk [vmem:[#allocation9 + $0x30] sm:$0x40] %vm2687, %v2670
    %2692 = vst.msk [vmem:[#allocation9 + $0x40] sm:$0x40] %vm2687, %v2672
    %2693 = vst.msk [vmem:[#allocation9 + $0x50] sm:$0x40] %vm2687, %v2674
    %2694 = vst.msk [vmem:[#allocation9 + $0x60] sm:$0x40] %vm2687, %v2676
    %2695 = vst.msk [vmem:[#allocation9 + $0x70] sm:$0x40] %vm2687, %v2678
    %v2696 = vld [vmem:[#allocation4] sm:$0x8]
    %v2697 = vld [vmem:[#allocation4 + $0x8] sm:$0x8]
    %v2698 = vld [vmem:[#allocation4 + $0x10] sm:$0x8]
    %v2699 = vld [vmem:[#allocation4 + $0x18] sm:$0x8]
    %v2700 = vld [vmem:[#allocation4 + $0x20] sm:$0x8]
    %v2701 = vld [vmem:[#allocation4 + $0x28] sm:$0x8]
    %v2702 = vld [vmem:[#allocation4 + $0x30] sm:$0x8]
    %v2703 = vld [vmem:[#allocation4 + $0x38] sm:$0x8]
    %v2704 = vunpack.c.l.bf16 %v2696
    %v2705 = vunpack.c.l.bf16 %v2697
    %v2706 = vunpack.c.l.bf16 %v2698
    %v2707 = vunpack.c.l.bf16 %v2699
    %v2708 = vunpack.c.l.bf16 %v2700
    %v2709 = vunpack.c.l.bf16 %v2701
    %v2710 = vunpack.c.l.bf16 %v2702
    %v2711 = vunpack.c.l.bf16 %v2703
    %v2712 = vpack.c.bf16 %v2647, %v2647
    %v2713 = vpack.c.bf16 %v2648, %v2648
    %v2714 = vpack.c.bf16 %v2649, %v2649
    %v2715 = vpack.c.bf16 %v2650, %v2650
    %v2716 = vpack.c.bf16 %v2651, %v2651
    %v2717 = vpack.c.bf16 %v2652, %v2652
    %v2718 = vpack.c.bf16 %v2653, %v2653
    %v2719 = vpack.c.bf16 %v2654, %v2654
    %v2720 = vld [vmem:[#allocation7] sm:$0xf]
    %v2721 = vld [vmem:[#allocation7 + $0x4] sm:$0xf]
    %v2722 = vld [vmem:[#allocation7 + $0x8] sm:$0xf]
    %v2723 = vld [vmem:[#allocation7 + $0xc] sm:$0xf]
    %v2732 = vunpack.c.l.b16 %v2712
    %v2733 = vunpack.c.l.b16 %v2713
    %v2734 = vunpack.c.l.b16 %v2714
    %v2735 = vunpack.c.l.b16 %v2715
    %v2736 = vunpack.c.l.b16 %v2716
    %v2737 = vunpack.c.l.b16 %v2717
    %v2738 = vunpack.c.l.b16 %v2718
    %v2739 = vunpack.c.l.b16 %v2719
    %v2740 = vrot.slane %v2732, 6
    %v2741 = vrot.slane %v2733, 5
    %v2742 = vsel %vm448, %v2741, %v2740
    %v2743 = vrot.slane %v2734, 4
    %v2744 = vsel %vm451, %v2743, %v2742
    %v2745 = vrot.slane %v2735, 3
    %v2746 = vsel %vm454, %v2745, %v2744
    %v2747 = vrot.slane %v2736, 2
    %v2748 = vsel %vm457, %v2747, %v2746
    %v2749 = vrot.slane %v2737, 1
    %v2750 = vsel %vm460, %v2749, %v2748
    %v2751 = vsel %vm463, %v2738, %v2750
    %v2752 = vrot.slane %v2739, 7
    %v2753 = vsel %vm466, %v2752, %v2751
    %v2754 = vpack.c.b16 %v2753, %v2753
    %2755 = vrot.lane.b32.xlu0 %v2754, 64
    %v2756 = vpop.permute.xlu0 %2755
    %v2761 = vunpack.c.l.b16 %v2720
    %v2762 = vunpack.c.l.b16 %v2721
    %v2763 = vunpack.c.l.b16 %v2722
    %v2764 = vunpack.c.l.b16 %v2723
    %v2765 = vpack.c.b16 %v2762, %v2761
    %v2766 = vpack.c.b16 %v2764, %v2763
    %v2770 = vsel %vm86, %v2756, 0
    %2772 = vmatprep.subr.bf16.mxu0 0
    %2773 = vmatpush1.bf16.msra.mxu0 %v2765
    %2774 = vmatprep.subr.bf16.mxu0 0
    %2775 = vmatpush1.bf16.msra.mxu0 %v2766
    %2776 = vmatprep.subr.bf16.mxu0 0
    %2777 = vmatpush1.bf16.msra.mxu0 0
    %2778 = vmatprep.subr.bf16.mxu0 0
    %2779 = vmatpush1.bf16.msra.mxu0 0
    %2780 = vmatprep.subr.bf16.mxu0 0
    %2781 = vmatpush1.bf16.msra.mxu0 0
    %2782 = vmatprep.subr.bf16.mxu0 0
    %2783 = vmatpush1.bf16.msra.mxu0 0
    %2784 = vmatprep.subr.bf16.mxu0 0
    %2785 = vmatpush1.bf16.msra.mxu0 0
    %2786 = vmatprep.subr.bf16.mxu0 0
    %2787 = vmatpush1.bf16.msra.mxu0 0
    %2788 = vmatprep.subr.bf16.mxu0 0
    %2789 = vmatpush1.bf16.msra.mxu0 0
    %2790 = vmatprep.subr.bf16.mxu0 0
    %2791 = vmatpush1.bf16.msra.mxu0 0
    %2792 = vmatprep.subr.bf16.mxu0 0
    %2793 = vmatpush1.bf16.msra.mxu0 0
    %2794 = vmatprep.subr.bf16.mxu0 0
    %2795 = vmatpush1.bf16.msra.mxu0 0
    %2796 = vmatprep.subr.bf16.mxu0 0
    %2797 = vmatpush1.bf16.msra.mxu0 0
    %2798 = vmatprep.subr.bf16.mxu0 0
    %2799 = vmatpush1.bf16.msra.mxu0 0
    %2800 = vmatprep.subr.bf16.mxu0 0
    %2801 = vmatpush1.bf16.msra.mxu0 0
    %2802 = vmatprep.subr.bf16.mxu0 0
    %2803 = vmatpush1.bf16.msra.mxu0 0
    %2804 = vmatprep.mubr.bf16.mxu0 0
    %2805 = vmatmul.mubr.bf16.gmra.mrb[0].mxu0 %v2770
    %v2806 = vpop.f32.mrb[0].mxu0
    %v2807 = vadd.f32 0.0, %v2806
    %v2808 = vpop.f32.mrb[0].mxu0
    %v2809 = vpop.f32.mrb[0].mxu0
    %v2810 = vpop.f32.mrb[0].mxu0
    %2811 = vdwg.mxu0
    %v2813 = vrot.slane %v2807, 1
    %v2814 = vrot.slane %v2807, 2
    %v2815 = vrot.slane %v2807, 3
    %v2816 = vrot.slane %v2807, 4
    %v2817 = vrot.slane %v2807, 5
    %v2818 = vrot.slane %v2807, 6
    %v2819 = vrot.slane %v2807, 7
    %v2828 = vadd.f32 %v2704, %v2813
    %v2829 = vadd.f32 %v2705, %v2814
    %v2830 = vadd.f32 %v2706, %v2815
    %v2831 = vadd.f32 %v2707, %v2816
    %v2832 = vadd.f32 %v2708, %v2817
    %v2833 = vadd.f32 %v2709, %v2818
    %v2834 = vadd.f32 %v2710, %v2819
    %v2835 = vadd.f32 %v2711, %v2807
    %v2836 = vmul.f32 %v2828, 0.5
    %v2837 = vmul.f32 %v2829, 0.5
    %v2838 = vmul.f32 %v2830, 0.5
    %v2839 = vmul.f32 %v2831, 0.5
    %v2840 = vmul.f32 %v2832, 0.5
    %v2841 = vmul.f32 %v2833, 0.5
    %v2842 = vmul.f32 %v2834, 0.5
    %v2843 = vmul.f32 %v2835, 0.5
    %v2844 = vtanh.pop %v2836
    %v2845 = vtanh.pop %v2837
    %v2846 = vtanh.pop %v2838
    %v2847 = vtanh.pop %v2839
    %v2848 = vtanh.pop %v2840
    %v2849 = vtanh.pop %v2841
    %v2850 = vtanh.pop %v2842
    %v2851 = vtanh.pop %v2843
    %v2852 = vmul.f32 %v2844, 0.5
    %v2853 = vmul.f32 %v2845, 0.5
    %v2854 = vmul.f32 %v2846, 0.5
    %v2855 = vmul.f32 %v2847, 0.5
    %v2856 = vmul.f32 %v2848, 0.5
    %v2857 = vmul.f32 %v2849, 0.5
    %v2858 = vmul.f32 %v2850, 0.5
    %v2859 = vmul.f32 %v2851, 0.5
    %v2860 = vadd.f32 %v2852, 0.5
    %v2861 = vadd.f32 %v2853, 0.5
    %v2862 = vadd.f32 %v2854, 0.5
    %v2863 = vadd.f32 %v2855, 0.5
    %v2864 = vadd.f32 %v2856, 0.5
    %v2865 = vadd.f32 %v2857, 0.5
    %v2866 = vadd.f32 %v2858, 0.5
    %v2867 = vadd.f32 %v2859, 0.5
    %v2868 = vtanh.pop %v2828
    %v2869 = vtanh.pop %v2829
    %v2870 = vtanh.pop %v2830
    %v2871 = vtanh.pop %v2831
    %v2872 = vtanh.pop %v2832
    %v2873 = vtanh.pop %v2833
    %v2874 = vtanh.pop %v2834
    %v2875 = vtanh.pop %v2835
    %v2884 = vrot.slane %v2599, 7
    %v2885 = vrot.slane %v2600, 7
    %v2886 = vrot.slane %v2601, 7
    %v2887 = vrot.slane %v2602, 7
    %v2888 = vrot.slane %v2603, 7
    %v2889 = vrot.slane %v2604, 7
    %v2890 = vrot.slane %v2605, 7
    %v2891 = vrot.slane %v2606, 7
    %v2900 = vmul.f32 %v2860, %v2884
    %v2901 = vmul.f32 %v2861, %v2885
    %v2902 = vmul.f32 %v2862, %v2886
    %v2903 = vmul.f32 %v2863, %v2887
    %v2904 = vmul.f32 %v2864, %v2888
    %v2905 = vmul.f32 %v2865, %v2889
    %v2906 = vmul.f32 %v2866, %v2890
    %v2907 = vmul.f32 %v2867, %v2891
    %2916 = vrot.lane.b32.xlu0 %v2868, 32
    %v2917 = vpop.permute.xlu0 %2916
    %2918 = vrot.lane.b32.xlu0 %v2869, 32
    %v2919 = vpop.permute.xlu0 %2918
    %2920 = vrot.lane.b32.xlu0 %v2870, 32
    %v2921 = vpop.permute.xlu0 %2920
    %2922 = vrot.lane.b32.xlu0 %v2871, 32
    %v2923 = vpop.permute.xlu0 %2922
    %2924 = vrot.lane.b32.xlu0 %v2872, 32
    %v2925 = vpop.permute.xlu0 %2924
    %2926 = vrot.lane.b32.xlu0 %v2873, 32
    %v2927 = vpop.permute.xlu0 %2926
    %2928 = vrot.lane.b32.xlu0 %v2874, 32
    %v2929 = vpop.permute.xlu0 %2928
    %2930 = vrot.lane.b32.xlu0 %v2875, 32
    %v2931 = vpop.permute.xlu0 %2930
    %v2940 = vmul.f32 %v2860, %v2917
    %v2941 = vmul.f32 %v2861, %v2919
    %v2942 = vmul.f32 %v2862, %v2921
    %v2943 = vmul.f32 %v2863, %v2923
    %v2944 = vmul.f32 %v2864, %v2925
    %v2945 = vmul.f32 %v2865, %v2927
    %v2946 = vmul.f32 %v2866, %v2929
    %v2947 = vmul.f32 %v2867, %v2931
    %2956 = vrot.lane.b32.xlu0 %v2940, 32
    %v2957 = vpop.permute.xlu0 %2956
    %2958 = vrot.lane.b32.xlu0 %v2941, 32
    %v2959 = vpop.permute.xlu0 %2958
    %2960 = vrot.lane.b32.xlu0 %v2942, 32
    %v2961 = vpop.permute.xlu0 %2960
    %2962 = vrot.lane.b32.xlu0 %v2943, 32
    %v2963 = vpop.permute.xlu0 %2962
    %2964 = vrot.lane.b32.xlu0 %v2944, 32
    %v2965 = vpop.permute.xlu0 %2964
    %2966 = vrot.lane.b32.xlu0 %v2945, 32
    %v2967 = vpop.permute.xlu0 %2966
    %2968 = vrot.lane.b32.xlu0 %v2946, 32
    %v2969 = vpop.permute.xlu0 %2968
    %2970 = vrot.lane.b32.xlu0 %v2947, 32
    %v2971 = vpop.permute.xlu0 %2970
    %v2980 = vadd.f32 %v2900, %v2957
    %v2981 = vadd.f32 %v2901, %v2959
    %v2982 = vadd.f32 %v2902, %v2961
    %v2983 = vadd.f32 %v2903, %v2963
    %v2984 = vadd.f32 %v2904, %v2965
    %v2985 = vadd.f32 %v2905, %v2967
    %v2986 = vadd.f32 %v2906, %v2969
    %v2987 = vadd.f32 %v2907, %v2971
    %v2988 = vtanh.pop %v2980
    %v2989 = vtanh.pop %v2981
    %v2990 = vtanh.pop %v2982
    %v2991 = vtanh.pop %v2983
    %v2992 = vtanh.pop %v2984
    %v2993 = vtanh.pop %v2985
    %v2994 = vtanh.pop %v2986
    %v2995 = vtanh.pop %v2987
    %3004 = vrot.lane.b32.xlu0 %v2988, 32
    %v3005 = vpop.permute.xlu0 %3004
    %3006 = vrot.lane.b32.xlu0 %v2989, 32
    %v3007 = vpop.permute.xlu0 %3006
    %3008 = vrot.lane.b32.xlu0 %v2990, 32
    %v3009 = vpop.permute.xlu0 %3008
    %3010 = vrot.lane.b32.xlu0 %v2991, 32
    %v3011 = vpop.permute.xlu0 %3010
    %3012 = vrot.lane.b32.xlu0 %v2992, 32
    %v3013 = vpop.permute.xlu0 %3012
    %3014 = vrot.lane.b32.xlu0 %v2993, 32
    %v3015 = vpop.permute.xlu0 %3014
    %3016 = vrot.lane.b32.xlu0 %v2994, 32
    %v3017 = vpop.permute.xlu0 %3016
    %3018 = vrot.lane.b32.xlu0 %v2995, 32
    %v3019 = vpop.permute.xlu0 %3018
    %v3028 = vmul.f32 %v2860, %v3005
    %v3029 = vmul.f32 %v2861, %v3007
    %v3030 = vmul.f32 %v2862, %v3009
    %v3031 = vmul.f32 %v2863, %v3011
    %v3032 = vmul.f32 %v2864, %v3013
    %v3033 = vmul.f32 %v2865, %v3015
    %v3034 = vmul.f32 %v2866, %v3017
    %v3035 = vmul.f32 %v2867, %v3019
    %3044 = vrot.lane.b32.xlu0 %v3028, 64
    %v3045 = vpop.permute.xlu0 %3044
    %3046 = vrot.lane.b32.xlu0 %v3029, 64
    %v3047 = vpop.permute.xlu0 %3046
    %3048 = vrot.lane.b32.xlu0 %v3030, 64
    %v3049 = vpop.permute.xlu0 %3048
    %3050 = vrot.lane.b32.xlu0 %v3031, 64
    %v3051 = vpop.permute.xlu0 %3050
    %3052 = vrot.lane.b32.xlu0 %v3032, 64
    %v3053 = vpop.permute.xlu0 %3052
    %3054 = vrot.lane.b32.xlu0 %v3033, 64
    %v3055 = vpop.permute.xlu0 %3054
    %3056 = vrot.lane.b32.xlu0 %v3034, 64
    %v3057 = vpop.permute.xlu0 %3056
    %3058 = vrot.lane.b32.xlu0 %v3035, 64
    %v3059 = vpop.permute.xlu0 %3058
    %vm3068 = vcmask 261127
    %3069 = vst.msk [vmem:[#allocation9] sm:$0x80] %vm3068, %v3045
    %3070 = vst.msk [vmem:[#allocation9 + $0x10] sm:$0x80] %vm3068, %v3047
    %3071 = vst.msk [vmem:[#allocation9 + $0x20] sm:$0x80] %vm3068, %v3049
    %3072 = vst.msk [vmem:[#allocation9 + $0x30] sm:$0x80] %vm3068, %v3051
    %3073 = vst.msk [vmem:[#allocation9 + $0x40] sm:$0x80] %vm3068, %v3053
    %3074 = vst.msk [vmem:[#allocation9 + $0x50] sm:$0x80] %vm3068, %v3055
    %3075 = vst.msk [vmem:[#allocation9 + $0x60] sm:$0x80] %vm3068, %v3057
    %3076 = vst.msk [vmem:[#allocation9 + $0x70] sm:$0x80] %vm3068, %v3059
    // Predicated region
    $region22: #{tpu_custom_call.1} parent=1 // pred_check
      %p3077 = pneg %p44
    $region23: #{tpu_custom_call.1} parent=1 // pred_check_branch
      %3079 = sbr.rel (%p3077) target = $region25
    $region24: #{tpu_custom_call.1} parent=1 // pred_region
      %v3088 = vrot.slane %v2981, 7
      %v3089 = vrot.slane %v2982, 6
      %v3090 = vsel %vm448, %v3089, %v3088
      %v3091 = vrot.slane %v2983, 5
      %v3092 = vsel %vm451, %v3091, %v3090
      %v3093 = vrot.slane %v2984, 4
      %v3094 = vsel %vm454, %v3093, %v3092
      %v3095 = vrot.slane %v2985, 3
      %v3096 = vsel %vm457, %v3095, %v3094
      %v3097 = vrot.slane %v2986, 2
      %v3098 = vsel %vm460, %v3097, %v3096
      %v3099 = vrot.slane %v2987, 1
      %v3100 = vsel %vm463, %v3099, %v3098
      %3101 = vrot.lane.b32.xlu0 %v2980, 96
      %v3102 = vpop.permute.xlu0 %3101
      %3103 = vrot.lane.b32.xlu0 %v3100, 96
      %v3104 = vpop.permute.xlu0 %3103
      %3107 = vst.msk [vmem:[#allocation10 - $0x7] sm:$0x80] %vm3068, %v3102
      %vm3108 = vcmask 260096
      %3109 = vst.msk [vmem:[#allocation10 + $0x1] sm:$0x7f] %vm3108, %v3104
    $region25: #{tpu_custom_call.1} parent=1 // pred_fallthru
      _
    %v3110 = vld [vmem:[#allocation4 + $0x4] sm:$0x1]
    %v3111 = vld [vmem:[#allocation4 + $0xc] sm:$0x1]
    %v3112 = vld [vmem:[#allocation4 + $0x14] sm:$0x1]
    %v3113 = vld [vmem:[#allocation4 + $0x1c] sm:$0x1]
    %v3114 = vld [vmem:[#allocation4 + $0x24] sm:$0x1]
    %v3115 = vld [vmem:[#allocation4 + $0x2c] sm:$0x1]
    %v3116 = vld [vmem:[#allocation4 + $0x34] sm:$0x1]
    %v3117 = vld [vmem:[#allocation4 + $0x3c] sm:$0x1]
    %v3118 = vunpack.c.l.bf16 %v3110
    %v3119 = vunpack.c.l.bf16 %v3111
    %v3120 = vunpack.c.l.bf16 %v3112
    %v3121 = vunpack.c.l.bf16 %v3113
    %v3122 = vunpack.c.l.bf16 %v3114
    %v3123 = vunpack.c.l.bf16 %v3115
    %v3124 = vunpack.c.l.bf16 %v3116
    %v3125 = vunpack.c.l.bf16 %v3117
    %v3126 = vpack.c.bf16 %v3028, %v3028
    %v3127 = vpack.c.bf16 %v3029, %v3029
    %v3128 = vpack.c.bf16 %v3030, %v3030
    %v3129 = vpack.c.bf16 %v3031, %v3031
    %v3130 = vpack.c.bf16 %v3032, %v3032
    %v3131 = vpack.c.bf16 %v3033, %v3033
    %v3132 = vpack.c.bf16 %v3034, %v3034
    %v3133 = vpack.c.bf16 %v3035, %v3035
    %v3134 = vld [vmem:[#allocation7] sm:$0xf]
    %v3135 = vld [vmem:[#allocation7 + $0x4] sm:$0xf]
    %v3136 = vld [vmem:[#allocation7 + $0x8] sm:$0xf]
    %v3137 = vld [vmem:[#allocation7 + $0xc] sm:$0xf]
    %v3146 = vunpack.c.l.b16 %v3126
    %v3147 = vunpack.c.l.b16 %v3127
    %v3148 = vunpack.c.l.b16 %v3128
    %v3149 = vunpack.c.l.b16 %v3129
    %v3150 = vunpack.c.l.b16 %v3130
    %v3151 = vunpack.c.l.b16 %v3131
    %v3152 = vunpack.c.l.b16 %v3132
    %v3153 = vunpack.c.l.b16 %v3133
    %v3154 = vrot.slane %v3146, 7
    %v3155 = vrot.slane %v3147, 6
    %v3156 = vsel %vm448, %v3155, %v3154
    %v3157 = vrot.slane %v3148, 5
    %v3158 = vsel %vm451, %v3157, %v3156
    %v3159 = vrot.slane %v3149, 4
    %v3160 = vsel %vm454, %v3159, %v3158
    %v3161 = vrot.slane %v3150, 3
    %v3162 = vsel %vm457, %v3161, %v3160
    %v3163 = vrot.slane %v3151, 2
    %v3164 = vsel %vm460, %v3163, %v3162
    %v3165 = vrot.slane %v3152, 1
    %v3166 = vsel %vm463, %v3165, %v3164
    %v3167 = vsel %vm466, %v3153, %v3166
    %v3168 = vpack.c.b16 %v3167, %v3167
    %3169 = vrot.lane.b32.xlu0 %v3168, 64
    %v3170 = vpop.permute.xlu0 %3169
    %v3175 = vunpack.c.l.b16 %v3134
    %v3176 = vunpack.c.l.b16 %v3135
    %v3177 = vunpack.c.l.b16 %v3136
    %v3178 = vunpack.c.l.b16 %v3137
    %v3179 = vpack.c.b16 %v3176, %v3175
    %v3180 = vpack.c.b16 %v3178, %v3177
    %v3184 = vsel %vm86, %v3170, 0
    %3186 = vmatprep.subr.bf16.mxu0 0
    %3187 = vmatpush1.bf16.msra.mxu0 %v3179
    %3188 = vmatprep.subr.bf16.mxu0 0
    %3189 = vmatpush1.bf16.msra.mxu0 %v3180
    %3190 = vmatprep.subr.bf16.mxu0 0
    %3191 = vmatpush1.bf16.msra.mxu0 0
    %3192 = vmatprep.subr.bf16.mxu0 0
    %3193 = vmatpush1.bf16.msra.mxu0 0
    %3194 = vmatprep.subr.bf16.mxu0 0
    %3195 = vmatpush1.bf16.msra.mxu0 0
    %3196 = vmatprep.subr.bf16.mxu0 0
    %3197 = vmatpush1.bf16.msra.mxu0 0
    %3198 = vmatprep.subr.bf16.mxu0 0
    %3199 = vmatpush1.bf16.msra.mxu0 0
    %3200 = vmatprep.subr.bf16.mxu0 0
    %3201 = vmatpush1.bf16.msra.mxu0 0
    %3202 = vmatprep.subr.bf16.mxu0 0
    %3203 = vmatpush1.bf16.msra.mxu0 0
    %3204 = vmatprep.subr.bf16.mxu0 0
    %3205 = vmatpush1.bf16.msra.mxu0 0
    %3206 = vmatprep.subr.bf16.mxu0 0
    %3207 = vmatpush1.bf16.msra.mxu0 0
    %3208 = vmatprep.subr.bf16.mxu0 0
    %3209 = vmatpush1.bf16.msra.mxu0 0
    %3210 = vmatprep.subr.bf16.mxu0 0
    %3211 = vmatpush1.bf16.msra.mxu0 0
    %3212 = vmatprep.subr.bf16.mxu0 0
    %3213 = vmatpush1.bf16.msra.mxu0 0
    %3214 = vmatprep.subr.bf16.mxu0 0
    %3215 = vmatpush1.bf16.msra.mxu0 0
    %3216 = vmatprep.subr.bf16.mxu0 0
    %3217 = vmatpush1.bf16.msra.mxu0 0
    %3218 = vmatprep.mubr.bf16.mxu0 0
    %3219 = vmatmul.mubr.bf16.gmra.mrb[0].mxu0 %v3184
    %v3220 = vpop.f32.mrb[0].mxu0
    %v3221 = vadd.f32 0.0, %v3220
    %v3222 = vpop.f32.mrb[0].mxu0
    %v3223 = vpop.f32.mrb[0].mxu0
    %v3224 = vpop.f32.mrb[0].mxu0
    %3225 = vdwg.mxu0
    %v3227 = vrot.slane %v3221, 1
    %v3228 = vrot.slane %v3221, 2
    %v3229 = vrot.slane %v3221, 3
    %v3230 = vrot.slane %v3221, 4
    %v3231 = vrot.slane %v3221, 5
    %v3232 = vrot.slane %v3221, 6
    %v3233 = vrot.slane %v3221, 7
    %v3242 = vadd.f32 %v3118, %v3221
    %v3243 = vadd.f32 %v3119, %v3227
    %v3244 = vadd.f32 %v3120, %v3228
    %v3245 = vadd.f32 %v3121, %v3229
    %v3246 = vadd.f32 %v3122, %v3230
    %v3247 = vadd.f32 %v3123, %v3231
    %v3248 = vadd.f32 %v3124, %v3232
    %v3249 = vadd.f32 %v3125, %v3233
    %v3250 = vmul.f32 %v3242, 0.5
    %v3251 = vmul.f32 %v3243, 0.5
    %v3252 = vmul.f32 %v3244, 0.5
    %v3253 = vmul.f32 %v3245, 0.5
    %v3254 = vmul.f32 %v3246, 0.5
    %v3255 = vmul.f32 %v3247, 0.5
    %v3256 = vmul.f32 %v3248, 0.5
    %v3257 = vmul.f32 %v3249, 0.5
    %v3258 = vtanh.pop %v3250
    %v3259 = vtanh.pop %v3251
    %v3260 = vtanh.pop %v3252
    %v3261 = vtanh.pop %v3253
    %v3262 = vtanh.pop %v3254
    %v3263 = vtanh.pop %v3255
    %v3264 = vtanh.pop %v3256
    %v3265 = vtanh.pop %v3257
    %v3266 = vmul.f32 %v3258, 0.5
    %v3267 = vmul.f32 %v3259, 0.5
    %v3268 = vmul.f32 %v3260, 0.5
    %v3269 = vmul.f32 %v3261, 0.5
    %v3270 = vmul.f32 %v3262, 0.5
    %v3271 = vmul.f32 %v3263, 0.5
    %v3272 = vmul.f32 %v3264, 0.5
    %v3273 = vmul.f32 %v3265, 0.5
    %v3274 = vadd.f32 %v3266, 0.5
    %v3275 = vadd.f32 %v3267, 0.5
    %v3276 = vadd.f32 %v3268, 0.5
    %v3277 = vadd.f32 %v3269, 0.5
    %v3278 = vadd.f32 %v3270, 0.5
    %v3279 = vadd.f32 %v3271, 0.5
    %v3280 = vadd.f32 %v3272, 0.5
    %v3281 = vadd.f32 %v3273, 0.5
    %v3282 = vtanh.pop %v3242
    %v3283 = vtanh.pop %v3243
    %v3284 = vtanh.pop %v3244
    %v3285 = vtanh.pop %v3245
    %v3286 = vtanh.pop %v3246
    %v3287 = vtanh.pop %v3247
    %v3288 = vtanh.pop %v3248
    %v3289 = vtanh.pop %v3249
    %v3298 = vrot.slane %v2980, 7
    %v3299 = vrot.slane %v2981, 7
    %v3300 = vrot.slane %v2982, 7
    %v3301 = vrot.slane %v2983, 7
    %v3302 = vrot.slane %v2984, 7
    %v3303 = vrot.slane %v2985, 7
    %v3304 = vrot.slane %v2986, 7
    %v3305 = vrot.slane %v2987, 7
    %v3314 = vmul.f32 %v3274, %v3298
    %v3315 = vmul.f32 %v3275, %v3299
    %v3316 = vmul.f32 %v3276, %v3300
    %v3317 = vmul.f32 %v3277, %v3301
    %v3318 = vmul.f32 %v3278, %v3302
    %v3319 = vmul.f32 %v3279, %v3303
    %v3320 = vmul.f32 %v3280, %v3304
    %v3321 = vmul.f32 %v3281, %v3305
    %3330 = vrot.lane.b32.xlu0 %v3282, 32
    %v3331 = vpop.permute.xlu0 %3330
    %3332 = vrot.lane.b32.xlu0 %v3283, 32
    %v3333 = vpop.permute.xlu0 %3332
    %3334 = vrot.lane.b32.xlu0 %v3284, 32
    %v3335 = vpop.permute.xlu0 %3334
    %3336 = vrot.lane.b32.xlu0 %v3285, 32
    %v3337 = vpop.permute.xlu0 %3336
    %3338 = vrot.lane.b32.xlu0 %v3286, 32
    %v3339 = vpop.permute.xlu0 %3338
    %3340 = vrot.lane.b32.xlu0 %v3287, 32
    %v3341 = vpop.permute.xlu0 %3340
    %3342 = vrot.lane.b32.xlu0 %v3288, 32
    %v3343 = vpop.permute.xlu0 %3342
    %3344 = vrot.lane.b32.xlu0 %v3289, 32
    %v3345 = vpop.permute.xlu0 %3344
    %v3354 = vmul.f32 %v3274, %v3331
    %v3355 = vmul.f32 %v3275, %v3333
    %v3356 = vmul.f32 %v3276, %v3335
    %v3357 = vmul.f32 %v3277, %v3337
    %v3358 = vmul.f32 %v3278, %v3339
    %v3359 = vmul.f32 %v3279, %v3341
    %v3360 = vmul.f32 %v3280, %v3343
    %v3361 = vmul.f32 %v3281, %v3345
    %3370 = vrot.lane.b32.xlu0 %v3354, 32
    %v3371 = vpop.permute.xlu0 %3370
    %3372 = vrot.lane.b32.xlu0 %v3355, 32
    %v3373 = vpop.permute.xlu0 %3372
    %3374 = vrot.lane.b32.xlu0 %v3356, 32
    %v3375 = vpop.permute.xlu0 %3374
    %3376 = vrot.lane.b32.xlu0 %v3357, 32
    %v3377 = vpop.permute.xlu0 %3376
    %3378 = vrot.lane.b32.xlu0 %v3358, 32
    %v3379 = vpop.permute.xlu0 %3378
    %3380 = vrot.lane.b32.xlu0 %v3359, 32
    %v3381 = vpop.permute.xlu0 %3380
    %3382 = vrot.lane.b32.xlu0 %v3360, 32
    %v3383 = vpop.permute.xlu0 %3382
    %3384 = vrot.lane.b32.xlu0 %v3361, 32
    %v3385 = vpop.permute.xlu0 %3384
    %v3394 = vadd.f32 %v3314, %v3371
    %v3395 = vadd.f32 %v3315, %v3373
    %v3396 = vadd.f32 %v3316, %v3375
    %v3397 = vadd.f32 %v3317, %v3377
    %v3398 = vadd.f32 %v3318, %v3379
    %v3399 = vadd.f32 %v3319, %v3381
    %v3400 = vadd.f32 %v3320, %v3383
    %v3401 = vadd.f32 %v3321, %v3385
    %v3402 = vtanh.pop %v3394
    %v3403 = vtanh.pop %v3395
    %v3404 = vtanh.pop %v3396
    %v3405 = vtanh.pop %v3397
    %v3406 = vtanh.pop %v3398
    %v3407 = vtanh.pop %v3399
    %v3408 = vtanh.pop %v3400
    %v3409 = vtanh.pop %v3401
    %3418 = vrot.lane.b32.xlu0 %v3402, 32
    %v3419 = vpop.permute.xlu0 %3418
    %3420 = vrot.lane.b32.xlu0 %v3403, 32
    %v3421 = vpop.permute.xlu0 %3420
    %3422 = vrot.lane.b32.xlu0 %v3404, 32
    %v3423 = vpop.permute.xlu0 %3422
    %3424 = vrot.lane.b32.xlu0 %v3405, 32
    %v3425 = vpop.permute.xlu0 %3424
    %3426 = vrot.lane.b32.xlu0 %v3406, 32
    %v3427 = vpop.permute.xlu0 %3426
    %3428 = vrot.lane.b32.xlu0 %v3407, 32
    %v3429 = vpop.permute.xlu0 %3428
    %3430 = vrot.lane.b32.xlu0 %v3408, 32
    %v3431 = vpop.permute.xlu0 %3430
    %3432 = vrot.lane.b32.xlu0 %v3409, 32
    %v3433 = vpop.permute.xlu0 %3432
    %v3442 = vmul.f32 %v3274, %v3419
    %v3443 = vmul.f32 %v3275, %v3421
    %v3444 = vmul.f32 %v3276, %v3423
    %v3445 = vmul.f32 %v3277, %v3425
    %v3446 = vmul.f32 %v3278, %v3427
    %v3447 = vmul.f32 %v3279, %v3429
    %v3448 = vmul.f32 %v3280, %v3431
    %v3449 = vmul.f32 %v3281, %v3433
    %3458 = vrot.lane.b32.xlu0 %v3442, 64
    %v3459 = vpop.permute.xlu0 %3458
    %3460 = vrot.lane.b32.xlu0 %v3443, 64
    %v3461 = vpop.permute.xlu0 %3460
    %3462 = vrot.lane.b32.xlu0 %v3444, 64
    %v3463 = vpop.permute.xlu0 %3462
    %3464 = vrot.lane.b32.xlu0 %v3445, 64
    %v3465 = vpop.permute.xlu0 %3464
    %3466 = vrot.lane.b32.xlu0 %v3446, 64
    %v3467 = vpop.permute.xlu0 %3466
    %3468 = vrot.lane.b32.xlu0 %v3447, 64
    %v3469 = vpop.permute.xlu0 %3468
    %3470 = vrot.lane.b32.xlu0 %v3448, 64
    %v3471 = vpop.permute.xlu0 %3470
    %3472 = vrot.lane.b32.xlu0 %v3449, 64
    %v3473 = vpop.permute.xlu0 %3472
    %3482 = vst.msk [vmem:[#allocation9 + $0x8] sm:$0x1] %vm394, %v3459
    %3483 = vst.msk [vmem:[#allocation9 + $0x18] sm:$0x1] %vm394, %v3461
    %3484 = vst.msk [vmem:[#allocation9 + $0x28] sm:$0x1] %vm394, %v3463
    %3485 = vst.msk [vmem:[#allocation9 + $0x38] sm:$0x1] %vm394, %v3465
    %3486 = vst.msk [vmem:[#allocation9 + $0x48] sm:$0x1] %vm394, %v3467
    %3487 = vst.msk [vmem:[#allocation9 + $0x58] sm:$0x1] %vm394, %v3469
    %3488 = vst.msk [vmem:[#allocation9 + $0x68] sm:$0x1] %vm394, %v3471
    %3489 = vst.msk [vmem:[#allocation9 + $0x78] sm:$0x1] %vm394, %v3473
    %v3490 = vld [vmem:[#allocation4 + $0x4] sm:$0x1]
    %v3491 = vld [vmem:[#allocation4 + $0xc] sm:$0x1]
    %v3492 = vld [vmem:[#allocation4 + $0x14] sm:$0x1]
    %v3493 = vld [vmem:[#allocation4 + $0x1c] sm:$0x1]
    %v3494 = vld [vmem:[#allocation4 + $0x24] sm:$0x1]
    %v3495 = vld [vmem:[#allocation4 + $0x2c] sm:$0x1]
    %v3496 = vld [vmem:[#allocation4 + $0x34] sm:$0x1]
    %v3497 = vld [vmem:[#allocation4 + $0x3c] sm:$0x1]
    %v3498 = vunpack.c.l.bf16 %v3490
    %v3499 = vunpack.c.l.bf16 %v3491
    %v3500 = vunpack.c.l.bf16 %v3492
    %v3501 = vunpack.c.l.bf16 %v3493
    %v3502 = vunpack.c.l.bf16 %v3494
    %v3503 = vunpack.c.l.bf16 %v3495
    %v3504 = vunpack.c.l.bf16 %v3496
    %v3505 = vunpack.c.l.bf16 %v3497
    %v3506 = vpack.c.bf16 %v3442, %v3442
    %v3507 = vpack.c.bf16 %v3443, %v3443
    %v3508 = vpack.c.bf16 %v3444, %v3444
    %v3509 = vpack.c.bf16 %v3445, %v3445
    %v3510 = vpack.c.bf16 %v3446, %v3446
    %v3511 = vpack.c.bf16 %v3447, %v3447
    %v3512 = vpack.c.bf16 %v3448, %v3448
    %v3513 = vpack.c.bf16 %v3449, %v3449
    %v3514 = vld [vmem:[#allocation7] sm:$0xf]
    %v3515 = vld [vmem:[#allocation7 + $0x4] sm:$0xf]
    %v3516 = vld [vmem:[#allocation7 + $0x8] sm:$0xf]
    %v3517 = vld [vmem:[#allocation7 + $0xc] sm:$0xf]
    %v3526 = vunpack.c.l.b16 %v3506
    %v3527 = vunpack.c.l.b16 %v3507
    %v3528 = vunpack.c.l.b16 %v3508
    %v3529 = vunpack.c.l.b16 %v3509
    %v3530 = vunpack.c.l.b16 %v3510
    %v3531 = vunpack.c.l.b16 %v3511
    %v3532 = vunpack.c.l.b16 %v3512
    %v3533 = vunpack.c.l.b16 %v3513
    %v3534 = vrot.slane %v3527, 7
    %v3535 = vsel %vm448, %v3534, %v3526
    %v3536 = vrot.slane %v3528, 6
    %v3537 = vsel %vm451, %v3536, %v3535
    %v3538 = vrot.slane %v3529, 5
    %v3539 = vsel %vm454, %v3538, %v3537
    %v3540 = vrot.slane %v3530, 4
    %v3541 = vsel %vm457, %v3540, %v3539
    %v3542 = vrot.slane %v3531, 3
    %v3543 = vsel %vm460, %v3542, %v3541
    %v3544 = vrot.slane %v3532, 2
    %v3545 = vsel %vm463, %v3544, %v3543
    %v3546 = vrot.slane %v3533, 1
    %v3547 = vsel %vm466, %v3546, %v3545
    %v3548 = vpack.c.b16 %v3547, %v3547
    %3549 = vrot.lane.b32.xlu0 %v3548, 64
    %v3550 = vpop.permute.xlu0 %3549
    %v3555 = vunpack.c.l.b16 %v3514
    %v3556 = vunpack.c.l.b16 %v3515
    %v3557 = vunpack.c.l.b16 %v3516
    %v3558 = vunpack.c.l.b16 %v3517
    %v3559 = vpack.c.b16 %v3556, %v3555
    %v3560 = vpack.c.b16 %v3558, %v3557
    %v3564 = vsel %vm86, %v3550, 0
    %3566 = vmatprep.subr.bf16.mxu0 0
    %3567 = vmatpush1.bf16.msra.mxu0 %v3559
    %3568 = vmatprep.subr.bf16.mxu0 0
    %3569 = vmatpush1.bf16.msra.mxu0 %v3560
    %3570 = vmatprep.subr.bf16.mxu0 0
    %3571 = vmatpush1.bf16.msra.mxu0 0
    %3572 = vmatprep.subr.bf16.mxu0 0
    %3573 = vmatpush1.bf16.msra.mxu0 0
    %3574 = vmatprep.subr.bf16.mxu0 0
    %3575 = vmatpush1.bf16.msra.mxu0 0
    %3576 = vmatprep.subr.bf16.mxu0 0
    %3577 = vmatpush1.bf16.msra.mxu0 0
    %3578 = vmatprep.subr.bf16.mxu0 0
    %3579 = vmatpush1.bf16.msra.mxu0 0
    %3580 = vmatprep.subr.bf16.mxu0 0
    %3581 = vmatpush1.bf16.msra.mxu0 0
    %3582 = vmatprep.subr.bf16.mxu0 0
    %3583 = vmatpush1.bf16.msra.mxu0 0
    %3584 = vmatprep.subr.bf16.mxu0 0
    %3585 = vmatpush1.bf16.msra.mxu0 0
    %3586 = vmatprep.subr.bf16.mxu0 0
    %3587 = vmatpush1.bf16.msra.mxu0 0
    %3588 = vmatprep.subr.bf16.mxu0 0
    %3589 = vmatpush1.bf16.msra.mxu0 0
    %3590 = vmatprep.subr.bf16.mxu0 0
    %3591 = vmatpush1.bf16.msra.mxu0 0
    %3592 = vmatprep.subr.bf16.mxu0 0
    %3593 = vmatpush1.bf16.msra.mxu0 0
    %3594 = vmatprep.subr.bf16.mxu0 0
    %3595 = vmatpush1.bf16.msra.mxu0 0
    %3596 = vmatprep.subr.bf16.mxu0 0
    %3597 = vmatpush1.bf16.msra.mxu0 0
    %3598 = vmatprep.mubr.bf16.mxu0 0
    %3599 = vmatmul.mubr.bf16.gmra.mrb[0].mxu0 %v3564
    %v3600 = vpop.f32.mrb[0].mxu0
    %v3601 = vadd.f32 0.0, %v3600
    %v3602 = vpop.f32.mrb[0].mxu0
    %v3603 = vpop.f32.mrb[0].mxu0
    %v3604 = vpop.f32.mrb[0].mxu0
    %3605 = vdwg.mxu0
    %v3607 = vrot.slane %v3601, 7
    %v3608 = vrot.slane %v3601, 1
    %v3609 = vrot.slane %v3601, 2
    %v3610 = vrot.slane %v3601, 3
    %v3611 = vrot.slane %v3601, 4
    %v3612 = vrot.slane %v3601, 5
    %v3613 = vrot.slane %v3601, 6
    %v3622 = vadd.f32 %v3498, %v3607
    %v3623 = vadd.f32 %v3499, %v3601
    %v3624 = vadd.f32 %v3500, %v3608
    %v3625 = vadd.f32 %v3501, %v3609
    %v3626 = vadd.f32 %v3502, %v3610
    %v3627 = vadd.f32 %v3503, %v3611
    %v3628 = vadd.f32 %v3504, %v3612
    %v3629 = vadd.f32 %v3505, %v3613
    %v3630 = vmul.f32 %v3622, 0.5
    %v3631 = vmul.f32 %v3623, 0.5
    %v3632 = vmul.f32 %v3624, 0.5
    %v3633 = vmul.f32 %v3625, 0.5
    %v3634 = vmul.f32 %v3626, 0.5
    %v3635 = vmul.f32 %v3627, 0.5
    %v3636 = vmul.f32 %v3628, 0.5
    %v3637 = vmul.f32 %v3629, 0.5
    %v3638 = vtanh.pop %v3630
    %v3639 = vtanh.pop %v3631
    %v3640 = vtanh.pop %v3632
    %v3641 = vtanh.pop %v3633
    %v3642 = vtanh.pop %v3634
    %v3643 = vtanh.pop %v3635
    %v3644 = vtanh.pop %v3636
    %v3645 = vtanh.pop %v3637
    %v3646 = vmul.f32 %v3638, 0.5
    %v3647 = vmul.f32 %v3639, 0.5
    %v3648 = vmul.f32 %v3640, 0.5
    %v3649 = vmul.f32 %v3641, 0.5
    %v3650 = vmul.f32 %v3642, 0.5
    %v3651 = vmul.f32 %v3643, 0.5
    %v3652 = vmul.f32 %v3644, 0.5
    %v3653 = vmul.f32 %v3645, 0.5
    %v3654 = vadd.f32 %v3646, 0.5
    %v3655 = vadd.f32 %v3647, 0.5
    %v3656 = vadd.f32 %v3648, 0.5
    %v3657 = vadd.f32 %v3649, 0.5
    %v3658 = vadd.f32 %v3650, 0.5
    %v3659 = vadd.f32 %v3651, 0.5
    %v3660 = vadd.f32 %v3652, 0.5
    %v3661 = vadd.f32 %v3653, 0.5
    %v3662 = vtanh.pop %v3622
    %v3663 = vtanh.pop %v3623
    %v3664 = vtanh.pop %v3624
    %v3665 = vtanh.pop %v3625
    %v3666 = vtanh.pop %v3626
    %v3667 = vtanh.pop %v3627
    %v3668 = vtanh.pop %v3628
    %v3669 = vtanh.pop %v3629
    %v3678 = vrot.slane %v3394, 7
    %v3679 = vrot.slane %v3395, 7
    %v3680 = vrot.slane %v3396, 7
    %v3681 = vrot.slane %v3397, 7
    %v3682 = vrot.slane %v3398, 7
    %v3683 = vrot.slane %v3399, 7
    %v3684 = vrot.slane %v3400, 7
    %v3685 = vrot.slane %v3401, 7
    %v3694 = vmul.f32 %v3654, %v3678
    %v3695 = vmul.f32 %v3655, %v3679
    %v3696 = vmul.f32 %v3656, %v3680
    %v3697 = vmul.f32 %v3657, %v3681
    %v3698 = vmul.f32 %v3658, %v3682
    %v3699 = vmul.f32 %v3659, %v3683
    %v3700 = vmul.f32 %v3660, %v3684
    %v3701 = vmul.f32 %v3661, %v3685
    %3710 = vrot.lane.b32.xlu0 %v3662, 32
    %v3711 = vpop.permute.xlu0 %3710
    %3712 = vrot.lane.b32.xlu0 %v3663, 32
    %v3713 = vpop.permute.xlu0 %3712
    %3714 = vrot.lane.b32.xlu0 %v3664, 32
    %v3715 = vpop.permute.xlu0 %3714
    %3716 = vrot.lane.b32.xlu0 %v3665, 32
    %v3717 = vpop.permute.xlu0 %3716
    %3718 = vrot.lane.b32.xlu0 %v3666, 32
    %v3719 = vpop.permute.xlu0 %3718
    %3720 = vrot.lane.b32.xlu0 %v3667, 32
    %v3721 = vpop.permute.xlu0 %3720
    %3722 = vrot.lane.b32.xlu0 %v3668, 32
    %v3723 = vpop.permute.xlu0 %3722
    %3724 = vrot.lane.b32.xlu0 %v3669, 32
    %v3725 = vpop.permute.xlu0 %3724
    %v3734 = vmul.f32 %v3654, %v3711
    %v3735 = vmul.f32 %v3655, %v3713
    %v3736 = vmul.f32 %v3656, %v3715
    %v3737 = vmul.f32 %v3657, %v3717
    %v3738 = vmul.f32 %v3658, %v3719
    %v3739 = vmul.f32 %v3659, %v3721
    %v3740 = vmul.f32 %v3660, %v3723
    %v3741 = vmul.f32 %v3661, %v3725
    %3750 = vrot.lane.b32.xlu0 %v3734, 32
    %v3751 = vpop.permute.xlu0 %3750
    %3752 = vrot.lane.b32.xlu0 %v3735, 32
    %v3753 = vpop.permute.xlu0 %3752
    %3754 = vrot.lane.b32.xlu0 %v3736, 32
    %v3755 = vpop.permute.xlu0 %3754
    %3756 = vrot.lane.b32.xlu0 %v3737, 32
    %v3757 = vpop.permute.xlu0 %3756
    %3758 = vrot.lane.b32.xlu0 %v3738, 32
    %v3759 = vpop.permute.xlu0 %3758
    %3760 = vrot.lane.b32.xlu0 %v3739, 32
    %v3761 = vpop.permute.xlu0 %3760
    %3762 = vrot.lane.b32.xlu0 %v3740, 32
    %v3763 = vpop.permute.xlu0 %3762
    %3764 = vrot.lane.b32.xlu0 %v3741, 32
    %v3765 = vpop.permute.xlu0 %3764
    %v3774 = vadd.f32 %v3694, %v3751
    %v3775 = vadd.f32 %v3695, %v3753
    %v3776 = vadd.f32 %v3696, %v3755
    %v3777 = vadd.f32 %v3697, %v3757
    %v3778 = vadd.f32 %v3698, %v3759
    %v3779 = vadd.f32 %v3699, %v3761
    %v3780 = vadd.f32 %v3700, %v3763
    %v3781 = vadd.f32 %v3701, %v3765
    %v3782 = vtanh.pop %v3774
    %v3783 = vtanh.pop %v3775
    %v3784 = vtanh.pop %v3776
    %v3785 = vtanh.pop %v3777
    %v3786 = vtanh.pop %v3778
    %v3787 = vtanh.pop %v3779
    %v3788 = vtanh.pop %v3780
    %v3789 = vtanh.pop %v3781
    %3798 = vrot.lane.b32.xlu0 %v3782, 32
    %v3799 = vpop.permute.xlu0 %3798
    %3800 = vrot.lane.b32.xlu0 %v3783, 32
    %v3801 = vpop.permute.xlu0 %3800
    %3802 = vrot.lane.b32.xlu0 %v3784, 32
    %v3803 = vpop.permute.xlu0 %3802
    %3804 = vrot.lane.b32.xlu0 %v3785, 32
    %v3805 = vpop.permute.xlu0 %3804
    %3806 = vrot.lane.b32.xlu0 %v3786, 32
    %v3807 = vpop.permute.xlu0 %3806
    %3808 = vrot.lane.b32.xlu0 %v3787, 32
    %v3809 = vpop.permute.xlu0 %3808
    %3810 = vrot.lane.b32.xlu0 %v3788, 32
    %v3811 = vpop.permute.xlu0 %3810
    %3812 = vrot.lane.b32.xlu0 %v3789, 32
    %v3813 = vpop.permute.xlu0 %3812
    %v3822 = vmul.f32 %v3654, %v3799
    %v3823 = vmul.f32 %v3655, %v3801
    %v3824 = vmul.f32 %v3656, %v3803
    %v3825 = vmul.f32 %v3657, %v3805
    %v3826 = vmul.f32 %v3658, %v3807
    %v3827 = vmul.f32 %v3659, %v3809
    %v3828 = vmul.f32 %v3660, %v3811
    %v3829 = vmul.f32 %v3661, %v3813
    %3838 = vrot.lane.b32.xlu0 %v3822, 64
    %v3839 = vpop.permute.xlu0 %3838
    %3840 = vrot.lane.b32.xlu0 %v3823, 64
    %v3841 = vpop.permute.xlu0 %3840
    %3842 = vrot.lane.b32.xlu0 %v3824, 64
    %v3843 = vpop.permute.xlu0 %3842
    %3844 = vrot.lane.b32.xlu0 %v3825, 64
    %v3845 = vpop.permute.xlu0 %3844
    %3846 = vrot.lane.b32.xlu0 %v3826, 64
    %v3847 = vpop.permute.xlu0 %3846
    %3848 = vrot.lane.b32.xlu0 %v3827, 64
    %v3849 = vpop.permute.xlu0 %3848
    %3850 = vrot.lane.b32.xlu0 %v3828, 64
    %v3851 = vpop.permute.xlu0 %3850
    %3852 = vrot.lane.b32.xlu0 %v3829, 64
    %v3853 = vpop.permute.xlu0 %3852
    %3862 = vst.msk [vmem:[#allocation9 + $0x8] sm:$0x2] %vm782, %v3839
    %3863 = vst.msk [vmem:[#allocation9 + $0x18] sm:$0x2] %vm782, %v3841
    %3864 = vst.msk [vmem:[#allocation9 + $0x28] sm:$0x2] %vm782, %v3843
    %3865 = vst.msk [vmem:[#allocation9 + $0x38] sm:$0x2] %vm782, %v3845
    %3866 = vst.msk [vmem:[#allocation9 + $0x48] sm:$0x2] %vm782, %v3847
    %3867 = vst.msk [vmem:[#allocation9 + $0x58] sm:$0x2] %vm782, %v3849
    %3868 = vst.msk [vmem:[#allocation9 + $0x68] sm:$0x2] %vm782, %v3851
    %3869 = vst.msk [vmem:[#allocation9 + $0x78] sm:$0x2] %vm782, %v3853
    %v3870 = vld [vmem:[#allocation4 + $0x4] sm:$0x2]
    %v3871 = vld [vmem:[#allocation4 + $0xc] sm:$0x2]
    %v3872 = vld [vmem:[#allocation4 + $0x14] sm:$0x2]
    %v3873 = vld [vmem:[#allocation4 + $0x1c] sm:$0x2]
    %v3874 = vld [vmem:[#allocation4 + $0x24] sm:$0x2]
    %v3875 = vld [vmem:[#allocation4 + $0x2c] sm:$0x2]
    %v3876 = vld [vmem:[#allocation4 + $0x34] sm:$0x2]
    %v3877 = vld [vmem:[#allocation4 + $0x3c] sm:$0x2]
    %v3878 = vunpack.c.l.bf16 %v3870
    %v3879 = vunpack.c.l.bf16 %v3871
    %v3880 = vunpack.c.l.bf16 %v3872
    %v3881 = vunpack.c.l.bf16 %v3873
    %v3882 = vunpack.c.l.bf16 %v3874
    %v3883 = vunpack.c.l.bf16 %v3875
    %v3884 = vunpack.c.l.bf16 %v3876
    %v3885 = vunpack.c.l.bf16 %v3877
    %v3886 = vpack.c.bf16 %v3822, %v3822
    %v3887 = vpack.c.bf16 %v3823, %v3823
    %v3888 = vpack.c.bf16 %v3824, %v3824
    %v3889 = vpack.c.bf16 %v3825, %v3825
    %v3890 = vpack.c.bf16 %v3826, %v3826
    %v3891 = vpack.c.bf16 %v3827, %v3827
    %v3892 = vpack.c.bf16 %v3828, %v3828
    %v3893 = vpack.c.bf16 %v3829, %v3829
    %v3894 = vld [vmem:[#allocation7] sm:$0xf]
    %v3895 = vld [vmem:[#allocation7 + $0x4] sm:$0xf]
    %v3896 = vld [vmem:[#allocation7 + $0x8] sm:$0xf]
    %v3897 = vld [vmem:[#allocation7 + $0xc] sm:$0xf]
    %v3906 = vunpack.c.l.b16 %v3886
    %v3907 = vunpack.c.l.b16 %v3887
    %v3908 = vunpack.c.l.b16 %v3888
    %v3909 = vunpack.c.l.b16 %v3889
    %v3910 = vunpack.c.l.b16 %v3890
    %v3911 = vunpack.c.l.b16 %v3891
    %v3912 = vunpack.c.l.b16 %v3892
    %v3913 = vunpack.c.l.b16 %v3893
    %v3914 = vrot.slane %v3906, 1
    %v3915 = vsel %vm448, %v3907, %v3914
    %v3916 = vrot.slane %v3908, 7
    %v3917 = vsel %vm451, %v3916, %v3915
    %v3918 = vrot.slane %v3909, 6
    %v3919 = vsel %vm454, %v3918, %v3917
    %v3920 = vrot.slane %v3910, 5
    %v3921 = vsel %vm457, %v3920, %v3919
    %v3922 = vrot.slane %v3911, 4
    %v3923 = vsel %vm460, %v3922, %v3921
    %v3924 = vrot.slane %v3912, 3
    %v3925 = vsel %vm463, %v3924, %v3923
    %v3926 = vrot.slane %v3913, 2
    %v3927 = vsel %vm466, %v3926, %v3925
    %v3928 = vpack.c.b16 %v3927, %v3927
    %3929 = vrot.lane.b32.xlu0 %v3928, 64
    %v3930 = vpop.permute.xlu0 %3929
    %v3935 = vunpack.c.l.b16 %v3894
    %v3936 = vunpack.c.l.b16 %v3895
    %v3937 = vunpack.c.l.b16 %v3896
    %v3938 = vunpack.c.l.b16 %v3897
    %v3939 = vpack.c.b16 %v3936, %v3935
    %v3940 = vpack.c.b16 %v3938, %v3937
    %v3944 = vsel %vm86, %v3930, 0
    %3946 = vmatprep.subr.bf16.mxu0 0
    %3947 = vmatpush1.bf16.msra.mxu0 %v3939
    %3948 = vmatprep.subr.bf16.mxu0 0
    %3949 = vmatpush1.bf16.msra.mxu0 %v3940
    %3950 = vmatprep.subr.bf16.mxu0 0
    %3951 = vmatpush1.bf16.msra.mxu0 0
    %3952 = vmatprep.subr.bf16.mxu0 0
    %3953 = vmatpush1.bf16.msra.mxu0 0
    %3954 = vmatprep.subr.bf16.mxu0 0
    %3955 = vmatpush1.bf16.msra.mxu0 0
    %3956 = vmatprep.subr.bf16.mxu0 0
    %3957 = vmatpush1.bf16.msra.mxu0 0
    %3958 = vmatprep.subr.bf16.mxu0 0
    %3959 = vmatpush1.bf16.msra.mxu0 0
    %3960 = vmatprep.subr.bf16.mxu0 0
    %3961 = vmatpush1.bf16.msra.mxu0 0
    %3962 = vmatprep.subr.bf16.mxu0 0
    %3963 = vmatpush1.bf16.msra.mxu0 0
    %3964 = vmatprep.subr.bf16.mxu0 0
    %3965 = vmatpush1.bf16.msra.mxu0 0
    %3966 = vmatprep.subr.bf16.mxu0 0
    %3967 = vmatpush1.bf16.msra.mxu0 0
    %3968 = vmatprep.subr.bf16.mxu0 0
    %3969 = vmatpush1.bf16.msra.mxu0 0
    %3970 = vmatprep.subr.bf16.mxu0 0
    %3971 = vmatpush1.bf16.msra.mxu0 0
    %3972 = vmatprep.subr.bf16.mxu0 0
    %3973 = vmatpush1.bf16.msra.mxu0 0
    %3974 = vmatprep.subr.bf16.mxu0 0
    %3975 = vmatpush1.bf16.msra.mxu0 0
    %3976 = vmatprep.subr.bf16.mxu0 0
    %3977 = vmatpush1.bf16.msra.mxu0 0
    %3978 = vmatprep.mubr.bf16.mxu0 0
    %3979 = vmatmul.mubr.bf16.gmra.mrb[0].mxu0 %v3944
    %v3980 = vpop.f32.mrb[0].mxu0
    %v3981 = vadd.f32 0.0, %v3980
    %v3982 = vpop.f32.mrb[0].mxu0
    %v3983 = vpop.f32.mrb[0].mxu0
    %v3984 = vpop.f32.mrb[0].mxu0
    %3985 = vdwg.mxu0
    %v3987 = vrot.slane %v3981, 6
    %v3988 = vrot.slane %v3981, 7
    %v3989 = vrot.slane %v3981, 1
    %v3990 = vrot.slane %v3981, 2
    %v3991 = vrot.slane %v3981, 3
    %v3992 = vrot.slane %v3981, 4
    %v3993 = vrot.slane %v3981, 5
    %v4002 = vadd.f32 %v3878, %v3987
    %v4003 = vadd.f32 %v3879, %v3988
    %v4004 = vadd.f32 %v3880, %v3981
    %v4005 = vadd.f32 %v3881, %v3989
    %v4006 = vadd.f32 %v3882, %v3990
    %v4007 = vadd.f32 %v3883, %v3991
    %v4008 = vadd.f32 %v3884, %v3992
    %v4009 = vadd.f32 %v3885, %v3993
    %v4010 = vmul.f32 %v4002, 0.5
    %v4011 = vmul.f32 %v4003, 0.5
    %v4012 = vmul.f32 %v4004, 0.5
    %v4013 = vmul.f32 %v4005, 0.5
    %v4014 = vmul.f32 %v4006, 0.5
    %v4015 = vmul.f32 %v4007, 0.5
    %v4016 = vmul.f32 %v4008, 0.5
    %v4017 = vmul.f32 %v4009, 0.5
    %v4018 = vtanh.pop %v4010
    %v4019 = vtanh.pop %v4011
    %v4020 = vtanh.pop %v4012
    %v4021 = vtanh.pop %v4013
    %v4022 = vtanh.pop %v4014
    %v4023 = vtanh.pop %v4015
    %v4024 = vtanh.pop %v4016
    %v4025 = vtanh.pop %v4017
    %v4026 = vmul.f32 %v4018, 0.5
    %v4027 = vmul.f32 %v4019, 0.5
    %v4028 = vmul.f32 %v4020, 0.5
    %v4029 = vmul.f32 %v4021, 0.5
    %v4030 = vmul.f32 %v4022, 0.5
    %v4031 = vmul.f32 %v4023, 0.5
    %v4032 = vmul.f32 %v4024, 0.5
    %v4033 = vmul.f32 %v4025, 0.5
    %v4034 = vadd.f32 %v4026, 0.5
    %v4035 = vadd.f32 %v4027, 0.5
    %v4036 = vadd.f32 %v4028, 0.5
    %v4037 = vadd.f32 %v4029, 0.5
    %v4038 = vadd.f32 %v4030, 0.5
    %v4039 = vadd.f32 %v4031, 0.5
    %v4040 = vadd.f32 %v4032, 0.5
    %v4041 = vadd.f32 %v4033, 0.5
    %v4042 = vtanh.pop %v4002
    %v4043 = vtanh.pop %v4003
    %v4044 = vtanh.pop %v4004
    %v4045 = vtanh.pop %v4005
    %v4046 = vtanh.pop %v4006
    %v4047 = vtanh.pop %v4007
    %v4048 = vtanh.pop %v4008
    %v4049 = vtanh.pop %v4009
    %v4058 = vrot.slane %v3774, 7
    %v4059 = vrot.slane %v3775, 7
    %v4060 = vrot.slane %v3776, 7
    %v4061 = vrot.slane %v3777, 7
    %v4062 = vrot.slane %v3778, 7
    %v4063 = vrot.slane %v3779, 7
    %v4064 = vrot.slane %v3780, 7
    %v4065 = vrot.slane %v3781, 7
    %v4074 = vmul.f32 %v4034, %v4058
    %v4075 = vmul.f32 %v4035, %v4059
    %v4076 = vmul.f32 %v4036, %v4060
    %v4077 = vmul.f32 %v4037, %v4061
    %v4078 = vmul.f32 %v4038, %v4062
    %v4079 = vmul.f32 %v4039, %v4063
    %v4080 = vmul.f32 %v4040, %v4064
    %v4081 = vmul.f32 %v4041, %v4065
    %4090 = vrot.lane.b32.xlu0 %v4042, 32
    %v4091 = vpop.permute.xlu0 %4090
    %4092 = vrot.lane.b32.xlu0 %v4043, 32
    %v4093 = vpop.permute.xlu0 %4092
    %4094 = vrot.lane.b32.xlu0 %v4044, 32
    %v4095 = vpop.permute.xlu0 %4094
    %4096 = vrot.lane.b32.xlu0 %v4045, 32
    %v4097 = vpop.permute.xlu0 %4096
    %4098 = vrot.lane.b32.xlu0 %v4046, 32
    %v4099 = vpop.permute.xlu0 %4098
    %4100 = vrot.lane.b32.xlu0 %v4047, 32
    %v4101 = vpop.permute.xlu0 %4100
    %4102 = vrot.lane.b32.xlu0 %v4048, 32
    %v4103 = vpop.permute.xlu0 %4102
    %4104 = vrot.lane.b32.xlu0 %v4049, 32
    %v4105 = vpop.permute.xlu0 %4104
    %v4114 = vmul.f32 %v4034, %v4091
    %v4115 = vmul.f32 %v4035, %v4093
    %v4116 = vmul.f32 %v4036, %v4095
    %v4117 = vmul.f32 %v4037, %v4097
    %v4118 = vmul.f32 %v4038, %v4099
    %v4119 = vmul.f32 %v4039, %v4101
    %v4120 = vmul.f32 %v4040, %v4103
    %v4121 = vmul.f32 %v4041, %v4105
    %4130 = vrot.lane.b32.xlu0 %v4114, 32
    %v4131 = vpop.permute.xlu0 %4130
    %4132 = vrot.lane.b32.xlu0 %v4115, 32
    %v4133 = vpop.permute.xlu0 %4132
    %4134 = vrot.lane.b32.xlu0 %v4116, 32
    %v4135 = vpop.permute.xlu0 %4134
    %4136 = vrot.lane.b32.xlu0 %v4117, 32
    %v4137 = vpop.permute.xlu0 %4136
    %4138 = vrot.lane.b32.xlu0 %v4118, 32
    %v4139 = vpop.permute.xlu0 %4138
    %4140 = vrot.lane.b32.xlu0 %v4119, 32
    %v4141 = vpop.permute.xlu0 %4140
    %4142 = vrot.lane.b32.xlu0 %v4120, 32
    %v4143 = vpop.permute.xlu0 %4142
    %4144 = vrot.lane.b32.xlu0 %v4121, 32
    %v4145 = vpop.permute.xlu0 %4144
    %v4154 = vadd.f32 %v4074, %v4131
    %v4155 = vadd.f32 %v4075, %v4133
    %v4156 = vadd.f32 %v4076, %v4135
    %v4157 = vadd.f32 %v4077, %v4137
    %v4158 = vadd.f32 %v4078, %v4139
    %v4159 = vadd.f32 %v4079, %v4141
    %v4160 = vadd.f32 %v4080, %v4143
    %v4161 = vadd.f32 %v4081, %v4145
    %v4162 = vtanh.pop %v4154
    %v4163 = vtanh.pop %v4155
    %v4164 = vtanh.pop %v4156
    %v4165 = vtanh.pop %v4157
    %v4166 = vtanh.pop %v4158
    %v4167 = vtanh.pop %v4159
    %v4168 = vtanh.pop %v4160
    %v4169 = vtanh.pop %v4161
    %4178 = vrot.lane.b32.xlu0 %v4162, 32
    %v4179 = vpop.permute.xlu0 %4178
    %4180 = vrot.lane.b32.xlu0 %v4163, 32
    %v4181 = vpop.permute.xlu0 %4180
    %4182 = vrot.lane.b32.xlu0 %v4164, 32
    %v4183 = vpop.permute.xlu0 %4182
    %4184 = vrot.lane.b32.xlu0 %v4165, 32
    %v4185 = vpop.permute.xlu0 %4184
    %4186 = vrot.lane.b32.xlu0 %v4166, 32
    %v4187 = vpop.permute.xlu0 %4186
    %4188 = vrot.lane.b32.xlu0 %v4167, 32
    %v4189 = vpop.permute.xlu0 %4188
    %4190 = vrot.lane.b32.xlu0 %v4168, 32
    %v4191 = vpop.permute.xlu0 %4190
    %4192 = vrot.lane.b32.xlu0 %v4169, 32
    %v4193 = vpop.permute.xlu0 %4192
    %v4202 = vmul.f32 %v4034, %v4179
    %v4203 = vmul.f32 %v4035, %v4181
    %v4204 = vmul.f32 %v4036, %v4183
    %v4205 = vmul.f32 %v4037, %v4185
    %v4206 = vmul.f32 %v4038, %v4187
    %v4207 = vmul.f32 %v4039, %v4189
    %v4208 = vmul.f32 %v4040, %v4191
    %v4209 = vmul.f32 %v4041, %v4193
    %4218 = vrot.lane.b32.xlu0 %v4202, 64
    %v4219 = vpop.permute.xlu0 %4218
    %4220 = vrot.lane.b32.xlu0 %v4203, 64
    %v4221 = vpop.permute.xlu0 %4220
    %4222 = vrot.lane.b32.xlu0 %v4204, 64
    %v4223 = vpop.permute.xlu0 %4222
    %4224 = vrot.lane.b32.xlu0 %v4205, 64
    %v4225 = vpop.permute.xlu0 %4224
    %4226 = vrot.lane.b32.xlu0 %v4206, 64
    %v4227 = vpop.permute.xlu0 %4226
    %4228 = vrot.lane.b32.xlu0 %v4207, 64
    %v4229 = vpop.permute.xlu0 %4228
    %4230 = vrot.lane.b32.xlu0 %v4208, 64
    %v4231 = vpop.permute.xlu0 %4230
    %4232 = vrot.lane.b32.xlu0 %v4209, 64
    %v4233 = vpop.permute.xlu0 %4232
    %4242 = vst.msk [vmem:[#allocation9 + $0x8] sm:$0x4] %vm1163, %v4219
    %4243 = vst.msk [vmem:[#allocation9 + $0x18] sm:$0x4] %vm1163, %v4221
    %4244 = vst.msk [vmem:[#allocation9 + $0x28] sm:$0x4] %vm1163, %v4223
    %4245 = vst.msk [vmem:[#allocation9 + $0x38] sm:$0x4] %vm1163, %v4225
    %4246 = vst.msk [vmem:[#allocation9 + $0x48] sm:$0x4] %vm1163, %v4227
    %4247 = vst.msk [vmem:[#allocation9 + $0x58] sm:$0x4] %vm1163, %v4229
    %4248 = vst.msk [vmem:[#allocation9 + $0x68] sm:$0x4] %vm1163, %v4231
    %4249 = vst.msk [vmem:[#allocation9 + $0x78] sm:$0x4] %vm1163, %v4233
    %v4250 = vld [vmem:[#allocation4 + $0x4] sm:$0x2]
    %v4251 = vld [vmem:[#allocation4 + $0xc] sm:$0x2]
    %v4252 = vld [vmem:[#allocation4 + $0x14] sm:$0x2]
    %v4253 = vld [vmem:[#allocation4 + $0x1c] sm:$0x2]
    %v4254 = vld [vmem:[#allocation4 + $0x24] sm:$0x2]
    %v4255 = vld [vmem:[#allocation4 + $0x2c] sm:$0x2]
    %v4256 = vld [vmem:[#allocation4 + $0x34] sm:$0x2]
    %v4257 = vld [vmem:[#allocation4 + $0x3c] sm:$0x2]
    %v4258 = vunpack.c.l.bf16 %v4250
    %v4259 = vunpack.c.l.bf16 %v4251
    %v4260 = vunpack.c.l.bf16 %v4252
    %v4261 = vunpack.c.l.bf16 %v4253
    %v4262 = vunpack.c.l.bf16 %v4254
    %v4263 = vunpack.c.l.bf16 %v4255
    %v4264 = vunpack.c.l.bf16 %v4256
    %v4265 = vunpack.c.l.bf16 %v4257
    %v4266 = vpack.c.bf16 %v4202, %v4202
    %v4267 = vpack.c.bf16 %v4203, %v4203
    %v4268 = vpack.c.bf16 %v4204, %v4204
    %v4269 = vpack.c.bf16 %v4205, %v4205
    %v4270 = vpack.c.bf16 %v4206, %v4206
    %v4271 = vpack.c.bf16 %v4207, %v4207
    %v4272 = vpack.c.bf16 %v4208, %v4208
    %v4273 = vpack.c.bf16 %v4209, %v4209
    %v4274 = vld [vmem:[#allocation7] sm:$0xf]
    %v4275 = vld [vmem:[#allocation7 + $0x4] sm:$0xf]
    %v4276 = vld [vmem:[#allocation7 + $0x8] sm:$0xf]
    %v4277 = vld [vmem:[#allocation7 + $0xc] sm:$0xf]
    %v4286 = vunpack.c.l.b16 %v4266
    %v4287 = vunpack.c.l.b16 %v4267
    %v4288 = vunpack.c.l.b16 %v4268
    %v4289 = vunpack.c.l.b16 %v4269
    %v4290 = vunpack.c.l.b16 %v4270
    %v4291 = vunpack.c.l.b16 %v4271
    %v4292 = vunpack.c.l.b16 %v4272
    %v4293 = vunpack.c.l.b16 %v4273
    %v4294 = vrot.slane %v4286, 2
    %v4295 = vrot.slane %v4287, 1
    %v4296 = vsel %vm448, %v4295, %v4294
    %v4297 = vsel %vm451, %v4288, %v4296
    %v4298 = vrot.slane %v4289, 7
    %v4299 = vsel %vm454, %v4298, %v4297
    %v4300 = vrot.slane %v4290, 6
    %v4301 = vsel %vm457, %v4300, %v4299
    %v4302 = vrot.slane %v4291, 5
    %v4303 = vsel %vm460, %v4302, %v4301
    %v4304 = vrot.slane %v4292, 4
    %v4305 = vsel %vm463, %v4304, %v4303
    %v4306 = vrot.slane %v4293, 3
    %v4307 = vsel %vm466, %v4306, %v4305
    %v4308 = vpack.c.b16 %v4307, %v4307
    %4309 = vrot.lane.b32.xlu0 %v4308, 64
    %v4310 = vpop.permute.xlu0 %4309
    %v4315 = vunpack.c.l.b16 %v4274
    %v4316 = vunpack.c.l.b16 %v4275
    %v4317 = vunpack.c.l.b16 %v4276
    %v4318 = vunpack.c.l.b16 %v4277
    %v4319 = vpack.c.b16 %v4316, %v4315
    %v4320 = vpack.c.b16 %v4318, %v4317
    %v4324 = vsel %vm86, %v4310, 0
    %4326 = vmatprep.subr.bf16.mxu0 0
    %4327 = vmatpush1.bf16.msra.mxu0 %v4319
    %4328 = vmatprep.subr.bf16.mxu0 0
    %4329 = vmatpush1.bf16.msra.mxu0 %v4320
    %4330 = vmatprep.subr.bf16.mxu0 0
    %4331 = vmatpush1.bf16.msra.mxu0 0
    %4332 = vmatprep.subr.bf16.mxu0 0
    %4333 = vmatpush1.bf16.msra.mxu0 0
    %4334 = vmatprep.subr.bf16.mxu0 0
    %4335 = vmatpush1.bf16.msra.mxu0 0
    %4336 = vmatprep.subr.bf16.mxu0 0
    %4337 = vmatpush1.bf16.msra.mxu0 0
    %4338 = vmatprep.subr.bf16.mxu0 0
    %4339 = vmatpush1.bf16.msra.mxu0 0
    %4340 = vmatprep.subr.bf16.mxu0 0
    %4341 = vmatpush1.bf16.msra.mxu0 0
    %4342 = vmatprep.subr.bf16.mxu0 0
    %4343 = vmatpush1.bf16.msra.mxu0 0
    %4344 = vmatprep.subr.bf16.mxu0 0
    %4345 = vmatpush1.bf16.msra.mxu0 0
    %4346 = vmatprep.subr.bf16.mxu0 0
    %4347 = vmatpush1.bf16.msra.mxu0 0
    %4348 = vmatprep.subr.bf16.mxu0 0
    %4349 = vmatpush1.bf16.msra.mxu0 0
    %4350 = vmatprep.subr.bf16.mxu0 0
    %4351 = vmatpush1.bf16.msra.mxu0 0
    %4352 = vmatprep.subr.bf16.mxu0 0
    %4353 = vmatpush1.bf16.msra.mxu0 0
    %4354 = vmatprep.subr.bf16.mxu0 0
    %4355 = vmatpush1.bf16.msra.mxu0 0
    %4356 = vmatprep.subr.bf16.mxu0 0
    %4357 = vmatpush1.bf16.msra.mxu0 0
    %4358 = vmatprep.mubr.bf16.mxu0 0
    %4359 = vmatmul.mubr.bf16.gmra.mrb[0].mxu0 %v4324
    %v4360 = vpop.f32.mrb[0].mxu0
    %v4361 = vadd.f32 0.0, %v4360
    %v4362 = vpop.f32.mrb[0].mxu0
    %v4363 = vpop.f32.mrb[0].mxu0
    %v4364 = vpop.f32.mrb[0].mxu0
    %4365 = vdwg.mxu0
    %v4367 = vrot.slane %v4361, 5
    %v4368 = vrot.slane %v4361, 6
    %v4369 = vrot.slane %v4361, 7
    %v4370 = vrot.slane %v4361, 1
    %v4371 = vrot.slane %v4361, 2
    %v4372 = vrot.slane %v4361, 3
    %v4373 = vrot.slane %v4361, 4
    %v4382 = vadd.f32 %v4258, %v4367
    %v4383 = vadd.f32 %v4259, %v4368
    %v4384 = vadd.f32 %v4260, %v4369
    %v4385 = vadd.f32 %v4261, %v4361
    %v4386 = vadd.f32 %v4262, %v4370
    %v4387 = vadd.f32 %v4263, %v4371
    %v4388 = vadd.f32 %v4264, %v4372
    %v4389 = vadd.f32 %v4265, %v4373
    %v4390 = vmul.f32 %v4382, 0.5
    %v4391 = vmul.f32 %v4383, 0.5
    %v4392 = vmul.f32 %v4384, 0.5
    %v4393 = vmul.f32 %v4385, 0.5
    %v4394 = vmul.f32 %v4386, 0.5
    %v4395 = vmul.f32 %v4387, 0.5
    %v4396 = vmul.f32 %v4388, 0.5
    %v4397 = vmul.f32 %v4389, 0.5
    %v4398 = vtanh.pop %v4390
    %v4399 = vtanh.pop %v4391
    %v4400 = vtanh.pop %v4392
    %v4401 = vtanh.pop %v4393
    %v4402 = vtanh.pop %v4394
    %v4403 = vtanh.pop %v4395
    %v4404 = vtanh.pop %v4396
    %v4405 = vtanh.pop %v4397
    %v4406 = vmul.f32 %v4398, 0.5
    %v4407 = vmul.f32 %v4399, 0.5
    %v4408 = vmul.f32 %v4400, 0.5
    %v4409 = vmul.f32 %v4401, 0.5
    %v4410 = vmul.f32 %v4402, 0.5
    %v4411 = vmul.f32 %v4403, 0.5
    %v4412 = vmul.f32 %v4404, 0.5
    %v4413 = vmul.f32 %v4405, 0.5
    %v4414 = vadd.f32 %v4406, 0.5
    %v4415 = vadd.f32 %v4407, 0.5
    %v4416 = vadd.f32 %v4408, 0.5
    %v4417 = vadd.f32 %v4409, 0.5
    %v4418 = vadd.f32 %v4410, 0.5
    %v4419 = vadd.f32 %v4411, 0.5
    %v4420 = vadd.f32 %v4412, 0.5
    %v4421 = vadd.f32 %v4413, 0.5
    %v4422 = vtanh.pop %v4382
    %v4423 = vtanh.pop %v4383
    %v4424 = vtanh.pop %v4384
    %v4425 = vtanh.pop %v4385
    %v4426 = vtanh.pop %v4386
    %v4427 = vtanh.pop %v4387
    %v4428 = vtanh.pop %v4388
    %v4429 = vtanh.pop %v4389
    %v4438 = vrot.slane %v4154, 7
    %v4439 = vrot.slane %v4155, 7
    %v4440 = vrot.slane %v4156, 7
    %v4441 = vrot.slane %v4157, 7
    %v4442 = vrot.slane %v4158, 7
    %v4443 = vrot.slane %v4159, 7
    %v4444 = vrot.slane %v4160, 7
    %v4445 = vrot.slane %v4161, 7
    %v4454 = vmul.f32 %v4414, %v4438
    %v4455 = vmul.f32 %v4415, %v4439
    %v4456 = vmul.f32 %v4416, %v4440
    %v4457 = vmul.f32 %v4417, %v4441
    %v4458 = vmul.f32 %v4418, %v4442
    %v4459 = vmul.f32 %v4419, %v4443
    %v4460 = vmul.f32 %v4420, %v4444
    %v4461 = vmul.f32 %v4421, %v4445
    %4470 = vrot.lane.b32.xlu0 %v4422, 32
    %v4471 = vpop.permute.xlu0 %4470
    %4472 = vrot.lane.b32.xlu0 %v4423, 32
    %v4473 = vpop.permute.xlu0 %4472
    %4474 = vrot.lane.b32.xlu0 %v4424, 32
    %v4475 = vpop.permute.xlu0 %4474
    %4476 = vrot.lane.b32.xlu0 %v4425, 32
    %v4477 = vpop.permute.xlu0 %4476
    %4478 = vrot.lane.b32.xlu0 %v4426, 32
    %v4479 = vpop.permute.xlu0 %4478
    %4480 = vrot.lane.b32.xlu0 %v4427, 32
    %v4481 = vpop.permute.xlu0 %4480
    %4482 = vrot.lane.b32.xlu0 %v4428, 32
    %v4483 = vpop.permute.xlu0 %4482
    %4484 = vrot.lane.b32.xlu0 %v4429, 32
    %v4485 = vpop.permute.xlu0 %4484
    %v4494 = vmul.f32 %v4414, %v4471
    %v4495 = vmul.f32 %v4415, %v4473
    %v4496 = vmul.f32 %v4416, %v4475
    %v4497 = vmul.f32 %v4417, %v4477
    %v4498 = vmul.f32 %v4418, %v4479
    %v4499 = vmul.f32 %v4419, %v4481
    %v4500 = vmul.f32 %v4420, %v4483
    %v4501 = vmul.f32 %v4421, %v4485
    %4510 = vrot.lane.b32.xlu0 %v4494, 32
    %v4511 = vpop.permute.xlu0 %4510
    %4512 = vrot.lane.b32.xlu0 %v4495, 32
    %v4513 = vpop.permute.xlu0 %4512
    %4514 = vrot.lane.b32.xlu0 %v4496, 32
    %v4515 = vpop.permute.xlu0 %4514
    %4516 = vrot.lane.b32.xlu0 %v4497, 32
    %v4517 = vpop.permute.xlu0 %4516
    %4518 = vrot.lane.b32.xlu0 %v4498, 32
    %v4519 = vpop.permute.xlu0 %4518
    %4520 = vrot.lane.b32.xlu0 %v4499, 32
    %v4521 = vpop.permute.xlu0 %4520
    %4522 = vrot.lane.b32.xlu0 %v4500, 32
    %v4523 = vpop.permute.xlu0 %4522
    %4524 = vrot.lane.b32.xlu0 %v4501, 32
    %v4525 = vpop.permute.xlu0 %4524
    %v4534 = vadd.f32 %v4454, %v4511
    %v4535 = vadd.f32 %v4455, %v4513
    %v4536 = vadd.f32 %v4456, %v4515
    %v4537 = vadd.f32 %v4457, %v4517
    %v4538 = vadd.f32 %v4458, %v4519
    %v4539 = vadd.f32 %v4459, %v4521
    %v4540 = vadd.f32 %v4460, %v4523
    %v4541 = vadd.f32 %v4461, %v4525
    %v4542 = vtanh.pop %v4534
    %v4543 = vtanh.pop %v4535
    %v4544 = vtanh.pop %v4536
    %v4545 = vtanh.pop %v4537
    %v4546 = vtanh.pop %v4538
    %v4547 = vtanh.pop %v4539
    %v4548 = vtanh.pop %v4540
    %v4549 = vtanh.pop %v4541
    %4558 = vrot.lane.b32.xlu0 %v4542, 32
    %v4559 = vpop.permute.xlu0 %4558
    %4560 = vrot.lane.b32.xlu0 %v4543, 32
    %v4561 = vpop.permute.xlu0 %4560
    %4562 = vrot.lane.b32.xlu0 %v4544, 32
    %v4563 = vpop.permute.xlu0 %4562
    %4564 = vrot.lane.b32.xlu0 %v4545, 32
    %v4565 = vpop.permute.xlu0 %4564
    %4566 = vrot.lane.b32.xlu0 %v4546, 32
    %v4567 = vpop.permute.xlu0 %4566
    %4568 = vrot.lane.b32.xlu0 %v4547, 32
    %v4569 = vpop.permute.xlu0 %4568
    %4570 = vrot.lane.b32.xlu0 %v4548, 32
    %v4571 = vpop.permute.xlu0 %4570
    %4572 = vrot.lane.b32.xlu0 %v4549, 32
    %v4573 = vpop.permute.xlu0 %4572
    %v4582 = vmul.f32 %v4414, %v4559
    %v4583 = vmul.f32 %v4415, %v4561
    %v4584 = vmul.f32 %v4416, %v4563
    %v4585 = vmul.f32 %v4417, %v4565
    %v4586 = vmul.f32 %v4418, %v4567
    %v4587 = vmul.f32 %v4419, %v4569
    %v4588 = vmul.f32 %v4420, %v4571
    %v4589 = vmul.f32 %v4421, %v4573
    %4598 = vrot.lane.b32.xlu0 %v4582, 64
    %v4599 = vpop.permute.xlu0 %4598
    %4600 = vrot.lane.b32.xlu0 %v4583, 64
    %v4601 = vpop.permute.xlu0 %4600
    %4602 = vrot.lane.b32.xlu0 %v4584, 64
    %v4603 = vpop.permute.xlu0 %4602
    %4604 = vrot.lane.b32.xlu0 %v4585, 64
    %v4605 = vpop.permute.xlu0 %4604
    %4606 = vrot.lane.b32.xlu0 %v4586, 64
    %v4607 = vpop.permute.xlu0 %4606
    %4608 = vrot.lane.b32.xlu0 %v4587, 64
    %v4609 = vpop.permute.xlu0 %4608
    %4610 = vrot.lane.b32.xlu0 %v4588, 64
    %v4611 = vpop.permute.xlu0 %4610
    %4612 = vrot.lane.b32.xlu0 %v4589, 64
    %v4613 = vpop.permute.xlu0 %4612
    %4622 = vst.msk [vmem:[#allocation9 + $0x8] sm:$0x8] %vm1544, %v4599
    %4623 = vst.msk [vmem:[#allocation9 + $0x18] sm:$0x8] %vm1544, %v4601
    %4624 = vst.msk [vmem:[#allocation9 + $0x28] sm:$0x8] %vm1544, %v4603
    %4625 = vst.msk [vmem:[#allocation9 + $0x38] sm:$0x8] %vm1544, %v4605
    %4626 = vst.msk [vmem:[#allocation9 + $0x48] sm:$0x8] %vm1544, %v4607
    %4627 = vst.msk [vmem:[#allocation9 + $0x58] sm:$0x8] %vm1544, %v4609
    %4628 = vst.msk [vmem:[#allocation9 + $0x68] sm:$0x8] %vm1544, %v4611
    %4629 = vst.msk [vmem:[#allocation9 + $0x78] sm:$0x8] %vm1544, %v4613
    %v4630 = vld [vmem:[#allocation4 + $0x4] sm:$0x4]
    %v4631 = vld [vmem:[#allocation4 + $0xc] sm:$0x4]
    %v4632 = vld [vmem:[#allocation4 + $0x14] sm:$0x4]
    %v4633 = vld [vmem:[#allocation4 + $0x1c] sm:$0x4]
    %v4634 = vld [vmem:[#allocation4 + $0x24] sm:$0x4]
    %v4635 = vld [vmem:[#allocation4 + $0x2c] sm:$0x4]
    %v4636 = vld [vmem:[#allocation4 + $0x34] sm:$0x4]
    %v4637 = vld [vmem:[#allocation4 + $0x3c] sm:$0x4]
    %v4638 = vunpack.c.l.bf16 %v4630
    %v4639 = vunpack.c.l.bf16 %v4631
    %v4640 = vunpack.c.l.bf16 %v4632
    %v4641 = vunpack.c.l.bf16 %v4633
    %v4642 = vunpack.c.l.bf16 %v4634
    %v4643 = vunpack.c.l.bf16 %v4635
    %v4644 = vunpack.c.l.bf16 %v4636
    %v4645 = vunpack.c.l.bf16 %v4637
    %v4646 = vpack.c.bf16 %v4582, %v4582
    %v4647 = vpack.c.bf16 %v4583, %v4583
    %v4648 = vpack.c.bf16 %v4584, %v4584
    %v4649 = vpack.c.bf16 %v4585, %v4585
    %v4650 = vpack.c.bf16 %v4586, %v4586
    %v4651 = vpack.c.bf16 %v4587, %v4587
    %v4652 = vpack.c.bf16 %v4588, %v4588
    %v4653 = vpack.c.bf16 %v4589, %v4589
    %v4654 = vld [vmem:[#allocation7] sm:$0xf]
    %v4655 = vld [vmem:[#allocation7 + $0x4] sm:$0xf]
    %v4656 = vld [vmem:[#allocation7 + $0x8] sm:$0xf]
    %v4657 = vld [vmem:[#allocation7 + $0xc] sm:$0xf]
    %v4666 = vunpack.c.l.b16 %v4646
    %v4667 = vunpack.c.l.b16 %v4647
    %v4668 = vunpack.c.l.b16 %v4648
    %v4669 = vunpack.c.l.b16 %v4649
    %v4670 = vunpack.c.l.b16 %v4650
    %v4671 = vunpack.c.l.b16 %v4651
    %v4672 = vunpack.c.l.b16 %v4652
    %v4673 = vunpack.c.l.b16 %v4653
    %v4674 = vrot.slane %v4666, 3
    %v4675 = vrot.slane %v4667, 2
    %v4676 = vsel %vm448, %v4675, %v4674
    %v4677 = vrot.slane %v4668, 1
    %v4678 = vsel %vm451, %v4677, %v4676
    %v4679 = vsel %vm454, %v4669, %v4678
    %v4680 = vrot.slane %v4670, 7
    %v4681 = vsel %vm457, %v4680, %v4679
    %v4682 = vrot.slane %v4671, 6
    %v4683 = vsel %vm460, %v4682, %v4681
    %v4684 = vrot.slane %v4672, 5
    %v4685 = vsel %vm463, %v4684, %v4683
    %v4686 = vrot.slane %v4673, 4
    %v4687 = vsel %vm466, %v4686, %v4685
    %v4688 = vpack.c.b16 %v4687, %v4687
    %4689 = vrot.lane.b32.xlu0 %v4688, 64
    %v4690 = vpop.permute.xlu0 %4689
    %v4695 = vunpack.c.l.b16 %v4654
    %v4696 = vunpack.c.l.b16 %v4655
    %v4697 = vunpack.c.l.b16 %v4656
    %v4698 = vunpack.c.l.b16 %v4657
    %v4699 = vpack.c.b16 %v4696, %v4695
    %v4700 = vpack.c.b16 %v4698, %v4697
    %v4704 = vsel %vm86, %v4690, 0
    %4706 = vmatprep.subr.bf16.mxu0 0
    %4707 = vmatpush1.bf16.msra.mxu0 %v4699
    %4708 = vmatprep.subr.bf16.mxu0 0
    %4709 = vmatpush1.bf16.msra.mxu0 %v4700
    %4710 = vmatprep.subr.bf16.mxu0 0
    %4711 = vmatpush1.bf16.msra.mxu0 0
    %4712 = vmatprep.subr.bf16.mxu0 0
    %4713 = vmatpush1.bf16.msra.mxu0 0
    %4714 = vmatprep.subr.bf16.mxu0 0
    %4715 = vmatpush1.bf16.msra.mxu0 0
    %4716 = vmatprep.subr.bf16.mxu0 0
    %4717 = vmatpush1.bf16.msra.mxu0 0
    %4718 = vmatprep.subr.bf16.mxu0 0
    %4719 = vmatpush1.bf16.msra.mxu0 0
    %4720 = vmatprep.subr.bf16.mxu0 0
    %4721 = vmatpush1.bf16.msra.mxu0 0
    %4722 = vmatprep.subr.bf16.mxu0 0
    %4723 = vmatpush1.bf16.msra.mxu0 0
    %4724 = vmatprep.subr.bf16.mxu0 0
    %4725 = vmatpush1.bf16.msra.mxu0 0
    %4726 = vmatprep.subr.bf16.mxu0 0
    %4727 = vmatpush1.bf16.msra.mxu0 0
    %4728 = vmatprep.subr.bf16.mxu0 0
    %4729 = vmatpush1.bf16.msra.mxu0 0
    %4730 = vmatprep.subr.bf16.mxu0 0
    %4731 = vmatpush1.bf16.msra.mxu0 0
    %4732 = vmatprep.subr.bf16.mxu0 0
    %4733 = vmatpush1.bf16.msra.mxu0 0
    %4734 = vmatprep.subr.bf16.mxu0 0
    %4735 = vmatpush1.bf16.msra.mxu0 0
    %4736 = vmatprep.subr.bf16.mxu0 0
    %4737 = vmatpush1.bf16.msra.mxu0 0
    %4738 = vmatprep.mubr.bf16.mxu0 0
    %4739 = vmatmul.mubr.bf16.gmra.mrb[0].mxu0 %v4704
    %v4740 = vpop.f32.mrb[0].mxu0
    %v4741 = vadd.f32 0.0, %v4740
    %v4742 = vpop.f32.mrb[0].mxu0
    %v4743 = vpop.f32.mrb[0].mxu0
    %v4744 = vpop.f32.mrb[0].mxu0
    %4745 = vdwg.mxu0
    %v4747 = vrot.slane %v4741, 4
    %v4748 = vrot.slane %v4741, 5
    %v4749 = vrot.slane %v4741, 6
    %v4750 = vrot.slane %v4741, 7
    %v4751 = vrot.slane %v4741, 1
    %v4752 = vrot.slane %v4741, 2
    %v4753 = vrot.slane %v4741, 3
    %v4762 = vadd.f32 %v4638, %v4747
    %v4763 = vadd.f32 %v4639, %v4748
    %v4764 = vadd.f32 %v4640, %v4749
    %v4765 = vadd.f32 %v4641, %v4750
    %v4766 = vadd.f32 %v4642, %v4741
    %v4767 = vadd.f32 %v4643, %v4751
    %v4768 = vadd.f32 %v4644, %v4752
    %v4769 = vadd.f32 %v4645, %v4753
    %v4770 = vmul.f32 %v4762, 0.5
    %v4771 = vmul.f32 %v4763, 0.5
    %v4772 = vmul.f32 %v4764, 0.5
    %v4773 = vmul.f32 %v4765, 0.5
    %v4774 = vmul.f32 %v4766, 0.5
    %v4775 = vmul.f32 %v4767, 0.5
    %v4776 = vmul.f32 %v4768, 0.5
    %v4777 = vmul.f32 %v4769, 0.5
    %v4778 = vtanh.pop %v4770
    %v4779 = vtanh.pop %v4771
    %v4780 = vtanh.pop %v4772
    %v4781 = vtanh.pop %v4773
    %v4782 = vtanh.pop %v4774
    %v4783 = vtanh.pop %v4775
    %v4784 = vtanh.pop %v4776
    %v4785 = vtanh.pop %v4777
    %v4786 = vmul.f32 %v4778, 0.5
    %v4787 = vmul.f32 %v4779, 0.5
    %v4788 = vmul.f32 %v4780, 0.5
    %v4789 = vmul.f32 %v4781, 0.5
    %v4790 = vmul.f32 %v4782, 0.5
    %v4791 = vmul.f32 %v4783, 0.5
    %v4792 = vmul.f32 %v4784, 0.5
    %v4793 = vmul.f32 %v4785, 0.5
    %v4794 = vadd.f32 %v4786, 0.5
    %v4795 = vadd.f32 %v4787, 0.5
    %v4796 = vadd.f32 %v4788, 0.5
    %v4797 = vadd.f32 %v4789, 0.5
    %v4798 = vadd.f32 %v4790, 0.5
    %v4799 = vadd.f32 %v4791, 0.5
    %v4800 = vadd.f32 %v4792, 0.5
    %v4801 = vadd.f32 %v4793, 0.5
    %v4802 = vtanh.pop %v4762
    %v4803 = vtanh.pop %v4763
    %v4804 = vtanh.pop %v4764
    %v4805 = vtanh.pop %v4765
    %v4806 = vtanh.pop %v4766
    %v4807 = vtanh.pop %v4767
    %v4808 = vtanh.pop %v4768
    %v4809 = vtanh.pop %v4769
    %v4818 = vrot.slane %v4534, 7
    %v4819 = vrot.slane %v4535, 7
    %v4820 = vrot.slane %v4536, 7
    %v4821 = vrot.slane %v4537, 7
    %v4822 = vrot.slane %v4538, 7
    %v4823 = vrot.slane %v4539, 7
    %v4824 = vrot.slane %v4540, 7
    %v4825 = vrot.slane %v4541, 7
    %v4834 = vmul.f32 %v4794, %v4818
    %v4835 = vmul.f32 %v4795, %v4819
    %v4836 = vmul.f32 %v4796, %v4820
    %v4837 = vmul.f32 %v4797, %v4821
    %v4838 = vmul.f32 %v4798, %v4822
    %v4839 = vmul.f32 %v4799, %v4823
    %v4840 = vmul.f32 %v4800, %v4824
    %v4841 = vmul.f32 %v4801, %v4825
    %4850 = vrot.lane.b32.xlu0 %v4802, 32
    %v4851 = vpop.permute.xlu0 %4850
    %4852 = vrot.lane.b32.xlu0 %v4803, 32
    %v4853 = vpop.permute.xlu0 %4852
    %4854 = vrot.lane.b32.xlu0 %v4804, 32
    %v4855 = vpop.permute.xlu0 %4854
    %4856 = vrot.lane.b32.xlu0 %v4805, 32
    %v4857 = vpop.permute.xlu0 %4856
    %4858 = vrot.lane.b32.xlu0 %v4806, 32
    %v4859 = vpop.permute.xlu0 %4858
    %4860 = vrot.lane.b32.xlu0 %v4807, 32
    %v4861 = vpop.permute.xlu0 %4860
    %4862 = vrot.lane.b32.xlu0 %v4808, 32
    %v4863 = vpop.permute.xlu0 %4862
    %4864 = vrot.lane.b32.xlu0 %v4809, 32
    %v4865 = vpop.permute.xlu0 %4864
    %v4874 = vmul.f32 %v4794, %v4851
    %v4875 = vmul.f32 %v4795, %v4853
    %v4876 = vmul.f32 %v4796, %v4855
    %v4877 = vmul.f32 %v4797, %v4857
    %v4878 = vmul.f32 %v4798, %v4859
    %v4879 = vmul.f32 %v4799, %v4861
    %v4880 = vmul.f32 %v4800, %v4863
    %v4881 = vmul.f32 %v4801, %v4865
    %4890 = vrot.lane.b32.xlu0 %v4874, 32
    %v4891 = vpop.permute.xlu0 %4890
    %4892 = vrot.lane.b32.xlu0 %v4875, 32
    %v4893 = vpop.permute.xlu0 %4892
    %4894 = vrot.lane.b32.xlu0 %v4876, 32
    %v4895 = vpop.permute.xlu0 %4894
    %4896 = vrot.lane.b32.xlu0 %v4877, 32
    %v4897 = vpop.permute.xlu0 %4896
    %4898 = vrot.lane.b32.xlu0 %v4878, 32
    %v4899 = vpop.permute.xlu0 %4898
    %4900 = vrot.lane.b32.xlu0 %v4879, 32
    %v4901 = vpop.permute.xlu0 %4900
    %4902 = vrot.lane.b32.xlu0 %v4880, 32
    %v4903 = vpop.permute.xlu0 %4902
    %4904 = vrot.lane.b32.xlu0 %v4881, 32
    %v4905 = vpop.permute.xlu0 %4904
    %v4914 = vadd.f32 %v4834, %v4891
    %v4915 = vadd.f32 %v4835, %v4893
    %v4916 = vadd.f32 %v4836, %v4895
    %v4917 = vadd.f32 %v4837, %v4897
    %v4918 = vadd.f32 %v4838, %v4899
    %v4919 = vadd.f32 %v4839, %v4901
    %v4920 = vadd.f32 %v4840, %v4903
    %v4921 = vadd.f32 %v4841, %v4905
    %v4922 = vtanh.pop %v4914
    %v4923 = vtanh.pop %v4915
    %v4924 = vtanh.pop %v4916
    %v4925 = vtanh.pop %v4917
    %v4926 = vtanh.pop %v4918
    %v4927 = vtanh.pop %v4919
    %v4928 = vtanh.pop %v4920
    %v4929 = vtanh.pop %v4921
    %4938 = vrot.lane.b32.xlu0 %v4922, 32
    %v4939 = vpop.permute.xlu0 %4938
    %4940 = vrot.lane.b32.xlu0 %v4923, 32
    %v4941 = vpop.permute.xlu0 %4940
    %4942 = vrot.lane.b32.xlu0 %v4924, 32
    %v4943 = vpop.permute.xlu0 %4942
    %4944 = vrot.lane.b32.xlu0 %v4925, 32
    %v4945 = vpop.permute.xlu0 %4944
    %4946 = vrot.lane.b32.xlu0 %v4926, 32
    %v4947 = vpop.permute.xlu0 %4946
    %4948 = vrot.lane.b32.xlu0 %v4927, 32
    %v4949 = vpop.permute.xlu0 %4948
    %4950 = vrot.lane.b32.xlu0 %v4928, 32
    %v4951 = vpop.permute.xlu0 %4950
    %4952 = vrot.lane.b32.xlu0 %v4929, 32
    %v4953 = vpop.permute.xlu0 %4952
    %v4962 = vmul.f32 %v4794, %v4939
    %v4963 = vmul.f32 %v4795, %v4941
    %v4964 = vmul.f32 %v4796, %v4943
    %v4965 = vmul.f32 %v4797, %v4945
    %v4966 = vmul.f32 %v4798, %v4947
    %v4967 = vmul.f32 %v4799, %v4949
    %v4968 = vmul.f32 %v4800, %v4951
    %v4969 = vmul.f32 %v4801, %v4953
    %4978 = vrot.lane.b32.xlu0 %v4962, 64
    %v4979 = vpop.permute.xlu0 %4978
    %4980 = vrot.lane.b32.xlu0 %v4963, 64
    %v4981 = vpop.permute.xlu0 %4980
    %4982 = vrot.lane.b32.xlu0 %v4964, 64
    %v4983 = vpop.permute.xlu0 %4982
    %4984 = vrot.lane.b32.xlu0 %v4965, 64
    %v4985 = vpop.permute.xlu0 %4984
    %4986 = vrot.lane.b32.xlu0 %v4966, 64
    %v4987 = vpop.permute.xlu0 %4986
    %4988 = vrot.lane.b32.xlu0 %v4967, 64
    %v4989 = vpop.permute.xlu0 %4988
    %4990 = vrot.lane.b32.xlu0 %v4968, 64
    %v4991 = vpop.permute.xlu0 %4990
    %4992 = vrot.lane.b32.xlu0 %v4969, 64
    %v4993 = vpop.permute.xlu0 %4992
    %5002 = vst.msk [vmem:[#allocation9 + $0x8] sm:$0x10] %vm1925, %v4979
    %5003 = vst.msk [vmem:[#allocation9 + $0x18] sm:$0x10] %vm1925, %v4981
    %5004 = vst.msk [vmem:[#allocation9 + $0x28] sm:$0x10] %vm1925, %v4983
    %5005 = vst.msk [vmem:[#allocation9 + $0x38] sm:$0x10] %vm1925, %v4985
    %5006 = vst.msk [vmem:[#allocation9 + $0x48] sm:$0x10] %vm1925, %v4987
    %5007 = vst.msk [vmem:[#allocation9 + $0x58] sm:$0x10] %vm1925, %v4989
    %5008 = vst.msk [vmem:[#allocation9 + $0x68] sm:$0x10] %vm1925, %v4991
    %5009 = vst.msk [vmem:[#allocation9 + $0x78] sm:$0x10] %vm1925, %v4993
    %v5010 = vld [vmem:[#allocation4 + $0x4] sm:$0x4]
    %v5011 = vld [vmem:[#allocation4 + $0xc] sm:$0x4]
    %v5012 = vld [vmem:[#allocation4 + $0x14] sm:$0x4]
    %v5013 = vld [vmem:[#allocation4 + $0x1c] sm:$0x4]
    %v5014 = vld [vmem:[#allocation4 + $0x24] sm:$0x4]
    %v5015 = vld [vmem:[#allocation4 + $0x2c] sm:$0x4]
    %v5016 = vld [vmem:[#allocation4 + $0x34] sm:$0x4]
    %v5017 = vld [vmem:[#allocation4 + $0x3c] sm:$0x4]
    %v5018 = vunpack.c.l.bf16 %v5010
    %v5019 = vunpack.c.l.bf16 %v5011
    %v5020 = vunpack.c.l.bf16 %v5012
    %v5021 = vunpack.c.l.bf16 %v5013
    %v5022 = vunpack.c.l.bf16 %v5014
    %v5023 = vunpack.c.l.bf16 %v5015
    %v5024 = vunpack.c.l.bf16 %v5016
    %v5025 = vunpack.c.l.bf16 %v5017
    %v5026 = vpack.c.bf16 %v4962, %v4962
    %v5027 = vpack.c.bf16 %v4963, %v4963
    %v5028 = vpack.c.bf16 %v4964, %v4964
    %v5029 = vpack.c.bf16 %v4965, %v4965
    %v5030 = vpack.c.bf16 %v4966, %v4966
    %v5031 = vpack.c.bf16 %v4967, %v4967
    %v5032 = vpack.c.bf16 %v4968, %v4968
    %v5033 = vpack.c.bf16 %v4969, %v4969
    %v5034 = vld [vmem:[#allocation7] sm:$0xf]
    %v5035 = vld [vmem:[#allocation7 + $0x4] sm:$0xf]
    %v5036 = vld [vmem:[#allocation7 + $0x8] sm:$0xf]
    %v5037 = vld [vmem:[#allocation7 + $0xc] sm:$0xf]
    %v5046 = vunpack.c.l.b16 %v5026
    %v5047 = vunpack.c.l.b16 %v5027
    %v5048 = vunpack.c.l.b16 %v5028
    %v5049 = vunpack.c.l.b16 %v5029
    %v5050 = vunpack.c.l.b16 %v5030
    %v5051 = vunpack.c.l.b16 %v5031
    %v5052 = vunpack.c.l.b16 %v5032
    %v5053 = vunpack.c.l.b16 %v5033
    %v5054 = vrot.slane %v5046, 4
    %v5055 = vrot.slane %v5047, 3
    %v5056 = vsel %vm448, %v5055, %v5054
    %v5057 = vrot.slane %v5048, 2
    %v5058 = vsel %vm451, %v5057, %v5056
    %v5059 = vrot.slane %v5049, 1
    %v5060 = vsel %vm454, %v5059, %v5058
    %v5061 = vsel %vm457, %v5050, %v5060
    %v5062 = vrot.slane %v5051, 7
    %v5063 = vsel %vm460, %v5062, %v5061
    %v5064 = vrot.slane %v5052, 6
    %v5065 = vsel %vm463, %v5064, %v5063
    %v5066 = vrot.slane %v5053, 5
    %v5067 = vsel %vm466, %v5066, %v5065
    %v5068 = vpack.c.b16 %v5067, %v5067
    %5069 = vrot.lane.b32.xlu0 %v5068, 64
    %v5070 = vpop.permute.xlu0 %5069
    %v5075 = vunpack.c.l.b16 %v5034
    %v5076 = vunpack.c.l.b16 %v5035
    %v5077 = vunpack.c.l.b16 %v5036
    %v5078 = vunpack.c.l.b16 %v5037
    %v5079 = vpack.c.b16 %v5076, %v5075
    %v5080 = vpack.c.b16 %v5078, %v5077
    %v5084 = vsel %vm86, %v5070, 0
    %5086 = vmatprep.subr.bf16.mxu0 0
    %5087 = vmatpush1.bf16.msra.mxu0 %v5079
    %5088 = vmatprep.subr.bf16.mxu0 0
    %5089 = vmatpush1.bf16.msra.mxu0 %v5080
    %5090 = vmatprep.subr.bf16.mxu0 0
    %5091 = vmatpush1.bf16.msra.mxu0 0
    %5092 = vmatprep.subr.bf16.mxu0 0
    %5093 = vmatpush1.bf16.msra.mxu0 0
    %5094 = vmatprep.subr.bf16.mxu0 0
    %5095 = vmatpush1.bf16.msra.mxu0 0
    %5096 = vmatprep.subr.bf16.mxu0 0
    %5097 = vmatpush1.bf16.msra.mxu0 0
    %5098 = vmatprep.subr.bf16.mxu0 0
    %5099 = vmatpush1.bf16.msra.mxu0 0
    %5100 = vmatprep.subr.bf16.mxu0 0
    %5101 = vmatpush1.bf16.msra.mxu0 0
    %5102 = vmatprep.subr.bf16.mxu0 0
    %5103 = vmatpush1.bf16.msra.mxu0 0
    %5104 = vmatprep.subr.bf16.mxu0 0
    %5105 = vmatpush1.bf16.msra.mxu0 0
    %5106 = vmatprep.subr.bf16.mxu0 0
    %5107 = vmatpush1.bf16.msra.mxu0 0
    %5108 = vmatprep.subr.bf16.mxu0 0
    %5109 = vmatpush1.bf16.msra.mxu0 0
    %5110 = vmatprep.subr.bf16.mxu0 0
    %5111 = vmatpush1.bf16.msra.mxu0 0
    %5112 = vmatprep.subr.bf16.mxu0 0
    %5113 = vmatpush1.bf16.msra.mxu0 0
    %5114 = vmatprep.subr.bf16.mxu0 0
    %5115 = vmatpush1.bf16.msra.mxu0 0
    %5116 = vmatprep.subr.bf16.mxu0 0
    %5117 = vmatpush1.bf16.msra.mxu0 0
    %5118 = vmatprep.mubr.bf16.mxu0 0
    %5119 = vmatmul.mubr.bf16.gmra.mrb[0].mxu0 %v5084
    %v5120 = vpop.f32.mrb[0].mxu0
    %v5121 = vadd.f32 0.0, %v5120
    %v5122 = vpop.f32.mrb[0].mxu0
    %v5123 = vpop.f32.mrb[0].mxu0
    %v5124 = vpop.f32.mrb[0].mxu0
    %5125 = vdwg.mxu0
    %v5127 = vrot.slane %v5121, 3
    %v5128 = vrot.slane %v5121, 4
    %v5129 = vrot.slane %v5121, 5
    %v5130 = vrot.slane %v5121, 6
    %v5131 = vrot.slane %v5121, 7
    %v5132 = vrot.slane %v5121, 1
    %v5133 = vrot.slane %v5121, 2
    %v5142 = vadd.f32 %v5018, %v5127
    %v5143 = vadd.f32 %v5019, %v5128
    %v5144 = vadd.f32 %v5020, %v5129
    %v5145 = vadd.f32 %v5021, %v5130
    %v5146 = vadd.f32 %v5022, %v5131
    %v5147 = vadd.f32 %v5023, %v5121
    %v5148 = vadd.f32 %v5024, %v5132
    %v5149 = vadd.f32 %v5025, %v5133
    %v5150 = vmul.f32 %v5142, 0.5
    %v5151 = vmul.f32 %v5143, 0.5
    %v5152 = vmul.f32 %v5144, 0.5
    %v5153 = vmul.f32 %v5145, 0.5
    %v5154 = vmul.f32 %v5146, 0.5
    %v5155 = vmul.f32 %v5147, 0.5
    %v5156 = vmul.f32 %v5148, 0.5
    %v5157 = vmul.f32 %v5149, 0.5
    %v5158 = vtanh.pop %v5150
    %v5159 = vtanh.pop %v5151
    %v5160 = vtanh.pop %v5152
    %v5161 = vtanh.pop %v5153
    %v5162 = vtanh.pop %v5154
    %v5163 = vtanh.pop %v5155
    %v5164 = vtanh.pop %v5156
    %v5165 = vtanh.pop %v5157
    %v5166 = vmul.f32 %v5158, 0.5
    %v5167 = vmul.f32 %v5159, 0.5
    %v5168 = vmul.f32 %v5160, 0.5
    %v5169 = vmul.f32 %v5161, 0.5
    %v5170 = vmul.f32 %v5162, 0.5
    %v5171 = vmul.f32 %v5163, 0.5
    %v5172 = vmul.f32 %v5164, 0.5
    %v5173 = vmul.f32 %v5165, 0.5
    %v5174 = vadd.f32 %v5166, 0.5
    %v5175 = vadd.f32 %v5167, 0.5
    %v5176 = vadd.f32 %v5168, 0.5
    %v5177 = vadd.f32 %v5169, 0.5
    %v5178 = vadd.f32 %v5170, 0.5
    %v5179 = vadd.f32 %v5171, 0.5
    %v5180 = vadd.f32 %v5172, 0.5
    %v5181 = vadd.f32 %v5173, 0.5
    %v5182 = vtanh.pop %v5142
    %v5183 = vtanh.pop %v5143
    %v5184 = vtanh.pop %v5144
    %v5185 = vtanh.pop %v5145
    %v5186 = vtanh.pop %v5146
    %v5187 = vtanh.pop %v5147
    %v5188 = vtanh.pop %v5148
    %v5189 = vtanh.pop %v5149
    %v5198 = vrot.slane %v4914, 7
    %v5199 = vrot.slane %v4915, 7
    %v5200 = vrot.slane %v4916, 7
    %v5201 = vrot.slane %v4917, 7
    %v5202 = vrot.slane %v4918, 7
    %v5203 = vrot.slane %v4919, 7
    %v5204 = vrot.slane %v4920, 7
    %v5205 = vrot.slane %v4921, 7
    %v5214 = vmul.f32 %v5174, %v5198
    %v5215 = vmul.f32 %v5175, %v5199
    %v5216 = vmul.f32 %v5176, %v5200
    %v5217 = vmul.f32 %v5177, %v5201
    %v5218 = vmul.f32 %v5178, %v5202
    %v5219 = vmul.f32 %v5179, %v5203
    %v5220 = vmul.f32 %v5180, %v5204
    %v5221 = vmul.f32 %v5181, %v5205
    %5230 = vrot.lane.b32.xlu0 %v5182, 32
    %v5231 = vpop.permute.xlu0 %5230
    %5232 = vrot.lane.b32.xlu0 %v5183, 32
    %v5233 = vpop.permute.xlu0 %5232
    %5234 = vrot.lane.b32.xlu0 %v5184, 32
    %v5235 = vpop.permute.xlu0 %5234
    %5236 = vrot.lane.b32.xlu0 %v5185, 32
    %v5237 = vpop.permute.xlu0 %5236
    %5238 = vrot.lane.b32.xlu0 %v5186, 32
    %v5239 = vpop.permute.xlu0 %5238
    %5240 = vrot.lane.b32.xlu0 %v5187, 32
    %v5241 = vpop.permute.xlu0 %5240
    %5242 = vrot.lane.b32.xlu0 %v5188, 32
    %v5243 = vpop.permute.xlu0 %5242
    %5244 = vrot.lane.b32.xlu0 %v5189, 32
    %v5245 = vpop.permute.xlu0 %5244
    %v5254 = vmul.f32 %v5174, %v5231
    %v5255 = vmul.f32 %v5175, %v5233
    %v5256 = vmul.f32 %v5176, %v5235
    %v5257 = vmul.f32 %v5177, %v5237
    %v5258 = vmul.f32 %v5178, %v5239
    %v5259 = vmul.f32 %v5179, %v5241
    %v5260 = vmul.f32 %v5180, %v5243
    %v5261 = vmul.f32 %v5181, %v5245
    %5270 = vrot.lane.b32.xlu0 %v5254, 32
    %v5271 = vpop.permute.xlu0 %5270
    %5272 = vrot.lane.b32.xlu0 %v5255, 32
    %v5273 = vpop.permute.xlu0 %5272
    %5274 = vrot.lane.b32.xlu0 %v5256, 32
    %v5275 = vpop.permute.xlu0 %5274
    %5276 = vrot.lane.b32.xlu0 %v5257, 32
    %v5277 = vpop.permute.xlu0 %5276
    %5278 = vrot.lane.b32.xlu0 %v5258, 32
    %v5279 = vpop.permute.xlu0 %5278
    %5280 = vrot.lane.b32.xlu0 %v5259, 32
    %v5281 = vpop.permute.xlu0 %5280
    %5282 = vrot.lane.b32.xlu0 %v5260, 32
    %v5283 = vpop.permute.xlu0 %5282
    %5284 = vrot.lane.b32.xlu0 %v5261, 32
    %v5285 = vpop.permute.xlu0 %5284
    %v5294 = vadd.f32 %v5214, %v5271
    %v5295 = vadd.f32 %v5215, %v5273
    %v5296 = vadd.f32 %v5216, %v5275
    %v5297 = vadd.f32 %v5217, %v5277
    %v5298 = vadd.f32 %v5218, %v5279
    %v5299 = vadd.f32 %v5219, %v5281
    %v5300 = vadd.f32 %v5220, %v5283
    %v5301 = vadd.f32 %v5221, %v5285
    %v5302 = vtanh.pop %v5294
    %v5303 = vtanh.pop %v5295
    %v5304 = vtanh.pop %v5296
    %v5305 = vtanh.pop %v5297
    %v5306 = vtanh.pop %v5298
    %v5307 = vtanh.pop %v5299
    %v5308 = vtanh.pop %v5300
    %v5309 = vtanh.pop %v5301
    %5318 = vrot.lane.b32.xlu0 %v5302, 32
    %v5319 = vpop.permute.xlu0 %5318
    %5320 = vrot.lane.b32.xlu0 %v5303, 32
    %v5321 = vpop.permute.xlu0 %5320
    %5322 = vrot.lane.b32.xlu0 %v5304, 32
    %v5323 = vpop.permute.xlu0 %5322
    %5324 = vrot.lane.b32.xlu0 %v5305, 32
    %v5325 = vpop.permute.xlu0 %5324
    %5326 = vrot.lane.b32.xlu0 %v5306, 32
    %v5327 = vpop.permute.xlu0 %5326
    %5328 = vrot.lane.b32.xlu0 %v5307, 32
    %v5329 = vpop.permute.xlu0 %5328
    %5330 = vrot.lane.b32.xlu0 %v5308, 32
    %v5331 = vpop.permute.xlu0 %5330
    %5332 = vrot.lane.b32.xlu0 %v5309, 32
    %v5333 = vpop.permute.xlu0 %5332
    %v5342 = vmul.f32 %v5174, %v5319
    %v5343 = vmul.f32 %v5175, %v5321
    %v5344 = vmul.f32 %v5176, %v5323
    %v5345 = vmul.f32 %v5177, %v5325
    %v5346 = vmul.f32 %v5178, %v5327
    %v5347 = vmul.f32 %v5179, %v5329
    %v5348 = vmul.f32 %v5180, %v5331
    %v5349 = vmul.f32 %v5181, %v5333
    %5358 = vrot.lane.b32.xlu0 %v5342, 64
    %v5359 = vpop.permute.xlu0 %5358
    %5360 = vrot.lane.b32.xlu0 %v5343, 64
    %v5361 = vpop.permute.xlu0 %5360
    %5362 = vrot.lane.b32.xlu0 %v5344, 64
    %v5363 = vpop.permute.xlu0 %5362
    %5364 = vrot.lane.b32.xlu0 %v5345, 64
    %v5365 = vpop.permute.xlu0 %5364
    %5366 = vrot.lane.b32.xlu0 %v5346, 64
    %v5367 = vpop.permute.xlu0 %5366
    %5368 = vrot.lane.b32.xlu0 %v5347, 64
    %v5369 = vpop.permute.xlu0 %5368
    %5370 = vrot.lane.b32.xlu0 %v5348, 64
    %v5371 = vpop.permute.xlu0 %5370
    %5372 = vrot.lane.b32.xlu0 %v5349, 64
    %v5373 = vpop.permute.xlu0 %5372
    %5382 = vst.msk [vmem:[#allocation9 + $0x8] sm:$0x20] %vm2306, %v5359
    %5383 = vst.msk [vmem:[#allocation9 + $0x18] sm:$0x20] %vm2306, %v5361
    %5384 = vst.msk [vmem:[#allocation9 + $0x28] sm:$0x20] %vm2306, %v5363
    %5385 = vst.msk [vmem:[#allocation9 + $0x38] sm:$0x20] %vm2306, %v5365
    %5386 = vst.msk [vmem:[#allocation9 + $0x48] sm:$0x20] %vm2306, %v5367
    %5387 = vst.msk [vmem:[#allocation9 + $0x58] sm:$0x20] %vm2306, %v5369
    %5388 = vst.msk [vmem:[#allocation9 + $0x68] sm:$0x20] %vm2306, %v5371
    %5389 = vst.msk [vmem:[#allocation9 + $0x78] sm:$0x20] %vm2306, %v5373
    %v5390 = vld [vmem:[#allocation4 + $0x4] sm:$0x8]
    %v5391 = vld [vmem:[#allocation4 + $0xc] sm:$0x8]
    %v5392 = vld [vmem:[#allocation4 + $0x14] sm:$0x8]
    %v5393 = vld [vmem:[#allocation4 + $0x1c] sm:$0x8]
    %v5394 = vld [vmem:[#allocation4 + $0x24] sm:$0x8]
    %v5395 = vld [vmem:[#allocation4 + $0x2c] sm:$0x8]
    %v5396 = vld [vmem:[#allocation4 + $0x34] sm:$0x8]
    %v5397 = vld [vmem:[#allocation4 + $0x3c] sm:$0x8]
    %v5398 = vunpack.c.l.bf16 %v5390
    %v5399 = vunpack.c.l.bf16 %v5391
    %v5400 = vunpack.c.l.bf16 %v5392
    %v5401 = vunpack.c.l.bf16 %v5393
    %v5402 = vunpack.c.l.bf16 %v5394
    %v5403 = vunpack.c.l.bf16 %v5395
    %v5404 = vunpack.c.l.bf16 %v5396
    %v5405 = vunpack.c.l.bf16 %v5397
    %v5406 = vpack.c.bf16 %v5342, %v5342
    %v5407 = vpack.c.bf16 %v5343, %v5343
    %v5408 = vpack.c.bf16 %v5344, %v5344
    %v5409 = vpack.c.bf16 %v5345, %v5345
    %v5410 = vpack.c.bf16 %v5346, %v5346
    %v5411 = vpack.c.bf16 %v5347, %v5347
    %v5412 = vpack.c.bf16 %v5348, %v5348
    %v5413 = vpack.c.bf16 %v5349, %v5349
    %v5414 = vld [vmem:[#allocation7] sm:$0xf]
    %v5415 = vld [vmem:[#allocation7 + $0x4] sm:$0xf]
    %v5416 = vld [vmem:[#allocation7 + $0x8] sm:$0xf]
    %v5417 = vld [vmem:[#allocation7 + $0xc] sm:$0xf]
    %v5426 = vunpack.c.l.b16 %v5406
    %v5427 = vunpack.c.l.b16 %v5407
    %v5428 = vunpack.c.l.b16 %v5408
    %v5429 = vunpack.c.l.b16 %v5409
    %v5430 = vunpack.c.l.b16 %v5410
    %v5431 = vunpack.c.l.b16 %v5411
    %v5432 = vunpack.c.l.b16 %v5412
    %v5433 = vunpack.c.l.b16 %v5413
    %v5434 = vrot.slane %v5426, 5
    %v5435 = vrot.slane %v5427, 4
    %v5436 = vsel %vm448, %v5435, %v5434
    %v5437 = vrot.slane %v5428, 3
    %v5438 = vsel %vm451, %v5437, %v5436
    %v5439 = vrot.slane %v5429, 2
    %v5440 = vsel %vm454, %v5439, %v5438
    %v5441 = vrot.slane %v5430, 1
    %v5442 = vsel %vm457, %v5441, %v5440
    %v5443 = vsel %vm460, %v5431, %v5442
    %v5444 = vrot.slane %v5432, 7
    %v5445 = vsel %vm463, %v5444, %v5443
    %v5446 = vrot.slane %v5433, 6
    %v5447 = vsel %vm466, %v5446, %v5445
    %v5448 = vpack.c.b16 %v5447, %v5447
    %5449 = vrot.lane.b32.xlu0 %v5448, 64
    %v5450 = vpop.permute.xlu0 %5449
    %v5455 = vunpack.c.l.b16 %v5414
    %v5456 = vunpack.c.l.b16 %v5415
    %v5457 = vunpack.c.l.b16 %v5416
    %v5458 = vunpack.c.l.b16 %v5417
    %v5459 = vpack.c.b16 %v5456, %v5455
    %v5460 = vpack.c.b16 %v5458, %v5457
    %v5464 = vsel %vm86, %v5450, 0
    %5466 = vmatprep.subr.bf16.mxu0 0
    %5467 = vmatpush1.bf16.msra.mxu0 %v5459
    %5468 = vmatprep.subr.bf16.mxu0 0
    %5469 = vmatpush1.bf16.msra.mxu0 %v5460
    %5470 = vmatprep.subr.bf16.mxu0 0
    %5471 = vmatpush1.bf16.msra.mxu0 0
    %5472 = vmatprep.subr.bf16.mxu0 0
    %5473 = vmatpush1.bf16.msra.mxu0 0
    %5474 = vmatprep.subr.bf16.mxu0 0
    %5475 = vmatpush1.bf16.msra.mxu0 0
    %5476 = vmatprep.subr.bf16.mxu0 0
    %5477 = vmatpush1.bf16.msra.mxu0 0
    %5478 = vmatprep.subr.bf16.mxu0 0
    %5479 = vmatpush1.bf16.msra.mxu0 0
    %5480 = vmatprep.subr.bf16.mxu0 0
    %5481 = vmatpush1.bf16.msra.mxu0 0
    %5482 = vmatprep.subr.bf16.mxu0 0
    %5483 = vmatpush1.bf16.msra.mxu0 0
    %5484 = vmatprep.subr.bf16.mxu0 0
    %5485 = vmatpush1.bf16.msra.mxu0 0
    %5486 = vmatprep.subr.bf16.mxu0 0
    %5487 = vmatpush1.bf16.msra.mxu0 0
    %5488 = vmatprep.subr.bf16.mxu0 0
    %5489 = vmatpush1.bf16.msra.mxu0 0
    %5490 = vmatprep.subr.bf16.mxu0 0
    %5491 = vmatpush1.bf16.msra.mxu0 0
    %5492 = vmatprep.subr.bf16.mxu0 0
    %5493 = vmatpush1.bf16.msra.mxu0 0
    %5494 = vmatprep.subr.bf16.mxu0 0
    %5495 = vmatpush1.bf16.msra.mxu0 0
    %5496 = vmatprep.subr.bf16.mxu0 0
    %5497 = vmatpush1.bf16.msra.mxu0 0
    %5498 = vmatprep.mubr.bf16.mxu0 0
    %5499 = vmatmul.mubr.bf16.gmra.mrb[0].mxu0 %v5464
    %v5500 = vpop.f32.mrb[0].mxu0
    %v5501 = vadd.f32 0.0, %v5500
    %v5502 = vpop.f32.mrb[0].mxu0
    %v5503 = vpop.f32.mrb[0].mxu0
    %v5504 = vpop.f32.mrb[0].mxu0
    %5505 = vdwg.mxu0
    %v5507 = vrot.slane %v5501, 2
    %v5508 = vrot.slane %v5501, 3
    %v5509 = vrot.slane %v5501, 4
    %v5510 = vrot.slane %v5501, 5
    %v5511 = vrot.slane %v5501, 6
    %v5512 = vrot.slane %v5501, 7
    %v5513 = vrot.slane %v5501, 1
    %v5522 = vadd.f32 %v5398, %v5507
    %v5523 = vadd.f32 %v5399, %v5508
    %v5524 = vadd.f32 %v5400, %v5509
    %v5525 = vadd.f32 %v5401, %v5510
    %v5526 = vadd.f32 %v5402, %v5511
    %v5527 = vadd.f32 %v5403, %v5512
    %v5528 = vadd.f32 %v5404, %v5501
    %v5529 = vadd.f32 %v5405, %v5513
    %v5530 = vmul.f32 %v5522, 0.5
    %v5531 = vmul.f32 %v5523, 0.5
    %v5532 = vmul.f32 %v5524, 0.5
    %v5533 = vmul.f32 %v5525, 0.5
    %v5534 = vmul.f32 %v5526, 0.5
    %v5535 = vmul.f32 %v5527, 0.5
    %v5536 = vmul.f32 %v5528, 0.5
    %v5537 = vmul.f32 %v5529, 0.5
    %v5538 = vtanh.pop %v5530
    %v5539 = vtanh.pop %v5531
    %v5540 = vtanh.pop %v5532
    %v5541 = vtanh.pop %v5533
    %v5542 = vtanh.pop %v5534
    %v5543 = vtanh.pop %v5535
    %v5544 = vtanh.pop %v5536
    %v5545 = vtanh.pop %v5537
    %v5546 = vmul.f32 %v5538, 0.5
    %v5547 = vmul.f32 %v5539, 0.5
    %v5548 = vmul.f32 %v5540, 0.5
    %v5549 = vmul.f32 %v5541, 0.5
    %v5550 = vmul.f32 %v5542, 0.5
    %v5551 = vmul.f32 %v5543, 0.5
    %v5552 = vmul.f32 %v5544, 0.5
    %v5553 = vmul.f32 %v5545, 0.5
    %v5554 = vadd.f32 %v5546, 0.5
    %v5555 = vadd.f32 %v5547, 0.5
    %v5556 = vadd.f32 %v5548, 0.5
    %v5557 = vadd.f32 %v5549, 0.5
    %v5558 = vadd.f32 %v5550, 0.5
    %v5559 = vadd.f32 %v5551, 0.5
    %v5560 = vadd.f32 %v5552, 0.5
    %v5561 = vadd.f32 %v5553, 0.5
    %v5562 = vtanh.pop %v5522
    %v5563 = vtanh.pop %v5523
    %v5564 = vtanh.pop %v5524
    %v5565 = vtanh.pop %v5525
    %v5566 = vtanh.pop %v5526
    %v5567 = vtanh.pop %v5527
    %v5568 = vtanh.pop %v5528
    %v5569 = vtanh.pop %v5529
    %v5578 = vrot.slane %v5294, 7
    %v5579 = vrot.slane %v5295, 7
    %v5580 = vrot.slane %v5296, 7
    %v5581 = vrot.slane %v5297, 7
    %v5582 = vrot.slane %v5298, 7
    %v5583 = vrot.slane %v5299, 7
    %v5584 = vrot.slane %v5300, 7
    %v5585 = vrot.slane %v5301, 7
    %v5594 = vmul.f32 %v5554, %v5578
    %v5595 = vmul.f32 %v5555, %v5579
    %v5596 = vmul.f32 %v5556, %v5580
    %v5597 = vmul.f32 %v5557, %v5581
    %v5598 = vmul.f32 %v5558, %v5582
    %v5599 = vmul.f32 %v5559, %v5583
    %v5600 = vmul.f32 %v5560, %v5584
    %v5601 = vmul.f32 %v5561, %v5585
    %5610 = vrot.lane.b32.xlu0 %v5562, 32
    %v5611 = vpop.permute.xlu0 %5610
    %5612 = vrot.lane.b32.xlu0 %v5563, 32
    %v5613 = vpop.permute.xlu0 %5612
    %5614 = vrot.lane.b32.xlu0 %v5564, 32
    %v5615 = vpop.permute.xlu0 %5614
    %5616 = vrot.lane.b32.xlu0 %v5565, 32
    %v5617 = vpop.permute.xlu0 %5616
    %5618 = vrot.lane.b32.xlu0 %v5566, 32
    %v5619 = vpop.permute.xlu0 %5618
    %5620 = vrot.lane.b32.xlu0 %v5567, 32
    %v5621 = vpop.permute.xlu0 %5620
    %5622 = vrot.lane.b32.xlu0 %v5568, 32
    %v5623 = vpop.permute.xlu0 %5622
    %5624 = vrot.lane.b32.xlu0 %v5569, 32
    %v5625 = vpop.permute.xlu0 %5624
    %v5634 = vmul.f32 %v5554, %v5611
    %v5635 = vmul.f32 %v5555, %v5613
    %v5636 = vmul.f32 %v5556, %v5615
    %v5637 = vmul.f32 %v5557, %v5617
    %v5638 = vmul.f32 %v5558, %v5619
    %v5639 = vmul.f32 %v5559, %v5621
    %v5640 = vmul.f32 %v5560, %v5623
    %v5641 = vmul.f32 %v5561, %v5625
    %5650 = vrot.lane.b32.xlu0 %v5634, 32
    %v5651 = vpop.permute.xlu0 %5650
    %5652 = vrot.lane.b32.xlu0 %v5635, 32
    %v5653 = vpop.permute.xlu0 %5652
    %5654 = vrot.lane.b32.xlu0 %v5636, 32
    %v5655 = vpop.permute.xlu0 %5654
    %5656 = vrot.lane.b32.xlu0 %v5637, 32
    %v5657 = vpop.permute.xlu0 %5656
    %5658 = vrot.lane.b32.xlu0 %v5638, 32
    %v5659 = vpop.permute.xlu0 %5658
    %5660 = vrot.lane.b32.xlu0 %v5639, 32
    %v5661 = vpop.permute.xlu0 %5660
    %5662 = vrot.lane.b32.xlu0 %v5640, 32
    %v5663 = vpop.permute.xlu0 %5662
    %5664 = vrot.lane.b32.xlu0 %v5641, 32
    %v5665 = vpop.permute.xlu0 %5664
    %v5674 = vadd.f32 %v5594, %v5651
    %v5675 = vadd.f32 %v5595, %v5653
    %v5676 = vadd.f32 %v5596, %v5655
    %v5677 = vadd.f32 %v5597, %v5657
    %v5678 = vadd.f32 %v5598, %v5659
    %v5679 = vadd.f32 %v5599, %v5661
    %v5680 = vadd.f32 %v5600, %v5663
    %v5681 = vadd.f32 %v5601, %v5665
    %v5682 = vtanh.pop %v5674
    %v5683 = vtanh.pop %v5675
    %v5684 = vtanh.pop %v5676
    %v5685 = vtanh.pop %v5677
    %v5686 = vtanh.pop %v5678
    %v5687 = vtanh.pop %v5679
    %v5688 = vtanh.pop %v5680
    %v5689 = vtanh.pop %v5681
    %5698 = vrot.lane.b32.xlu0 %v5682, 32
    %v5699 = vpop.permute.xlu0 %5698
    %5700 = vrot.lane.b32.xlu0 %v5683, 32
    %v5701 = vpop.permute.xlu0 %5700
    %5702 = vrot.lane.b32.xlu0 %v5684, 32
    %v5703 = vpop.permute.xlu0 %5702
    %5704 = vrot.lane.b32.xlu0 %v5685, 32
    %v5705 = vpop.permute.xlu0 %5704
    %5706 = vrot.lane.b32.xlu0 %v5686, 32
    %v5707 = vpop.permute.xlu0 %5706
    %5708 = vrot.lane.b32.xlu0 %v5687, 32
    %v5709 = vpop.permute.xlu0 %5708
    %5710 = vrot.lane.b32.xlu0 %v5688, 32
    %v5711 = vpop.permute.xlu0 %5710
    %5712 = vrot.lane.b32.xlu0 %v5689, 32
    %v5713 = vpop.permute.xlu0 %5712
    %v5722 = vmul.f32 %v5554, %v5699
    %v5723 = vmul.f32 %v5555, %v5701
    %v5724 = vmul.f32 %v5556, %v5703
    %v5725 = vmul.f32 %v5557, %v5705
    %v5726 = vmul.f32 %v5558, %v5707
    %v5727 = vmul.f32 %v5559, %v5709
    %v5728 = vmul.f32 %v5560, %v5711
    %v5729 = vmul.f32 %v5561, %v5713
    %5738 = vrot.lane.b32.xlu0 %v5722, 64
    %v5739 = vpop.permute.xlu0 %5738
    %5740 = vrot.lane.b32.xlu0 %v5723, 64
    %v5741 = vpop.permute.xlu0 %5740
    %5742 = vrot.lane.b32.xlu0 %v5724, 64
    %v5743 = vpop.permute.xlu0 %5742
    %5744 = vrot.lane.b32.xlu0 %v5725, 64
    %v5745 = vpop.permute.xlu0 %5744
    %5746 = vrot.lane.b32.xlu0 %v5726, 64
    %v5747 = vpop.permute.xlu0 %5746
    %5748 = vrot.lane.b32.xlu0 %v5727, 64
    %v5749 = vpop.permute.xlu0 %5748
    %5750 = vrot.lane.b32.xlu0 %v5728, 64
    %v5751 = vpop.permute.xlu0 %5750
    %5752 = vrot.lane.b32.xlu0 %v5729, 64
    %v5753 = vpop.permute.xlu0 %5752
    %5762 = vst.msk [vmem:[#allocation9 + $0x8] sm:$0x40] %vm2687, %v5739
    %5763 = vst.msk [vmem:[#allocation9 + $0x18] sm:$0x40] %vm2687, %v5741
    %5764 = vst.msk [vmem:[#allocation9 + $0x28] sm:$0x40] %vm2687, %v5743
    %5765 = vst.msk [vmem:[#allocation9 + $0x38] sm:$0x40] %vm2687, %v5745
    %5766 = vst.msk [vmem:[#allocation9 + $0x48] sm:$0x40] %vm2687, %v5747
    %5767 = vst.msk [vmem:[#allocation9 + $0x58] sm:$0x40] %vm2687, %v5749
    %5768 = vst.msk [vmem:[#allocation9 + $0x68] sm:$0x40] %vm2687, %v5751
    %5769 = vst.msk [vmem:[#allocation9 + $0x78] sm:$0x40] %vm2687, %v5753
    %v5770 = vld [vmem:[#allocation4 + $0x4] sm:$0x8]
    %v5771 = vld [vmem:[#allocation4 + $0xc] sm:$0x8]
    %v5772 = vld [vmem:[#allocation4 + $0x14] sm:$0x8]
    %v5773 = vld [vmem:[#allocation4 + $0x1c] sm:$0x8]
    %v5774 = vld [vmem:[#allocation4 + $0x24] sm:$0x8]
    %v5775 = vld [vmem:[#allocation4 + $0x2c] sm:$0x8]
    %v5776 = vld [vmem:[#allocation4 + $0x34] sm:$0x8]
    %v5777 = vld [vmem:[#allocation4 + $0x3c] sm:$0x8]
    %v5778 = vunpack.c.l.bf16 %v5770
    %v5779 = vunpack.c.l.bf16 %v5771
    %v5780 = vunpack.c.l.bf16 %v5772
    %v5781 = vunpack.c.l.bf16 %v5773
    %v5782 = vunpack.c.l.bf16 %v5774
    %v5783 = vunpack.c.l.bf16 %v5775
    %v5784 = vunpack.c.l.bf16 %v5776
    %v5785 = vunpack.c.l.bf16 %v5777
    %v5786 = vpack.c.bf16 %v5722, %v5722
    %v5787 = vpack.c.bf16 %v5723, %v5723
    %v5788 = vpack.c.bf16 %v5724, %v5724
    %v5789 = vpack.c.bf16 %v5725, %v5725
    %v5790 = vpack.c.bf16 %v5726, %v5726
    %v5791 = vpack.c.bf16 %v5727, %v5727
    %v5792 = vpack.c.bf16 %v5728, %v5728
    %v5793 = vpack.c.bf16 %v5729, %v5729
    %v5794 = vld [vmem:[#allocation7] sm:$0xf]
    %v5795 = vld [vmem:[#allocation7 + $0x4] sm:$0xf]
    %v5796 = vld [vmem:[#allocation7 + $0x8] sm:$0xf]
    %v5797 = vld [vmem:[#allocation7 + $0xc] sm:$0xf]
    %v5806 = vunpack.c.l.b16 %v5786
    %v5807 = vunpack.c.l.b16 %v5787
    %v5808 = vunpack.c.l.b16 %v5788
    %v5809 = vunpack.c.l.b16 %v5789
    %v5810 = vunpack.c.l.b16 %v5790
    %v5811 = vunpack.c.l.b16 %v5791
    %v5812 = vunpack.c.l.b16 %v5792
    %v5813 = vunpack.c.l.b16 %v5793
    %v5814 = vrot.slane %v5806, 6
    %v5815 = vrot.slane %v5807, 5
    %v5816 = vsel %vm448, %v5815, %v5814
    %v5817 = vrot.slane %v5808, 4
    %v5818 = vsel %vm451, %v5817, %v5816
    %v5819 = vrot.slane %v5809, 3
    %v5820 = vsel %vm454, %v5819, %v5818
    %v5821 = vrot.slane %v5810, 2
    %v5822 = vsel %vm457, %v5821, %v5820
    %v5823 = vrot.slane %v5811, 1
    %v5824 = vsel %vm460, %v5823, %v5822
    %v5825 = vsel %vm463, %v5812, %v5824
    %v5826 = vrot.slane %v5813, 7
    %v5827 = vsel %vm466, %v5826, %v5825
    %v5828 = vpack.c.b16 %v5827, %v5827
    %5829 = vrot.lane.b32.xlu0 %v5828, 64
    %v5830 = vpop.permute.xlu0 %5829
    %v5835 = vunpack.c.l.b16 %v5794
    %v5836 = vunpack.c.l.b16 %v5795
    %v5837 = vunpack.c.l.b16 %v5796
    %v5838 = vunpack.c.l.b16 %v5797
    %v5839 = vpack.c.b16 %v5836, %v5835
    %v5840 = vpack.c.b16 %v5838, %v5837
    %v5844 = vsel %vm86, %v5830, 0
    %5846 = vmatprep.subr.bf16.mxu0 0
    %5847 = vmatpush1.bf16.msra.mxu0 %v5839
    %5848 = vmatprep.subr.bf16.mxu0 0
    %5849 = vmatpush1.bf16.msra.mxu0 %v5840
    %5850 = vmatprep.subr.bf16.mxu0 0
    %5851 = vmatpush1.bf16.msra.mxu0 0
    %5852 = vmatprep.subr.bf16.mxu0 0
    %5853 = vmatpush1.bf16.msra.mxu0 0
    %5854 = vmatprep.subr.bf16.mxu0 0
    %5855 = vmatpush1.bf16.msra.mxu0 0
    %5856 = vmatprep.subr.bf16.mxu0 0
    %5857 = vmatpush1.bf16.msra.mxu0 0
    %5858 = vmatprep.subr.bf16.mxu0 0
    %5859 = vmatpush1.bf16.msra.mxu0 0
    %5860 = vmatprep.subr.bf16.mxu0 0
    %5861 = vmatpush1.bf16.msra.mxu0 0
    %5862 = vmatprep.subr.bf16.mxu0 0
    %5863 = vmatpush1.bf16.msra.mxu0 0
    %5864 = vmatprep.subr.bf16.mxu0 0
    %5865 = vmatpush1.bf16.msra.mxu0 0
    %5866 = vmatprep.subr.bf16.mxu0 0
    %5867 = vmatpush1.bf16.msra.mxu0 0
    %5868 = vmatprep.subr.bf16.mxu0 0
    %5869 = vmatpush1.bf16.msra.mxu0 0
    %5870 = vmatprep.subr.bf16.mxu0 0
    %5871 = vmatpush1.bf16.msra.mxu0 0
    %5872 = vmatprep.subr.bf16.mxu0 0
    %5873 = vmatpush1.bf16.msra.mxu0 0
    %5874 = vmatprep.subr.bf16.mxu0 0
    %5875 = vmatpush1.bf16.msra.mxu0 0
    %5876 = vmatprep.subr.bf16.mxu0 0
    %5877 = vmatpush1.bf16.msra.mxu0 0
    %5878 = vmatprep.mubr.bf16.mxu0 0
    %5879 = vmatmul.mubr.bf16.gmra.mrb[0].mxu0 %v5844
    %v5880 = vpop.f32.mrb[0].mxu0
    %v5881 = vadd.f32 0.0, %v5880
    %v5882 = vpop.f32.mrb[0].mxu0
    %v5883 = vpop.f32.mrb[0].mxu0
    %v5884 = vpop.f32.mrb[0].mxu0
    %5885 = vdwg.mxu0
    %v5887 = vrot.slane %v5881, 1
    %v5888 = vrot.slane %v5881, 2
    %v5889 = vrot.slane %v5881, 3
    %v5890 = vrot.slane %v5881, 4
    %v5891 = vrot.slane %v5881, 5
    %v5892 = vrot.slane %v5881, 6
    %v5893 = vrot.slane %v5881, 7
    %v5902 = vadd.f32 %v5778, %v5887
    %v5903 = vadd.f32 %v5779, %v5888
    %v5904 = vadd.f32 %v5780, %v5889
    %v5905 = vadd.f32 %v5781, %v5890
    %v5906 = vadd.f32 %v5782, %v5891
    %v5907 = vadd.f32 %v5783, %v5892
    %v5908 = vadd.f32 %v5784, %v5893
    %v5909 = vadd.f32 %v5785, %v5881
    %v5910 = vmul.f32 %v5902, 0.5
    %v5911 = vmul.f32 %v5903, 0.5
    %v5912 = vmul.f32 %v5904, 0.5
    %v5913 = vmul.f32 %v5905, 0.5
    %v5914 = vmul.f32 %v5906, 0.5
    %v5915 = vmul.f32 %v5907, 0.5
    %v5916 = vmul.f32 %v5908, 0.5
    %v5917 = vmul.f32 %v5909, 0.5
    %v5918 = vtanh.pop %v5910
    %v5919 = vtanh.pop %v5911
    %v5920 = vtanh.pop %v5912
    %v5921 = vtanh.pop %v5913
    %v5922 = vtanh.pop %v5914
    %v5923 = vtanh.pop %v5915
    %v5924 = vtanh.pop %v5916
    %v5925 = vtanh.pop %v5917
    %v5926 = vmul.f32 %v5918, 0.5
    %v5927 = vmul.f32 %v5919, 0.5
    %v5928 = vmul.f32 %v5920, 0.5
    %v5929 = vmul.f32 %v5921, 0.5
    %v5930 = vmul.f32 %v5922, 0.5
    %v5931 = vmul.f32 %v5923, 0.5
    %v5932 = vmul.f32 %v5924, 0.5
    %v5933 = vmul.f32 %v5925, 0.5
    %v5934 = vadd.f32 %v5926, 0.5
    %v5935 = vadd.f32 %v5927, 0.5
    %v5936 = vadd.f32 %v5928, 0.5
    %v5937 = vadd.f32 %v5929, 0.5
    %v5938 = vadd.f32 %v5930, 0.5
    %v5939 = vadd.f32 %v5931, 0.5
    %v5940 = vadd.f32 %v5932, 0.5
    %v5941 = vadd.f32 %v5933, 0.5
    %v5942 = vtanh.pop %v5902
    %v5943 = vtanh.pop %v5903
    %v5944 = vtanh.pop %v5904
    %v5945 = vtanh.pop %v5905
    %v5946 = vtanh.pop %v5906
    %v5947 = vtanh.pop %v5907
    %v5948 = vtanh.pop %v5908
    %v5949 = vtanh.pop %v5909
    %v5958 = vrot.slane %v5674, 7
    %v5959 = vrot.slane %v5675, 7
    %v5960 = vrot.slane %v5676, 7
    %v5961 = vrot.slane %v5677, 7
    %v5962 = vrot.slane %v5678, 7
    %v5963 = vrot.slane %v5679, 7
    %v5964 = vrot.slane %v5680, 7
    %v5965 = vrot.slane %v5681, 7
    %v5974 = vmul.f32 %v5934, %v5958
    %v5975 = vmul.f32 %v5935, %v5959
    %v5976 = vmul.f32 %v5936, %v5960
    %v5977 = vmul.f32 %v5937, %v5961
    %v5978 = vmul.f32 %v5938, %v5962
    %v5979 = vmul.f32 %v5939, %v5963
    %v5980 = vmul.f32 %v5940, %v5964
    %v5981 = vmul.f32 %v5941, %v5965
    %5990 = vrot.lane.b32.xlu0 %v5942, 32
    %v5991 = vpop.permute.xlu0 %5990
    %5992 = vrot.lane.b32.xlu0 %v5943, 32
    %v5993 = vpop.permute.xlu0 %5992
    %5994 = vrot.lane.b32.xlu0 %v5944, 32
    %v5995 = vpop.permute.xlu0 %5994
    %5996 = vrot.lane.b32.xlu0 %v5945, 32
    %v5997 = vpop.permute.xlu0 %5996
    %5998 = vrot.lane.b32.xlu0 %v5946, 32
    %v5999 = vpop.permute.xlu0 %5998
    %6000 = vrot.lane.b32.xlu0 %v5947, 32
    %v6001 = vpop.permute.xlu0 %6000
    %6002 = vrot.lane.b32.xlu0 %v5948, 32
    %v6003 = vpop.permute.xlu0 %6002
    %6004 = vrot.lane.b32.xlu0 %v5949, 32
    %v6005 = vpop.permute.xlu0 %6004
    %v6014 = vmul.f32 %v5934, %v5991
    %v6015 = vmul.f32 %v5935, %v5993
    %v6016 = vmul.f32 %v5936, %v5995
    %v6017 = vmul.f32 %v5937, %v5997
    %v6018 = vmul.f32 %v5938, %v5999
    %v6019 = vmul.f32 %v5939, %v6001
    %v6020 = vmul.f32 %v5940, %v6003
    %v6021 = vmul.f32 %v5941, %v6005
    %6030 = vrot.lane.b32.xlu0 %v6014, 32
    %v6031 = vpop.permute.xlu0 %6030
    %6032 = vrot.lane.b32.xlu0 %v6015, 32
    %v6033 = vpop.permute.xlu0 %6032
    %6034 = vrot.lane.b32.xlu0 %v6016, 32
    %v6035 = vpop.permute.xlu0 %6034
    %6036 = vrot.lane.b32.xlu0 %v6017, 32
    %v6037 = vpop.permute.xlu0 %6036
    %6038 = vrot.lane.b32.xlu0 %v6018, 32
    %v6039 = vpop.permute.xlu0 %6038
    %6040 = vrot.lane.b32.xlu0 %v6019, 32
    %v6041 = vpop.permute.xlu0 %6040
    %6042 = vrot.lane.b32.xlu0 %v6020, 32
    %v6043 = vpop.permute.xlu0 %6042
    %6044 = vrot.lane.b32.xlu0 %v6021, 32
    %v6045 = vpop.permute.xlu0 %6044
    %v6054 = vadd.f32 %v5974, %v6031
    %v6055 = vadd.f32 %v5975, %v6033
    %v6056 = vadd.f32 %v5976, %v6035
    %v6057 = vadd.f32 %v5977, %v6037
    %v6058 = vadd.f32 %v5978, %v6039
    %v6059 = vadd.f32 %v5979, %v6041
    %v6060 = vadd.f32 %v5980, %v6043
    %v6061 = vadd.f32 %v5981, %v6045
    %v6062 = vtanh.pop %v6054
    %v6063 = vtanh.pop %v6055
    %v6064 = vtanh.pop %v6056
    %v6065 = vtanh.pop %v6057
    %v6066 = vtanh.pop %v6058
    %v6067 = vtanh.pop %v6059
    %v6068 = vtanh.pop %v6060
    %v6069 = vtanh.pop %v6061
    %6078 = vrot.lane.b32.xlu0 %v6062, 32
    %v6079 = vpop.permute.xlu0 %6078
    %6080 = vrot.lane.b32.xlu0 %v6063, 32
    %v6081 = vpop.permute.xlu0 %6080
    %6082 = vrot.lane.b32.xlu0 %v6064, 32
    %v6083 = vpop.permute.xlu0 %6082
    %6084 = vrot.lane.b32.xlu0 %v6065, 32
    %v6085 = vpop.permute.xlu0 %6084
    %6086 = vrot.lane.b32.xlu0 %v6066, 32
    %v6087 = vpop.permute.xlu0 %6086
    %6088 = vrot.lane.b32.xlu0 %v6067, 32
    %v6089 = vpop.permute.xlu0 %6088
    %6090 = vrot.lane.b32.xlu0 %v6068, 32
    %v6091 = vpop.permute.xlu0 %6090
    %6092 = vrot.lane.b32.xlu0 %v6069, 32
    %v6093 = vpop.permute.xlu0 %6092
    %v6102 = vmul.f32 %v5934, %v6079
    %v6103 = vmul.f32 %v5935, %v6081
    %v6104 = vmul.f32 %v5936, %v6083
    %v6105 = vmul.f32 %v5937, %v6085
    %v6106 = vmul.f32 %v5938, %v6087
    %v6107 = vmul.f32 %v5939, %v6089
    %v6108 = vmul.f32 %v5940, %v6091
    %v6109 = vmul.f32 %v5941, %v6093
    %6118 = vrot.lane.b32.xlu0 %v6102, 64
    %v6119 = vpop.permute.xlu0 %6118
    %6120 = vrot.lane.b32.xlu0 %v6103, 64
    %v6121 = vpop.permute.xlu0 %6120
    %6122 = vrot.lane.b32.xlu0 %v6104, 64
    %v6123 = vpop.permute.xlu0 %6122
    %6124 = vrot.lane.b32.xlu0 %v6105, 64
    %v6125 = vpop.permute.xlu0 %6124
    %6126 = vrot.lane.b32.xlu0 %v6106, 64
    %v6127 = vpop.permute.xlu0 %6126
    %6128 = vrot.lane.b32.xlu0 %v6107, 64
    %v6129 = vpop.permute.xlu0 %6128
    %6130 = vrot.lane.b32.xlu0 %v6108, 64
    %v6131 = vpop.permute.xlu0 %6130
    %6132 = vrot.lane.b32.xlu0 %v6109, 64
    %v6133 = vpop.permute.xlu0 %6132
    %6142 = vst.msk [vmem:[#allocation9 + $0x8] sm:$0x80] %vm3068, %v6119
    %6143 = vst.msk [vmem:[#allocation9 + $0x18] sm:$0x80] %vm3068, %v6121
    %6144 = vst.msk [vmem:[#allocation9 + $0x28] sm:$0x80] %vm3068, %v6123
    %6145 = vst.msk [vmem:[#allocation9 + $0x38] sm:$0x80] %vm3068, %v6125
    %6146 = vst.msk [vmem:[#allocation9 + $0x48] sm:$0x80] %vm3068, %v6127
    %6147 = vst.msk [vmem:[#allocation9 + $0x58] sm:$0x80] %vm3068, %v6129
    %6148 = vst.msk [vmem:[#allocation9 + $0x68] sm:$0x80] %vm3068, %v6131
    %6149 = vst.msk [vmem:[#allocation9 + $0x78] sm:$0x80] %vm3068, %v6133
    %v6150 = vrot.slane %v6103, 7
    %v6151 = vrot.slane %v6104, 6
    %v6152 = vsel %vm448, %v6151, %v6150
    %v6153 = vrot.slane %v6105, 5
    %v6154 = vsel %vm451, %v6153, %v6152
    %v6155 = vrot.slane %v6106, 4
    %v6156 = vsel %vm454, %v6155, %v6154
    %v6157 = vrot.slane %v6107, 3
    %v6158 = vsel %vm457, %v6157, %v6156
    %v6159 = vrot.slane %v6108, 2
    %v6160 = vsel %vm460, %v6159, %v6158
    %v6161 = vrot.slane %v6109, 1
    %v6162 = vsel %vm463, %v6161, %v6160
    %6163 = vrot.lane.b32.xlu0 %v6162, 64
    %v6164 = vpop.permute.xlu0 %6163
    %6166 = vst.msk [vmem:[#allocation2 - $0x7] sm:$0x80] %vm3068, %v6119
    %vm6167 = vcmask 260096
    %6168 = vst.msk [vmem:[#allocation2 + $0x1] sm:$0x7f] %vm6167, %v6164
    %v6177 = vrot.slane %v6055, 7
    %v6178 = vrot.slane %v6056, 6
    %v6179 = vsel %vm448, %v6178, %v6177
    %v6180 = vrot.slane %v6057, 5
    %v6181 = vsel %vm451, %v6180, %v6179
    %v6182 = vrot.slane %v6058, 4
    %v6183 = vsel %vm454, %v6182, %v6181
    %v6184 = vrot.slane %v6059, 3
    %v6185 = vsel %vm457, %v6184, %v6183
    %v6186 = vrot.slane %v6060, 2
    %v6187 = vsel %vm460, %v6186, %v6185
    %v6188 = vrot.slane %v6061, 1
    %v6189 = vsel %vm463, %v6188, %v6187
    %6190 = vrot.lane.b32.xlu0 %v6054, 96
    %v6191 = vpop.permute.xlu0 %6190
    %6192 = vrot.lane.b32.xlu0 %v6189, 96
    %v6193 = vpop.permute.xlu0 %6192
    %6196 = vst.msk [vmem:[#allocation3 - $0x7] sm:$0x80] %vm3068, %v6191
    %6197 = vst.msk [vmem:[#allocation3 + $0x1] sm:$0x7f] %vm6167, %v6193
    // Predicated region
    $region26: #{tpu_custom_call.1} parent=1 // pred_check
      _
    $region27: #{tpu_custom_call.1} parent=1 // pred_check_branch
      %6199 = sbr.rel (0) target = $region29
    $region28: #{tpu_custom_call.1} parent=1 // pred_region
      %s6201 = ssub.s32 2048, 2048
      %6202 = vsyncadd [#allocation6], %s6201
      %s6203 = sshll.u32 [#allocation9], 4
      %s6204 = int_to_ptr.vmem [resolvable:$true] %s6203
      %6209 = dma.vmem_to_hbm [thread:$0]  %s6204, 2048, %s2, [#allocation6], 128, 128, 8
    $region29: #{tpu_custom_call.1} parent=1 // pred_fallthru
      _
    // Predicated region
    $region30: #{tpu_custom_call.1} parent=1 // pred_check
      _
    $region31: #{tpu_custom_call.1} parent=1 // pred_check_branch
      %6211 = sbr.rel (0) target = $region33
    $region32: #{tpu_custom_call.1} parent=1 // pred_region
      %s6213 = ssub.s32 128, 128
      %6214 = vsyncadd [#allocation11], %s6213
      %s6216 = sshll.u32 [#allocation10], 4
      %s6217 = int_to_ptr.vmem [resolvable:$true] %s6216
      %6219 = dma.vmem_to_hbm [thread:$0]  %s6217, 128, %s3, [#allocation11]
    $region33: #{tpu_custom_call.1} parent=1 // pred_fallthru
      _
    // Predicated region
    $region34: #{tpu_custom_call.1} parent=1 // pred_check
      _
    $region35: #{tpu_custom_call.1} parent=1 // pred_check_branch
      %6221 = sbr.rel (0) target = $region37
    $region36: #{tpu_custom_call.1} parent=1 // pred_region
      %6222 = dma.done [#allocation6], 2048
    $region37: #{tpu_custom_call.1} parent=1 // pred_fallthru
      _
    // Predicated region
    $region38: #{tpu_custom_call.1} parent=1 // pred_check
      _
    $region39: #{tpu_custom_call.1} parent=1 // pred_check_branch
      %6224 = sbr.rel (0) target = $region41
    $region40: #{tpu_custom_call.1} parent=1 // pred_region
      %6225 = dma.done [#allocation11], 128
    $region41: #{tpu_custom_call.1} parent=1 // pred_fallthru
      _
    %6226 = vsyncpa [#allocation5], 1
    %6227 = vsyncpa [#allocation8], 1
    %6228 = vsyncpa [#allocation6], 1
    %6229 = vsyncpa [#allocation11], 1

// kernel: tpu_custom_call.1
$region0: #{tpu_custom_call.1}
  #allocation0 [shape = 'u32[]', space=smem, size = 0x4, offset = 0x4, fixed_abs, tag = 'smem constant byte address 0x4 - core index']
  #allocation1 [shape = 'u32[144,128]{1,0:T(1,128)}', space=vmem, size = 0x12000, scoped, tag = 'internal scratch']
  #allocation2 [shape = 'f32[8,32]{1,0:T(8,128)}', space=vmem, size = 0x1000, scoped, tag = 'scratch operand']
  #allocation3 [shape = 'f32[8,32]{1,0:T(8,128)}', space=vmem, size = 0x1000, scoped, tag = 'scratch operand']
  %s0 = inlined_call_operand.hbm [shape: bf16[8,16,128], index: 0, kind: input, shape index: {}]
  %s1 = inlined_call_operand.hbm [shape: bf16[32,128], index: 1, kind: input, shape index: {}]
  %s2 = inlined_call_operand.hbm [shape: f32[8,16,32], index: 2, kind: output, shape index: {0}]
  %s3 = inlined_call_operand.hbm [shape: f32[8,32], index: 3, kind: output, shape index: {1}]
  %4 = xla_tuple %s2, %s3
  %s5 = sld [smem:[#allocation0]]
  $region42: #{tpu_custom_call.1} parent=0
    _
  %s7 = ssub.s32 1, %s5
  %s8 = scalar_select 0, %s7, %s5
  $region1: #{tpu_custom_call.1} parent=0
    #allocation4 [shape = 'u8[32768]{0}', space=vmem, size = 0x8000, scoped, tag = 'input window, operand 0, single buffered']
    #allocation5 [shape = 's32[1]{0}', space=sflag, size = 0x4, scoped, tag = 'scoped memory for tpu_custom_call.1']
    #allocation6 [shape = 's32[1]{0}', space=sflag, size = 0x4, scoped, tag = 'scoped memory for tpu_custom_call.1']
    #allocation7 [shape = 'u8[8192]{0}', space=vmem, size = 0x2000, scoped, tag = 'input window, operand 1, single buffered']
    #allocation8 [shape = 's32[1]{0}', space=sflag, size = 0x4, scoped, tag = 'scoped memory for tpu_custom_call.1']
    #allocation9 [shape = 'u8[65536]{0}', space=vmem, size = 0x10000, scoped, tag = 'output window, operand 0, single buffered']
    #allocation10 [shape = 'u8[4096]{0}', space=vmem, size = 0x1000, scoped, tag = 'output window, operand 1, single buffered']
    #allocation11 [shape = 's32[1]{0}', space=sflag, size = 0x4, scoped, tag = 'scoped memory for tpu_custom_call.1']
    %9 = vsyncpa [#allocation5], 0
    %10 = vsyncpa [#allocation8], 0
    %11 = vsyncpa [#allocation6], 0
    %12 = vsyncpa [#allocation11], 0
    // Predicated region
    $region2: #{tpu_custom_call.1} parent=1 // pred_check
      _
    $region3: #{tpu_custom_call.1} parent=1 // pred_check_branch
      %14 = sbr.rel (0) target = $region5
    $region4: #{tpu_custom_call.1} parent=1 // pred_region
      %s16 = ssub.s32 1024, 1024
      %17 = vsyncadd [#allocation5], %s16
      %s18 = sshll.u32 [#allocation4], 4
      %s19 = int_to_ptr.vmem [resolvable:$true] %s18
      %24 = dma.hbm_to_vmem [thread:$0]  %s0, 1024, %s19, [#allocation5], 64, 64, 4
    $region5: #{tpu_custom_call.1} parent=1 // pred_fallthru
      _
    // Predicated region
    $region6: #{tpu_custom_call.1} parent=1 // pred_check
      _
    $region7: #{tpu_custom_call.1} parent=1 // pred_check_branch
      %26 = sbr.rel (0) target = $region9
    $region8: #{tpu_custom_call.1} parent=1 // pred_region
      %s28 = ssub.s32 256, 256
      %29 = vsyncadd [#allocation8], %s28
      %s30 = sshll.u32 [#allocation7], 4
      %s31 = int_to_ptr.vmem [resolvable:$true] %s30
      %36 = dma.hbm_to_vmem [thread:$0]  %s1, 256, %s31, [#allocation8], 64, 64, 4
    $region9: #{tpu_custom_call.1} parent=1 // pred_fallthru
      _
    // Predicated region
    $region10: #{tpu_custom_call.1} parent=1 // pred_check
      _
    $region11: #{tpu_custom_call.1} parent=1 // pred_check_branch
      %38 = sbr.rel (0) target = $region13
    $region12: #{tpu_custom_call.1} parent=1 // pred_region
      %39 = dma.done [#allocation5], 1024
    $region13: #{tpu_custom_call.1} parent=1 // pred_fallthru
      _
    // Predicated region
    $region14: #{tpu_custom_call.1} parent=1 // pred_check
      _
    $region15: #{tpu_custom_call.1} parent=1 // pred_check_branch
      %41 = sbr.rel (0) target = $region17
    $region16: #{tpu_custom_call.1} parent=1 // pred_region
      %42 = dma.done [#allocation8], 256
    $region17: #{tpu_custom_call.1} parent=1 // pred_fallthru
      _
    %p44 = scmp.eq.s32.totalorder 0, 0
    // Predicated region
    $region18: #{tpu_custom_call.1} parent=1 // pred_check
      %p45 = pneg %p44
    $region19: #{tpu_custom_call.1} parent=1 // pred_check_branch
      %47 = sbr.rel (%p45) target = $region21
    $region20: #{tpu_custom_call.1} parent=1 // pred_region
      %vm48 = vcmask 261120
      %49 = vst.msk [vmem:[#allocation2] sm:$0xff] %vm48, 0.0
      %50 = vst.msk [vmem:[#allocation3] sm:$0xff] %vm48, 0.0
    $region21: #{tpu_custom_call.1} parent=1 // pred_fallthru
      _
    %v51 = vld [vmem:[#allocation2] sm:$0xff]
    %v52 = vld [vmem:[#allocation3] sm:$0xff]
    %v53 = vld [vmem:[#allocation4] sm:$0x1]
    %v54 = vld [vmem:[#allocation4 + $0x8] sm:$0x1]
    %v55 = vld [vmem:[#allocation4 + $0x10] sm:$0x1]
    %v56 = vld [vmem:[#allocation4 + $0x18] sm:$0x1]
    %v57 = vld [vmem:[#allocation4 + $0x20] sm:$0x1]
    %v58 = vld [vmem:[#allocation4 + $0x28] sm:$0x1]
    %v59 = vld [vmem:[#allocation4 + $0x30] sm:$0x1]
    %v60 = vld [vmem:[#allocation4 + $0x38] sm:$0x1]
    %v61 = vunpack.c.l.bf16 %v53
    %v62 = vunpack.c.l.bf16 %v54
    %v63 = vunpack.c.l.bf16 %v55
    %v64 = vunpack.c.l.bf16 %v56
    %v65 = vunpack.c.l.bf16 %v57
    %v66 = vunpack.c.l.bf16 %v58
    %v67 = vunpack.c.l.bf16 %v59
    %v68 = vunpack.c.l.bf16 %v60
    %v69 = vpack.c.bf16 %v51, %v51
    %v70 = vld [vmem:[#allocation7] sm:$0xf]
    %v71 = vld [vmem:[#allocation7 + $0x4] sm:$0xf]
    %v72 = vld [vmem:[#allocation7 + $0x8] sm:$0xf]
    %v73 = vld [vmem:[#allocation7 + $0xc] sm:$0xf]
    %v78 = vunpack.c.l.b16 %v70
    %v79 = vunpack.c.l.b16 %v71
    %v80 = vunpack.c.l.b16 %v72
    %v81 = vunpack.c.l.b16 %v73
    %v82 = vpack.c.b16 %v79, %v78
    %v83 = vpack.c.b16 %v81, %v80
    %vm86 = vcmask 261120
    %v88 = vsel %vm86, %v69, 0
    %90 = vmatprep.subr.bf16.mxu0 0
    %91 = vmatpush1.bf16.msra.mxu0 %v82
    %92 = vmatprep.subr.bf16.mxu0 0
    %93 = vmatpush1.bf16.msra.mxu0 %v83
    %94 = vmatprep.subr.bf16.mxu0 0
    %95 = vmatpush1.bf16.msra.mxu0 0
    %96 = vmatprep.subr.bf16.mxu0 0
    %97 = vmatpush1.bf16.msra.mxu0 0
    %98 = vmatprep.subr.bf16.mxu0 0
    %99 = vmatpush1.bf16.msra.mxu0 0
    %100 = vmatprep.subr.bf16.mxu0 0
    %101 = vmatpush1.bf16.msra.mxu0 0
    %102 = vmatprep.subr.bf16.mxu0 0
    %103 = vmatpush1.bf16.msra.mxu0 0
    %104 = vmatprep.subr.bf16.mxu0 0
    %105 = vmatpush1.bf16.msra.mxu0 0
    %106 = vmatprep.subr.bf16.mxu0 0
    %107 = vmatpush1.bf16.msra.mxu0 0
    %108 = vmatprep.subr.bf16.mxu0 0
    %109 = vmatpush1.bf16.msra.mxu0 0
    %110 = vmatprep.subr.bf16.mxu0 0
    %111 = vmatpush1.bf16.msra.mxu0 0
    %112 = vmatprep.subr.bf16.mxu0 0
    %113 = vmatpush1.bf16.msra.mxu0 0
    %114 = vmatprep.subr.bf16.mxu0 0
    %115 = vmatpush1.bf16.msra.mxu0 0
    %116 = vmatprep.subr.bf16.mxu0 0
    %117 = vmatpush1.bf16.msra.mxu0 0
    %118 = vmatprep.subr.bf16.mxu0 0
    %119 = vmatpush1.bf16.msra.mxu0 0
    %120 = vmatprep.subr.bf16.mxu0 0
    %121 = vmatpush1.bf16.msra.mxu0 0
    %122 = vmatprep.mubr.bf16.mxu0 0
    %123 = vmatmul.mubr.bf16.gmra.mrb[0].mxu0 %v88
    %v124 = vpop.f32.mrb[0].mxu0
    %v125 = vadd.f32 0.0, %v124
    %v126 = vpop.f32.mrb[0].mxu0
    %v127 = vpop.f32.mrb[0].mxu0
    %v128 = vpop.f32.mrb[0].mxu0
    %129 = vdwg.mxu0
    %v131 = vrot.slane %v125, 1
    %v132 = vrot.slane %v125, 2
    %v133 = vrot.slane %v125, 3
    %v134 = vrot.slane %v125, 4
    %v135 = vrot.slane %v125, 5
    %v136 = vrot.slane %v125, 6
    %v137 = vrot.slane %v125, 7
    %v146 = vadd.f32 %v61, %v125
    %v147 = vadd.f32 %v62, %v131
    %v148 = vadd.f32 %v63, %v132
    %v149 = vadd.f32 %v64, %v133
    %v150 = vadd.f32 %v65, %v134
    %v151 = vadd.f32 %v66, %v135
    %v152 = vadd.f32 %v67, %v136
    %v153 = vadd.f32 %v68, %v137
    %v154 = vmul.f32 %v146, 0.5
    %v155 = vmul.f32 %v147, 0.5
    %v156 = vmul.f32 %v148, 0.5
    %v157 = vmul.f32 %v149, 0.5
    %v158 = vmul.f32 %v150, 0.5
    %v159 = vmul.f32 %v151, 0.5
    %v160 = vmul.f32 %v152, 0.5
    %v161 = vmul.f32 %v153, 0.5
    %v162 = vtanh.pop %v154
    %v163 = vtanh.pop %v155
    %v164 = vtanh.pop %v156
    %v165 = vtanh.pop %v157
    %v166 = vtanh.pop %v158
    %v167 = vtanh.pop %v159
    %v168 = vtanh.pop %v160
    %v169 = vtanh.pop %v161
    %v170 = vmul.f32 %v162, 0.5
    %v171 = vmul.f32 %v163, 0.5
    %v172 = vmul.f32 %v164, 0.5
    %v173 = vmul.f32 %v165, 0.5
    %v174 = vmul.f32 %v166, 0.5
    %v175 = vmul.f32 %v167, 0.5
    %v176 = vmul.f32 %v168, 0.5
    %v177 = vmul.f32 %v169, 0.5
    %v178 = vadd.f32 %v170, 0.5
    %v179 = vadd.f32 %v171, 0.5
    %v180 = vadd.f32 %v172, 0.5
    %v181 = vadd.f32 %v173, 0.5
    %v182 = vadd.f32 %v174, 0.5
    %v183 = vadd.f32 %v175, 0.5
    %v184 = vadd.f32 %v176, 0.5
    %v185 = vadd.f32 %v177, 0.5
    %v186 = vtanh.pop %v146
    %v187 = vtanh.pop %v147
    %v188 = vtanh.pop %v148
    %v189 = vtanh.pop %v149
    %v190 = vtanh.pop %v150
    %v191 = vtanh.pop %v151
    %v192 = vtanh.pop %v152
    %v193 = vtanh.pop %v153
    %v195 = vrot.slane %v52, 1
    %v196 = vrot.slane %v52, 2
    %v197 = vrot.slane %v52, 3
    %v198 = vrot.slane %v52, 4
    %v199 = vrot.slane %v52, 5
    %v200 = vrot.slane %v52, 6
    %v201 = vrot.slane %v52, 7
    %202 = vrot.lane.b32.xlu0 %v52, 32
    %v203 = vpop.permute.xlu0 %202
    %204 = vrot.lane.b32.xlu0 %v195, 32
    %v205 = vpop.permute.xlu0 %204
    %206 = vrot.lane.b32.xlu0 %v196, 32
    %v207 = vpop.permute.xlu0 %206
    %208 = vrot.lane.b32.xlu0 %v197, 32
    %v209 = vpop.permute.xlu0 %208
    %210 = vrot.lane.b32.xlu0 %v198, 32
    %v211 = vpop.permute.xlu0 %210
    %212 = vrot.lane.b32.xlu0 %v199, 32
    %v213 = vpop.permute.xlu0 %212
    %214 = vrot.lane.b32.xlu0 %v200, 32
    %v215 = vpop.permute.xlu0 %214
    %216 = vrot.lane.b32.xlu0 %v201, 32
    %v217 = vpop.permute.xlu0 %216
    %v226 = vmul.f32 %v178, %v203
    %v227 = vmul.f32 %v179, %v205
    %v228 = vmul.f32 %v180, %v207
    %v229 = vmul.f32 %v181, %v209
    %v230 = vmul.f32 %v182, %v211
    %v231 = vmul.f32 %v183, %v213
    %v232 = vmul.f32 %v184, %v215
    %v233 = vmul.f32 %v185, %v217
    %242 = vrot.lane.b32.xlu0 %v186, 32
    %v243 = vpop.permute.xlu0 %242
    %244 = vrot.lane.b32.xlu0 %v187, 32
    %v245 = vpop.permute.xlu0 %244
    %246 = vrot.lane.b32.xlu0 %v188, 32
    %v247 = vpop.permute.xlu0 %246
    %248 = vrot.lane.b32.xlu0 %v189, 32
    %v249 = vpop.permute.xlu0 %248
    %250 = vrot.lane.b32.xlu0 %v190, 32
    %v251 = vpop.permute.xlu0 %250
    %252 = vrot.lane.b32.xlu0 %v191, 32
    %v253 = vpop.permute.xlu0 %252
    %254 = vrot.lane.b32.xlu0 %v192, 32
    %v255 = vpop.permute.xlu0 %254
    %256 = vrot.lane.b32.xlu0 %v193, 32
    %v257 = vpop.permute.xlu0 %256
    %v266 = vmul.f32 %v178, %v243
    %v267 = vmul.f32 %v179, %v245
    %v268 = vmul.f32 %v180, %v247
    %v269 = vmul.f32 %v181, %v249
    %v270 = vmul.f32 %v182, %v251
    %v271 = vmul.f32 %v183, %v253
    %v272 = vmul.f32 %v184, %v255
    %v273 = vmul.f32 %v185, %v257
    %282 = vrot.lane.b32.xlu0 %v266, 32
    %v283 = vpop.permute.xlu0 %282
    %284 = vrot.lane.b32.xlu0 %v267, 32
    %v285 = vpop.permute.xlu0 %284
    %286 = vrot.lane.b32.xlu0 %v268, 32
    %v287 = vpop.permute.xlu0 %286
    %288 = vrot.lane.b32.xlu0 %v269, 32
    %v289 = vpop.permute.xlu0 %288
    %290 = vrot.lane.b32.xlu0 %v270, 32
    %v291 = vpop.permute.xlu0 %290
    %292 = vrot.lane.b32.xlu0 %v271, 32
    %v293 = vpop.permute.xlu0 %292
    %294 = vrot.lane.b32.xlu0 %v272, 32
    %v295 = vpop.permute.xlu0 %294
    %296 = vrot.lane.b32.xlu0 %v273, 32
    %v297 = vpop.permute.xlu0 %296
    %v306 = vadd.f32 %v226, %v283
    %v307 = vadd.f32 %v227, %v285
    %v308 = vadd.f32 %v228, %v287
    %v309 = vadd.f32 %v229, %v289
    %v310 = vadd.f32 %v230, %v291
    %v311 = vadd.f32 %v231, %v293
    %v312 = vadd.f32 %v232, %v295
    %v313 = vadd.f32 %v233, %v297
    %v314 = vtanh.pop %v306
    %v315 = vtanh.pop %v307
    %v316 = vtanh.pop %v308
    %v317 = vtanh.pop %v309
    %v318 = vtanh.pop %v310
    %v319 = vtanh.pop %v311
    %v320 = vtanh.pop %v312
    %v321 = vtanh.pop %v313
    %330 = vrot.lane.b32.xlu0 %v314, 32
    %v331 = vpop.permute.xlu0 %330
    %332 = vrot.lane.b32.xlu0 %v315, 32
    %v333 = vpop.permute.xlu0 %332
    %334 = vrot.lane.b32.xlu0 %v316, 32
    %v335 = vpop.permute.xlu0 %334
    %336 = vrot.lane.b32.xlu0 %v317, 32
    %v337 = vpop.permute.xlu0 %336
    %338 = vrot.lane.b32.xlu0 %v318, 32
    %v339 = vpop.permute.xlu0 %338
    %340 = vrot.lane.b32.xlu0 %v319, 32
    %v341 = vpop.permute.xlu0 %340
    %342 = vrot.lane.b32.xlu0 %v320, 32
    %v343 = vpop.permute.xlu0 %342
    %344 = vrot.lane.b32.xlu0 %v321, 32
    %v345 = vpop.permute.xlu0 %344
    %v354 = vmul.f32 %v178, %v331
    %v355 = vmul.f32 %v179, %v333
    %v356 = vmul.f32 %v180, %v335
    %v357 = vmul.f32 %v181, %v337
    %v358 = vmul.f32 %v182, %v339
    %v359 = vmul.f32 %v183, %v341
    %v360 = vmul.f32 %v184, %v343
    %v361 = vmul.f32 %v185, %v345
    %370 = vrot.lane.b32.xlu0 %v354, 64
    %v371 = vpop.permute.xlu0 %370
    %372 = vrot.lane.b32.xlu0 %v355, 64
    %v373 = vpop.permute.xlu0 %372
    %374 = vrot.lane.b32.xlu0 %v356, 64
    %v375 = vpop.permute.xlu0 %374
    %376 = vrot.lane.b32.xlu0 %v357, 64
    %v377 = vpop.permute.xlu0 %376
    %378 = vrot.lane.b32.xlu0 %v358, 64
    %v379 = vpop.permute.xlu0 %378
    %380 = vrot.lane.b32.xlu0 %v359, 64
    %v381 = vpop.permute.xlu0 %380
    %382 = vrot.lane.b32.xlu0 %v360, 64
    %v383 = vpop.permute.xlu0 %382
    %384 = vrot.lane.b32.xlu0 %v361, 64
    %v385 = vpop.permute.xlu0 %384
    %vm394 = vcmask 253952
    %395 = vst.msk [vmem:[#allocation9] sm:$0x1] %vm394, %v371
    %396 = vst.msk [vmem:[#allocation9 + $0x10] sm:$0x1] %vm394, %v373
    %397 = vst.msk [vmem:[#allocation9 + $0x20] sm:$0x1] %vm394, %v375
    %398 = vst.msk [vmem:[#allocation9 + $0x30] sm:$0x1] %vm394, %v377
    %399 = vst.msk [vmem:[#allocation9 + $0x40] sm:$0x1] %vm394, %v379
    %400 = vst.msk [vmem:[#allocation9 + $0x50] sm:$0x1] %vm394, %v381
    %401 = vst.msk [vmem:[#allocation9 + $0x60] sm:$0x1] %vm394, %v383
    %402 = vst.msk [vmem:[#allocation9 + $0x70] sm:$0x1] %vm394, %v385
    %v403 = vld [vmem:[#allocation4] sm:$0x1]
    %v404 = vld [vmem:[#allocation4 + $0x8] sm:$0x1]
    %v405 = vld [vmem:[#allocation4 + $0x10] sm:$0x1]
    %v406 = vld [vmem:[#allocation4 + $0x18] sm:$0x1]
    %v407 = vld [vmem:[#allocation4 + $0x20] sm:$0x1]
    %v408 = vld [vmem:[#allocation4 + $0x28] sm:$0x1]
    %v409 = vld [vmem:[#allocation4 + $0x30] sm:$0x1]
    %v410 = vld [vmem:[#allocation4 + $0x38] sm:$0x1]
    %v411 = vunpack.c.l.bf16 %v403
    %v412 = vunpack.c.l.bf16 %v404
    %v413 = vunpack.c.l.bf16 %v405
    %v414 = vunpack.c.l.bf16 %v406
    %v415 = vunpack.c.l.bf16 %v407
    %v416 = vunpack.c.l.bf16 %v408
    %v417 = vunpack.c.l.bf16 %v409
    %v418 = vunpack.c.l.bf16 %v410
    %v419 = vpack.c.bf16 %v354, %v354
    %v420 = vpack.c.bf16 %v355, %v355
    %v421 = vpack.c.bf16 %v356, %v356
    %v422 = vpack.c.bf16 %v357, %v357
    %v423 = vpack.c.bf16 %v358, %v358
    %v424 = vpack.c.bf16 %v359, %v359
    %v425 = vpack.c.bf16 %v360, %v360
    %v426 = vpack.c.bf16 %v361, %v361
    %v427 = vld [vmem:[#allocation7] sm:$0xf]
    %v428 = vld [vmem:[#allocation7 + $0x4] sm:$0xf]
    %v429 = vld [vmem:[#allocation7 + $0x8] sm:$0xf]
    %v430 = vld [vmem:[#allocation7 + $0xc] sm:$0xf]
    %v439 = vunpack.c.l.b16 %v419
    %v440 = vunpack.c.l.b16 %v420
    %v441 = vunpack.c.l.b16 %v421
    %v442 = vunpack.c.l.b16 %v422
    %v443 = vunpack.c.l.b16 %v423
    %v444 = vunpack.c.l.b16 %v424
    %v445 = vunpack.c.l.b16 %v425
    %v446 = vunpack.c.l.b16 %v426
    %v447 = vrot.slane %v440, 7
    %vm448 = vcmask 1041409
    %v449 = vsel %vm448, %v447, %v439
    %v450 = vrot.slane %v441, 6
    %vm451 = vcmask 1042434
    %v452 = vsel %vm451, %v450, %v449
    %v453 = vrot.slane %v442, 5
    %vm454 = vcmask 1043459
    %v455 = vsel %vm454, %v453, %v452
    %v456 = vrot.slane %v443, 4
    %vm457 = vcmask 1044484
    %v458 = vsel %vm457, %v456, %v455
    %v459 = vrot.slane %v444, 3
    %vm460 = vcmask 1045509
    %v461 = vsel %vm460, %v459, %v458
    %v462 = vrot.slane %v445, 2
    %vm463 = vcmask 1046534
    %v464 = vsel %vm463, %v462, %v461
    %v465 = vrot.slane %v446, 1
    %vm466 = vcmask 1047559
    %v467 = vsel %vm466, %v465, %v464
    %v468 = vpack.c.b16 %v467, %v467
    %469 = vrot.lane.b32.xlu0 %v468, 64
    %v470 = vpop.permute.xlu0 %469
    %v475 = vunpack.c.l.b16 %v427
    %v476 = vunpack.c.l.b16 %v428
    %v477 = vunpack.c.l.b16 %v429
    %v478 = vunpack.c.l.b16 %v430
    %v479 = vpack.c.b16 %v476, %v475
    %v480 = vpack.c.b16 %v478, %v477
    %v484 = vsel %vm86, %v470, 0
    %486 = vmatprep.subr.bf16.mxu0 0
    %487 = vmatpush1.bf16.msra.mxu0 %v479
    %488 = vmatprep.subr.bf16.mxu0 0
    %489 = vmatpush1.bf16.msra.mxu0 %v480
    %490 = vmatprep.subr.bf16.mxu0 0
    %491 = vmatpush1.bf16.msra.mxu0 0
    %492 = vmatprep.subr.bf16.mxu0 0
    %493 = vmatpush1.bf16.msra.mxu0 0
    %494 = vmatprep.subr.bf16.mxu0 0
    %495 = vmatpush1.bf16.msra.mxu0 0
    %496 = vmatprep.subr.bf16.mxu0 0
    %497 = vmatpush1.bf16.msra.mxu0 0
    %498 = vmatprep.subr.bf16.mxu0 0
    %499 = vmatpush1.bf16.msra.mxu0 0
    %500 = vmatprep.subr.bf16.mxu0 0
    %501 = vmatpush1.bf16.msra.mxu0 0
    %502 = vmatprep.subr.bf16.mxu0 0
    %503 = vmatpush1.bf16.msra.mxu0 0
    %504 = vmatprep.subr.bf16.mxu0 0
    %505 = vmatpush1.bf16.msra.mxu0 0
    %506 = vmatprep.subr.bf16.mxu0 0
    %507 = vmatpush1.bf16.msra.mxu0 0
    %508 = vmatprep.subr.bf16.mxu0 0
    %509 = vmatpush1.bf16.msra.mxu0 0
    %510 = vmatprep.subr.bf16.mxu0 0
    %511 = vmatpush1.bf16.msra.mxu0 0
    %512 = vmatprep.subr.bf16.mxu0 0
    %513 = vmatpush1.bf16.msra.mxu0 0
    %514 = vmatprep.subr.bf16.mxu0 0
    %515 = vmatpush1.bf16.msra.mxu0 0
    %516 = vmatprep.subr.bf16.mxu0 0
    %517 = vmatpush1.bf16.msra.mxu0 0
    %518 = vmatprep.mubr.bf16.mxu0 0
    %519 = vmatmul.mubr.bf16.gmra.mrb[0].mxu0 %v484
    %v520 = vpop.f32.mrb[0].mxu0
    %v521 = vadd.f32 0.0, %v520
    %v522 = vpop.f32.mrb[0].mxu0
    %v523 = vpop.f32.mrb[0].mxu0
    %v524 = vpop.f32.mrb[0].mxu0
    %525 = vdwg.mxu0
    %v527 = vrot.slane %v521, 7
    %v528 = vrot.slane %v521, 1
    %v529 = vrot.slane %v521, 2
    %v530 = vrot.slane %v521, 3
    %v531 = vrot.slane %v521, 4
    %v532 = vrot.slane %v521, 5
    %v533 = vrot.slane %v521, 6
    %v542 = vadd.f32 %v411, %v527
    %v543 = vadd.f32 %v412, %v521
    %v544 = vadd.f32 %v413, %v528
    %v545 = vadd.f32 %v414, %v529
    %v546 = vadd.f32 %v415, %v530
    %v547 = vadd.f32 %v416, %v531
    %v548 = vadd.f32 %v417, %v532
    %v549 = vadd.f32 %v418, %v533
    %v550 = vmul.f32 %v542, 0.5
    %v551 = vmul.f32 %v543, 0.5
    %v552 = vmul.f32 %v544, 0.5
    %v553 = vmul.f32 %v545, 0.5
    %v554 = vmul.f32 %v546, 0.5
    %v555 = vmul.f32 %v547, 0.5
    %v556 = vmul.f32 %v548, 0.5
    %v557 = vmul.f32 %v549, 0.5
    %v558 = vtanh.pop %v550
    %v559 = vtanh.pop %v551
    %v560 = vtanh.pop %v552
    %v561 = vtanh.pop %v553
    %v562 = vtanh.pop %v554
    %v563 = vtanh.pop %v555
    %v564 = vtanh.pop %v556
    %v565 = vtanh.pop %v557
    %v566 = vmul.f32 %v558, 0.5
    %v567 = vmul.f32 %v559, 0.5
    %v568 = vmul.f32 %v560, 0.5
    %v569 = vmul.f32 %v561, 0.5
    %v570 = vmul.f32 %v562, 0.5
    %v571 = vmul.f32 %v563, 0.5
    %v572 = vmul.f32 %v564, 0.5
    %v573 = vmul.f32 %v565, 0.5
    %v574 = vadd.f32 %v566, 0.5
    %v575 = vadd.f32 %v567, 0.5
    %v576 = vadd.f32 %v568, 0.5
    %v577 = vadd.f32 %v569, 0.5
    %v578 = vadd.f32 %v570, 0.5
    %v579 = vadd.f32 %v571, 0.5
    %v580 = vadd.f32 %v572, 0.5
    %v581 = vadd.f32 %v573, 0.5
    %v582 = vtanh.pop %v542
    %v583 = vtanh.pop %v543
    %v584 = vtanh.pop %v544
    %v585 = vtanh.pop %v545
    %v586 = vtanh.pop %v546
    %v587 = vtanh.pop %v547
    %v588 = vtanh.pop %v548
    %v589 = vtanh.pop %v549
    %v598 = vrot.slane %v306, 7
    %v599 = vrot.slane %v307, 7
    %v600 = vrot.slane %v308, 7
    %v601 = vrot.slane %v309, 7
    %v602 = vrot.slane %v310, 7
    %v603 = vrot.slane %v311, 7
    %v604 = vrot.slane %v312, 7
    %v605 = vrot.slane %v313, 7
    %v614 = vmul.f32 %v574, %v598
    %v615 = vmul.f32 %v575, %v599
    %v616 = vmul.f32 %v576, %v600
    %v617 = vmul.f32 %v577, %v601
    %v618 = vmul.f32 %v578, %v602
    %v619 = vmul.f32 %v579, %v603
    %v620 = vmul.f32 %v580, %v604
    %v621 = vmul.f32 %v581, %v605
    %630 = vrot.lane.b32.xlu0 %v582, 32
    %v631 = vpop.permute.xlu0 %630
    %632 = vrot.lane.b32.xlu0 %v583, 32
    %v633 = vpop.permute.xlu0 %632
    %634 = vrot.lane.b32.xlu0 %v584, 32
    %v635 = vpop.permute.xlu0 %634
    %636 = vrot.lane.b32.xlu0 %v585, 32
    %v637 = vpop.permute.xlu0 %636
    %638 = vrot.lane.b32.xlu0 %v586, 32
    %v639 = vpop.permute.xlu0 %638
    %640 = vrot.lane.b32.xlu0 %v587, 32
    %v641 = vpop.permute.xlu0 %640
    %642 = vrot.lane.b32.xlu0 %v588, 32
    %v643 = vpop.permute.xlu0 %642
    %644 = vrot.lane.b32.xlu0 %v589, 32
    %v645 = vpop.permute.xlu0 %644
    %v654 = vmul.f32 %v574, %v631
    %v655 = vmul.f32 %v575, %v633
    %v656 = vmul.f32 %v576, %v635
    %v657 = vmul.f32 %v577, %v637
    %v658 = vmul.f32 %v578, %v639
    %v659 = vmul.f32 %v579, %v641
    %v660 = vmul.f32 %v580, %v643
    %v661 = vmul.f32 %v581, %v645
    %670 = vrot.lane.b32.xlu0 %v654, 32
    %v671 = vpop.permute.xlu0 %670
    %672 = vrot.lane.b32.xlu0 %v655, 32
    %v673 = vpop.permute.xlu0 %672
    %674 = vrot.lane.b32.xlu0 %v656, 32
    %v675 = vpop.permute.xlu0 %674
    %676 = vrot.lane.b32.xlu0 %v657, 32
    %v677 = vpop.permute.xlu0 %676
    %678 = vrot.lane.b32.xlu0 %v658, 32
    %v679 = vpop.permute.xlu0 %678
    %680 = vrot.lane.b32.xlu0 %v659, 32
    %v681 = vpop.permute.xlu0 %680
    %682 = vrot.lane.b32.xlu0 %v660, 32
    %v683 = vpop.permute.xlu0 %682
    %684 = vrot.lane.b32.xlu0 %v661, 32
    %v685 = vpop.permute.xlu0 %684
    %v694 = vadd.f32 %v614, %v671
    %v695 = vadd.f32 %v615, %v673
    %v696 = vadd.f32 %v616, %v675
    %v697 = vadd.f32 %v617, %v677
    %v698 = vadd.f32 %v618, %v679
    %v699 = vadd.f32 %v619, %v681
    %v700 = vadd.f32 %v620, %v683
    %v701 = vadd.f32 %v621, %v685
    %v702 = vtanh.pop %v694
    %v703 = vtanh.pop %v695
    %v704 = vtanh.pop %v696
    %v705 = vtanh.pop %v697
    %v706 = vtanh.pop %v698
    %v707 = vtanh.pop %v699
    %v708 = vtanh.pop %v700
    %v709 = vtanh.pop %v701
    %718 = vrot.lane.b32.xlu0 %v702, 32
    %v719 = vpop.permute.xlu0 %718
    %720 = vrot.lane.b32.xlu0 %v703, 32
    %v721 = vpop.permute.xlu0 %720
    %722 = vrot.lane.b32.xlu0 %v704, 32
    %v723 = vpop.permute.xlu0 %722
    %724 = vrot.lane.b32.xlu0 %v705, 32
    %v725 = vpop.permute.xlu0 %724
    %726 = vrot.lane.b32.xlu0 %v706, 32
    %v727 = vpop.permute.xlu0 %726
    %728 = vrot.lane.b32.xlu0 %v707, 32
    %v729 = vpop.permute.xlu0 %728
    %730 = vrot.lane.b32.xlu0 %v708, 32
    %v731 = vpop.permute.xlu0 %730
    %732 = vrot.lane.b32.xlu0 %v709, 32
    %v733 = vpop.permute.xlu0 %732
    %v742 = vmul.f32 %v574, %v719
    %v743 = vmul.f32 %v575, %v721
    %v744 = vmul.f32 %v576, %v723
    %v745 = vmul.f32 %v577, %v725
    %v746 = vmul.f32 %v578, %v727
    %v747 = vmul.f32 %v579, %v729
    %v748 = vmul.f32 %v580, %v731
    %v749 = vmul.f32 %v581, %v733
    %758 = vrot.lane.b32.xlu0 %v742, 64
    %v759 = vpop.permute.xlu0 %758
    %760 = vrot.lane.b32.xlu0 %v743, 64
    %v761 = vpop.permute.xlu0 %760
    %762 = vrot.lane.b32.xlu0 %v744, 64
    %v763 = vpop.permute.xlu0 %762
    %764 = vrot.lane.b32.xlu0 %v745, 64
    %v765 = vpop.permute.xlu0 %764
    %766 = vrot.lane.b32.xlu0 %v746, 64
    %v767 = vpop.permute.xlu0 %766
    %768 = vrot.lane.b32.xlu0 %v747, 64
    %v769 = vpop.permute.xlu0 %768
    %770 = vrot.lane.b32.xlu0 %v748, 64
    %v771 = vpop.permute.xlu0 %770
    %772 = vrot.lane.b32.xlu0 %v749, 64
    %v773 = vpop.permute.xlu0 %772
    %vm782 = vcmask 254977
    %783 = vst.msk [vmem:[#allocation9] sm:$0x2] %vm782, %v759
    %784 = vst.msk [vmem:[#allocation9 + $0x10] sm:$0x2] %vm782, %v761
    %785 = vst.msk [vmem:[#allocation9 + $0x20] sm:$0x2] %vm782, %v763
    %786 = vst.msk [vmem:[#allocation9 + $0x30] sm:$0x2] %vm782, %v765
    %787 = vst.msk [vmem:[#allocation9 + $0x40] sm:$0x2] %vm782, %v767
    %788 = vst.msk [vmem:[#allocation9 + $0x50] sm:$0x2] %vm782, %v769
    %789 = vst.msk [vmem:[#allocation9 + $0x60] sm:$0x2] %vm782, %v771
    %790 = vst.msk [vmem:[#allocation9 + $0x70] sm:$0x2] %vm782, %v773
    %v791 = vld [vmem:[#allocation4] sm:$0x2]
    %v792 = vld [vmem:[#allocation4 + $0x8] sm:$0x2]
    %v793 = vld [vmem:[#allocation4 + $0x10] sm:$0x2]
    %v794 = vld [vmem:[#allocation4 + $0x18] sm:$0x2]
    %v795 = vld [vmem:[#allocation4 + $0x20] sm:$0x2]
    %v796 = vld [vmem:[#allocation4 + $0x28] sm:$0x2]
    %v797 = vld [vmem:[#allocation4 + $0x30] sm:$0x2]
    %v798 = vld [vmem:[#allocation4 + $0x38] sm:$0x2]
    %v799 = vunpack.c.l.bf16 %v791
    %v800 = vunpack.c.l.bf16 %v792
    %v801 = vunpack.c.l.bf16 %v793
    %v802 = vunpack.c.l.bf16 %v794
    %v803 = vunpack.c.l.bf16 %v795
    %v804 = vunpack.c.l.bf16 %v796
    %v805 = vunpack.c.l.bf16 %v797
    %v806 = vunpack.c.l.bf16 %v798
    %v807 = vpack.c.bf16 %v742, %v742
    %v808 = vpack.c.bf16 %v743, %v743
    %v809 = vpack.c.bf16 %v744, %v744
    %v810 = vpack.c.bf16 %v745, %v745
    %v811 = vpack.c.bf16 %v746, %v746
    %v812 = vpack.c.bf16 %v747, %v747
    %v813 = vpack.c.bf16 %v748, %v748
    %v814 = vpack.c.bf16 %v749, %v749
    %v815 = vld [vmem:[#allocation7] sm:$0xf]
    %v816 = vld [vmem:[#allocation7 + $0x4] sm:$0xf]
    %v817 = vld [vmem:[#allocation7 + $0x8] sm:$0xf]
    %v818 = vld [vmem:[#allocation7 + $0xc] sm:$0xf]
    %v827 = vunpack.c.l.b16 %v807
    %v828 = vunpack.c.l.b16 %v808
    %v829 = vunpack.c.l.b16 %v809
    %v830 = vunpack.c.l.b16 %v810
    %v831 = vunpack.c.l.b16 %v811
    %v832 = vunpack.c.l.b16 %v812
    %v833 = vunpack.c.l.b16 %v813
    %v834 = vunpack.c.l.b16 %v814
    %v835 = vrot.slane %v827, 1
    %v836 = vsel %vm448, %v828, %v835
    %v837 = vrot.slane %v829, 7
    %v838 = vsel %vm451, %v837, %v836
    %v839 = vrot.slane %v830, 6
    %v840 = vsel %vm454, %v839, %v838
    %v841 = vrot.slane %v831, 5
    %v842 = vsel %vm457, %v841, %v840
    %v843 = vrot.slane %v832, 4
    %v844 = vsel %vm460, %v843, %v842
    %v845 = vrot.slane %v833, 3
    %v846 = vsel %vm463, %v845, %v844
    %v847 = vrot.slane %v834, 2
    %v848 = vsel %vm466, %v847, %v846
    %v849 = vpack.c.b16 %v848, %v848
    %850 = vrot.lane.b32.xlu0 %v849, 64
    %v851 = vpop.permute.xlu0 %850
    %v856 = vunpack.c.l.b16 %v815
    %v857 = vunpack.c.l.b16 %v816
    %v858 = vunpack.c.l.b16 %v817
    %v859 = vunpack.c.l.b16 %v818
    %v860 = vpack.c.b16 %v857, %v856
    %v861 = vpack.c.b16 %v859, %v858
    %v865 = vsel %vm86, %v851, 0
    %867 = vmatprep.subr.bf16.mxu0 0
    %868 = vmatpush1.bf16.msra.mxu0 %v860
    %869 = vmatprep.subr.bf16.mxu0 0
    %870 = vmatpush1.bf16.msra.mxu0 %v861
    %871 = vmatprep.subr.bf16.mxu0 0
    %872 = vmatpush1.bf16.msra.mxu0 0
    %873 = vmatprep.subr.bf16.mxu0 0
    %874 = vmatpush1.bf16.msra.mxu0 0
    %875 = vmatprep.subr.bf16.mxu0 0
    %876 = vmatpush1.bf16.msra.mxu0 0
    %877 = vmatprep.subr.bf16.mxu0 0
    %878 = vmatpush1.bf16.msra.mxu0 0
    %879 = vmatprep.subr.bf16.mxu0 0
    %880 = vmatpush1.bf16.msra.mxu0 0
    %881 = vmatprep.subr.bf16.mxu0 0
    %882 = vmatpush1.bf16.msra.mxu0 0
    %883 = vmatprep.subr.bf16.mxu0 0
    %884 = vmatpush1.bf16.msra.mxu0 0
    %885 = vmatprep.subr.bf16.mxu0 0
    %886 = vmatpush1.bf16.msra.mxu0 0
    %887 = vmatprep.subr.bf16.mxu0 0
    %888 = vmatpush1.bf16.msra.mxu0 0
    %889 = vmatprep.subr.bf16.mxu0 0
    %890 = vmatpush1.bf16.msra.mxu0 0
    %891 = vmatprep.subr.bf16.mxu0 0
    %892 = vmatpush1.bf16.msra.mxu0 0
    %893 = vmatprep.subr.bf16.mxu0 0
    %894 = vmatpush1.bf16.msra.mxu0 0
    %895 = vmatprep.subr.bf16.mxu0 0
    %896 = vmatpush1.bf16.msra.mxu0 0
    %897 = vmatprep.subr.bf16.mxu0 0
    %898 = vmatpush1.bf16.msra.mxu0 0
    %899 = vmatprep.mubr.bf16.mxu0 0
    %900 = vmatmul.mubr.bf16.gmra.mrb[0].mxu0 %v865
    %v901 = vpop.f32.mrb[0].mxu0
    %v902 = vadd.f32 0.0, %v901
    %v903 = vpop.f32.mrb[0].mxu0
    %v904 = vpop.f32.mrb[0].mxu0
    %v905 = vpop.f32.mrb[0].mxu0
    %906 = vdwg.mxu0
    %v908 = vrot.slane %v902, 6
    %v909 = vrot.slane %v902, 7
    %v910 = vrot.slane %v902, 1
    %v911 = vrot.slane %v902, 2
    %v912 = vrot.slane %v902, 3
    %v913 = vrot.slane %v902, 4
    %v914 = vrot.slane %v902, 5
    %v923 = vadd.f32 %v799, %v908
    %v924 = vadd.f32 %v800, %v909
    %v925 = vadd.f32 %v801, %v902
    %v926 = vadd.f32 %v802, %v910
    %v927 = vadd.f32 %v803, %v911
    %v928 = vadd.f32 %v804, %v912
    %v929 = vadd.f32 %v805, %v913
    %v930 = vadd.f32 %v806, %v914
    %v931 = vmul.f32 %v923, 0.5
    %v932 = vmul.f32 %v924, 0.5
    %v933 = vmul.f32 %v925, 0.5
    %v934 = vmul.f32 %v926, 0.5
    %v935 = vmul.f32 %v927, 0.5
    %v936 = vmul.f32 %v928, 0.5
    %v937 = vmul.f32 %v929, 0.5
    %v938 = vmul.f32 %v930, 0.5
    %v939 = vtanh.pop %v931
    %v940 = vtanh.pop %v932
    %v941 = vtanh.pop %v933
    %v942 = vtanh.pop %v934
    %v943 = vtanh.pop %v935
    %v944 = vtanh.pop %v936
    %v945 = vtanh.pop %v937
    %v946 = vtanh.pop %v938
    %v947 = vmul.f32 %v939, 0.5
    %v948 = vmul.f32 %v940, 0.5
    %v949 = vmul.f32 %v941, 0.5
    %v950 = vmul.f32 %v942, 0.5
    %v951 = vmul.f32 %v943, 0.5
    %v952 = vmul.f32 %v944, 0.5
    %v953 = vmul.f32 %v945, 0.5
    %v954 = vmul.f32 %v946, 0.5
    %v955 = vadd.f32 %v947, 0.5
    %v956 = vadd.f32 %v948, 0.5
    %v957 = vadd.f32 %v949, 0.5
    %v958 = vadd.f32 %v950, 0.5
    %v959 = vadd.f32 %v951, 0.5
    %v960 = vadd.f32 %v952, 0.5
    %v961 = vadd.f32 %v953, 0.5
    %v962 = vadd.f32 %v954, 0.5
    %v963 = vtanh.pop %v923
    %v964 = vtanh.pop %v924
    %v965 = vtanh.pop %v925
    %v966 = vtanh.pop %v926
    %v967 = vtanh.pop %v927
    %v968 = vtanh.pop %v928
    %v969 = vtanh.pop %v929
    %v970 = vtanh.pop %v930
    %v979 = vrot.slane %v694, 7
    %v980 = vrot.slane %v695, 7
    %v981 = vrot.slane %v696, 7
    %v982 = vrot.slane %v697, 7
    %v983 = vrot.slane %v698, 7
    %v984 = vrot.slane %v699, 7
    %v985 = vrot.slane %v700, 7
    %v986 = vrot.slane %v701, 7
    %v995 = vmul.f32 %v955, %v979
    %v996 = vmul.f32 %v956, %v980
    %v997 = vmul.f32 %v957, %v981
    %v998 = vmul.f32 %v958, %v982
    %v999 = vmul.f32 %v959, %v983
    %v1000 = vmul.f32 %v960, %v984
    %v1001 = vmul.f32 %v961, %v985
    %v1002 = vmul.f32 %v962, %v986
    %1011 = vrot.lane.b32.xlu0 %v963, 32
    %v1012 = vpop.permute.xlu0 %1011
    %1013 = vrot.lane.b32.xlu0 %v964, 32
    %v1014 = vpop.permute.xlu0 %1013
    %1015 = vrot.lane.b32.xlu0 %v965, 32
    %v1016 = vpop.permute.xlu0 %1015
    %1017 = vrot.lane.b32.xlu0 %v966, 32
    %v1018 = vpop.permute.xlu0 %1017
    %1019 = vrot.lane.b32.xlu0 %v967, 32
    %v1020 = vpop.permute.xlu0 %1019
    %1021 = vrot.lane.b32.xlu0 %v968, 32
    %v1022 = vpop.permute.xlu0 %1021
    %1023 = vrot.lane.b32.xlu0 %v969, 32
    %v1024 = vpop.permute.xlu0 %1023
    %1025 = vrot.lane.b32.xlu0 %v970, 32
    %v1026 = vpop.permute.xlu0 %1025
    %v1035 = vmul.f32 %v955, %v1012
    %v1036 = vmul.f32 %v956, %v1014
    %v1037 = vmul.f32 %v957, %v1016
    %v1038 = vmul.f32 %v958, %v1018
    %v1039 = vmul.f32 %v959, %v1020
    %v1040 = vmul.f32 %v960, %v1022
    %v1041 = vmul.f32 %v961, %v1024
    %v1042 = vmul.f32 %v962, %v1026
    %1051 = vrot.lane.b32.xlu0 %v1035, 32
    %v1052 = vpop.permute.xlu0 %1051
    %1053 = vrot.lane.b32.xlu0 %v1036, 32
    %v1054 = vpop.permute.xlu0 %1053
    %1055 = vrot.lane.b32.xlu0 %v1037, 32
    %v1056 = vpop.permute.xlu0 %1055
    %1057 = vrot.lane.b32.xlu0 %v1038, 32
    %v1058 = vpop.permute.xlu0 %1057
    %1059 = vrot.lane.b32.xlu0 %v1039, 32
    %v1060 = vpop.permute.xlu0 %1059
    %1061 = vrot.lane.b32.xlu0 %v1040, 32
    %v1062 = vpop.permute.xlu0 %1061
    %1063 = vrot.lane.b32.xlu0 %v1041, 32
    %v1064 = vpop.permute.xlu0 %1063
    %1065 = vrot.lane.b32.xlu0 %v1042, 32
    %v1066 = vpop.permute.xlu0 %1065
    %v1075 = vadd.f32 %v995, %v1052
    %v1076 = vadd.f32 %v996, %v1054
    %v1077 = vadd.f32 %v997, %v1056
    %v1078 = vadd.f32 %v998, %v1058
    %v1079 = vadd.f32 %v999, %v1060
    %v1080 = vadd.f32 %v1000, %v1062
    %v1081 = vadd.f32 %v1001, %v1064
    %v1082 = vadd.f32 %v1002, %v1066
    %v1083 = vtanh.pop %v1075
    %v1084 = vtanh.pop %v1076
    %v1085 = vtanh.pop %v1077
    %v1086 = vtanh.pop %v1078
    %v1087 = vtanh.pop %v1079
    %v1088 = vtanh.pop %v1080
    %v1089 = vtanh.pop %v1081
    %v1090 = vtanh.pop %v1082
    %1099 = vrot.lane.b32.xlu0 %v1083, 32
    %v1100 = vpop.permute.xlu0 %1099
    %1101 = vrot.lane.b32.xlu0 %v1084, 32
    %v1102 = vpop.permute.xlu0 %1101
    %1103 = vrot.lane.b32.xlu0 %v1085, 32
    %v1104 = vpop.permute.xlu0 %1103
    %1105 = vrot.lane.b32.xlu0 %v1086, 32
    %v1106 = vpop.permute.xlu0 %1105
    %1107 = vrot.lane.b32.xlu0 %v1087, 32
    %v1108 = vpop.permute.xlu0 %1107
    %1109 = vrot.lane.b32.xlu0 %v1088, 32
    %v1110 = vpop.permute.xlu0 %1109
    %1111 = vrot.lane.b32.xlu0 %v1089, 32
    %v1112 = vpop.permute.xlu0 %1111
    %1113 = vrot.lane.b32.xlu0 %v1090, 32
    %v1114 = vpop.permute.xlu0 %1113
    %v1123 = vmul.f32 %v955, %v1100
    %v1124 = vmul.f32 %v956, %v1102
    %v1125 = vmul.f32 %v957, %v1104
    %v1126 = vmul.f32 %v958, %v1106
    %v1127 = vmul.f32 %v959, %v1108
    %v1128 = vmul.f32 %v960, %v1110
    %v1129 = vmul.f32 %v961, %v1112
    %v1130 = vmul.f32 %v962, %v1114
    %1139 = vrot.lane.b32.xlu0 %v1123, 64
    %v1140 = vpop.permute.xlu0 %1139
    %1141 = vrot.lane.b32.xlu0 %v1124, 64
    %v1142 = vpop.permute.xlu0 %1141
    %1143 = vrot.lane.b32.xlu0 %v1125, 64
    %v1144 = vpop.permute.xlu0 %1143
    %1145 = vrot.lane.b32.xlu0 %v1126, 64
    %v1146 = vpop.permute.xlu0 %1145
    %1147 = vrot.lane.b32.xlu0 %v1127, 64
    %v1148 = vpop.permute.xlu0 %1147
    %1149 = vrot.lane.b32.xlu0 %v1128, 64
    %v1150 = vpop.permute.xlu0 %1149
    %1151 = vrot.lane.b32.xlu0 %v1129, 64
    %v1152 = vpop.permute.xlu0 %1151
    %1153 = vrot.lane.b32.xlu0 %v1130, 64
    %v1154 = vpop.permute.xlu0 %1153
    %vm1163 = vcmask 256002
    %1164 = vst.msk [vmem:[#allocation9] sm:$0x4] %vm1163, %v1140
    %1165 = vst.msk [vmem:[#allocation9 + $0x10] sm:$0x4] %vm1163, %v1142
    %1166 = vst.msk [vmem:[#allocation9 + $0x20] sm:$0x4] %vm1163, %v1144
    %1167 = vst.msk [vmem:[#allocation9 + $0x30] sm:$0x4] %vm1163, %v1146
    %1168 = vst.msk [vmem:[#allocation9 + $0x40] sm:$0x4] %vm1163, %v1148
    %1169 = vst.msk [vmem:[#allocation9 + $0x50] sm:$0x4] %vm1163, %v1150
    %1170 = vst.msk [vmem:[#allocation9 + $0x60] sm:$0x4] %vm1163, %v1152
    %1171 = vst.msk [vmem:[#allocation9 + $0x70] sm:$0x4] %vm1163, %v1154
    %v1172 = vld [vmem:[#allocation4] sm:$0x2]
    %v1173 = vld [vmem:[#allocation4 + $0x8] sm:$0x2]
    %v1174 = vld [vmem:[#allocation4 + $0x10] sm:$0x2]
    %v1175 = vld [vmem:[#allocation4 + $0x18] sm:$0x2]
    %v1176 = vld [vmem:[#allocation4 + $0x20] sm:$0x2]
    %v1177 = vld [vmem:[#allocation4 + $0x28] sm:$0x2]
    %v1178 = vld [vmem:[#allocation4 + $0x30] sm:$0x2]
    %v1179 = vld [vmem:[#allocation4 + $0x38] sm:$0x2]
    %v1180 = vunpack.c.l.bf16 %v1172
    %v1181 = vunpack.c.l.bf16 %v1173
    %v1182 = vunpack.c.l.bf16 %v1174
    %v1183 = vunpack.c.l.bf16 %v1175
    %v1184 = vunpack.c.l.bf16 %v1176
    %v1185 = vunpack.c.l.bf16 %v1177
    %v1186 = vunpack.c.l.bf16 %v1178
    %v1187 = vunpack.c.l.bf16 %v1179
    %v1188 = vpack.c.bf16 %v1123, %v1123
    %v1189 = vpack.c.bf16 %v1124, %v1124
    %v1190 = vpack.c.bf16 %v1125, %v1125
    %v1191 = vpack.c.bf16 %v1126, %v1126
    %v1192 = vpack.c.bf16 %v1127, %v1127
    %v1193 = vpack.c.bf16 %v1128, %v1128
    %v1194 = vpack.c.bf16 %v1129, %v1129
    %v1195 = vpack.c.bf16 %v1130, %v1130
    %v1196 = vld [vmem:[#allocation7] sm:$0xf]
    %v1197 = vld [vmem:[#allocation7 + $0x4] sm:$0xf]
    %v1198 = vld [vmem:[#allocation7 + $0x8] sm:$0xf]
    %v1199 = vld [vmem:[#allocation7 + $0xc] sm:$0xf]
    %v1208 = vunpack.c.l.b16 %v1188
    %v1209 = vunpack.c.l.b16 %v1189
    %v1210 = vunpack.c.l.b16 %v1190
    %v1211 = vunpack.c.l.b16 %v1191
    %v1212 = vunpack.c.l.b16 %v1192
    %v1213 = vunpack.c.l.b16 %v1193
    %v1214 = vunpack.c.l.b16 %v1194
    %v1215 = vunpack.c.l.b16 %v1195
    %v1216 = vrot.slane %v1208, 2
    %v1217 = vrot.slane %v1209, 1
    %v1218 = vsel %vm448, %v1217, %v1216
    %v1219 = vsel %vm451, %v1210, %v1218
    %v1220 = vrot.slane %v1211, 7
    %v1221 = vsel %vm454, %v1220, %v1219
    %v1222 = vrot.slane %v1212, 6
    %v1223 = vsel %vm457, %v1222, %v1221
    %v1224 = vrot.slane %v1213, 5
    %v1225 = vsel %vm460, %v1224, %v1223
    %v1226 = vrot.slane %v1214, 4
    %v1227 = vsel %vm463, %v1226, %v1225
    %v1228 = vrot.slane %v1215, 3
    %v1229 = vsel %vm466, %v1228, %v1227
    %v1230 = vpack.c.b16 %v1229, %v1229
    %1231 = vrot.lane.b32.xlu0 %v1230, 64
    %v1232 = vpop.permute.xlu0 %1231
    %v1237 = vunpack.c.l.b16 %v1196
    %v1238 = vunpack.c.l.b16 %v1197
    %v1239 = vunpack.c.l.b16 %v1198
    %v1240 = vunpack.c.l.b16 %v1199
    %v1241 = vpack.c.b16 %v1238, %v1237
    %v1242 = vpack.c.b16 %v1240, %v1239
    %v1246 = vsel %vm86, %v1232, 0
    %1248 = vmatprep.subr.bf16.mxu0 0
    %1249 = vmatpush1.bf16.msra.mxu0 %v1241
    %1250 = vmatprep.subr.bf16.mxu0 0
    %1251 = vmatpush1.bf16.msra.mxu0 %v1242
    %1252 = vmatprep.subr.bf16.mxu0 0
    %1253 = vmatpush1.bf16.msra.mxu0 0
    %1254 = vmatprep.subr.bf16.mxu0 0
    %1255 = vmatpush1.bf16.msra.mxu0 0
    %1256 = vmatprep.subr.bf16.mxu0 0
    %1257 = vmatpush1.bf16.msra.mxu0 0
    %1258 = vmatprep.subr.bf16.mxu0 0
    %1259 = vmatpush1.bf16.msra.mxu0 0
    %1260 = vmatprep.subr.bf16.mxu0 0
    %1261 = vmatpush1.bf16.msra.mxu0 0
    %1262 = vmatprep.subr.bf16.mxu0 0
    %1263 = vmatpush1.bf16.msra.mxu0 0
    %1264 = vmatprep.subr.bf16.mxu0 0
    %1265 = vmatpush1.bf16.msra.mxu0 0
    %1266 = vmatprep.subr.bf16.mxu0 0
    %1267 = vmatpush1.bf16.msra.mxu0 0
    %1268 = vmatprep.subr.bf16.mxu0 0
    %1269 = vmatpush1.bf16.msra.mxu0 0
    %1270 = vmatprep.subr.bf16.mxu0 0
    %1271 = vmatpush1.bf16.msra.mxu0 0
    %1272 = vmatprep.subr.bf16.mxu0 0
    %1273 = vmatpush1.bf16.msra.mxu0 0
    %1274 = vmatprep.subr.bf16.mxu0 0
    %1275 = vmatpush1.bf16.msra.mxu0 0
    %1276 = vmatprep.subr.bf16.mxu0 0
    %1277 = vmatpush1.bf16.msra.mxu0 0
    %1278 = vmatprep.subr.bf16.mxu0 0
    %1279 = vmatpush1.bf16.msra.mxu0 0
    %1280 = vmatprep.mubr.bf16.mxu0 0
    %1281 = vmatmul.mubr.bf16.gmra.mrb[0].mxu0 %v1246
    %v1282 = vpop.f32.mrb[0].mxu0
    %v1283 = vadd.f32 0.0, %v1282
    %v1284 = vpop.f32.mrb[0].mxu0
    %v1285 = vpop.f32.mrb[0].mxu0
    %v1286 = vpop.f32.mrb[0].mxu0
    %1287 = vdwg.mxu0
    %v1289 = vrot.slane %v1283, 5
    %v1290 = vrot.slane %v1283, 6
    %v1291 = vrot.slane %v1283, 7
    %v1292 = vrot.slane %v1283, 1
    %v1293 = vrot.slane %v1283, 2
    %v1294 = vrot.slane %v1283, 3
    %v1295 = vrot.slane %v1283, 4
    %v1304 = vadd.f32 %v1180, %v1289
    %v1305 = vadd.f32 %v1181, %v1290
    %v1306 = vadd.f32 %v1182, %v1291
    %v1307 = vadd.f32 %v1183, %v1283
    %v1308 = vadd.f32 %v1184, %v1292
    %v1309 = vadd.f32 %v1185, %v1293
    %v1310 = vadd.f32 %v1186, %v1294
    %v1311 = vadd.f32 %v1187, %v1295
    %v1312 = vmul.f32 %v1304, 0.5
    %v1313 = vmul.f32 %v1305, 0.5
    %v1314 = vmul.f32 %v1306, 0.5
    %v1315 = vmul.f32 %v1307, 0.5
    %v1316 = vmul.f32 %v1308, 0.5
    %v1317 = vmul.f32 %v1309, 0.5
    %v1318 = vmul.f32 %v1310, 0.5
    %v1319 = vmul.f32 %v1311, 0.5
    %v1320 = vtanh.pop %v1312
    %v1321 = vtanh.pop %v1313
    %v1322 = vtanh.pop %v1314
    %v1323 = vtanh.pop %v1315
    %v1324 = vtanh.pop %v1316
    %v1325 = vtanh.pop %v1317
    %v1326 = vtanh.pop %v1318
    %v1327 = vtanh.pop %v1319
    %v1328 = vmul.f32 %v1320, 0.5
    %v1329 = vmul.f32 %v1321, 0.5
    %v1330 = vmul.f32 %v1322, 0.5
    %v1331 = vmul.f32 %v1323, 0.5
    %v1332 = vmul.f32 %v1324, 0.5
    %v1333 = vmul.f32 %v1325, 0.5
    %v1334 = vmul.f32 %v1326, 0.5
    %v1335 = vmul.f32 %v1327, 0.5
    %v1336 = vadd.f32 %v1328, 0.5
    %v1337 = vadd.f32 %v1329, 0.5
    %v1338 = vadd.f32 %v1330, 0.5
    %v1339 = vadd.f32 %v1331, 0.5
    %v1340 = vadd.f32 %v1332, 0.5
    %v1341 = vadd.f32 %v1333, 0.5
    %v1342 = vadd.f32 %v1334, 0.5
    %v1343 = vadd.f32 %v1335, 0.5
    %v1344 = vtanh.pop %v1304
    %v1345 = vtanh.pop %v1305
    %v1346 = vtanh.pop %v1306
    %v1347 = vtanh.pop %v1307
    %v1348 = vtanh.pop %v1308
    %v1349 = vtanh.pop %v1309
    %v1350 = vtanh.pop %v1310
    %v1351 = vtanh.pop %v1311
    %v1360 = vrot.slane %v1075, 7
    %v1361 = vrot.slane %v1076, 7
    %v1362 = vrot.slane %v1077, 7
    %v1363 = vrot.slane %v1078, 7
    %v1364 = vrot.slane %v1079, 7
    %v1365 = vrot.slane %v1080, 7
    %v1366 = vrot.slane %v1081, 7
    %v1367 = vrot.slane %v1082, 7
    %v1376 = vmul.f32 %v1336, %v1360
    %v1377 = vmul.f32 %v1337, %v1361
    %v1378 = vmul.f32 %v1338, %v1362
    %v1379 = vmul.f32 %v1339, %v1363
    %v1380 = vmul.f32 %v1340, %v1364
    %v1381 = vmul.f32 %v1341, %v1365
    %v1382 = vmul.f32 %v1342, %v1366
    %v1383 = vmul.f32 %v1343, %v1367
    %1392 = vrot.lane.b32.xlu0 %v1344, 32
    %v1393 = vpop.permute.xlu0 %1392
    %1394 = vrot.lane.b32.xlu0 %v1345, 32
    %v1395 = vpop.permute.xlu0 %1394
    %1396 = vrot.lane.b32.xlu0 %v1346, 32
    %v1397 = vpop.permute.xlu0 %1396
    %1398 = vrot.lane.b32.xlu0 %v1347, 32
    %v1399 = vpop.permute.xlu0 %1398
    %1400 = vrot.lane.b32.xlu0 %v1348, 32
    %v1401 = vpop.permute.xlu0 %1400
    %1402 = vrot.lane.b32.xlu0 %v1349, 32
    %v1403 = vpop.permute.xlu0 %1402
    %1404 = vrot.lane.b32.xlu0 %v1350, 32
    %v1405 = vpop.permute.xlu0 %1404
    %1406 = vrot.lane.b32.xlu0 %v1351, 32
    %v1407 = vpop.permute.xlu0 %1406
    %v1416 = vmul.f32 %v1336, %v1393
    %v1417 = vmul.f32 %v1337, %v1395
    %v1418 = vmul.f32 %v1338, %v1397
    %v1419 = vmul.f32 %v1339, %v1399
    %v1420 = vmul.f32 %v1340, %v1401
    %v1421 = vmul.f32 %v1341, %v1403
    %v1422 = vmul.f32 %v1342, %v1405
    %v1423 = vmul.f32 %v1343, %v1407
    %1432 = vrot.lane.b32.xlu0 %v1416, 32
    %v1433 = vpop.permute.xlu0 %1432
    %1434 = vrot.lane.b32.xlu0 %v1417, 32
    %v1435 = vpop.permute.xlu0 %1434
    %1436 = vrot.lane.b32.xlu0 %v1418, 32
    %v1437 = vpop.permute.xlu0 %1436
    %1438 = vrot.lane.b32.xlu0 %v1419, 32
    %v1439 = vpop.permute.xlu0 %1438
    %1440 = vrot.lane.b32.xlu0 %v1420, 32
    %v1441 = vpop.permute.xlu0 %1440
    %1442 = vrot.lane.b32.xlu0 %v1421, 32
    %v1443 = vpop.permute.xlu0 %1442
    %1444 = vrot.lane.b32.xlu0 %v1422, 32
    %v1445 = vpop.permute.xlu0 %1444
    %1446 = vrot.lane.b32.xlu0 %v1423, 32
    %v1447 = vpop.permute.xlu0 %1446
    %v1456 = vadd.f32 %v1376, %v1433
    %v1457 = vadd.f32 %v1377, %v1435
    %v1458 = vadd.f32 %v1378, %v1437
    %v1459 = vadd.f32 %v1379, %v1439
    %v1460 = vadd.f32 %v1380, %v1441
    %v1461 = vadd.f32 %v1381, %v1443
    %v1462 = vadd.f32 %v1382, %v1445
    %v1463 = vadd.f32 %v1383, %v1447
    %v1464 = vtanh.pop %v1456
    %v1465 = vtanh.pop %v1457
    %v1466 = vtanh.pop %v1458
    %v1467 = vtanh.pop %v1459
    %v1468 = vtanh.pop %v1460
    %v1469 = vtanh.pop %v1461
    %v1470 = vtanh.pop %v1462
    %v1471 = vtanh.pop %v1463
    %1480 = vrot.lane.b32.xlu0 %v1464, 32
    %v1481 = vpop.permute.xlu0 %1480
    %1482 = vrot.lane.b32.xlu0 %v1465, 32
    %v1483 = vpop.permute.xlu0 %1482
    %1484 = vrot.lane.b32.xlu0 %v1466, 32
    %v1485 = vpop.permute.xlu0 %1484
    %1486 = vrot.lane.b32.xlu0 %v1467, 32
    %v1487 = vpop.permute.xlu0 %1486
    %1488 = vrot.lane.b32.xlu0 %v1468, 32
    %v1489 = vpop.permute.xlu0 %1488
    %1490 = vrot.lane.b32.xlu0 %v1469, 32
    %v1491 = vpop.permute.xlu0 %1490
    %1492 = vrot.lane.b32.xlu0 %v1470, 32
    %v1493 = vpop.permute.xlu0 %1492
    %1494 = vrot.lane.b32.xlu0 %v1471, 32
    %v1495 = vpop.permute.xlu0 %1494
    %v1504 = vmul.f32 %v1336, %v1481
    %v1505 = vmul.f32 %v1337, %v1483
    %v1506 = vmul.f32 %v1338, %v1485
    %v1507 = vmul.f32 %v1339, %v1487
    %v1508 = vmul.f32 %v1340, %v1489
    %v1509 = vmul.f32 %v1341, %v1491
    %v1510 = vmul.f32 %v1342, %v1493
    %v1511 = vmul.f32 %v1343, %v1495
    %1520 = vrot.lane.b32.xlu0 %v1504, 64
    %v1521 = vpop.permute.xlu0 %1520
    %1522 = vrot.lane.b32.xlu0 %v1505, 64
    %v1523 = vpop.permute.xlu0 %1522
    %1524 = vrot.lane.b32.xlu0 %v1506, 64
    %v1525 = vpop.permute.xlu0 %1524
    %1526 = vrot.lane.b32.xlu0 %v1507, 64
    %v1527 = vpop.permute.xlu0 %1526
    %1528 = vrot.lane.b32.xlu0 %v1508, 64
    %v1529 = vpop.permute.xlu0 %1528
    %1530 = vrot.lane.b32.xlu0 %v1509, 64
    %v1531 = vpop.permute.xlu0 %1530
    %1532 = vrot.lane.b32.xlu0 %v1510, 64
    %v1533 = vpop.permute.xlu0 %1532
    %1534 = vrot.lane.b32.xlu0 %v1511, 64
    %v1535 = vpop.permute.xlu0 %1534
    %vm1544 = vcmask 257027
    %1545 = vst.msk [vmem:[#allocation9] sm:$0x8] %vm1544, %v1521
    %1546 = vst.msk [vmem:[#allocation9 + $0x10] sm:$0x8] %vm1544, %v1523
    %1547 = vst.msk [vmem:[#allocation9 + $0x20] sm:$0x8] %vm1544, %v1525
    %1548 = vst.msk [vmem:[#allocation9 + $0x30] sm:$0x8] %vm1544, %v1527
    %1549 = vst.msk [vmem:[#allocation9 + $0x40] sm:$0x8] %vm1544, %v1529
    %1550 = vst.msk [vmem:[#allocation9 + $0x50] sm:$0x8] %vm1544, %v1531
    %1551 = vst.msk [vmem:[#allocation9 + $0x60] sm:$0x8] %vm1544, %v1533
    %1552 = vst.msk [vmem:[#allocation9 + $0x70] sm:$0x8] %vm1544, %v1535
    %v1553 = vld [vmem:[#allocation4] sm:$0x4]
    %v1554 = vld [vmem:[#allocation4 + $0x8] sm:$0x4]
    %v1555 = vld [vmem:[#allocation4 + $0x10] sm:$0x4]
    %v1556 = vld [vmem:[#allocation4 + $0x18] sm:$0x4]
    %v1557 = vld [vmem:[#allocation4 + $0x20] sm:$0x4]
    %v1558 = vld [vmem:[#allocation4 + $0x28] sm:$0x4]
    %v1559 = vld [vmem:[#allocation4 + $0x30] sm:$0x4]
    %v1560 = vld [vmem:[#allocation4 + $0x38] sm:$0x4]
    %v1561 = vunpack.c.l.bf16 %v1553
    %v1562 = vunpack.c.l.bf16 %v1554
    %v1563 = vunpack.c.l.bf16 %v1555
    %v1564 = vunpack.c.l.bf16 %v1556
    %v1565 = vunpack.c.l.bf16 %v1557
    %v1566 = vunpack.c.l.bf16 %v1558
    %v1567 = vunpack.c.l.bf16 %v1559
    %v1568 = vunpack.c.l.bf16 %v1560
    %v1569 = vpack.c.bf16 %v1504, %v1504
    %v1570 = vpack.c.bf16 %v1505, %v1505
    %v1571 = vpack.c.bf16 %v1506, %v1506
    %v1572 = vpack.c.bf16 %v1507, %v1507
    %v1573 = vpack.c.bf16 %v1508, %v1508
    %v1574 = vpack.c.bf16 %v1509, %v1509
    %v1575 = vpack.c.bf16 %v1510, %v1510
    %v1576 = vpack.c.bf16 %v1511, %v1511
    %v1577 = vld [vmem:[#allocation7] sm:$0xf]
    %v1578 = vld [vmem:[#allocation7 + $0x4] sm:$0xf]
    %v1579 = vld [vmem:[#allocation7 + $0x8] sm:$0xf]
    %v1580 = vld [vmem:[#allocation7 + $0xc] sm:$0xf]
    %v1589 = vunpack.c.l.b16 %v1569
    %v1590 = vunpack.c.l.b16 %v1570
    %v1591 = vunpack.c.l.b16 %v1571
    %v1592 = vunpack.c.l.b16 %v1572
    %v1593 = vunpack.c.l.b16 %v1573
    %v1594 = vunpack.c.l.b16 %v1574
    %v1595 = vunpack.c.l.b16 %v1575
    %v1596 = vunpack.c.l.b16 %v1576
    %v1597 = vrot.slane %v1589, 3
    %v1598 = vrot.slane %v1590, 2
    %v1599 = vsel %vm448, %v1598, %v1597
    %v1600 = vrot.slane %v1591, 1
    %v1601 = vsel %vm451, %v1600, %v1599
    %v1602 = vsel %vm454, %v1592, %v1601
    %v1603 = vrot.slane %v1593, 7
    %v1604 = vsel %vm457, %v1603, %v1602
    %v1605 = vrot.slane %v1594, 6
    %v1606 = vsel %vm460, %v1605, %v1604
    %v1607 = vrot.slane %v1595, 5
    %v1608 = vsel %vm463, %v1607, %v1606
    %v1609 = vrot.slane %v1596, 4
    %v1610 = vsel %vm466, %v1609, %v1608
    %v1611 = vpack.c.b16 %v1610, %v1610
    %1612 = vrot.lane.b32.xlu0 %v1611, 64
    %v1613 = vpop.permute.xlu0 %1612
    %v1618 = vunpack.c.l.b16 %v1577
    %v1619 = vunpack.c.l.b16 %v1578
    %v1620 = vunpack.c.l.b16 %v1579
    %v1621 = vunpack.c.l.b16 %v1580
    %v1622 = vpack.c.b16 %v1619, %v1618
    %v1623 = vpack.c.b16 %v1621, %v1620
    %v1627 = vsel %vm86, %v1613, 0
    %1629 = vmatprep.subr.bf16.mxu0 0
    %1630 = vmatpush1.bf16.msra.mxu0 %v1622
    %1631 = vmatprep.subr.bf16.mxu0 0
    %1632 = vmatpush1.bf16.msra.mxu0 %v1623
    %1633 = vmatprep.subr.bf16.mxu0 0
    %1634 = vmatpush1.bf16.msra.mxu0 0
    %1635 = vmatprep.subr.bf16.mxu0 0
    %1636 = vmatpush1.bf16.msra.mxu0 0
    %1637 = vmatprep.subr.bf16.mxu0 0
    %1638 = vmatpush1.bf16.msra.mxu0 0
    %1639 = vmatprep.subr.bf16.mxu0 0
    %1640 = vmatpush1.bf16.msra.mxu0 0
    %1641 = vmatprep.subr.bf16.mxu0 0
    %1642 = vmatpush1.bf16.msra.mxu0 0
    %1643 = vmatprep.subr.bf16.mxu0 0
    %1644 = vmatpush1.bf16.msra.mxu0 0
    %1645 = vmatprep.subr.bf16.mxu0 0
    %1646 = vmatpush1.bf16.msra.mxu0 0
    %1647 = vmatprep.subr.bf16.mxu0 0
    %1648 = vmatpush1.bf16.msra.mxu0 0
    %1649 = vmatprep.subr.bf16.mxu0 0
    %1650 = vmatpush1.bf16.msra.mxu0 0
    %1651 = vmatprep.subr.bf16.mxu0 0
    %1652 = vmatpush1.bf16.msra.mxu0 0
    %1653 = vmatprep.subr.bf16.mxu0 0
    %1654 = vmatpush1.bf16.msra.mxu0 0
    %1655 = vmatprep.subr.bf16.mxu0 0
    %1656 = vmatpush1.bf16.msra.mxu0 0
    %1657 = vmatprep.subr.bf16.mxu0 0
    %1658 = vmatpush1.bf16.msra.mxu0 0
    %1659 = vmatprep.subr.bf16.mxu0 0
    %1660 = vmatpush1.bf16.msra.mxu0 0
    %1661 = vmatprep.mubr.bf16.mxu0 0
    %1662 = vmatmul.mubr.bf16.gmra.mrb[0].mxu0 %v1627
    %v1663 = vpop.f32.mrb[0].mxu0
    %v1664 = vadd.f32 0.0, %v1663
    %v1665 = vpop.f32.mrb[0].mxu0
    %v1666 = vpop.f32.mrb[0].mxu0
    %v1667 = vpop.f32.mrb[0].mxu0
    %1668 = vdwg.mxu0
    %v1670 = vrot.slane %v1664, 4
    %v1671 = vrot.slane %v1664, 5
    %v1672 = vrot.slane %v1664, 6
    %v1673 = vrot.slane %v1664, 7
    %v1674 = vrot.slane %v1664, 1
    %v1675 = vrot.slane %v1664, 2
    %v1676 = vrot.slane %v1664, 3
    %v1685 = vadd.f32 %v1561, %v1670
    %v1686 = vadd.f32 %v1562, %v1671
    %v1687 = vadd.f32 %v1563, %v1672
    %v1688 = vadd.f32 %v1564, %v1673
    %v1689 = vadd.f32 %v1565, %v1664
    %v1690 = vadd.f32 %v1566, %v1674
    %v1691 = vadd.f32 %v1567, %v1675
    %v1692 = vadd.f32 %v1568, %v1676
    %v1693 = vmul.f32 %v1685, 0.5
    %v1694 = vmul.f32 %v1686, 0.5
    %v1695 = vmul.f32 %v1687, 0.5
    %v1696 = vmul.f32 %v1688, 0.5
    %v1697 = vmul.f32 %v1689, 0.5
    %v1698 = vmul.f32 %v1690, 0.5
    %v1699 = vmul.f32 %v1691, 0.5
    %v1700 = vmul.f32 %v1692, 0.5
    %v1701 = vtanh.pop %v1693
    %v1702 = vtanh.pop %v1694
    %v1703 = vtanh.pop %v1695
    %v1704 = vtanh.pop %v1696
    %v1705 = vtanh.pop %v1697
    %v1706 = vtanh.pop %v1698
    %v1707 = vtanh.pop %v1699
    %v1708 = vtanh.pop %v1700
    %v1709 = vmul.f32 %v1701, 0.5
    %v1710 = vmul.f32 %v1702, 0.5
    %v1711 = vmul.f32 %v1703, 0.5
    %v1712 = vmul.f32 %v1704, 0.5
    %v1713 = vmul.f32 %v1705, 0.5
    %v1714 = vmul.f32 %v1706, 0.5
    %v1715 = vmul.f32 %v1707, 0.5
    %v1716 = vmul.f32 %v1708, 0.5
    %v1717 = vadd.f32 %v1709, 0.5
    %v1718 = vadd.f32 %v1710, 0.5
    %v1719 = vadd.f32 %v1711, 0.5
    %v1720 = vadd.f32 %v1712, 0.5
    %v1721 = vadd.f32 %v1713, 0.5
    %v1722 = vadd.f32 %v1714, 0.5
    %v1723 = vadd.f32 %v1715, 0.5
    %v1724 = vadd.f32 %v1716, 0.5
    %v1725 = vtanh.pop %v1685
    %v1726 = vtanh.pop %v1686
    %v1727 = vtanh.pop %v1687
    %v1728 = vtanh.pop %v1688
    %v1729 = vtanh.pop %v1689
    %v1730 = vtanh.pop %v1690
    %v1731 = vtanh.pop %v1691
    %v1732 = vtanh.pop %v1692
    %v1741 = vrot.slane %v1456, 7
    %v1742 = vrot.slane %v1457, 7
    %v1743 = vrot.slane %v1458, 7
    %v1744 = vrot.slane %v1459, 7
    %v1745 = vrot.slane %v1460, 7
    %v1746 = vrot.slane %v1461, 7
    %v1747 = vrot.slane %v1462, 7
    %v1748 = vrot.slane %v1463, 7
    %v1757 = vmul.f32 %v1717, %v1741
    %v1758 = vmul.f32 %v1718, %v1742
    %v1759 = vmul.f32 %v1719, %v1743
    %v1760 = vmul.f32 %v1720, %v1744
    %v1761 = vmul.f32 %v1721, %v1745
    %v1762 = vmul.f32 %v1722, %v1746
    %v1763 = vmul.f32 %v1723, %v1747
    %v1764 = vmul.f32 %v1724, %v1748
    %1773 = vrot.lane.b32.xlu0 %v1725, 32
    %v1774 = vpop.permute.xlu0 %1773
    %1775 = vrot.lane.b32.xlu0 %v1726, 32
    %v1776 = vpop.permute.xlu0 %1775
    %1777 = vrot.lane.b32.xlu0 %v1727, 32
    %v1778 = vpop.permute.xlu0 %1777
    %1779 = vrot.lane.b32.xlu0 %v1728, 32
    %v1780 = vpop.permute.xlu0 %1779
    %1781 = vrot.lane.b32.xlu0 %v1729, 32
    %v1782 = vpop.permute.xlu0 %1781
    %1783 = vrot.lane.b32.xlu0 %v1730, 32
    %v1784 = vpop.permute.xlu0 %1783
    %1785 = vrot.lane.b32.xlu0 %v1731, 32
    %v1786 = vpop.permute.xlu0 %1785
    %1787 = vrot.lane.b32.xlu0 %v1732, 32
    %v1788 = vpop.permute.xlu0 %1787
    %v1797 = vmul.f32 %v1717, %v1774
    %v1798 = vmul.f32 %v1718, %v1776
    %v1799 = vmul.f32 %v1719, %v1778
    %v1800 = vmul.f32 %v1720, %v1780
    %v1801 = vmul.f32 %v1721, %v1782
    %v1802 = vmul.f32 %v1722, %v1784
    %v1803 = vmul.f32 %v1723, %v1786
    %v1804 = vmul.f32 %v1724, %v1788
    %1813 = vrot.lane.b32.xlu0 %v1797, 32
    %v1814 = vpop.permute.xlu0 %1813
    %1815 = vrot.lane.b32.xlu0 %v1798, 32
    %v1816 = vpop.permute.xlu0 %1815
    %1817 = vrot.lane.b32.xlu0 %v1799, 32
    %v1818 = vpop.permute.xlu0 %1817
    %1819 = vrot.lane.b32.xlu0 %v1800, 32
    %v1820 = vpop.permute.xlu0 %1819
    %1821 = vrot.lane.b32.xlu0 %v1801, 32
    %v1822 = vpop.permute.xlu0 %1821
    %1823 = vrot.lane.b32.xlu0 %v1802, 32
    %v1824 = vpop.permute.xlu0 %1823
    %1825 = vrot.lane.b32.xlu0 %v1803, 32
    %v1826 = vpop.permute.xlu0 %1825
    %1827 = vrot.lane.b32.xlu0 %v1804, 32
    %v1828 = vpop.permute.xlu0 %1827
    %v1837 = vadd.f32 %v1757, %v1814
    %v1838 = vadd.f32 %v1758, %v1816
    %v1839 = vadd.f32 %v1759, %v1818
    %v1840 = vadd.f32 %v1760, %v1820
    %v1841 = vadd.f32 %v1761, %v1822
    %v1842 = vadd.f32 %v1762, %v1824
    %v1843 = vadd.f32 %v1763, %v1826
    %v1844 = vadd.f32 %v1764, %v1828
    %v1845 = vtanh.pop %v1837
    %v1846 = vtanh.pop %v1838
    %v1847 = vtanh.pop %v1839
    %v1848 = vtanh.pop %v1840
    %v1849 = vtanh.pop %v1841
    %v1850 = vtanh.pop %v1842
    %v1851 = vtanh.pop %v1843
    %v1852 = vtanh.pop %v1844
    %1861 = vrot.lane.b32.xlu0 %v1845, 32
    %v1862 = vpop.permute.xlu0 %1861
    %1863 = vrot.lane.b32.xlu0 %v1846, 32
    %v1864 = vpop.permute.xlu0 %1863
    %1865 = vrot.lane.b32.xlu0 %v1847, 32
    %v1866 = vpop.permute.xlu0 %1865
    %1867 = vrot.lane.b32.xlu0 %v1848, 32
    %v1868 = vpop.permute.xlu0 %1867
    %1869 = vrot.lane.b32.xlu0 %v1849, 32
    %v1870 = vpop.permute.xlu0 %1869
    %1871 = vrot.lane.b32.xlu0 %v1850, 32
    %v1872 = vpop.permute.xlu0 %1871
    %1873 = vrot.lane.b32.xlu0 %v1851, 32
    %v1874 = vpop.permute.xlu0 %1873
    %1875 = vrot.lane.b32.xlu0 %v1852, 32
    %v1876 = vpop.permute.xlu0 %1875
    %v1885 = vmul.f32 %v1717, %v1862
    %v1886 = vmul.f32 %v1718, %v1864
    %v1887 = vmul.f32 %v1719, %v1866
    %v1888 = vmul.f32 %v1720, %v1868
    %v1889 = vmul.f32 %v1721, %v1870
    %v1890 = vmul.f32 %v1722, %v1872
    %v1891 = vmul.f32 %v1723, %v1874
    %v1892 = vmul.f32 %v1724, %v1876
    %1901 = vrot.lane.b32.xlu0 %v1885, 64
    %v1902 = vpop.permute.xlu0 %1901
    %1903 = vrot.lane.b32.xlu0 %v1886, 64
    %v1904 = vpop.permute.xlu0 %1903
    %1905 = vrot.lane.b32.xlu0 %v1887, 64
    %v1906 = vpop.permute.xlu0 %1905
    %1907 = vrot.lane.b32.xlu0 %v1888, 64
    %v1908 = vpop.permute.xlu0 %1907
    %1909 = vrot.lane.b32.xlu0 %v1889, 64
    %v1910 = vpop.permute.xlu0 %1909
    %1911 = vrot.lane.b32.xlu0 %v1890, 64
    %v1912 = vpop.permute.xlu0 %1911
    %1913 = vrot.lane.b32.xlu0 %v1891, 64
    %v1914 = vpop.permute.xlu0 %1913
    %1915 = vrot.lane.b32.xlu0 %v1892, 64
    %v1916 = vpop.permute.xlu0 %1915
    %vm1925 = vcmask 258052
    %1926 = vst.msk [vmem:[#allocation9] sm:$0x10] %vm1925, %v1902
    %1927 = vst.msk [vmem:[#allocation9 + $0x10] sm:$0x10] %vm1925, %v1904
    %1928 = vst.msk [vmem:[#allocation9 + $0x20] sm:$0x10] %vm1925, %v1906
    %1929 = vst.msk [vmem:[#allocation9 + $0x30] sm:$0x10] %vm1925, %v1908
    %1930 = vst.msk [vmem:[#allocation9 + $0x40] sm:$0x10] %vm1925, %v1910
    %1931 = vst.msk [vmem:[#allocation9 + $0x50] sm:$0x10] %vm1925, %v1912
    %1932 = vst.msk [vmem:[#allocation9 + $0x60] sm:$0x10] %vm1925, %v1914
    %1933 = vst.msk [vmem:[#allocation9 + $0x70] sm:$0x10] %vm1925, %v1916
    %v1934 = vld [vmem:[#allocation4] sm:$0x4]
    %v1935 = vld [vmem:[#allocation4 + $0x8] sm:$0x4]
    %v1936 = vld [vmem:[#allocation4 + $0x10] sm:$0x4]
    %v1937 = vld [vmem:[#allocation4 + $0x18] sm:$0x4]
    %v1938 = vld [vmem:[#allocation4 + $0x20] sm:$0x4]
    %v1939 = vld [vmem:[#allocation4 + $0x28] sm:$0x4]
    %v1940 = vld [vmem:[#allocation4 + $0x30] sm:$0x4]
    %v1941 = vld [vmem:[#allocation4 + $0x38] sm:$0x4]
    %v1942 = vunpack.c.l.bf16 %v1934
    %v1943 = vunpack.c.l.bf16 %v1935
    %v1944 = vunpack.c.l.bf16 %v1936
    %v1945 = vunpack.c.l.bf16 %v1937
    %v1946 = vunpack.c.l.bf16 %v1938
    %v1947 = vunpack.c.l.bf16 %v1939
    %v1948 = vunpack.c.l.bf16 %v1940
    %v1949 = vunpack.c.l.bf16 %v1941
    %v1950 = vpack.c.bf16 %v1885, %v1885
    %v1951 = vpack.c.bf16 %v1886, %v1886
    %v1952 = vpack.c.bf16 %v1887, %v1887
    %v1953 = vpack.c.bf16 %v1888, %v1888
    %v1954 = vpack.c.bf16 %v1889, %v1889
    %v1955 = vpack.c.bf16 %v1890, %v1890
    %v1956 = vpack.c.bf16 %v1891, %v1891
    %v1957 = vpack.c.bf16 %v1892, %v1892
    %v1958 = vld [vmem:[#allocation7] sm:$0xf]
    %v1959 = vld [vmem:[#allocation7 + $0x4] sm:$0xf]
    %v1960 = vld [vmem:[#allocation7 + $0x8] sm:$0xf]
    %v1961 = vld [vmem:[#allocation7 + $0xc] sm:$0xf]
    %v1970 = vunpack.c.l.b16 %v1950
    %v1971 = vunpack.c.l.b16 %v1951
    %v1972 = vunpack.c.l.b16 %v1952
    %v1973 = vunpack.c.l.b16 %v1953
    %v1974 = vunpack.c.l.b16 %v1954
    %v1975 = vunpack.c.l.b16 %v1955
    %v1976 = vunpack.c.l.b16 %v1956
    %v1977 = vunpack.c.l.b16 %v1957
    %v1978 = vrot.slane %v1970, 4
    %v1979 = vrot.slane %v1971, 3
    %v1980 = vsel %vm448, %v1979, %v1978
    %v1981 = vrot.slane %v1972, 2
    %v1982 = vsel %vm451, %v1981, %v1980
    %v1983 = vrot.slane %v1973, 1
    %v1984 = vsel %vm454, %v1983, %v1982
    %v1985 = vsel %vm457, %v1974, %v1984
    %v1986 = vrot.slane %v1975, 7
    %v1987 = vsel %vm460, %v1986, %v1985
    %v1988 = vrot.slane %v1976, 6
    %v1989 = vsel %vm463, %v1988, %v1987
    %v1990 = vrot.slane %v1977, 5
    %v1991 = vsel %vm466, %v1990, %v1989
    %v1992 = vpack.c.b16 %v1991, %v1991
    %1993 = vrot.lane.b32.xlu0 %v1992, 64
    %v1994 = vpop.permute.xlu0 %1993
    %v1999 = vunpack.c.l.b16 %v1958
    %v2000 = vunpack.c.l.b16 %v1959
    %v2001 = vunpack.c.l.b16 %v1960
    %v2002 = vunpack.c.l.b16 %v1961
    %v2003 = vpack.c.b16 %v2000, %v1999
    %v2004 = vpack.c.b16 %v2002, %v2001
    %v2008 = vsel %vm86, %v1994, 0
    %2010 = vmatprep.subr.bf16.mxu0 0
    %2011 = vmatpush1.bf16.msra.mxu0 %v2003
    %2012 = vmatprep.subr.bf16.mxu0 0
    %2013 = vmatpush1.bf16.msra.mxu0 %v2004
    %2014 = vmatprep.subr.bf16.mxu0 0
    %2015 = vmatpush1.bf16.msra.mxu0 0
    %2016 = vmatprep.subr.bf16.mxu0 0
    %2017 = vmatpush1.bf16.msra.mxu0 0
    %2018 = vmatprep.subr.bf16.mxu0 0
    %2019 = vmatpush1.bf16.msra.mxu0 0
    %2020 = vmatprep.subr.bf16.mxu0 0
    %2021 = vmatpush1.bf16.msra.mxu0 0
    %2022 = vmatprep.subr.bf16.mxu0 0
    %2023 = vmatpush1.bf16.msra.mxu0 0
    %2024 = vmatprep.subr.bf16.mxu0 0
    %2025 = vmatpush1.bf16.msra.mxu0 0
    %2026 = vmatprep.subr.bf16.mxu0 0
    %2027 = vmatpush1.bf16.msra.mxu0 0
    %2028 = vmatprep.subr.bf16.mxu0 0
    %2029 = vmatpush1.bf16.msra.mxu0 0
    %2030 = vmatprep.subr.bf16.mxu0 0
    %2031 = vmatpush1.bf16.msra.mxu0 0
    %2032 = vmatprep.subr.bf16.mxu0 0
    %2033 = vmatpush1.bf16.msra.mxu0 0
    %2034 = vmatprep.subr.bf16.mxu0 0
    %2035 = vmatpush1.bf16.msra.mxu0 0
    %2036 = vmatprep.subr.bf16.mxu0 0
    %2037 = vmatpush1.bf16.msra.mxu0 0
    %2038 = vmatprep.subr.bf16.mxu0 0
    %2039 = vmatpush1.bf16.msra.mxu0 0
    %2040 = vmatprep.subr.bf16.mxu0 0
    %2041 = vmatpush1.bf16.msra.mxu0 0
    %2042 = vmatprep.mubr.bf16.mxu0 0
    %2043 = vmatmul.mubr.bf16.gmra.mrb[0].mxu0 %v2008
    %v2044 = vpop.f32.mrb[0].mxu0
    %v2045 = vadd.f32 0.0, %v2044
    %v2046 = vpop.f32.mrb[0].mxu0
    %v2047 = vpop.f32.mrb[0].mxu0
    %v2048 = vpop.f32.mrb[0].mxu0
    %2049 = vdwg.mxu0
    %v2051 = vrot.slane %v2045, 3
    %v2052 = vrot.slane %v2045, 4
    %v2053 = vrot.slane %v2045, 5
    %v2054 = vrot.slane %v2045, 6
    %v2055 = vrot.slane %v2045, 7
    %v2056 = vrot.slane %v2045, 1
    %v2057 = vrot.slane %v2045, 2
    %v2066 = vadd.f32 %v1942, %v2051
    %v2067 = vadd.f32 %v1943, %v2052
    %v2068 = vadd.f32 %v1944, %v2053
    %v2069 = vadd.f32 %v1945, %v2054
    %v2070 = vadd.f32 %v1946, %v2055
    %v2071 = vadd.f32 %v1947, %v2045
    %v2072 = vadd.f32 %v1948, %v2056
    %v2073 = vadd.f32 %v1949, %v2057
    %v2074 = vmul.f32 %v2066, 0.5
    %v2075 = vmul.f32 %v2067, 0.5
    %v2076 = vmul.f32 %v2068, 0.5
    %v2077 = vmul.f32 %v2069, 0.5
    %v2078 = vmul.f32 %v2070, 0.5
    %v2079 = vmul.f32 %v2071, 0.5
    %v2080 = vmul.f32 %v2072, 0.5
    %v2081 = vmul.f32 %v2073, 0.5
    %v2082 = vtanh.pop %v2074
    %v2083 = vtanh.pop %v2075
    %v2084 = vtanh.pop %v2076
    %v2085 = vtanh.pop %v2077
    %v2086 = vtanh.pop %v2078
    %v2087 = vtanh.pop %v2079
    %v2088 = vtanh.pop %v2080
    %v2089 = vtanh.pop %v2081
    %v2090 = vmul.f32 %v2082, 0.5
    %v2091 = vmul.f32 %v2083, 0.5
    %v2092 = vmul.f32 %v2084, 0.5
    %v2093 = vmul.f32 %v2085, 0.5
    %v2094 = vmul.f32 %v2086, 0.5
    %v2095 = vmul.f32 %v2087, 0.5
    %v2096 = vmul.f32 %v2088, 0.5
    %v2097 = vmul.f32 %v2089, 0.5
    %v2098 = vadd.f32 %v2090, 0.5
    %v2099 = vadd.f32 %v2091, 0.5
    %v2100 = vadd.f32 %v2092, 0.5
    %v2101 = vadd.f32 %v2093, 0.5
    %v2102 = vadd.f32 %v2094, 0.5
    %v2103 = vadd.f32 %v2095, 0.5
    %v2104 = vadd.f32 %v2096, 0.5
    %v2105 = vadd.f32 %v2097, 0.5
    %v2106 = vtanh.pop %v2066
    %v2107 = vtanh.pop %v2067
    %v2108 = vtanh.pop %v2068
    %v2109 = vtanh.pop %v2069
    %v2110 = vtanh.pop %v2070
    %v2111 = vtanh.pop %v2071
    %v2112 = vtanh.pop %v2072
    %v2113 = vtanh.pop %v2073
    %v2122 = vrot.slane %v1837, 7
    %v2123 = vrot.slane %v1838, 7
    %v2124 = vrot.slane %v1839, 7
    %v2125 = vrot.slane %v1840, 7
    %v2126 = vrot.slane %v1841, 7
    %v2127 = vrot.slane %v1842, 7
    %v2128 = vrot.slane %v1843, 7
    %v2129 = vrot.slane %v1844, 7
    %v2138 = vmul.f32 %v2098, %v2122
    %v2139 = vmul.f32 %v2099, %v2123
    %v2140 = vmul.f32 %v2100, %v2124
    %v2141 = vmul.f32 %v2101, %v2125
    %v2142 = vmul.f32 %v2102, %v2126
    %v2143 = vmul.f32 %v2103, %v2127
    %v2144 = vmul.f32 %v2104, %v2128
    %v2145 = vmul.f32 %v2105, %v2129
    %2154 = vrot.lane.b32.xlu0 %v2106, 32
    %v2155 = vpop.permute.xlu0 %2154
    %2156 = vrot.lane.b32.xlu0 %v2107, 32
    %v2157 = vpop.permute.xlu0 %2156
    %2158 = vrot.lane.b32.xlu0 %v2108, 32
    %v2159 = vpop.permute.xlu0 %2158
    %2160 = vrot.lane.b32.xlu0 %v2109, 32
    %v2161 = vpop.permute.xlu0 %2160
    %2162 = vrot.lane.b32.xlu0 %v2110, 32
    %v2163 = vpop.permute.xlu0 %2162
    %2164 = vrot.lane.b32.xlu0 %v2111, 32
    %v2165 = vpop.permute.xlu0 %2164
    %2166 = vrot.lane.b32.xlu0 %v2112, 32
    %v2167 = vpop.permute.xlu0 %2166
    %2168 = vrot.lane.b32.xlu0 %v2113, 32
    %v2169 = vpop.permute.xlu0 %2168
    %v2178 = vmul.f32 %v2098, %v2155
    %v2179 = vmul.f32 %v2099, %v2157
    %v2180 = vmul.f32 %v2100, %v2159
    %v2181 = vmul.f32 %v2101, %v2161
    %v2182 = vmul.f32 %v2102, %v2163
    %v2183 = vmul.f32 %v2103, %v2165
    %v2184 = vmul.f32 %v2104, %v2167
    %v2185 = vmul.f32 %v2105, %v2169
    %2194 = vrot.lane.b32.xlu0 %v2178, 32
    %v2195 = vpop.permute.xlu0 %2194
    %2196 = vrot.lane.b32.xlu0 %v2179, 32
    %v2197 = vpop.permute.xlu0 %2196
    %2198 = vrot.lane.b32.xlu0 %v2180, 32
    %v2199 = vpop.permute.xlu0 %2198
    %2200 = vrot.lane.b32.xlu0 %v2181, 32
    %v2201 = vpop.permute.xlu0 %2200
    %2202 = vrot.lane.b32.xlu0 %v2182, 32
    %v2203 = vpop.permute.xlu0 %2202
    %2204 = vrot.lane.b32.xlu0 %v2183, 32
    %v2205 = vpop.permute.xlu0 %2204
    %2206 = vrot.lane.b32.xlu0 %v2184, 32
    %v2207 = vpop.permute.xlu0 %2206
    %2208 = vrot.lane.b32.xlu0 %v2185, 32
    %v2209 = vpop.permute.xlu0 %2208
    %v2218 = vadd.f32 %v2138, %v2195
    %v2219 = vadd.f32 %v2139, %v2197
    %v2220 = vadd.f32 %v2140, %v2199
    %v2221 = vadd.f32 %v2141, %v2201
    %v2222 = vadd.f32 %v2142, %v2203
    %v2223 = vadd.f32 %v2143, %v2205
    %v2224 = vadd.f32 %v2144, %v2207
    %v2225 = vadd.f32 %v2145, %v2209
    %v2226 = vtanh.pop %v2218
    %v2227 = vtanh.pop %v2219
    %v2228 = vtanh.pop %v2220
    %v2229 = vtanh.pop %v2221
    %v2230 = vtanh.pop %v2222
    %v2231 = vtanh.pop %v2223
    %v2232 = vtanh.pop %v2224
    %v2233 = vtanh.pop %v2225
    %2242 = vrot.lane.b32.xlu0 %v2226, 32
    %v2243 = vpop.permute.xlu0 %2242
    %2244 = vrot.lane.b32.xlu0 %v2227, 32
    %v2245 = vpop.permute.xlu0 %2244
    %2246 = vrot.lane.b32.xlu0 %v2228, 32
    %v2247 = vpop.permute.xlu0 %2246
    %2248 = vrot.lane.b32.xlu0 %v2229, 32
    %v2249 = vpop.permute.xlu0 %2248
    %2250 = vrot.lane.b32.xlu0 %v2230, 32
    %v2251 = vpop.permute.xlu0 %2250
    %2252 = vrot.lane.b32.xlu0 %v2231, 32
    %v2253 = vpop.permute.xlu0 %2252
    %2254 = vrot.lane.b32.xlu0 %v2232, 32
    %v2255 = vpop.permute.xlu0 %2254
    %2256 = vrot.lane.b32.xlu0 %v2233, 32
    %v2257 = vpop.permute.xlu0 %2256
    %v2266 = vmul.f32 %v2098, %v2243
    %v2267 = vmul.f32 %v2099, %v2245
    %v2268 = vmul.f32 %v2100, %v2247
    %v2269 = vmul.f32 %v2101, %v2249
    %v2270 = vmul.f32 %v2102, %v2251
    %v2271 = vmul.f32 %v2103, %v2253
    %v2272 = vmul.f32 %v2104, %v2255
    %v2273 = vmul.f32 %v2105, %v2257
    %2282 = vrot.lane.b32.xlu0 %v2266, 64
    %v2283 = vpop.permute.xlu0 %2282
    %2284 = vrot.lane.b32.xlu0 %v2267, 64
    %v2285 = vpop.permute.xlu0 %2284
    %2286 = vrot.lane.b32.xlu0 %v2268, 64
    %v2287 = vpop.permute.xlu0 %2286
    %2288 = vrot.lane.b32.xlu0 %v2269, 64
    %v2289 = vpop.permute.xlu0 %2288
    %2290 = vrot.lane.b32.xlu0 %v2270, 64
    %v2291 = vpop.permute.xlu0 %2290
    %2292 = vrot.lane.b32.xlu0 %v2271, 64
    %v2293 = vpop.permute.xlu0 %2292
    %2294 = vrot.lane.b32.xlu0 %v2272, 64
    %v2295 = vpop.permute.xlu0 %2294
    %2296 = vrot.lane.b32.xlu0 %v2273, 64
    %v2297 = vpop.permute.xlu0 %2296
    %vm2306 = vcmask 259077
    %2307 = vst.msk [vmem:[#allocation9] sm:$0x20] %vm2306, %v2283
    %2308 = vst.msk [vmem:[#allocation9 + $0x10] sm:$0x20] %vm2306, %v2285
    %2309 = vst.msk [vmem:[#allocation9 + $0x20] sm:$0x20] %vm2306, %v2287
    %2310 = vst.msk [vmem:[#allocation9 + $0x30] sm:$0x20] %vm2306, %v2289
    %2311 = vst.msk [vmem:[#allocation9 + $0x40] sm:$0x20] %vm2306, %v2291
    %2312 = vst.msk [vmem:[#allocation9 + $0x50] sm:$0x20] %vm2306, %v2293
    %2313 = vst.msk [vmem:[#allocation9 + $0x60] sm:$0x20] %vm2306, %v2295
    %2314 = vst.msk [vmem:[#allocation9 + $0x70] sm:$0x20] %vm2306, %v2297
    %v2315 = vld [vmem:[#allocation4] sm:$0x8]
    %v2316 = vld [vmem:[#allocation4 + $0x8] sm:$0x8]
    %v2317 = vld [vmem:[#allocation4 + $0x10] sm:$0x8]
    %v2318 = vld [vmem:[#allocation4 + $0x18] sm:$0x8]
    %v2319 = vld [vmem:[#allocation4 + $0x20] sm:$0x8]
    %v2320 = vld [vmem:[#allocation4 + $0x28] sm:$0x8]
    %v2321 = vld [vmem:[#allocation4 + $0x30] sm:$0x8]
    %v2322 = vld [vmem:[#allocation4 + $0x38] sm:$0x8]
    %v2323 = vunpack.c.l.bf16 %v2315
    %v2324 = vunpack.c.l.bf16 %v2316
    %v2325 = vunpack.c.l.bf16 %v2317
    %v2326 = vunpack.c.l.bf16 %v2318
    %v2327 = vunpack.c.l.bf16 %v2319
    %v2328 = vunpack.c.l.bf16 %v2320
    %v2329 = vunpack.c.l.bf16 %v2321
    %v2330 = vunpack.c.l.bf16 %v2322
    %v2331 = vpack.c.bf16 %v2266, %v2266
    %v2332 = vpack.c.bf16 %v2267, %v2267
    %v2333 = vpack.c.bf16 %v2268, %v2268
    %v2334 = vpack.c.bf16 %v2269, %v2269
    %v2335 = vpack.c.bf16 %v2270, %v2270
    %v2336 = vpack.c.bf16 %v2271, %v2271
    %v2337 = vpack.c.bf16 %v2272, %v2272
    %v2338 = vpack.c.bf16 %v2273, %v2273
    %v2339 = vld [vmem:[#allocation7] sm:$0xf]
    %v2340 = vld [vmem:[#allocation7 + $0x4] sm:$0xf]
    %v2341 = vld [vmem:[#allocation7 + $0x8] sm:$0xf]
    %v2342 = vld [vmem:[#allocation7 + $0xc] sm:$0xf]
    %v2351 = vunpack.c.l.b16 %v2331
    %v2352 = vunpack.c.l.b16 %v2332
    %v2353 = vunpack.c.l.b16 %v2333
    %v2354 = vunpack.c.l.b16 %v2334
    %v2355 = vunpack.c.l.b16 %v2335
    %v2356 = vunpack.c.l.b16 %v2336
    %v2357 = vunpack.c.l.b16 %v2337
    %v2358 = vunpack.c.l.b16 %v2338
    %v2359 = vrot.slane %v2351, 5
    %v2360 = vrot.slane %v2352, 4
    %v2361 = vsel %vm448, %v2360, %v2359
    %v2362 = vrot.slane %v2353, 3
    %v2363 = vsel %vm451, %v2362, %v2361
    %v2364 = vrot.slane %v2354, 2
    %v2365 = vsel %vm454, %v2364, %v2363
    %v2366 = vrot.slane %v2355, 1
    %v2367 = vsel %vm457, %v2366, %v2365
    %v2368 = vsel %vm460, %v2356, %v2367
    %v2369 = vrot.slane %v2357, 7
    %v2370 = vsel %vm463, %v2369, %v2368
    %v2371 = vrot.slane %v2358, 6
    %v2372 = vsel %vm466, %v2371, %v2370
    %v2373 = vpack.c.b16 %v2372, %v2372
    %2374 = vrot.lane.b32.xlu0 %v2373, 64
    %v2375 = vpop.permute.xlu0 %2374
    %v2380 = vunpack.c.l.b16 %v2339
    %v2381 = vunpack.c.l.b16 %v2340
    %v2382 = vunpack.c.l.b16 %v2341
    %v2383 = vunpack.c.l.b16 %v2342
    %v2384 = vpack.c.b16 %v2381, %v2380
    %v2385 = vpack.c.b16 %v2383, %v2382
    %v2389 = vsel %vm86, %v2375, 0
    %2391 = vmatprep.subr.bf16.mxu0 0
    %2392 = vmatpush1.bf16.msra.mxu0 %v2384
    %2393 = vmatprep.subr.bf16.mxu0 0
    %2394 = vmatpush1.bf16.msra.mxu0 %v2385
    %2395 = vmatprep.subr.bf16.mxu0 0
    %2396 = vmatpush1.bf16.msra.mxu0 0
    %2397 = vmatprep.subr.bf16.mxu0 0
    %2398 = vmatpush1.bf16.msra.mxu0 0
    %2399 = vmatprep.subr.bf16.mxu0 0
    %2400 = vmatpush1.bf16.msra.mxu0 0
    %2401 = vmatprep.subr.bf16.mxu0 0
    %2402 = vmatpush1.bf16.msra.mxu0 0
    %2403 = vmatprep.subr.bf16.mxu0 0
    %2404 = vmatpush1.bf16.msra.mxu0 0
    %2405 = vmatprep.subr.bf16.mxu0 0
    %2406 = vmatpush1.bf16.msra.mxu0 0
    %2407 = vmatprep.subr.bf16.mxu0 0
    %2408 = vmatpush1.bf16.msra.mxu0 0
    %2409 = vmatprep.subr.bf16.mxu0 0
    %2410 = vmatpush1.bf16.msra.mxu0 0
    %2411 = vmatprep.subr.bf16.mxu0 0
    %2412 = vmatpush1.bf16.msra.mxu0 0
    %2413 = vmatprep.subr.bf16.mxu0 0
    %2414 = vmatpush1.bf16.msra.mxu0 0
    %2415 = vmatprep.subr.bf16.mxu0 0
    %2416 = vmatpush1.bf16.msra.mxu0 0
    %2417 = vmatprep.subr.bf16.mxu0 0
    %2418 = vmatpush1.bf16.msra.mxu0 0
    %2419 = vmatprep.subr.bf16.mxu0 0
    %2420 = vmatpush1.bf16.msra.mxu0 0
    %2421 = vmatprep.subr.bf16.mxu0 0
    %2422 = vmatpush1.bf16.msra.mxu0 0
    %2423 = vmatprep.mubr.bf16.mxu0 0
    %2424 = vmatmul.mubr.bf16.gmra.mrb[0].mxu0 %v2389
    %v2425 = vpop.f32.mrb[0].mxu0
    %v2426 = vadd.f32 0.0, %v2425
    %v2427 = vpop.f32.mrb[0].mxu0
    %v2428 = vpop.f32.mrb[0].mxu0
    %v2429 = vpop.f32.mrb[0].mxu0
    %2430 = vdwg.mxu0
    %v2432 = vrot.slane %v2426, 2
    %v2433 = vrot.slane %v2426, 3
    %v2434 = vrot.slane %v2426, 4
    %v2435 = vrot.slane %v2426, 5
    %v2436 = vrot.slane %v2426, 6
    %v2437 = vrot.slane %v2426, 7
    %v2438 = vrot.slane %v2426, 1
    %v2447 = vadd.f32 %v2323, %v2432
    %v2448 = vadd.f32 %v2324, %v2433
    %v2449 = vadd.f32 %v2325, %v2434
    %v2450 = vadd.f32 %v2326, %v2435
    %v2451 = vadd.f32 %v2327, %v2436
    %v2452 = vadd.f32 %v2328, %v2437
    %v2453 = vadd.f32 %v2329, %v2426
    %v2454 = vadd.f32 %v2330, %v2438
    %v2455 = vmul.f32 %v2447, 0.5
    %v2456 = vmul.f32 %v2448, 0.5
    %v2457 = vmul.f32 %v2449, 0.5
    %v2458 = vmul.f32 %v2450, 0.5
    %v2459 = vmul.f32 %v2451, 0.5
    %v2460 = vmul.f32 %v2452, 0.5
    %v2461 = vmul.f32 %v2453, 0.5
    %v2462 = vmul.f32 %v2454, 0.5
    %v2463 = vtanh.pop %v2455
    %v2464 = vtanh.pop %v2456
    %v2465 = vtanh.pop %v2457
    %v2466 = vtanh.pop %v2458
    %v2467 = vtanh.pop %v2459
    %v2468 = vtanh.pop %v2460
    %v2469 = vtanh.pop %v2461
    %v2470 = vtanh.pop %v2462
    %v2471 = vmul.f32 %v2463, 0.5
    %v2472 = vmul.f32 %v2464, 0.5
    %v2473 = vmul.f32 %v2465, 0.5
    %v2474 = vmul.f32 %v2466, 0.5
    %v2475 = vmul.f32 %v2467, 0.5
    %v2476 = vmul.f32 %v2468, 0.5
    %v2477 = vmul.f32 %v2469, 0.5
    %v2478 = vmul.f32 %v2470, 0.5
    %v2479 = vadd.f32 %v2471, 0.5
    %v2480 = vadd.f32 %v2472, 0.5
    %v2481 = vadd.f32 %v2473, 0.5
    %v2482 = vadd.f32 %v2474, 0.5
    %v2483 = vadd.f32 %v2475, 0.5
    %v2484 = vadd.f32 %v2476, 0.5
    %v2485 = vadd.f32 %v2477, 0.5
    %v2486 = vadd.f32 %v2478, 0.5
    %v2487 = vtanh.pop %v2447
    %v2488 = vtanh.pop %v2448
    %v2489 = vtanh.pop %v2449
    %v2490 = vtanh.pop %v2450
    %v2491 = vtanh.pop %v2451
    %v2492 = vtanh.pop %v2452
    %v2493 = vtanh.pop %v2453
    %v2494 = vtanh.pop %v2454
    %v2503 = vrot.slane %v2218, 7
    %v2504 = vrot.slane %v2219, 7
    %v2505 = vrot.slane %v2220, 7
    %v2506 = vrot.slane %v2221, 7
    %v2507 = vrot.slane %v2222, 7
    %v2508 = vrot.slane %v2223, 7
    %v2509 = vrot.slane %v2224, 7
    %v2510 = vrot.slane %v2225, 7
    %v2519 = vmul.f32 %v2479, %v2503
    %v2520 = vmul.f32 %v2480, %v2504
    %v2521 = vmul.f32 %v2481, %v2505
    %v2522 = vmul.f32 %v2482, %v2506
    %v2523 = vmul.f32 %v2483, %v2507
    %v2524 = vmul.f32 %v2484, %v2508
    %v2525 = vmul.f32 %v2485, %v2509
    %v2526 = vmul.f32 %v2486, %v2510
    %2535 = vrot.lane.b32.xlu0 %v2487, 32
    %v2536 = vpop.permute.xlu0 %2535
    %2537 = vrot.lane.b32.xlu0 %v2488, 32
    %v2538 = vpop.permute.xlu0 %2537
    %2539 = vrot.lane.b32.xlu0 %v2489, 32
    %v2540 = vpop.permute.xlu0 %2539
    %2541 = vrot.lane.b32.xlu0 %v2490, 32
    %v2542 = vpop.permute.xlu0 %2541
    %2543 = vrot.lane.b32.xlu0 %v2491, 32
    %v2544 = vpop.permute.xlu0 %2543
    %2545 = vrot.lane.b32.xlu0 %v2492, 32
    %v2546 = vpop.permute.xlu0 %2545
    %2547 = vrot.lane.b32.xlu0 %v2493, 32
    %v2548 = vpop.permute.xlu0 %2547
    %2549 = vrot.lane.b32.xlu0 %v2494, 32
    %v2550 = vpop.permute.xlu0 %2549
    %v2559 = vmul.f32 %v2479, %v2536
    %v2560 = vmul.f32 %v2480, %v2538
    %v2561 = vmul.f32 %v2481, %v2540
    %v2562 = vmul.f32 %v2482, %v2542
    %v2563 = vmul.f32 %v2483, %v2544
    %v2564 = vmul.f32 %v2484, %v2546
    %v2565 = vmul.f32 %v2485, %v2548
    %v2566 = vmul.f32 %v2486, %v2550
    %2575 = vrot.lane.b32.xlu0 %v2559, 32
    %v2576 = vpop.permute.xlu0 %2575
    %2577 = vrot.lane.b32.xlu0 %v2560, 32
    %v2578 = vpop.permute.xlu0 %2577
    %2579 = vrot.lane.b32.xlu0 %v2561, 32
    %v2580 = vpop.permute.xlu0 %2579
    %2581 = vrot.lane.b32.xlu0 %v2562, 32
    %v2582 = vpop.permute.xlu0 %2581
    %2583 = vrot.lane.b32.xlu0 %v2563, 32
    %v2584 = vpop.permute.xlu0 %2583
    %2585 = vrot.lane.b32.xlu0 %v2564, 32
    %v2586 = vpop.permute.xlu0 %2585
    %2587 = vrot.lane.b32.xlu0 %v2565, 32
    %v2588 = vpop.permute.xlu0 %2587
    %2589 = vrot.lane.b32.xlu0 %v2566, 32
    %v2590 = vpop.permute.xlu0 %2589
    %v2599 = vadd.f32 %v2519, %v2576
    %v2600 = vadd.f32 %v2520, %v2578
    %v2601 = vadd.f32 %v2521, %v2580
    %v2602 = vadd.f32 %v2522, %v2582
    %v2603 = vadd.f32 %v2523, %v2584
    %v2604 = vadd.f32 %v2524, %v2586
    %v2605 = vadd.f32 %v2525, %v2588
    %v2606 = vadd.f32 %v2526, %v2590
    %v2607 = vtanh.pop %v2599
    %v2608 = vtanh.pop %v2600
    %v2609 = vtanh.pop %v2601
    %v2610 = vtanh.pop %v2602
    %v2611 = vtanh.pop %v2603
    %v2612 = vtanh.pop %v2604
    %v2613 = vtanh.pop %v2605
    %v2614 = vtanh.pop %v2606
    %2623 = vrot.lane.b32.xlu0 %v2607, 32
    %v2624 = vpop.permute.xlu0 %2623
    %2625 = vrot.lane.b32.xlu0 %v2608, 32
    %v2626 = vpop.permute.xlu0 %2625
    %2627 = vrot.lane.b32.xlu0 %v2609, 32
    %v2628 = vpop.permute.xlu0 %2627
    %2629 = vrot.lane.b32.xlu0 %v2610, 32
    %v2630 = vpop.permute.xlu0 %2629
    %2631 = vrot.lane.b32.xlu0 %v2611, 32
    %v2632 = vpop.permute.xlu0 %2631
    %2633 = vrot.lane.b32.xlu0 %v2612, 32
    %v2634 = vpop.permute.xlu0 %2633
    %2635 = vrot.lane.b32.xlu0 %v2613, 32
    %v2636 = vpop.permute.xlu0 %2635
    %2637 = vrot.lane.b32.xlu0 %v2614, 32
    %v2638 = vpop.permute.xlu0 %2637
    %v2647 = vmul.f32 %v2479, %v2624
    %v2648 = vmul.f32 %v2480, %v2626
    %v2649 = vmul.f32 %v2481, %v2628
    %v2650 = vmul.f32 %v2482, %v2630
    %v2651 = vmul.f32 %v2483, %v2632
    %v2652 = vmul.f32 %v2484, %v2634
    %v2653 = vmul.f32 %v2485, %v2636
    %v2654 = vmul.f32 %v2486, %v2638
    %2663 = vrot.lane.b32.xlu0 %v2647, 64
    %v2664 = vpop.permute.xlu0 %2663
    %2665 = vrot.lane.b32.xlu0 %v2648, 64
    %v2666 = vpop.permute.xlu0 %2665
    %2667 = vrot.lane.b32.xlu0 %v2649, 64
    %v2668 = vpop.permute.xlu0 %2667
    %2669 = vrot.lane.b32.xlu0 %v2650, 64
    %v2670 = vpop.permute.xlu0 %2669
    %2671 = vrot.lane.b32.xlu0 %v2651, 64
    %v2672 = vpop.permute.xlu0 %2671
    %2673 = vrot.lane.b32.xlu0 %v2652, 64
    %v2674 = vpop.permute.xlu0 %2673
    %2675 = vrot.lane.b32.xlu0 %v2653, 64
    %v2676 = vpop.permute.xlu0 %2675
    %2677 = vrot.lane.b32.xlu0 %v2654, 64
    %v2678 = vpop.permute.xlu0 %2677
    %vm2687 = vcmask 260102
    %2688 = vst.msk [vmem:[#allocation9] sm:$0x40] %vm2687, %v2664
    %2689 = vst.msk [vmem:[#allocation9 + $0x10] sm:$0x40] %vm2687, %v2666
    %2690 = vst.msk [vmem:[#allocation9 + $0x20] sm:$0x40] %vm2687, %v2668
    %2691 = vst.msk [vmem:[#allocation9 + $0x30] sm:$0x40] %vm2687, %v2670
    %2692 = vst.msk [vmem:[#allocation9 + $0x40] sm:$0x40] %vm2687, %v2672
    %2693 = vst.msk [vmem:[#allocation9 + $0x50] sm:$0x40] %vm2687, %v2674
    %2694 = vst.msk [vmem:[#allocation9 + $0x60] sm:$0x40] %vm2687, %v2676
    %2695 = vst.msk [vmem:[#allocation9 + $0x70] sm:$0x40] %vm2687, %v2678
    %v2696 = vld [vmem:[#allocation4] sm:$0x8]
    %v2697 = vld [vmem:[#allocation4 + $0x8] sm:$0x8]
    %v2698 = vld [vmem:[#allocation4 + $0x10] sm:$0x8]
    %v2699 = vld [vmem:[#allocation4 + $0x18] sm:$0x8]
    %v2700 = vld [vmem:[#allocation4 + $0x20] sm:$0x8]
    %v2701 = vld [vmem:[#allocation4 + $0x28] sm:$0x8]
    %v2702 = vld [vmem:[#allocation4 + $0x30] sm:$0x8]
    %v2703 = vld [vmem:[#allocation4 + $0x38] sm:$0x8]
    %v2704 = vunpack.c.l.bf16 %v2696
    %v2705 = vunpack.c.l.bf16 %v2697
    %v2706 = vunpack.c.l.bf16 %v2698
    %v2707 = vunpack.c.l.bf16 %v2699
    %v2708 = vunpack.c.l.bf16 %v2700
    %v2709 = vunpack.c.l.bf16 %v2701
    %v2710 = vunpack.c.l.bf16 %v2702
    %v2711 = vunpack.c.l.bf16 %v2703
    %v2712 = vpack.c.bf16 %v2647, %v2647
    %v2713 = vpack.c.bf16 %v2648, %v2648
    %v2714 = vpack.c.bf16 %v2649, %v2649
    %v2715 = vpack.c.bf16 %v2650, %v2650
    %v2716 = vpack.c.bf16 %v2651, %v2651
    %v2717 = vpack.c.bf16 %v2652, %v2652
    %v2718 = vpack.c.bf16 %v2653, %v2653
    %v2719 = vpack.c.bf16 %v2654, %v2654
    %v2720 = vld [vmem:[#allocation7] sm:$0xf]
    %v2721 = vld [vmem:[#allocation7 + $0x4] sm:$0xf]
    %v2722 = vld [vmem:[#allocation7 + $0x8] sm:$0xf]
    %v2723 = vld [vmem:[#allocation7 + $0xc] sm:$0xf]
    %v2732 = vunpack.c.l.b16 %v2712
    %v2733 = vunpack.c.l.b16 %v2713
    %v2734 = vunpack.c.l.b16 %v2714
    %v2735 = vunpack.c.l.b16 %v2715
    %v2736 = vunpack.c.l.b16 %v2716
    %v2737 = vunpack.c.l.b16 %v2717
    %v2738 = vunpack.c.l.b16 %v2718
    %v2739 = vunpack.c.l.b16 %v2719
    %v2740 = vrot.slane %v2732, 6
    %v2741 = vrot.slane %v2733, 5
    %v2742 = vsel %vm448, %v2741, %v2740
    %v2743 = vrot.slane %v2734, 4
    %v2744 = vsel %vm451, %v2743, %v2742
    %v2745 = vrot.slane %v2735, 3
    %v2746 = vsel %vm454, %v2745, %v2744
    %v2747 = vrot.slane %v2736, 2
    %v2748 = vsel %vm457, %v2747, %v2746
    %v2749 = vrot.slane %v2737, 1
    %v2750 = vsel %vm460, %v2749, %v2748
    %v2751 = vsel %vm463, %v2738, %v2750
    %v2752 = vrot.slane %v2739, 7
    %v2753 = vsel %vm466, %v2752, %v2751
    %v2754 = vpack.c.b16 %v2753, %v2753
    %2755 = vrot.lane.b32.xlu0 %v2754, 64
    %v2756 = vpop.permute.xlu0 %2755
    %v2761 = vunpack.c.l.b16 %v2720
    %v2762 = vunpack.c.l.b16 %v2721
    %v2763 = vunpack.c.l.b16 %v2722
    %v2764 = vunpack.c.l.b16 %v2723
    %v2765 = vpack.c.b16 %v2762, %v2761
    %v2766 = vpack.c.b16 %v2764, %v2763
    %v2770 = vsel %vm86, %v2756, 0
    %2772 = vmatprep.subr.bf16.mxu0 0
    %2773 = vmatpush1.bf16.msra.mxu0 %v2765
    %2774 = vmatprep.subr.bf16.mxu0 0
    %2775 = vmatpush1.bf16.msra.mxu0 %v2766
    %2776 = vmatprep.subr.bf16.mxu0 0
    %2777 = vmatpush1.bf16.msra.mxu0 0
    %2778 = vmatprep.subr.bf16.mxu0 0
    %2779 = vmatpush1.bf16.msra.mxu0 0
    %2780 = vmatprep.subr.bf16.mxu0 0
    %2781 = vmatpush1.bf16.msra.mxu0 0
    %2782 = vmatprep.subr.bf16.mxu0 0
    %2783 = vmatpush1.bf16.msra.mxu0 0
    %2784 = vmatprep.subr.bf16.mxu0 0
    %2785 = vmatpush1.bf16.msra.mxu0 0
    %2786 = vmatprep.subr.bf16.mxu0 0
    %2787 = vmatpush1.bf16.msra.mxu0 0
    %2788 = vmatprep.subr.bf16.mxu0 0
    %2789 = vmatpush1.bf16.msra.mxu0 0
    %2790 = vmatprep.subr.bf16.mxu0 0
    %2791 = vmatpush1.bf16.msra.mxu0 0
    %2792 = vmatprep.subr.bf16.mxu0 0
    %2793 = vmatpush1.bf16.msra.mxu0 0
    %2794 = vmatprep.subr.bf16.mxu0 0
    %2795 = vmatpush1.bf16.msra.mxu0 0
    %2796 = vmatprep.subr.bf16.mxu0 0
    %2797 = vmatpush1.bf16.msra.mxu0 0
    %2798 = vmatprep.subr.bf16.mxu0 0
    %2799 = vmatpush1.bf16.msra.mxu0 0
    %2800 = vmatprep.subr.bf16.mxu0 0
    %2801 = vmatpush1.bf16.msra.mxu0 0
    %2802 = vmatprep.subr.bf16.mxu0 0
    %2803 = vmatpush1.bf16.msra.mxu0 0
    %2804 = vmatprep.mubr.bf16.mxu0 0
    %2805 = vmatmul.mubr.bf16.gmra.mrb[0].mxu0 %v2770
    %v2806 = vpop.f32.mrb[0].mxu0
    %v2807 = vadd.f32 0.0, %v2806
    %v2808 = vpop.f32.mrb[0].mxu0
    %v2809 = vpop.f32.mrb[0].mxu0
    %v2810 = vpop.f32.mrb[0].mxu0
    %2811 = vdwg.mxu0
    %v2813 = vrot.slane %v2807, 1
    %v2814 = vrot.slane %v2807, 2
    %v2815 = vrot.slane %v2807, 3
    %v2816 = vrot.slane %v2807, 4
    %v2817 = vrot.slane %v2807, 5
    %v2818 = vrot.slane %v2807, 6
    %v2819 = vrot.slane %v2807, 7
    %v2828 = vadd.f32 %v2704, %v2813
    %v2829 = vadd.f32 %v2705, %v2814
    %v2830 = vadd.f32 %v2706, %v2815
    %v2831 = vadd.f32 %v2707, %v2816
    %v2832 = vadd.f32 %v2708, %v2817
    %v2833 = vadd.f32 %v2709, %v2818
    %v2834 = vadd.f32 %v2710, %v2819
    %v2835 = vadd.f32 %v2711, %v2807
    %v2836 = vmul.f32 %v2828, 0.5
    %v2837 = vmul.f32 %v2829, 0.5
    %v2838 = vmul.f32 %v2830, 0.5
    %v2839 = vmul.f32 %v2831, 0.5
    %v2840 = vmul.f32 %v2832, 0.5
    %v2841 = vmul.f32 %v2833, 0.5
    %v2842 = vmul.f32 %v2834, 0.5
    %v2843 = vmul.f32 %v2835, 0.5
    %v2844 = vtanh.pop %v2836
    %v2845 = vtanh.pop %v2837
    %v2846 = vtanh.pop %v2838
    %v2847 = vtanh.pop %v2839
    %v2848 = vtanh.pop %v2840
    %v2849 = vtanh.pop %v2841
    %v2850 = vtanh.pop %v2842
    %v2851 = vtanh.pop %v2843
    %v2852 = vmul.f32 %v2844, 0.5
    %v2853 = vmul.f32 %v2845, 0.5
    %v2854 = vmul.f32 %v2846, 0.5
    %v2855 = vmul.f32 %v2847, 0.5
    %v2856 = vmul.f32 %v2848, 0.5
    %v2857 = vmul.f32 %v2849, 0.5
    %v2858 = vmul.f32 %v2850, 0.5
    %v2859 = vmul.f32 %v2851, 0.5
    %v2860 = vadd.f32 %v2852, 0.5
    %v2861 = vadd.f32 %v2853, 0.5
    %v2862 = vadd.f32 %v2854, 0.5
    %v2863 = vadd.f32 %v2855, 0.5
    %v2864 = vadd.f32 %v2856, 0.5
    %v2865 = vadd.f32 %v2857, 0.5
    %v2866 = vadd.f32 %v2858, 0.5
    %v2867 = vadd.f32 %v2859, 0.5
    %v2868 = vtanh.pop %v2828
    %v2869 = vtanh.pop %v2829
    %v2870 = vtanh.pop %v2830
    %v2871 = vtanh.pop %v2831
    %v2872 = vtanh.pop %v2832
    %v2873 = vtanh.pop %v2833
    %v2874 = vtanh.pop %v2834
    %v2875 = vtanh.pop %v2835
    %v2884 = vrot.slane %v2599, 7
    %v2885 = vrot.slane %v2600, 7
    %v2886 = vrot.slane %v2601, 7
    %v2887 = vrot.slane %v2602, 7
    %v2888 = vrot.slane %v2603, 7
    %v2889 = vrot.slane %v2604, 7
    %v2890 = vrot.slane %v2605, 7
    %v2891 = vrot.slane %v2606, 7
    %v2900 = vmul.f32 %v2860, %v2884
    %v2901 = vmul.f32 %v2861, %v2885
    %v2902 = vmul.f32 %v2862, %v2886
    %v2903 = vmul.f32 %v2863, %v2887
    %v2904 = vmul.f32 %v2864, %v2888
    %v2905 = vmul.f32 %v2865, %v2889
    %v2906 = vmul.f32 %v2866, %v2890
    %v2907 = vmul.f32 %v2867, %v2891
    %2916 = vrot.lane.b32.xlu0 %v2868, 32
    %v2917 = vpop.permute.xlu0 %2916
    %2918 = vrot.lane.b32.xlu0 %v2869, 32
    %v2919 = vpop.permute.xlu0 %2918
    %2920 = vrot.lane.b32.xlu0 %v2870, 32
    %v2921 = vpop.permute.xlu0 %2920
    %2922 = vrot.lane.b32.xlu0 %v2871, 32
    %v2923 = vpop.permute.xlu0 %2922
    %2924 = vrot.lane.b32.xlu0 %v2872, 32
    %v2925 = vpop.permute.xlu0 %2924
    %2926 = vrot.lane.b32.xlu0 %v2873, 32
    %v2927 = vpop.permute.xlu0 %2926
    %2928 = vrot.lane.b32.xlu0 %v2874, 32
    %v2929 = vpop.permute.xlu0 %2928
    %2930 = vrot.lane.b32.xlu0 %v2875, 32
    %v2931 = vpop.permute.xlu0 %2930
    %v2940 = vmul.f32 %v2860, %v2917
    %v2941 = vmul.f32 %v2861, %v2919
    %v2942 = vmul.f32 %v2862, %v2921
    %v2943 = vmul.f32 %v2863, %v2923
    %v2944 = vmul.f32 %v2864, %v2925
    %v2945 = vmul.f32 %v2865, %v2927
    %v2946 = vmul.f32 %v2866, %v2929
    %v2947 = vmul.f32 %v2867, %v2931
    %2956 = vrot.lane.b32.xlu0 %v2940, 32
    %v2957 = vpop.permute.xlu0 %2956
    %2958 = vrot.lane.b32.xlu0 %v2941, 32
    %v2959 = vpop.permute.xlu0 %2958
    %2960 = vrot.lane.b32.xlu0 %v2942, 32
    %v2961 = vpop.permute.xlu0 %2960
    %2962 = vrot.lane.b32.xlu0 %v2943, 32
    %v2963 = vpop.permute.xlu0 %2962
    %2964 = vrot.lane.b32.xlu0 %v2944, 32
    %v2965 = vpop.permute.xlu0 %2964
    %2966 = vrot.lane.b32.xlu0 %v2945, 32
    %v2967 = vpop.permute.xlu0 %2966
    %2968 = vrot.lane.b32.xlu0 %v2946, 32
    %v2969 = vpop.permute.xlu0 %2968
    %2970 = vrot.lane.b32.xlu0 %v2947, 32
    %v2971 = vpop.permute.xlu0 %2970
    %v2980 = vadd.f32 %v2900, %v2957
    %v2981 = vadd.f32 %v2901, %v2959
    %v2982 = vadd.f32 %v2902, %v2961
    %v2983 = vadd.f32 %v2903, %v2963
    %v2984 = vadd.f32 %v2904, %v2965
    %v2985 = vadd.f32 %v2905, %v2967
    %v2986 = vadd.f32 %v2906, %v2969
    %v2987 = vadd.f32 %v2907, %v2971
    %v2988 = vtanh.pop %v2980
    %v2989 = vtanh.pop %v2981
    %v2990 = vtanh.pop %v2982
    %v2991 = vtanh.pop %v2983
    %v2992 = vtanh.pop %v2984
    %v2993 = vtanh.pop %v2985
    %v2994 = vtanh.pop %v2986
    %v2995 = vtanh.pop %v2987
    %3004 = vrot.lane.b32.xlu0 %v2988, 32
    %v3005 = vpop.permute.xlu0 %3004
    %3006 = vrot.lane.b32.xlu0 %v2989, 32
    %v3007 = vpop.permute.xlu0 %3006
    %3008 = vrot.lane.b32.xlu0 %v2990, 32
    %v3009 = vpop.permute.xlu0 %3008
    %3010 = vrot.lane.b32.xlu0 %v2991, 32
    %v3011 = vpop.permute.xlu0 %3010
    %3012 = vrot.lane.b32.xlu0 %v2992, 32
    %v3013 = vpop.permute.xlu0 %3012
    %3014 = vrot.lane.b32.xlu0 %v2993, 32
    %v3015 = vpop.permute.xlu0 %3014
    %3016 = vrot.lane.b32.xlu0 %v2994, 32
    %v3017 = vpop.permute.xlu0 %3016
    %3018 = vrot.lane.b32.xlu0 %v2995, 32
    %v3019 = vpop.permute.xlu0 %3018
    %v3028 = vmul.f32 %v2860, %v3005
    %v3029 = vmul.f32 %v2861, %v3007
    %v3030 = vmul.f32 %v2862, %v3009
    %v3031 = vmul.f32 %v2863, %v3011
    %v3032 = vmul.f32 %v2864, %v3013
    %v3033 = vmul.f32 %v2865, %v3015
    %v3034 = vmul.f32 %v2866, %v3017
    %v3035 = vmul.f32 %v2867, %v3019
    %3044 = vrot.lane.b32.xlu0 %v3028, 64
    %v3045 = vpop.permute.xlu0 %3044
    %3046 = vrot.lane.b32.xlu0 %v3029, 64
    %v3047 = vpop.permute.xlu0 %3046
    %3048 = vrot.lane.b32.xlu0 %v3030, 64
    %v3049 = vpop.permute.xlu0 %3048
    %3050 = vrot.lane.b32.xlu0 %v3031, 64
    %v3051 = vpop.permute.xlu0 %3050
    %3052 = vrot.lane.b32.xlu0 %v3032, 64
    %v3053 = vpop.permute.xlu0 %3052
    %3054 = vrot.lane.b32.xlu0 %v3033, 64
    %v3055 = vpop.permute.xlu0 %3054
    %3056 = vrot.lane.b32.xlu0 %v3034, 64
    %v3057 = vpop.permute.xlu0 %3056
    %3058 = vrot.lane.b32.xlu0 %v3035, 64
    %v3059 = vpop.permute.xlu0 %3058
    %vm3068 = vcmask 261127
    %3069 = vst.msk [vmem:[#allocation9] sm:$0x80] %vm3068, %v3045
    %3070 = vst.msk [vmem:[#allocation9 + $0x10] sm:$0x80] %vm3068, %v3047
    %3071 = vst.msk [vmem:[#allocation9 + $0x20] sm:$0x80] %vm3068, %v3049
    %3072 = vst.msk [vmem:[#allocation9 + $0x30] sm:$0x80] %vm3068, %v3051
    %3073 = vst.msk [vmem:[#allocation9 + $0x40] sm:$0x80] %vm3068, %v3053
    %3074 = vst.msk [vmem:[#allocation9 + $0x50] sm:$0x80] %vm3068, %v3055
    %3075 = vst.msk [vmem:[#allocation9 + $0x60] sm:$0x80] %vm3068, %v3057
    %3076 = vst.msk [vmem:[#allocation9 + $0x70] sm:$0x80] %vm3068, %v3059
    // Predicated region
    $region22: #{tpu_custom_call.1} parent=1 // pred_check
      %p3077 = pneg %p44
    $region23: #{tpu_custom_call.1} parent=1 // pred_check_branch
      %3079 = sbr.rel (%p3077) target = $region25
    $region24: #{tpu_custom_call.1} parent=1 // pred_region
      %v3088 = vrot.slane %v2981, 7
      %v3089 = vrot.slane %v2982, 6
      %v3090 = vsel %vm448, %v3089, %v3088
      %v3091 = vrot.slane %v2983, 5
      %v3092 = vsel %vm451, %v3091, %v3090
      %v3093 = vrot.slane %v2984, 4
      %v3094 = vsel %vm454, %v3093, %v3092
      %v3095 = vrot.slane %v2985, 3
      %v3096 = vsel %vm457, %v3095, %v3094
      %v3097 = vrot.slane %v2986, 2
      %v3098 = vsel %vm460, %v3097, %v3096
      %v3099 = vrot.slane %v2987, 1
      %v3100 = vsel %vm463, %v3099, %v3098
      %3101 = vrot.lane.b32.xlu0 %v2980, 96
      %v3102 = vpop.permute.xlu0 %3101
      %3103 = vrot.lane.b32.xlu0 %v3100, 96
      %v3104 = vpop.permute.xlu0 %3103
      %3107 = vst.msk [vmem:[#allocation10 - $0x7] sm:$0x80] %vm3068, %v3102
      %vm3108 = vcmask 260096
      %3109 = vst.msk [vmem:[#allocation10 + $0x1] sm:$0x7f] %vm3108, %v3104
    $region25: #{tpu_custom_call.1} parent=1 // pred_fallthru
      _
    %v3110 = vld [vmem:[#allocation4 + $0x4] sm:$0x1]
    %v3111 = vld [vmem:[#allocation4 + $0xc] sm:$0x1]
    %v3112 = vld [vmem:[#allocation4 + $0x14] sm:$0x1]
    %v3113 = vld [vmem:[#allocation4 + $0x1c] sm:$0x1]
    %v3114 = vld [vmem:[#allocation4 + $0x24] sm:$0x1]
    %v3115 = vld [vmem:[#allocation4 + $0x2c] sm:$0x1]
    %v3116 = vld [vmem:[#allocation4 + $0x34] sm:$0x1]
    %v3117 = vld [vmem:[#allocation4 + $0x3c] sm:$0x1]
    %v3118 = vunpack.c.l.bf16 %v3110
    %v3119 = vunpack.c.l.bf16 %v3111
    %v3120 = vunpack.c.l.bf16 %v3112
    %v3121 = vunpack.c.l.bf16 %v3113
    %v3122 = vunpack.c.l.bf16 %v3114
    %v3123 = vunpack.c.l.bf16 %v3115
    %v3124 = vunpack.c.l.bf16 %v3116
    %v3125 = vunpack.c.l.bf16 %v3117
    %v3126 = vpack.c.bf16 %v3028, %v3028
    %v3127 = vpack.c.bf16 %v3029, %v3029
    %v3128 = vpack.c.bf16 %v3030, %v3030
    %v3129 = vpack.c.bf16 %v3031, %v3031
    %v3130 = vpack.c.bf16 %v3032, %v3032
    %v3131 = vpack.c.bf16 %v3033, %v3033
    %v3132 = vpack.c.bf16 %v3034, %v3034
    %v3133 = vpack.c.bf16 %v3035, %v3035
    %v3134 = vld [vmem:[#allocation7] sm:$0xf]
    %v3135 = vld [vmem:[#allocation7 + $0x4] sm:$0xf]
    %v3136 = vld [vmem:[#allocation7 + $0x8] sm:$0xf]
    %v3137 = vld [vmem:[#allocation7 + $0xc] sm:$0xf]
    %v3146 = vunpack.c.l.b16 %v3126
    %v3147 = vunpack.c.l.b16 %v3127
    %v3148 = vunpack.c.l.b16 %v3128
    %v3149 = vunpack.c.l.b16 %v3129
    %v3150 = vunpack.c.l.b16 %v3130
    %v3151 = vunpack.c.l.b16 %v3131
    %v3152 = vunpack.c.l.b16 %v3132
    %v3153 = vunpack.c.l.b16 %v3133
    %v3154 = vrot.slane %v3146, 7
    %v3155 = vrot.slane %v3147, 6
    %v3156 = vsel %vm448, %v3155, %v3154
    %v3157 = vrot.slane %v3148, 5
    %v3158 = vsel %vm451, %v3157, %v3156
    %v3159 = vrot.slane %v3149, 4
    %v3160 = vsel %vm454, %v3159, %v3158
    %v3161 = vrot.slane %v3150, 3
    %v3162 = vsel %vm457, %v3161, %v3160
    %v3163 = vrot.slane %v3151, 2
    %v3164 = vsel %vm460, %v3163, %v3162
    %v3165 = vrot.slane %v3152, 1
    %v3166 = vsel %vm463, %v3165, %v3164
    %v3167 = vsel %vm466, %v3153, %v3166
    %v3168 = vpack.c.b16 %v3167, %v3167
    %3169 = vrot.lane.b32.xlu0 %v3168, 64
    %v3170 = vpop.permute.xlu0 %3169
    %v3175 = vunpack.c.l.b16 %v3134
    %v3176 = vunpack.c.l.b16 %v3135
    %v3177 = vunpack.c.l.b16 %v3136
    %v3178 = vunpack.c.l.b16 %v3137
    %v3179 = vpack.c.b16 %v3176, %v3175
    %v3180 = vpack.c.b16 %v3178, %v3177
    %v3184 = vsel %vm86, %v3170, 0
    %3186 = vmatprep.subr.bf16.mxu0 0
    %3187 = vmatpush1.bf16.msra.mxu0 %v3179
    %3188 = vmatprep.subr.bf16.mxu0 0
    %3189 = vmatpush1.bf16.msra.mxu0 %v3180
    %3190 = vmatprep.subr.bf16.mxu0 0
    %3191 = vmatpush1.bf16.msra.mxu0 0
    %3192 = vmatprep.subr.bf16.mxu0 0
    %3193 = vmatpush1.bf16.msra.mxu0 0
    %3194 = vmatprep.subr.bf16.mxu0 0
    %3195 = vmatpush1.bf16.msra.mxu0 0
    %3196 = vmatprep.subr.bf16.mxu0 0
    %3197 = vmatpush1.bf16.msra.mxu0 0
    %3198 = vmatprep.subr.bf16.mxu0 0
    %3199 = vmatpush1.bf16.msra.mxu0 0
    %3200 = vmatprep.subr.bf16.mxu0 0
    %3201 = vmatpush1.bf16.msra.mxu0 0
    %3202 = vmatprep.subr.bf16.mxu0 0
    %3203 = vmatpush1.bf16.msra.mxu0 0
    %3204 = vmatprep.subr.bf16.mxu0 0
    %3205 = vmatpush1.bf16.msra.mxu0 0
    %3206 = vmatprep.subr.bf16.mxu0 0
    %3207 = vmatpush1.bf16.msra.mxu0 0
    %3208 = vmatprep.subr.bf16.mxu0 0
    %3209 = vmatpush1.bf16.msra.mxu0 0
    %3210 = vmatprep.subr.bf16.mxu0 0
    %3211 = vmatpush1.bf16.msra.mxu0 0
    %3212 = vmatprep.subr.bf16.mxu0 0
    %3213 = vmatpush1.bf16.msra.mxu0 0
    %3214 = vmatprep.subr.bf16.mxu0 0
    %3215 = vmatpush1.bf16.msra.mxu0 0
    %3216 = vmatprep.subr.bf16.mxu0 0
    %3217 = vmatpush1.bf16.msra.mxu0 0
    %3218 = vmatprep.mubr.bf16.mxu0 0
    %3219 = vmatmul.mubr.bf16.gmra.mrb[0].mxu0 %v3184
    %v3220 = vpop.f32.mrb[0].mxu0
    %v3221 = vadd.f32 0.0, %v3220
    %v3222 = vpop.f32.mrb[0].mxu0
    %v3223 = vpop.f32.mrb[0].mxu0
    %v3224 = vpop.f32.mrb[0].mxu0
    %3225 = vdwg.mxu0
    %v3227 = vrot.slane %v3221, 1
    %v3228 = vrot.slane %v3221, 2
    %v3229 = vrot.slane %v3221, 3
    %v3230 = vrot.slane %v3221, 4
    %v3231 = vrot.slane %v3221, 5
    %v3232 = vrot.slane %v3221, 6
    %v3233 = vrot.slane %v3221, 7
    %v3242 = vadd.f32 %v3118, %v3221
    %v3243 = vadd.f32 %v3119, %v3227
    %v3244 = vadd.f32 %v3120, %v3228
    %v3245 = vadd.f32 %v3121, %v3229
    %v3246 = vadd.f32 %v3122, %v3230
    %v3247 = vadd.f32 %v3123, %v3231
    %v3248 = vadd.f32 %v3124, %v3232
    %v3249 = vadd.f32 %v3125, %v3233
    %v3250 = vmul.f32 %v3242, 0.5
    %v3251 = vmul.f32 %v3243, 0.5
    %v3252 = vmul.f32 %v3244, 0.5
    %v3253 = vmul.f32 %v3245, 0.5
    %v3254 = vmul.f32 %v3246, 0.5
    %v3255 = vmul.f32 %v3247, 0.5
    %v3256 = vmul.f32 %v3248, 0.5
    %v3257 = vmul.f32 %v3249, 0.5
    %v3258 = vtanh.pop %v3250
    %v3259 = vtanh.pop %v3251
    %v3260 = vtanh.pop %v3252
    %v3261 = vtanh.pop %v3253
    %v3262 = vtanh.pop %v3254
    %v3263 = vtanh.pop %v3255
    %v3264 = vtanh.pop %v3256
    %v3265 = vtanh.pop %v3257
    %v3266 = vmul.f32 %v3258, 0.5
    %v3267 = vmul.f32 %v3259, 0.5
    %v3268 = vmul.f32 %v3260, 0.5
    %v3269 = vmul.f32 %v3261, 0.5
    %v3270 = vmul.f32 %v3262, 0.5
    %v3271 = vmul.f32 %v3263, 0.5
    %v3272 = vmul.f32 %v3264, 0.5
    %v3273 = vmul.f32 %v3265, 0.5
    %v3274 = vadd.f32 %v3266, 0.5
    %v3275 = vadd.f32 %v3267, 0.5
    %v3276 = vadd.f32 %v3268, 0.5
    %v3277 = vadd.f32 %v3269, 0.5
    %v3278 = vadd.f32 %v3270, 0.5
    %v3279 = vadd.f32 %v3271, 0.5
    %v3280 = vadd.f32 %v3272, 0.5
    %v3281 = vadd.f32 %v3273, 0.5
    %v3282 = vtanh.pop %v3242
    %v3283 = vtanh.pop %v3243
    %v3284 = vtanh.pop %v3244
    %v3285 = vtanh.pop %v3245
    %v3286 = vtanh.pop %v3246
    %v3287 = vtanh.pop %v3247
    %v3288 = vtanh.pop %v3248
    %v3289 = vtanh.pop %v3249
    %v3298 = vrot.slane %v2980, 7
    %v3299 = vrot.slane %v2981, 7
    %v3300 = vrot.slane %v2982, 7
    %v3301 = vrot.slane %v2983, 7
    %v3302 = vrot.slane %v2984, 7
    %v3303 = vrot.slane %v2985, 7
    %v3304 = vrot.slane %v2986, 7
    %v3305 = vrot.slane %v2987, 7
    %v3314 = vmul.f32 %v3274, %v3298
    %v3315 = vmul.f32 %v3275, %v3299
    %v3316 = vmul.f32 %v3276, %v3300
    %v3317 = vmul.f32 %v3277, %v3301
    %v3318 = vmul.f32 %v3278, %v3302
    %v3319 = vmul.f32 %v3279, %v3303
    %v3320 = vmul.f32 %v3280, %v3304
    %v3321 = vmul.f32 %v3281, %v3305
    %3330 = vrot.lane.b32.xlu0 %v3282, 32
    %v3331 = vpop.permute.xlu0 %3330
    %3332 = vrot.lane.b32.xlu0 %v3283, 32
    %v3333 = vpop.permute.xlu0 %3332
    %3334 = vrot.lane.b32.xlu0 %v3284, 32
    %v3335 = vpop.permute.xlu0 %3334
    %3336 = vrot.lane.b32.xlu0 %v3285, 32
    %v3337 = vpop.permute.xlu0 %3336
    %3338 = vrot.lane.b32.xlu0 %v3286, 32
    %v3339 = vpop.permute.xlu0 %3338
    %3340 = vrot.lane.b32.xlu0 %v3287, 32
    %v3341 = vpop.permute.xlu0 %3340
    %3342 = vrot.lane.b32.xlu0 %v3288, 32
    %v3343 = vpop.permute.xlu0 %3342
    %3344 = vrot.lane.b32.xlu0 %v3289, 32
    %v3345 = vpop.permute.xlu0 %3344
    %v3354 = vmul.f32 %v3274, %v3331
    %v3355 = vmul.f32 %v3275, %v3333
    %v3356 = vmul.f32 %v3276, %v3335
    %v3357 = vmul.f32 %v3277, %v3337
    %v3358 = vmul.f32 %v3278, %v3339
    %v3359 = vmul.f32 %v3279, %v3341
    %v3360 = vmul.f32 %v3280, %v3343
    %v3361 = vmul.f32 %v3281, %v3345
    %3370 = vrot.lane.b32.xlu0 %v3354, 32
    %v3371 = vpop.permute.xlu0 %3370
    %3372 = vrot.lane.b32.xlu0 %v3355, 32
    %v3373 = vpop.permute.xlu0 %3372
    %3374 = vrot.lane.b32.xlu0 %v3356, 32
    %v3375 = vpop.permute.xlu0 %3374
    %3376 = vrot.lane.b32.xlu0 %v3357, 32
    %v3377 = vpop.permute.xlu0 %3376
    %3378 = vrot.lane.b32.xlu0 %v3358, 32
    %v3379 = vpop.permute.xlu0 %3378
    %3380 = vrot.lane.b32.xlu0 %v3359, 32
    %v3381 = vpop.permute.xlu0 %3380
    %3382 = vrot.lane.b32.xlu0 %v3360, 32
    %v3383 = vpop.permute.xlu0 %3382
    %3384 = vrot.lane.b32.xlu0 %v3361, 32
    %v3385 = vpop.permute.xlu0 %3384
    %v3394 = vadd.f32 %v3314, %v3371
    %v3395 = vadd.f32 %v3315, %v3373
    %v3396 = vadd.f32 %v3316, %v3375
    %v3397 = vadd.f32 %v3317, %v3377
    %v3398 = vadd.f32 %v3318, %v3379
    %v3399 = vadd.f32 %v3319, %v3381
    %v3400 = vadd.f32 %v3320, %v3383
    %v3401 = vadd.f32 %v3321, %v3385
    %v3402 = vtanh.pop %v3394
    %v3403 = vtanh.pop %v3395
    %v3404 = vtanh.pop %v3396
    %v3405 = vtanh.pop %v3397
    %v3406 = vtanh.pop %v3398
    %v3407 = vtanh.pop %v3399
    %v3408 = vtanh.pop %v3400
    %v3409 = vtanh.pop %v3401
    %3418 = vrot.lane.b32.xlu0 %v3402, 32
    %v3419 = vpop.permute.xlu0 %3418
    %3420 = vrot.lane.b32.xlu0 %v3403, 32
    %v3421 = vpop.permute.xlu0 %3420
    %3422 = vrot.lane.b32.xlu0 %v3404, 32
    %v3423 = vpop.permute.xlu0 %3422
    %3424 = vrot.lane.b32.xlu0 %v3405, 32
    %v3425 = vpop.permute.xlu0 %3424
    %3426 = vrot.lane.b32.xlu0 %v3406, 32
    %v3427 = vpop.permute.xlu0 %3426
    %3428 = vrot.lane.b32.xlu0 %v3407, 32
    %v3429 = vpop.permute.xlu0 %3428
    %3430 = vrot.lane.b32.xlu0 %v3408, 32
    %v3431 = vpop.permute.xlu0 %3430
    %3432 = vrot.lane.b32.xlu0 %v3409, 32
    %v3433 = vpop.permute.xlu0 %3432
    %v3442 = vmul.f32 %v3274, %v3419
    %v3443 = vmul.f32 %v3275, %v3421
    %v3444 = vmul.f32 %v3276, %v3423
    %v3445 = vmul.f32 %v3277, %v3425
    %v3446 = vmul.f32 %v3278, %v3427
    %v3447 = vmul.f32 %v3279, %v3429
    %v3448 = vmul.f32 %v3280, %v3431
    %v3449 = vmul.f32 %v3281, %v3433
    %3458 = vrot.lane.b32.xlu0 %v3442, 64
    %v3459 = vpop.permute.xlu0 %3458
    %3460 = vrot.lane.b32.xlu0 %v3443, 64
    %v3461 = vpop.permute.xlu0 %3460
    %3462 = vrot.lane.b32.xlu0 %v3444, 64
    %v3463 = vpop.permute.xlu0 %3462
    %3464 = vrot.lane.b32.xlu0 %v3445, 64
    %v3465 = vpop.permute.xlu0 %3464
    %3466 = vrot.lane.b32.xlu0 %v3446, 64
    %v3467 = vpop.permute.xlu0 %3466
    %3468 = vrot.lane.b32.xlu0 %v3447, 64
    %v3469 = vpop.permute.xlu0 %3468
    %3470 = vrot.lane.b32.xlu0 %v3448, 64
    %v3471 = vpop.permute.xlu0 %3470
    %3472 = vrot.lane.b32.xlu0 %v3449, 64
    %v3473 = vpop.permute.xlu0 %3472
    %3482 = vst.msk [vmem:[#allocation9 + $0x8] sm:$0x1] %vm394, %v3459
    %3483 = vst.msk [vmem:[#allocation9 + $0x18] sm:$0x1] %vm394, %v3461
    %3484 = vst.msk [vmem:[#allocation9 + $0x28] sm:$0x1] %vm394, %v3463
    %3485 = vst.msk [vmem:[#allocation9 + $0x38] sm:$0x1] %vm394, %v3465
    %3486 = vst.msk [vmem:[#allocation9 + $0x48] sm:$0x1] %vm394, %v3467
    %3487 = vst.msk [vmem:[#allocation9 + $0x58] sm:$0x1] %vm394, %v3469
    %3488 = vst.msk [vmem:[#allocation9 + $0x68] sm:$0x1] %vm394, %v3471
    %3489 = vst.msk [vmem:[#allocation9 + $0x78] sm:$0x1] %vm394, %v3473
    %v3490 = vld [vmem:[#allocation4 + $0x4] sm:$0x1]
    %v3491 = vld [vmem:[#allocation4 + $0xc] sm:$0x1]
    %v3492 = vld [vmem:[#allocation4 + $0x14] sm:$0x1]
    %v3493 = vld [vmem:[#allocation4 + $0x1c] sm:$0x1]
    %v3494 = vld [vmem:[#allocation4 + $0x24] sm:$0x1]
    %v3495 = vld [vmem:[#allocation4 + $0x2c] sm:$0x1]
    %v3496 = vld [vmem:[#allocation4 + $0x34] sm:$0x1]
    %v3497 = vld [vmem:[#allocation4 + $0x3c] sm:$0x1]
    %v3498 = vunpack.c.l.bf16 %v3490
    %v3499 = vunpack.c.l.bf16 %v3491
    %v3500 = vunpack.c.l.bf16 %v3492
    %v3501 = vunpack.c.l.bf16 %v3493
    %v3502 = vunpack.c.l.bf16 %v3494
    %v3503 = vunpack.c.l.bf16 %v3495
    %v3504 = vunpack.c.l.bf16 %v3496
    %v3505 = vunpack.c.l.bf16 %v3497
    %v3506 = vpack.c.bf16 %v3442, %v3442
    %v3507 = vpack.c.bf16 %v3443, %v3443
    %v3508 = vpack.c.bf16 %v3444, %v3444
    %v3509 = vpack.c.bf16 %v3445, %v3445
    %v3510 = vpack.c.bf16 %v3446, %v3446
    %v3511 = vpack.c.bf16 %v3447, %v3447
    %v3512 = vpack.c.bf16 %v3448, %v3448
    %v3513 = vpack.c.bf16 %v3449, %v3449
    %v3514 = vld [vmem:[#allocation7] sm:$0xf]
    %v3515 = vld [vmem:[#allocation7 + $0x4] sm:$0xf]
    %v3516 = vld [vmem:[#allocation7 + $0x8] sm:$0xf]
    %v3517 = vld [vmem:[#allocation7 + $0xc] sm:$0xf]
    %v3526 = vunpack.c.l.b16 %v3506
    %v3527 = vunpack.c.l.b16 %v3507
    %v3528 = vunpack.c.l.b16 %v3508
    %v3529 = vunpack.c.l.b16 %v3509
    %v3530 = vunpack.c.l.b16 %v3510
    %v3531 = vunpack.c.l.b16 %v3511
    %v3532 = vunpack.c.l.b16 %v3512
    %v3533 = vunpack.c.l.b16 %v3513
    %v3534 = vrot.slane %v3527, 7
    %v3535 = vsel %vm448, %v3534, %v3526
    %v3536 = vrot.slane %v3528, 6
    %v3537 = vsel %vm451, %v3536, %v3535
    %v3538 = vrot.slane %v3529, 5
    %v3539 = vsel %vm454, %v3538, %v3537
    %v3540 = vrot.slane %v3530, 4
    %v3541 = vsel %vm457, %v3540, %v3539
    %v3542 = vrot.slane %v3531, 3
    %v3543 = vsel %vm460, %v3542, %v3541
    %v3544 = vrot.slane %v3532, 2
    %v3545 = vsel %vm463, %v3544, %v3543
    %v3546 = vrot.slane %v3533, 1
    %v3547 = vsel %vm466, %v3546, %v3545
    %v3548 = vpack.c.b16 %v3547, %v3547
    %3549 = vrot.lane.b32.xlu0 %v3548, 64
    %v3550 = vpop.permute.xlu0 %3549
    %v3555 = vunpack.c.l.b16 %v3514
    %v3556 = vunpack.c.l.b16 %v3515
    %v3557 = vunpack.c.l.b16 %v3516
    %v3558 = vunpack.c.l.b16 %v3517
    %v3559 = vpack.c.b16 %v3556, %v3555
    %v3560 = vpack.c.b16 %v3558, %v3557
    %v3564 = vsel %vm86, %v3550, 0
    %3566 = vmatprep.subr.bf16.mxu0 0
    %3567 = vmatpush1.bf16.msra.mxu0 %v3559
    %3568 = vmatprep.subr.bf16.mxu0 0
    %3569 = vmatpush1.bf16.msra.mxu0 %v3560
    %3570 = vmatprep.subr.bf16.mxu0 0
    %3571 = vmatpush1.bf16.msra.mxu0 0
    %3572 = vmatprep.subr.bf16.mxu0 0
    %3573 = vmatpush1.bf16.msra.mxu0 0
    %3574 = vmatprep.subr.bf16.mxu0 0
    %3575 = vmatpush1.bf16.msra.mxu0 0
    %3576 = vmatprep.subr.bf16.mxu0 0
    %3577 = vmatpush1.bf16.msra.mxu0 0
    %3578 = vmatprep.subr.bf16.mxu0 0
    %3579 = vmatpush1.bf16.msra.mxu0 0
    %3580 = vmatprep.subr.bf16.mxu0 0
    %3581 = vmatpush1.bf16.msra.mxu0 0
    %3582 = vmatprep.subr.bf16.mxu0 0
    %3583 = vmatpush1.bf16.msra.mxu0 0
    %3584 = vmatprep.subr.bf16.mxu0 0
    %3585 = vmatpush1.bf16.msra.mxu0 0
    %3586 = vmatprep.subr.bf16.mxu0 0
    %3587 = vmatpush1.bf16.msra.mxu0 0
    %3588 = vmatprep.subr.bf16.mxu0 0
    %3589 = vmatpush1.bf16.msra.mxu0 0
    %3590 = vmatprep.subr.bf16.mxu0 0
    %3591 = vmatpush1.bf16.msra.mxu0 0
    %3592 = vmatprep.subr.bf16.mxu0 0
    %3593 = vmatpush1.bf16.msra.mxu0 0
    %3594 = vmatprep.subr.bf16.mxu0 0
    %3595 = vmatpush1.bf16.msra.mxu0 0
    %3596 = vmatprep.subr.bf16.mxu0 0
    %3597 = vmatpush1.bf16.msra.mxu0 0
    %3598 = vmatprep.mubr.bf16.mxu0 0
    %3599 = vmatmul.mubr.bf16.gmra.mrb[0].mxu0 %v3564
    %v3600 = vpop.f32.mrb[0].mxu0
    %v3601 = vadd.f32 0.0, %v3600
    %v3602 = vpop.f32.mrb[0].mxu0
    %v3603 = vpop.f32.mrb[0].mxu0
    %v3604 = vpop.f32.mrb[0].mxu0
    %3605 = vdwg.mxu0
    %v3607 = vrot.slane %v3601, 7
    %v3608 = vrot.slane %v3601, 1
    %v3609 = vrot.slane %v3601, 2
    %v3610 = vrot.slane %v3601, 3
    %v3611 = vrot.slane %v3601, 4
    %v3612 = vrot.slane %v3601, 5
    %v3613 = vrot.slane %v3601, 6
    %v3622 = vadd.f32 %v3498, %v3607
    %v3623 = vadd.f32 %v3499, %v3601
    %v3624 = vadd.f32 %v3500, %v3608
    %v3625 = vadd.f32 %v3501, %v3609
    %v3626 = vadd.f32 %v3502, %v3610
    %v3627 = vadd.f32 %v3503, %v3611
    %v3628 = vadd.f32 %v3504, %v3612
    %v3629 = vadd.f32 %v3505, %v3613
    %v3630 = vmul.f32 %v3622, 0.5
    %v3631 = vmul.f32 %v3623, 0.5
    %v3632 = vmul.f32 %v3624, 0.5
    %v3633 = vmul.f32 %v3625, 0.5
    %v3634 = vmul.f32 %v3626, 0.5
    %v3635 = vmul.f32 %v3627, 0.5
    %v3636 = vmul.f32 %v3628, 0.5
    %v3637 = vmul.f32 %v3629, 0.5
    %v3638 = vtanh.pop %v3630
    %v3639 = vtanh.pop %v3631
    %v3640 = vtanh.pop %v3632
    %v3641 = vtanh.pop %v3633
    %v3642 = vtanh.pop %v3634
    %v3643 = vtanh.pop %v3635
    %v3644 = vtanh.pop %v3636
    %v3645 = vtanh.pop %v3637
    %v3646 = vmul.f32 %v3638, 0.5
    %v3647 = vmul.f32 %v3639, 0.5
    %v3648 = vmul.f32 %v3640, 0.5
    %v3649 = vmul.f32 %v3641, 0.5
    %v3650 = vmul.f32 %v3642, 0.5
    %v3651 = vmul.f32 %v3643, 0.5
    %v3652 = vmul.f32 %v3644, 0.5
    %v3653 = vmul.f32 %v3645, 0.5
    %v3654 = vadd.f32 %v3646, 0.5
    %v3655 = vadd.f32 %v3647, 0.5
    %v3656 = vadd.f32 %v3648, 0.5
    %v3657 = vadd.f32 %v3649, 0.5
    %v3658 = vadd.f32 %v3650, 0.5
    %v3659 = vadd.f32 %v3651, 0.5
    %v3660 = vadd.f32 %v3652, 0.5
    %v3661 = vadd.f32 %v3653, 0.5
    %v3662 = vtanh.pop %v3622
    %v3663 = vtanh.pop %v3623
    %v3664 = vtanh.pop %v3624
    %v3665 = vtanh.pop %v3625
    %v3666 = vtanh.pop %v3626
    %v3667 = vtanh.pop %v3627
    %v3668 = vtanh.pop %v3628
    %v3669 = vtanh.pop %v3629
    %v3678 = vrot.slane %v3394, 7
    %v3679 = vrot.slane %v3395, 7
    %v3680 = vrot.slane %v3396, 7
    %v3681 = vrot.slane %v3397, 7
    %v3682 = vrot.slane %v3398, 7
    %v3683 = vrot.slane %v3399, 7
    %v3684 = vrot.slane %v3400, 7
    %v3685 = vrot.slane %v3401, 7
    %v3694 = vmul.f32 %v3654, %v3678
    %v3695 = vmul.f32 %v3655, %v3679
    %v3696 = vmul.f32 %v3656, %v3680
    %v3697 = vmul.f32 %v3657, %v3681
    %v3698 = vmul.f32 %v3658, %v3682
    %v3699 = vmul.f32 %v3659, %v3683
    %v3700 = vmul.f32 %v3660, %v3684
    %v3701 = vmul.f32 %v3661, %v3685
    %3710 = vrot.lane.b32.xlu0 %v3662, 32
    %v3711 = vpop.permute.xlu0 %3710
    %3712 = vrot.lane.b32.xlu0 %v3663, 32
    %v3713 = vpop.permute.xlu0 %3712
    %3714 = vrot.lane.b32.xlu0 %v3664, 32
    %v3715 = vpop.permute.xlu0 %3714
    %3716 = vrot.lane.b32.xlu0 %v3665, 32
    %v3717 = vpop.permute.xlu0 %3716
    %3718 = vrot.lane.b32.xlu0 %v3666, 32
    %v3719 = vpop.permute.xlu0 %3718
    %3720 = vrot.lane.b32.xlu0 %v3667, 32
    %v3721 = vpop.permute.xlu0 %3720
    %3722 = vrot.lane.b32.xlu0 %v3668, 32
    %v3723 = vpop.permute.xlu0 %3722
    %3724 = vrot.lane.b32.xlu0 %v3669, 32
    %v3725 = vpop.permute.xlu0 %3724
    %v3734 = vmul.f32 %v3654, %v3711
    %v3735 = vmul.f32 %v3655, %v3713
    %v3736 = vmul.f32 %v3656, %v3715
    %v3737 = vmul.f32 %v3657, %v3717
    %v3738 = vmul.f32 %v3658, %v3719
    %v3739 = vmul.f32 %v3659, %v3721
    %v3740 = vmul.f32 %v3660, %v3723
    %v3741 = vmul.f32 %v3661, %v3725
    %3750 = vrot.lane.b32.xlu0 %v3734, 32
    %v3751 = vpop.permute.xlu0 %3750
    %3752 = vrot.lane.b32.xlu0 %v3735, 32
    %v3753 = vpop.permute.xlu0 %3752
    %3754 = vrot.lane.b32.xlu0 %v3736, 32
    %v3755 = vpop.permute.xlu0 %3754
    %3756 = vrot.lane.b32.xlu0 %v3737, 32
    %v3757 = vpop.permute.xlu0 %3756
    %3758 = vrot.lane.b32.xlu0 %v3738, 32
    %v3759 = vpop.permute.xlu0 %3758
    %3760 = vrot.lane.b32.xlu0 %v3739, 32
    %v3761 = vpop.permute.xlu0 %3760
    %3762 = vrot.lane.b32.xlu0 %v3740, 32
    %v3763 = vpop.permute.xlu0 %3762
    %3764 = vrot.lane.b32.xlu0 %v3741, 32
    %v3765 = vpop.permute.xlu0 %3764
    %v3774 = vadd.f32 %v3694, %v3751
    %v3775 = vadd.f32 %v3695, %v3753
    %v3776 = vadd.f32 %v3696, %v3755
    %v3777 = vadd.f32 %v3697, %v3757
    %v3778 = vadd.f32 %v3698, %v3759
    %v3779 = vadd.f32 %v3699, %v3761
    %v3780 = vadd.f32 %v3700, %v3763
    %v3781 = vadd.f32 %v3701, %v3765
    %v3782 = vtanh.pop %v3774
    %v3783 = vtanh.pop %v3775
    %v3784 = vtanh.pop %v3776
    %v3785 = vtanh.pop %v3777
    %v3786 = vtanh.pop %v3778
    %v3787 = vtanh.pop %v3779
    %v3788 = vtanh.pop %v3780
    %v3789 = vtanh.pop %v3781
    %3798 = vrot.lane.b32.xlu0 %v3782, 32
    %v3799 = vpop.permute.xlu0 %3798
    %3800 = vrot.lane.b32.xlu0 %v3783, 32
    %v3801 = vpop.permute.xlu0 %3800
    %3802 = vrot.lane.b32.xlu0 %v3784, 32
    %v3803 = vpop.permute.xlu0 %3802
    %3804 = vrot.lane.b32.xlu0 %v3785, 32
    %v3805 = vpop.permute.xlu0 %3804
    %3806 = vrot.lane.b32.xlu0 %v3786, 32
    %v3807 = vpop.permute.xlu0 %3806
    %3808 = vrot.lane.b32.xlu0 %v3787, 32
    %v3809 = vpop.permute.xlu0 %3808
    %3810 = vrot.lane.b32.xlu0 %v3788, 32
    %v3811 = vpop.permute.xlu0 %3810
    %3812 = vrot.lane.b32.xlu0 %v3789, 32
    %v3813 = vpop.permute.xlu0 %3812
    %v3822 = vmul.f32 %v3654, %v3799
    %v3823 = vmul.f32 %v3655, %v3801
    %v3824 = vmul.f32 %v3656, %v3803
    %v3825 = vmul.f32 %v3657, %v3805
    %v3826 = vmul.f32 %v3658, %v3807
    %v3827 = vmul.f32 %v3659, %v3809
    %v3828 = vmul.f32 %v3660, %v3811
    %v3829 = vmul.f32 %v3661, %v3813
    %3838 = vrot.lane.b32.xlu0 %v3822, 64
    %v3839 = vpop.permute.xlu0 %3838
    %3840 = vrot.lane.b32.xlu0 %v3823, 64
    %v3841 = vpop.permute.xlu0 %3840
    %3842 = vrot.lane.b32.xlu0 %v3824, 64
    %v3843 = vpop.permute.xlu0 %3842
    %3844 = vrot.lane.b32.xlu0 %v3825, 64
    %v3845 = vpop.permute.xlu0 %3844
    %3846 = vrot.lane.b32.xlu0 %v3826, 64
    %v3847 = vpop.permute.xlu0 %3846
    %3848 = vrot.lane.b32.xlu0 %v3827, 64
    %v3849 = vpop.permute.xlu0 %3848
    %3850 = vrot.lane.b32.xlu0 %v3828, 64
    %v3851 = vpop.permute.xlu0 %3850
    %3852 = vrot.lane.b32.xlu0 %v3829, 64
    %v3853 = vpop.permute.xlu0 %3852
    %3862 = vst.msk [vmem:[#allocation9 + $0x8] sm:$0x2] %vm782, %v3839
    %3863 = vst.msk [vmem:[#allocation9 + $0x18] sm:$0x2] %vm782, %v3841
    %3864 = vst.msk [vmem:[#allocation9 + $0x28] sm:$0x2] %vm782, %v3843
    %3865 = vst.msk [vmem:[#allocation9 + $0x38] sm:$0x2] %vm782, %v3845
    %3866 = vst.msk [vmem:[#allocation9 + $0x48] sm:$0x2] %vm782, %v3847
    %3867 = vst.msk [vmem:[#allocation9 + $0x58] sm:$0x2] %vm782, %v3849
    %3868 = vst.msk [vmem:[#allocation9 + $0x68] sm:$0x2] %vm782, %v3851
    %3869 = vst.msk [vmem:[#allocation9 + $0x78] sm:$0x2] %vm782, %v3853
    %v3870 = vld [vmem:[#allocation4 + $0x4] sm:$0x2]
    %v3871 = vld [vmem:[#allocation4 + $0xc] sm:$0x2]
    %v3872 = vld [vmem:[#allocation4 + $0x14] sm:$0x2]
    %v3873 = vld [vmem:[#allocation4 + $0x1c] sm:$0x2]
    %v3874 = vld [vmem:[#allocation4 + $0x24] sm:$0x2]
    %v3875 = vld [vmem:[#allocation4 + $0x2c] sm:$0x2]
    %v3876 = vld [vmem:[#allocation4 + $0x34] sm:$0x2]
    %v3877 = vld [vmem:[#allocation4 + $0x3c] sm:$0x2]
    %v3878 = vunpack.c.l.bf16 %v3870
    %v3879 = vunpack.c.l.bf16 %v3871
    %v3880 = vunpack.c.l.bf16 %v3872
    %v3881 = vunpack.c.l.bf16 %v3873
    %v3882 = vunpack.c.l.bf16 %v3874
    %v3883 = vunpack.c.l.bf16 %v3875
    %v3884 = vunpack.c.l.bf16 %v3876
    %v3885 = vunpack.c.l.bf16 %v3877
    %v3886 = vpack.c.bf16 %v3822, %v3822
    %v3887 = vpack.c.bf16 %v3823, %v3823
    %v3888 = vpack.c.bf16 %v3824, %v3824
    %v3889 = vpack.c.bf16 %v3825, %v3825
    %v3890 = vpack.c.bf16 %v3826, %v3826
    %v3891 = vpack.c.bf16 %v3827, %v3827
    %v3892 = vpack.c.bf16 %v3828, %v3828
    %v3893 = vpack.c.bf16 %v3829, %v3829
    %v3894 = vld [vmem:[#allocation7] sm:$0xf]
    %v3895 = vld [vmem:[#allocation7 + $0x4] sm:$0xf]
    %v3896 = vld [vmem:[#allocation7 + $0x8] sm:$0xf]
    %v3897 = vld [vmem:[#allocation7 + $0xc] sm:$0xf]
    %v3906 = vunpack.c.l.b16 %v3886
    %v3907 = vunpack.c.l.b16 %v3887
    %v3908 = vunpack.c.l.b16 %v3888
    %v3909 = vunpack.c.l.b16 %v3889
    %v3910 = vunpack.c.l.b16 %v3890
    %v3911 = vunpack.c.l.b16 %v3891
    %v3912 = vunpack.c.l.b16 %v3892
    %v3913 = vunpack.c.l.b16 %v3893
    %v3914 = vrot.slane %v3906, 1
    %v3915 = vsel %vm448, %v3907, %v3914
    %v3916 = vrot.slane %v3908, 7
    %v3917 = vsel %vm451, %v3916, %v3915
    %v3918 = vrot.slane %v3909, 6
    %v3919 = vsel %vm454, %v3918, %v3917
    %v3920 = vrot.slane %v3910, 5
    %v3921 = vsel %vm457, %v3920, %v3919
    %v3922 = vrot.slane %v3911, 4
    %v3923 = vsel %vm460, %v3922, %v3921
    %v3924 = vrot.slane %v3912, 3
    %v3925 = vsel %vm463, %v3924, %v3923
    %v3926 = vrot.slane %v3913, 2
    %v3927 = vsel %vm466, %v3926, %v3925
    %v3928 = vpack.c.b16 %v3927, %v3927
    %3929 = vrot.lane.b32.xlu0 %v3928, 64
    %v3930 = vpop.permute.xlu0 %3929
    %v3935 = vunpack.c.l.b16 %v3894
    %v3936 = vunpack.c.l.b16 %v3895
    %v3937 = vunpack.c.l.b16 %v3896
    %v3938 = vunpack.c.l.b16 %v3897
    %v3939 = vpack.c.b16 %v3936, %v3935
    %v3940 = vpack.c.b16 %v3938, %v3937
    %v3944 = vsel %vm86, %v3930, 0
    %3946 = vmatprep.subr.bf16.mxu0 0
    %3947 = vmatpush1.bf16.msra.mxu0 %v3939
    %3948 = vmatprep.subr.bf16.mxu0 0
    %3949 = vmatpush1.bf16.msra.mxu0 %v3940
    %3950 = vmatprep.subr.bf16.mxu0 0
    %3951 = vmatpush1.bf16.msra.mxu0 0
    %3952 = vmatprep.subr.bf16.mxu0 0
    %3953 = vmatpush1.bf16.msra.mxu0 0
    %3954 = vmatprep.subr.bf16.mxu0 0
    %3955 = vmatpush1.bf16.msra.mxu0 0
    %3956 = vmatprep.subr.bf16.mxu0 0
    %3957 = vmatpush1.bf16.msra.mxu0 0
    %3958 = vmatprep.subr.bf16.mxu0 0
    %3959 = vmatpush1.bf16.msra.mxu0 0
    %3960 = vmatprep.subr.bf16.mxu0 0
    %3961 = vmatpush1.bf16.msra.mxu0 0
    %3962 = vmatprep.subr.bf16.mxu0 0
    %3963 = vmatpush1.bf16.msra.mxu0 0
    %3964 = vmatprep.subr.bf16.mxu0 0
    %3965 = vmatpush1.bf16.msra.mxu0 0
    %3966 = vmatprep.subr.bf16.mxu0 0
    %3967 = vmatpush1.bf16.msra.mxu0 0
    %3968 = vmatprep.subr.bf16.mxu0 0
    %3969 = vmatpush1.bf16.msra.mxu0 0
    %3970 = vmatprep.subr.bf16.mxu0 0
    %3971 = vmatpush1.bf16.msra.mxu0 0
    %3972 = vmatprep.subr.bf16.mxu0 0
    %3973 = vmatpush1.bf16.msra.mxu0 0
    %3974 = vmatprep.subr.bf16.mxu0 0
    %3975 = vmatpush1.bf16.msra.mxu0 0
    %3976 = vmatprep.subr.bf16.mxu0 0
    %3977 = vmatpush1.bf16.msra.mxu0 0
    %3978 = vmatprep.mubr.bf16.mxu0 0
    %3979 = vmatmul.mubr.bf16.gmra.mrb[0].mxu0 %v3944
    %v3980 = vpop.f32.mrb[0].mxu0
    %v3981 = vadd.f32 0.0, %v3980
    %v3982 = vpop.f32.mrb[0].mxu0
    %v3983 = vpop.f32.mrb[0].mxu0
    %v3984 = vpop.f32.mrb[0].mxu0
    %3985 = vdwg.mxu0
    %v3987 = vrot.slane %v3981, 6
    %v3988 = vrot.slane %v3981, 7
    %v3989 = vrot.slane %v3981, 1
    %v3990 = vrot.slane %v3981, 2
    %v3991 = vrot.slane %v3981, 3
    %v3992 = vrot.slane %v3981, 4
    %v3993 = vrot.slane %v3981, 5
    %v4002 = vadd.f32 %v3878, %v3987
    %v4003 = vadd.f32 %v3879, %v3988
    %v4004 = vadd.f32 %v3880, %v3981
    %v4005 = vadd.f32 %v3881, %v3989
    %v4006 = vadd.f32 %v3882, %v3990
    %v4007 = vadd.f32 %v3883, %v3991
    %v4008 = vadd.f32 %v3884, %v3992
    %v4009 = vadd.f32 %v3885, %v3993
    %v4010 = vmul.f32 %v4002, 0.5
    %v4011 = vmul.f32 %v4003, 0.5
    %v4012 = vmul.f32 %v4004, 0.5
    %v4013 = vmul.f32 %v4005, 0.5
    %v4014 = vmul.f32 %v4006, 0.5
    %v4015 = vmul.f32 %v4007, 0.5
    %v4016 = vmul.f32 %v4008, 0.5
    %v4017 = vmul.f32 %v4009, 0.5
    %v4018 = vtanh.pop %v4010
    %v4019 = vtanh.pop %v4011
    %v4020 = vtanh.pop %v4012
    %v4021 = vtanh.pop %v4013
    %v4022 = vtanh.pop %v4014
    %v4023 = vtanh.pop %v4015
    %v4024 = vtanh.pop %v4016
    %v4025 = vtanh.pop %v4017
    %v4026 = vmul.f32 %v4018, 0.5
    %v4027 = vmul.f32 %v4019, 0.5
    %v4028 = vmul.f32 %v4020, 0.5
    %v4029 = vmul.f32 %v4021, 0.5
    %v4030 = vmul.f32 %v4022, 0.5
    %v4031 = vmul.f32 %v4023, 0.5
    %v4032 = vmul.f32 %v4024, 0.5
    %v4033 = vmul.f32 %v4025, 0.5
    %v4034 = vadd.f32 %v4026, 0.5
    %v4035 = vadd.f32 %v4027, 0.5
    %v4036 = vadd.f32 %v4028, 0.5
    %v4037 = vadd.f32 %v4029, 0.5
    %v4038 = vadd.f32 %v4030, 0.5
    %v4039 = vadd.f32 %v4031, 0.5
    %v4040 = vadd.f32 %v4032, 0.5
    %v4041 = vadd.f32 %v4033, 0.5
    %v4042 = vtanh.pop %v4002
    %v4043 = vtanh.pop %v4003
    %v4044 = vtanh.pop %v4004
    %v4045 = vtanh.pop %v4005
    %v4046 = vtanh.pop %v4006
    %v4047 = vtanh.pop %v4007
    %v4048 = vtanh.pop %v4008
    %v4049 = vtanh.pop %v4009
    %v4058 = vrot.slane %v3774, 7
    %v4059 = vrot.slane %v3775, 7
    %v4060 = vrot.slane %v3776, 7
    %v4061 = vrot.slane %v3777, 7
    %v4062 = vrot.slane %v3778, 7
    %v4063 = vrot.slane %v3779, 7
    %v4064 = vrot.slane %v3780, 7
    %v4065 = vrot.slane %v3781, 7
    %v4074 = vmul.f32 %v4034, %v4058
    %v4075 = vmul.f32 %v4035, %v4059
    %v4076 = vmul.f32 %v4036, %v4060
    %v4077 = vmul.f32 %v4037, %v4061
    %v4078 = vmul.f32 %v4038, %v4062
    %v4079 = vmul.f32 %v4039, %v4063
    %v4080 = vmul.f32 %v4040, %v4064
    %v4081 = vmul.f32 %v4041, %v4065
    %4090 = vrot.lane.b32.xlu0 %v4042, 32
    %v4091 = vpop.permute.xlu0 %4090
    %4092 = vrot.lane.b32.xlu0 %v4043, 32
    %v4093 = vpop.permute.xlu0 %4092
    %4094 = vrot.lane.b32.xlu0 %v4044, 32
    %v4095 = vpop.permute.xlu0 %4094
    %4096 = vrot.lane.b32.xlu0 %v4045, 32
    %v4097 = vpop.permute.xlu0 %4096
    %4098 = vrot.lane.b32.xlu0 %v4046, 32
    %v4099 = vpop.permute.xlu0 %4098
    %4100 = vrot.lane.b32.xlu0 %v4047, 32
    %v4101 = vpop.permute.xlu0 %4100
    %4102 = vrot.lane.b32.xlu0 %v4048, 32
    %v4103 = vpop.permute.xlu0 %4102
    %4104 = vrot.lane.b32.xlu0 %v4049, 32
    %v4105 = vpop.permute.xlu0 %4104
    %v4114 = vmul.f32 %v4034, %v4091
    %v4115 = vmul.f32 %v4035, %v4093
    %v4116 = vmul.f32 %v4036, %v4095
    %v4117 = vmul.f32 %v4037, %v4097
    %v4118 = vmul.f32 %v4038, %v4099
    %v4119 = vmul.f32 %v4039, %v4101
    %v4120 = vmul.f32 %v4040, %v4103
    %v4121 = vmul.f32 %v4041, %v4105
    %4130 = vrot.lane.b32.xlu0 %v4114, 32
    %v4131 = vpop.permute.xlu0 %4130
    %4132 = vrot.lane.b32.xlu0 %v4115, 32
    %v4133 = vpop.permute.xlu0 %4132
    %4134 = vrot.lane.b32.xlu0 %v4116, 32
    %v4135 = vpop.permute.xlu0 %4134
    %4136 = vrot.lane.b32.xlu0 %v4117, 32
    %v4137 = vpop.permute.xlu0 %4136
    %4138 = vrot.lane.b32.xlu0 %v4118, 32
    %v4139 = vpop.permute.xlu0 %4138
    %4140 = vrot.lane.b32.xlu0 %v4119, 32
    %v4141 = vpop.permute.xlu0 %4140
    %4142 = vrot.lane.b32.xlu0 %v4120, 32
    %v4143 = vpop.permute.xlu0 %4142
    %4144 = vrot.lane.b32.xlu0 %v4121, 32
    %v4145 = vpop.permute.xlu0 %4144
    %v4154 = vadd.f32 %v4074, %v4131
    %v4155 = vadd.f32 %v4075, %v4133
    %v4156 = vadd.f32 %v4076, %v4135
    %v4157 = vadd.f32 %v4077, %v4137
    %v4158 = vadd.f32 %v4078, %v4139
    %v4159 = vadd.f32 %v4079, %v4141
    %v4160 = vadd.f32 %v4080, %v4143
    %v4161 = vadd.f32 %v4081, %v4145
    %v4162 = vtanh.pop %v4154
    %v4163 = vtanh.pop %v4155
    %v4164 = vtanh.pop %v4156
    %v4165 = vtanh.pop %v4157
    %v4166 = vtanh.pop %v4158
    %v4167 = vtanh.pop %v4159
    %v4168 = vtanh.pop %v4160
    %v4169 = vtanh.pop %v4161
    %4178 = vrot.lane.b32.xlu0 %v4162, 32
    %v4179 = vpop.permute.xlu0 %4178
    %4180 = vrot.lane.b32.xlu0 %v4163, 32
    %v4181 = vpop.permute.xlu0 %4180
    %4182 = vrot.lane.b32.xlu0 %v4164, 32
    %v4183 = vpop.permute.xlu0 %4182
    %4184 = vrot.lane.b32.xlu0 %v4165, 32
    %v4185 = vpop.permute.xlu0 %4184
    %4186 = vrot.lane.b32.xlu0 %v4166, 32
    %v4187 = vpop.permute.xlu0 %4186
    %4188 = vrot.lane.b32.xlu0 %v4167, 32
    %v4189 = vpop.permute.xlu0 %4188
    %4190 = vrot.lane.b32.xlu0 %v4168, 32
    %v4191 = vpop.permute.xlu0 %4190
    %4192 = vrot.lane.b32.xlu0 %v4169, 32
    %v4193 = vpop.permute.xlu0 %4192
    %v4202 = vmul.f32 %v4034, %v4179
    %v4203 = vmul.f32 %v4035, %v4181
    %v4204 = vmul.f32 %v4036, %v4183
    %v4205 = vmul.f32 %v4037, %v4185
    %v4206 = vmul.f32 %v4038, %v4187
    %v4207 = vmul.f32 %v4039, %v4189
    %v4208 = vmul.f32 %v4040, %v4191
    %v4209 = vmul.f32 %v4041, %v4193
    %4218 = vrot.lane.b32.xlu0 %v4202, 64
    %v4219 = vpop.permute.xlu0 %4218
    %4220 = vrot.lane.b32.xlu0 %v4203, 64
    %v4221 = vpop.permute.xlu0 %4220
    %4222 = vrot.lane.b32.xlu0 %v4204, 64
    %v4223 = vpop.permute.xlu0 %4222
    %4224 = vrot.lane.b32.xlu0 %v4205, 64
    %v4225 = vpop.permute.xlu0 %4224
    %4226 = vrot.lane.b32.xlu0 %v4206, 64
    %v4227 = vpop.permute.xlu0 %4226
    %4228 = vrot.lane.b32.xlu0 %v4207, 64
    %v4229 = vpop.permute.xlu0 %4228
    %4230 = vrot.lane.b32.xlu0 %v4208, 64
    %v4231 = vpop.permute.xlu0 %4230
    %4232 = vrot.lane.b32.xlu0 %v4209, 64
    %v4233 = vpop.permute.xlu0 %4232
    %4242 = vst.msk [vmem:[#allocation9 + $0x8] sm:$0x4] %vm1163, %v4219
    %4243 = vst.msk [vmem:[#allocation9 + $0x18] sm:$0x4] %vm1163, %v4221
    %4244 = vst.msk [vmem:[#allocation9 + $0x28] sm:$0x4] %vm1163, %v4223
    %4245 = vst.msk [vmem:[#allocation9 + $0x38] sm:$0x4] %vm1163, %v4225
    %4246 = vst.msk [vmem:[#allocation9 + $0x48] sm:$0x4] %vm1163, %v4227
    %4247 = vst.msk [vmem:[#allocation9 + $0x58] sm:$0x4] %vm1163, %v4229
    %4248 = vst.msk [vmem:[#allocation9 + $0x68] sm:$0x4] %vm1163, %v4231
    %4249 = vst.msk [vmem:[#allocation9 + $0x78] sm:$0x4] %vm1163, %v4233
    %v4250 = vld [vmem:[#allocation4 + $0x4] sm:$0x2]
    %v4251 = vld [vmem:[#allocation4 + $0xc] sm:$0x2]
    %v4252 = vld [vmem:[#allocation4 + $0x14] sm:$0x2]
    %v4253 = vld [vmem:[#allocation4 + $0x1c] sm:$0x2]
    %v4254 = vld [vmem:[#allocation4 + $0x24] sm:$0x2]
    %v4255 = vld [vmem:[#allocation4 + $0x2c] sm:$0x2]
    %v4256 = vld [vmem:[#allocation4 + $0x34] sm:$0x2]
    %v4257 = vld [vmem:[#allocation4 + $0x3c] sm:$0x2]
    %v4258 = vunpack.c.l.bf16 %v4250
    %v4259 = vunpack.c.l.bf16 %v4251
    %v4260 = vunpack.c.l.bf16 %v4252
    %v4261 = vunpack.c.l.bf16 %v4253
    %v4262 = vunpack.c.l.bf16 %v4254
    %v4263 = vunpack.c.l.bf16 %v4255
    %v4264 = vunpack.c.l.bf16 %v4256
    %v4265 = vunpack.c.l.bf16 %v4257
    %v4266 = vpack.c.bf16 %v4202, %v4202
    %v4267 = vpack.c.bf16 %v4203, %v4203
    %v4268 = vpack.c.bf16 %v4204, %v4204
    %v4269 = vpack.c.bf16 %v4205, %v4205
    %v4270 = vpack.c.bf16 %v4206, %v4206
    %v4271 = vpack.c.bf16 %v4207, %v4207
    %v4272 = vpack.c.bf16 %v4208, %v4208
    %v4273 = vpack.c.bf16 %v4209, %v4209
    %v4274 = vld [vmem:[#allocation7] sm:$0xf]
    %v4275 = vld [vmem:[#allocation7 + $0x4] sm:$0xf]
    %v4276 = vld [vmem:[#allocation7 + $0x8] sm:$0xf]
    %v4277 = vld [vmem:[#allocation7 + $0xc] sm:$0xf]
    %v4286 = vunpack.c.l.b16 %v4266
    %v4287 = vunpack.c.l.b16 %v4267
    %v4288 = vunpack.c.l.b16 %v4268
    %v4289 = vunpack.c.l.b16 %v4269
    %v4290 = vunpack.c.l.b16 %v4270
    %v4291 = vunpack.c.l.b16 %v4271
    %v4292 = vunpack.c.l.b16 %v4272
    %v4293 = vunpack.c.l.b16 %v4273
    %v4294 = vrot.slane %v4286, 2
    %v4295 = vrot.slane %v4287, 1
    %v4296 = vsel %vm448, %v4295, %v4294
    %v4297 = vsel %vm451, %v4288, %v4296
    %v4298 = vrot.slane %v4289, 7
    %v4299 = vsel %vm454, %v4298, %v4297
    %v4300 = vrot.slane %v4290, 6
    %v4301 = vsel %vm457, %v4300, %v4299
    %v4302 = vrot.slane %v4291, 5
    %v4303 = vsel %vm460, %v4302, %v4301
    %v4304 = vrot.slane %v4292, 4
    %v4305 = vsel %vm463, %v4304, %v4303
    %v4306 = vrot.slane %v4293, 3
    %v4307 = vsel %vm466, %v4306, %v4305
    %v4308 = vpack.c.b16 %v4307, %v4307
    %4309 = vrot.lane.b32.xlu0 %v4308, 64
    %v4310 = vpop.permute.xlu0 %4309
    %v4315 = vunpack.c.l.b16 %v4274
    %v4316 = vunpack.c.l.b16 %v4275
    %v4317 = vunpack.c.l.b16 %v4276
    %v4318 = vunpack.c.l.b16 %v4277
    %v4319 = vpack.c.b16 %v4316, %v4315
    %v4320 = vpack.c.b16 %v4318, %v4317
    %v4324 = vsel %vm86, %v4310, 0
    %4326 = vmatprep.subr.bf16.mxu0 0
    %4327 = vmatpush1.bf16.msra.mxu0 %v4319
    %4328 = vmatprep.subr.bf16.mxu0 0
    %4329 = vmatpush1.bf16.msra.mxu0 %v4320
    %4330 = vmatprep.subr.bf16.mxu0 0
    %4331 = vmatpush1.bf16.msra.mxu0 0
    %4332 = vmatprep.subr.bf16.mxu0 0
    %4333 = vmatpush1.bf16.msra.mxu0 0
    %4334 = vmatprep.subr.bf16.mxu0 0
    %4335 = vmatpush1.bf16.msra.mxu0 0
    %4336 = vmatprep.subr.bf16.mxu0 0
    %4337 = vmatpush1.bf16.msra.mxu0 0
    %4338 = vmatprep.subr.bf16.mxu0 0
    %4339 = vmatpush1.bf16.msra.mxu0 0
    %4340 = vmatprep.subr.bf16.mxu0 0
    %4341 = vmatpush1.bf16.msra.mxu0 0
    %4342 = vmatprep.subr.bf16.mxu0 0
    %4343 = vmatpush1.bf16.msra.mxu0 0
    %4344 = vmatprep.subr.bf16.mxu0 0
    %4345 = vmatpush1.bf16.msra.mxu0 0
    %4346 = vmatprep.subr.bf16.mxu0 0
    %4347 = vmatpush1.bf16.msra.mxu0 0
    %4348 = vmatprep.subr.bf16.mxu0 0
    %4349 = vmatpush1.bf16.msra.mxu0 0
    %4350 = vmatprep.subr.bf16.mxu0 0
    %4351 = vmatpush1.bf16.msra.mxu0 0
    %4352 = vmatprep.subr.bf16.mxu0 0
    %4353 = vmatpush1.bf16.msra.mxu0 0
    %4354 = vmatprep.subr.bf16.mxu0 0
    %4355 = vmatpush1.bf16.msra.mxu0 0
    %4356 = vmatprep.subr.bf16.mxu0 0
    %4357 = vmatpush1.bf16.msra.mxu0 0
    %4358 = vmatprep.mubr.bf16.mxu0 0
    %4359 = vmatmul.mubr.bf16.gmra.mrb[0].mxu0 %v4324
    %v4360 = vpop.f32.mrb[0].mxu0
    %v4361 = vadd.f32 0.0, %v4360
    %v4362 = vpop.f32.mrb[0].mxu0
    %v4363 = vpop.f32.mrb[0].mxu0
    %v4364 = vpop.f32.mrb[0].mxu0
    %4365 = vdwg.mxu0
    %v4367 = vrot.slane %v4361, 5
    %v4368 = vrot.slane %v4361, 6
    %v4369 = vrot.slane %v4361, 7
    %v4370 = vrot.slane %v4361, 1
    %v4371 = vrot.slane %v4361, 2
    %v4372 = vrot.slane %v4361, 3
    %v4373 = vrot.slane %v4361, 4
    %v4382 = vadd.f32 %v4258, %v4367
    %v4383 = vadd.f32 %v4259, %v4368
    %v4384 = vadd.f32 %v4260, %v4369
    %v4385 = vadd.f32 %v4261, %v4361
    %v4386 = vadd.f32 %v4262, %v4370
    %v4387 = vadd.f32 %v4263, %v4371
    %v4388 = vadd.f32 %v4264, %v4372
    %v4389 = vadd.f32 %v4265, %v4373
    %v4390 = vmul.f32 %v4382, 0.5
    %v4391 = vmul.f32 %v4383, 0.5
    %v4392 = vmul.f32 %v4384, 0.5
    %v4393 = vmul.f32 %v4385, 0.5
    %v4394 = vmul.f32 %v4386, 0.5
    %v4395 = vmul.f32 %v4387, 0.5
    %v4396 = vmul.f32 %v4388, 0.5
    %v4397 = vmul.f32 %v4389, 0.5
    %v4398 = vtanh.pop %v4390
    %v4399 = vtanh.pop %v4391
    %v4400 = vtanh.pop %v4392
    %v4401 = vtanh.pop %v4393
    %v4402 = vtanh.pop %v4394
    %v4403 = vtanh.pop %v4395
    %v4404 = vtanh.pop %v4396
    %v4405 = vtanh.pop %v4397
    %v4406 = vmul.f32 %v4398, 0.5
    %v4407 = vmul.f32 %v4399, 0.5
    %v4408 = vmul.f32 %v4400, 0.5
    %v4409 = vmul.f32 %v4401, 0.5
    %v4410 = vmul.f32 %v4402, 0.5
    %v4411 = vmul.f32 %v4403, 0.5
    %v4412 = vmul.f32 %v4404, 0.5
    %v4413 = vmul.f32 %v4405, 0.5
    %v4414 = vadd.f32 %v4406, 0.5
    %v4415 = vadd.f32 %v4407, 0.5
    %v4416 = vadd.f32 %v4408, 0.5
    %v4417 = vadd.f32 %v4409, 0.5
    %v4418 = vadd.f32 %v4410, 0.5
    %v4419 = vadd.f32 %v4411, 0.5
    %v4420 = vadd.f32 %v4412, 0.5
    %v4421 = vadd.f32 %v4413, 0.5
    %v4422 = vtanh.pop %v4382
    %v4423 = vtanh.pop %v4383
    %v4424 = vtanh.pop %v4384
    %v4425 = vtanh.pop %v4385
    %v4426 = vtanh.pop %v4386
    %v4427 = vtanh.pop %v4387
    %v4428 = vtanh.pop %v4388
    %v4429 = vtanh.pop %v4389
    %v4438 = vrot.slane %v4154, 7
    %v4439 = vrot.slane %v4155, 7
    %v4440 = vrot.slane %v4156, 7
    %v4441 = vrot.slane %v4157, 7
    %v4442 = vrot.slane %v4158, 7
    %v4443 = vrot.slane %v4159, 7
    %v4444 = vrot.slane %v4160, 7
    %v4445 = vrot.slane %v4161, 7
    %v4454 = vmul.f32 %v4414, %v4438
    %v4455 = vmul.f32 %v4415, %v4439
    %v4456 = vmul.f32 %v4416, %v4440
    %v4457 = vmul.f32 %v4417, %v4441
    %v4458 = vmul.f32 %v4418, %v4442
    %v4459 = vmul.f32 %v4419, %v4443
    %v4460 = vmul.f32 %v4420, %v4444
    %v4461 = vmul.f32 %v4421, %v4445
    %4470 = vrot.lane.b32.xlu0 %v4422, 32
    %v4471 = vpop.permute.xlu0 %4470
    %4472 = vrot.lane.b32.xlu0 %v4423, 32
    %v4473 = vpop.permute.xlu0 %4472
    %4474 = vrot.lane.b32.xlu0 %v4424, 32
    %v4475 = vpop.permute.xlu0 %4474
    %4476 = vrot.lane.b32.xlu0 %v4425, 32
    %v4477 = vpop.permute.xlu0 %4476
    %4478 = vrot.lane.b32.xlu0 %v4426, 32
    %v4479 = vpop.permute.xlu0 %4478
    %4480 = vrot.lane.b32.xlu0 %v4427, 32
    %v4481 = vpop.permute.xlu0 %4480
    %4482 = vrot.lane.b32.xlu0 %v4428, 32
    %v4483 = vpop.permute.xlu0 %4482
    %4484 = vrot.lane.b32.xlu0 %v4429, 32
    %v4485 = vpop.permute.xlu0 %4484
    %v4494 = vmul.f32 %v4414, %v4471
    %v4495 = vmul.f32 %v4415, %v4473
    %v4496 = vmul.f32 %v4416, %v4475
    %v4497 = vmul.f32 %v4417, %v4477
    %v4498 = vmul.f32 %v4418, %v4479
    %v4499 = vmul.f32 %v4419, %v4481
    %v4500 = vmul.f32 %v4420, %v4483
    %v4501 = vmul.f32 %v4421, %v4485
    %4510 = vrot.lane.b32.xlu0 %v4494, 32
    %v4511 = vpop.permute.xlu0 %4510
    %4512 = vrot.lane.b32.xlu0 %v4495, 32
    %v4513 = vpop.permute.xlu0 %4512
    %4514 = vrot.lane.b32.xlu0 %v4496, 32
    %v4515 = vpop.permute.xlu0 %4514
    %4516 = vrot.lane.b32.xlu0 %v4497, 32
    %v4517 = vpop.permute.xlu0 %4516
    %4518 = vrot.lane.b32.xlu0 %v4498, 32
    %v4519 = vpop.permute.xlu0 %4518
    %4520 = vrot.lane.b32.xlu0 %v4499, 32
    %v4521 = vpop.permute.xlu0 %4520
    %4522 = vrot.lane.b32.xlu0 %v4500, 32
    %v4523 = vpop.permute.xlu0 %4522
    %4524 = vrot.lane.b32.xlu0 %v4501, 32
    %v4525 = vpop.permute.xlu0 %4524
    %v4534 = vadd.f32 %v4454, %v4511
    %v4535 = vadd.f32 %v4455, %v4513
    %v4536 = vadd.f32 %v4456, %v4515
    %v4537 = vadd.f32 %v4457, %v4517
    %v4538 = vadd.f32 %v4458, %v4519
    %v4539 = vadd.f32 %v4459, %v4521
    %v4540 = vadd.f32 %v4460, %v4523
    %v4541 = vadd.f32 %v4461, %v4525
    %v4542 = vtanh.pop %v4534
    %v4543 = vtanh.pop %v4535
    %v4544 = vtanh.pop %v4536
    %v4545 = vtanh.pop %v4537
    %v4546 = vtanh.pop %v4538
    %v4547 = vtanh.pop %v4539
    %v4548 = vtanh.pop %v4540
    %v4549 = vtanh.pop %v4541
    %4558 = vrot.lane.b32.xlu0 %v4542, 32
    %v4559 = vpop.permute.xlu0 %4558
    %4560 = vrot.lane.b32.xlu0 %v4543, 32
    %v4561 = vpop.permute.xlu0 %4560
    %4562 = vrot.lane.b32.xlu0 %v4544, 32
    %v4563 = vpop.permute.xlu0 %4562
    %4564 = vrot.lane.b32.xlu0 %v4545, 32
    %v4565 = vpop.permute.xlu0 %4564
    %4566 = vrot.lane.b32.xlu0 %v4546, 32
    %v4567 = vpop.permute.xlu0 %4566
    %4568 = vrot.lane.b32.xlu0 %v4547, 32
    %v4569 = vpop.permute.xlu0 %4568
    %4570 = vrot.lane.b32.xlu0 %v4548, 32
    %v4571 = vpop.permute.xlu0 %4570
    %4572 = vrot.lane.b32.xlu0 %v4549, 32
    %v4573 = vpop.permute.xlu0 %4572
    %v4582 = vmul.f32 %v4414, %v4559
    %v4583 = vmul.f32 %v4415, %v4561
    %v4584 = vmul.f32 %v4416, %v4563
    %v4585 = vmul.f32 %v4417, %v4565
    %v4586 = vmul.f32 %v4418, %v4567
    %v4587 = vmul.f32 %v4419, %v4569
    %v4588 = vmul.f32 %v4420, %v4571
    %v4589 = vmul.f32 %v4421, %v4573
    %4598 = vrot.lane.b32.xlu0 %v4582, 64
    %v4599 = vpop.permute.xlu0 %4598
    %4600 = vrot.lane.b32.xlu0 %v4583, 64
    %v4601 = vpop.permute.xlu0 %4600
    %4602 = vrot.lane.b32.xlu0 %v4584, 64
    %v4603 = vpop.permute.xlu0 %4602
    %4604 = vrot.lane.b32.xlu0 %v4585, 64
    %v4605 = vpop.permute.xlu0 %4604
    %4606 = vrot.lane.b32.xlu0 %v4586, 64
    %v4607 = vpop.permute.xlu0 %4606
    %4608 = vrot.lane.b32.xlu0 %v4587, 64
    %v4609 = vpop.permute.xlu0 %4608
    %4610 = vrot.lane.b32.xlu0 %v4588, 64
    %v4611 = vpop.permute.xlu0 %4610
    %4612 = vrot.lane.b32.xlu0 %v4589, 64
    %v4613 = vpop.permute.xlu0 %4612
    %4622 = vst.msk [vmem:[#allocation9 + $0x8] sm:$0x8] %vm1544, %v4599
    %4623 = vst.msk [vmem:[#allocation9 + $0x18] sm:$0x8] %vm1544, %v4601
    %4624 = vst.msk [vmem:[#allocation9 + $0x28] sm:$0x8] %vm1544, %v4603
    %4625 = vst.msk [vmem:[#allocation9 + $0x38] sm:$0x8] %vm1544, %v4605
    %4626 = vst.msk [vmem:[#allocation9 + $0x48] sm:$0x8] %vm1544, %v4607
    %4627 = vst.msk [vmem:[#allocation9 + $0x58] sm:$0x8] %vm1544, %v4609
    %4628 = vst.msk [vmem:[#allocation9 + $0x68] sm:$0x8] %vm1544, %v4611
    %4629 = vst.msk [vmem:[#allocation9 + $0x78] sm:$0x8] %vm1544, %v4613
    %v4630 = vld [vmem:[#allocation4 + $0x4] sm:$0x4]
    %v4631 = vld [vmem:[#allocation4 + $0xc] sm:$0x4]
    %v4632 = vld [vmem:[#allocation4 + $0x14] sm:$0x4]
    %v4633 = vld [vmem:[#allocation4 + $0x1c] sm:$0x4]
    %v4634 = vld [vmem:[#allocation4 + $0x24] sm:$0x4]
    %v4635 = vld [vmem:[#allocation4 + $0x2c] sm:$0x4]
    %v4636 = vld [vmem:[#allocation4 + $0x34] sm:$0x4]
    %v4637 = vld [vmem:[#allocation4 + $0x3c] sm:$0x4]
    %v4638 = vunpack.c.l.bf16 %v4630
    %v4639 = vunpack.c.l.bf16 %v4631
    %v4640 = vunpack.c.l.bf16 %v4632
    %v4641 = vunpack.c.l.bf16 %v4633
    %v4642 = vunpack.c.l.bf16 %v4634
    %v4643 = vunpack.c.l.bf16 %v4635
    %v4644 = vunpack.c.l.bf16 %v4636
    %v4645 = vunpack.c.l.bf16 %v4637
    %v4646 = vpack.c.bf16 %v4582, %v4582
    %v4647 = vpack.c.bf16 %v4583, %v4583
    %v4648 = vpack.c.bf16 %v4584, %v4584
    %v4649 = vpack.c.bf16 %v4585, %v4585
    %v4650 = vpack.c.bf16 %v4586, %v4586
    %v4651 = vpack.c.bf16 %v4587, %v4587
    %v4652 = vpack.c.bf16 %v4588, %v4588
    %v4653 = vpack.c.bf16 %v4589, %v4589
    %v4654 = vld [vmem:[#allocation7] sm:$0xf]
    %v4655 = vld [vmem:[#allocation7 + $0x4] sm:$0xf]
    %v4656 = vld [vmem:[#allocation7 + $0x8] sm:$0xf]
    %v4657 = vld [vmem:[#allocation7 + $0xc] sm:$0xf]
    %v4666 = vunpack.c.l.b16 %v4646
    %v4667 = vunpack.c.l.b16 %v4647
    %v4668 = vunpack.c.l.b16 %v4648
    %v4669 = vunpack.c.l.b16 %v4649
    %v4670 = vunpack.c.l.b16 %v4650
    %v4671 = vunpack.c.l.b16 %v4651
    %v4672 = vunpack.c.l.b16 %v4652
    %v4673 = vunpack.c.l.b16 %v4653
    %v4674 = vrot.slane %v4666, 3
    %v4675 = vrot.slane %v4667, 2
    %v4676 = vsel %vm448, %v4675, %v4674
    %v4677 = vrot.slane %v4668, 1
    %v4678 = vsel %vm451, %v4677, %v4676
    %v4679 = vsel %vm454, %v4669, %v4678
    %v4680 = vrot.slane %v4670, 7
    %v4681 = vsel %vm457, %v4680, %v4679
    %v4682 = vrot.slane %v4671, 6
    %v4683 = vsel %vm460, %v4682, %v4681
    %v4684 = vrot.slane %v4672, 5
    %v4685 = vsel %vm463, %v4684, %v4683
    %v4686 = vrot.slane %v4673, 4
    %v4687 = vsel %vm466, %v4686, %v4685
    %v4688 = vpack.c.b16 %v4687, %v4687
    %4689 = vrot.lane.b32.xlu0 %v4688, 64
    %v4690 = vpop.permute.xlu0 %4689
    %v4695 = vunpack.c.l.b16 %v4654
    %v4696 = vunpack.c.l.b16 %v4655
    %v4697 = vunpack.c.l.b16 %v4656
    %v4698 = vunpack.c.l.b16 %v4657
    %v4699 = vpack.c.b16 %v4696, %v4695
    %v4700 = vpack.c.b16 %v4698, %v4697
    %v4704 = vsel %vm86, %v4690, 0
    %4706 = vmatprep.subr.bf16.mxu0 0
    %4707 = vmatpush1.bf16.msra.mxu0 %v4699
    %4708 = vmatprep.subr.bf16.mxu0 0
    %4709 = vmatpush1.bf16.msra.mxu0 %v4700
    %4710 = vmatprep.subr.bf16.mxu0 0
    %4711 = vmatpush1.bf16.msra.mxu0 0
    %4712 = vmatprep.subr.bf16.mxu0 0
    %4713 = vmatpush1.bf16.msra.mxu0 0
    %4714 = vmatprep.subr.bf16.mxu0 0
    %4715 = vmatpush1.bf16.msra.mxu0 0
    %4716 = vmatprep.subr.bf16.mxu0 0
    %4717 = vmatpush1.bf16.msra.mxu0 0
    %4718 = vmatprep.subr.bf16.mxu0 0
    %4719 = vmatpush1.bf16.msra.mxu0 0
    %4720 = vmatprep.subr.bf16.mxu0 0
    %4721 = vmatpush1.bf16.msra.mxu0 0
    %4722 = vmatprep.subr.bf16.mxu0 0
    %4723 = vmatpush1.bf16.msra.mxu0 0
    %4724 = vmatprep.subr.bf16.mxu0 0
    %4725 = vmatpush1.bf16.msra.mxu0 0
    %4726 = vmatprep.subr.bf16.mxu0 0
    %4727 = vmatpush1.bf16.msra.mxu0 0
    %4728 = vmatprep.subr.bf16.mxu0 0
    %4729 = vmatpush1.bf16.msra.mxu0 0
    %4730 = vmatprep.subr.bf16.mxu0 0
    %4731 = vmatpush1.bf16.msra.mxu0 0
    %4732 = vmatprep.subr.bf16.mxu0 0
    %4733 = vmatpush1.bf16.msra.mxu0 0
    %4734 = vmatprep.subr.bf16.mxu0 0
    %4735 = vmatpush1.bf16.msra.mxu0 0
    %4736 = vmatprep.subr.bf16.mxu0 0
    %4737 = vmatpush1.bf16.msra.mxu0 0
    %4738 = vmatprep.mubr.bf16.mxu0 0
    %4739 = vmatmul.mubr.bf16.gmra.mrb[0].mxu0 %v4704
    %v4740 = vpop.f32.mrb[0].mxu0
    %v4741 = vadd.f32 0.0, %v4740
    %v4742 = vpop.f32.mrb[0].mxu0
    %v4743 = vpop.f32.mrb[0].mxu0
    %v4744 = vpop.f32.mrb[0].mxu0
    %4745 = vdwg.mxu0
    %v4747 = vrot.slane %v4741, 4
    %v4748 = vrot.slane %v4741, 5
    %v4749 = vrot.slane %v4741, 6
    %v4750 = vrot.slane %v4741, 7
    %v4751 = vrot.slane %v4741, 1
    %v4752 = vrot.slane %v4741, 2
    %v4753 = vrot.slane %v4741, 3
    %v4762 = vadd.f32 %v4638, %v4747
    %v4763 = vadd.f32 %v4639, %v4748
    %v4764 = vadd.f32 %v4640, %v4749
    %v4765 = vadd.f32 %v4641, %v4750
    %v4766 = vadd.f32 %v4642, %v4741
    %v4767 = vadd.f32 %v4643, %v4751
    %v4768 = vadd.f32 %v4644, %v4752
    %v4769 = vadd.f32 %v4645, %v4753
    %v4770 = vmul.f32 %v4762, 0.5
    %v4771 = vmul.f32 %v4763, 0.5
    %v4772 = vmul.f32 %v4764, 0.5
    %v4773 = vmul.f32 %v4765, 0.5
    %v4774 = vmul.f32 %v4766, 0.5
    %v4775 = vmul.f32 %v4767, 0.5
    %v4776 = vmul.f32 %v4768, 0.5
    %v4777 = vmul.f32 %v4769, 0.5
    %v4778 = vtanh.pop %v4770
    %v4779 = vtanh.pop %v4771
    %v4780 = vtanh.pop %v4772
    %v4781 = vtanh.pop %v4773
    %v4782 = vtanh.pop %v4774
    %v4783 = vtanh.pop %v4775
    %v4784 = vtanh.pop %v4776
    %v4785 = vtanh.pop %v4777
    %v4786 = vmul.f32 %v4778, 0.5
    %v4787 = vmul.f32 %v4779, 0.5
    %v4788 = vmul.f32 %v4780, 0.5
    %v4789 = vmul.f32 %v4781, 0.5
    %v4790 = vmul.f32 %v4782, 0.5
    %v4791 = vmul.f32 %v4783, 0.5
    %v4792 = vmul.f32 %v4784, 0.5
    %v4793 = vmul.f32 %v4785, 0.5
    %v4794 = vadd.f32 %v4786, 0.5
    %v4795 = vadd.f32 %v4787, 0.5
    %v4796 = vadd.f32 %v4788, 0.5
    %v4797 = vadd.f32 %v4789, 0.5
    %v4798 = vadd.f32 %v4790, 0.5
    %v4799 = vadd.f32 %v4791, 0.5
    %v4800 = vadd.f32 %v4792, 0.5
    %v4801 = vadd.f32 %v4793, 0.5
    %v4802 = vtanh.pop %v4762
    %v4803 = vtanh.pop %v4763
    %v4804 = vtanh.pop %v4764
    %v4805 = vtanh.pop %v4765
    %v4806 = vtanh.pop %v4766
    %v4807 = vtanh.pop %v4767
    %v4808 = vtanh.pop %v4768
    %v4809 = vtanh.pop %v4769
    %v4818 = vrot.slane %v4534, 7
    %v4819 = vrot.slane %v4535, 7
    %v4820 = vrot.slane %v4536, 7
    %v4821 = vrot.slane %v4537, 7
    %v4822 = vrot.slane %v4538, 7
    %v4823 = vrot.slane %v4539, 7
    %v4824 = vrot.slane %v4540, 7
    %v4825 = vrot.slane %v4541, 7
    %v4834 = vmul.f32 %v4794, %v4818
    %v4835 = vmul.f32 %v4795, %v4819
    %v4836 = vmul.f32 %v4796, %v4820
    %v4837 = vmul.f32 %v4797, %v4821
    %v4838 = vmul.f32 %v4798, %v4822
    %v4839 = vmul.f32 %v4799, %v4823
    %v4840 = vmul.f32 %v4800, %v4824
    %v4841 = vmul.f32 %v4801, %v4825
    %4850 = vrot.lane.b32.xlu0 %v4802, 32
    %v4851 = vpop.permute.xlu0 %4850
    %4852 = vrot.lane.b32.xlu0 %v4803, 32
    %v4853 = vpop.permute.xlu0 %4852
    %4854 = vrot.lane.b32.xlu0 %v4804, 32
    %v4855 = vpop.permute.xlu0 %4854
    %4856 = vrot.lane.b32.xlu0 %v4805, 32
    %v4857 = vpop.permute.xlu0 %4856
    %4858 = vrot.lane.b32.xlu0 %v4806, 32
    %v4859 = vpop.permute.xlu0 %4858
    %4860 = vrot.lane.b32.xlu0 %v4807, 32
    %v4861 = vpop.permute.xlu0 %4860
    %4862 = vrot.lane.b32.xlu0 %v4808, 32
    %v4863 = vpop.permute.xlu0 %4862
    %4864 = vrot.lane.b32.xlu0 %v4809, 32
    %v4865 = vpop.permute.xlu0 %4864
    %v4874 = vmul.f32 %v4794, %v4851
    %v4875 = vmul.f32 %v4795, %v4853
    %v4876 = vmul.f32 %v4796, %v4855
    %v4877 = vmul.f32 %v4797, %v4857
    %v4878 = vmul.f32 %v4798, %v4859
    %v4879 = vmul.f32 %v4799, %v4861
    %v4880 = vmul.f32 %v4800, %v4863
    %v4881 = vmul.f32 %v4801, %v4865
    %4890 = vrot.lane.b32.xlu0 %v4874, 32
    %v4891 = vpop.permute.xlu0 %4890
    %4892 = vrot.lane.b32.xlu0 %v4875, 32
    %v4893 = vpop.permute.xlu0 %4892
    %4894 = vrot.lane.b32.xlu0 %v4876, 32
    %v4895 = vpop.permute.xlu0 %4894
    %4896 = vrot.lane.b32.xlu0 %v4877, 32
    %v4897 = vpop.permute.xlu0 %4896
    %4898 = vrot.lane.b32.xlu0 %v4878, 32
    %v4899 = vpop.permute.xlu0 %4898
    %4900 = vrot.lane.b32.xlu0 %v4879, 32
    %v4901 = vpop.permute.xlu0 %4900
    %4902 = vrot.lane.b32.xlu0 %v4880, 32
    %v4903 = vpop.permute.xlu0 %4902
    %4904 = vrot.lane.b32.xlu0 %v4881, 32
    %v4905 = vpop.permute.xlu0 %4904
    %v4914 = vadd.f32 %v4834, %v4891
    %v4915 = vadd.f32 %v4835, %v4893
    %v4916 = vadd.f32 %v4836, %v4895
    %v4917 = vadd.f32 %v4837, %v4897
    %v4918 = vadd.f32 %v4838, %v4899
    %v4919 = vadd.f32 %v4839, %v4901
    %v4920 = vadd.f32 %v4840, %v4903
    %v4921 = vadd.f32 %v4841, %v4905
    %v4922 = vtanh.pop %v4914
    %v4923 = vtanh.pop %v4915
    %v4924 = vtanh.pop %v4916
    %v4925 = vtanh.pop %v4917
    %v4926 = vtanh.pop %v4918
    %v4927 = vtanh.pop %v4919
    %v4928 = vtanh.pop %v4920
    %v4929 = vtanh.pop %v4921
    %4938 = vrot.lane.b32.xlu0 %v4922, 32
    %v4939 = vpop.permute.xlu0 %4938
    %4940 = vrot.lane.b32.xlu0 %v4923, 32
    %v4941 = vpop.permute.xlu0 %4940
    %4942 = vrot.lane.b32.xlu0 %v4924, 32
    %v4943 = vpop.permute.xlu0 %4942
    %4944 = vrot.lane.b32.xlu0 %v4925, 32
    %v4945 = vpop.permute.xlu0 %4944
    %4946 = vrot.lane.b32.xlu0 %v4926, 32
    %v4947 = vpop.permute.xlu0 %4946
    %4948 = vrot.lane.b32.xlu0 %v4927, 32
    %v4949 = vpop.permute.xlu0 %4948
    %4950 = vrot.lane.b32.xlu0 %v4928, 32
    %v4951 = vpop.permute.xlu0 %4950
    %4952 = vrot.lane.b32.xlu0 %v4929, 32
    %v4953 = vpop.permute.xlu0 %4952
    %v4962 = vmul.f32 %v4794, %v4939
    %v4963 = vmul.f32 %v4795, %v4941
    %v4964 = vmul.f32 %v4796, %v4943
    %v4965 = vmul.f32 %v4797, %v4945
    %v4966 = vmul.f32 %v4798, %v4947
    %v4967 = vmul.f32 %v4799, %v4949
    %v4968 = vmul.f32 %v4800, %v4951
    %v4969 = vmul.f32 %v4801, %v4953
    %4978 = vrot.lane.b32.xlu0 %v4962, 64
    %v4979 = vpop.permute.xlu0 %4978
    %4980 = vrot.lane.b32.xlu0 %v4963, 64
    %v4981 = vpop.permute.xlu0 %4980
    %4982 = vrot.lane.b32.xlu0 %v4964, 64
    %v4983 = vpop.permute.xlu0 %4982
    %4984 = vrot.lane.b32.xlu0 %v4965, 64
    %v4985 = vpop.permute.xlu0 %4984
    %4986 = vrot.lane.b32.xlu0 %v4966, 64
    %v4987 = vpop.permute.xlu0 %4986
    %4988 = vrot.lane.b32.xlu0 %v4967, 64
    %v4989 = vpop.permute.xlu0 %4988
    %4990 = vrot.lane.b32.xlu0 %v4968, 64
    %v4991 = vpop.permute.xlu0 %4990
    %4992 = vrot.lane.b32.xlu0 %v4969, 64
    %v4993 = vpop.permute.xlu0 %4992
    %5002 = vst.msk [vmem:[#allocation9 + $0x8] sm:$0x10] %vm1925, %v4979
    %5003 = vst.msk [vmem:[#allocation9 + $0x18] sm:$0x10] %vm1925, %v4981
    %5004 = vst.msk [vmem:[#allocation9 + $0x28] sm:$0x10] %vm1925, %v4983
    %5005 = vst.msk [vmem:[#allocation9 + $0x38] sm:$0x10] %vm1925, %v4985
    %5006 = vst.msk [vmem:[#allocation9 + $0x48] sm:$0x10] %vm1925, %v4987
    %5007 = vst.msk [vmem:[#allocation9 + $0x58] sm:$0x10] %vm1925, %v4989
    %5008 = vst.msk [vmem:[#allocation9 + $0x68] sm:$0x10] %vm1925, %v4991
    %5009 = vst.msk [vmem:[#allocation9 + $0x78] sm:$0x10] %vm1925, %v4993
    %v5010 = vld [vmem:[#allocation4 + $0x4] sm:$0x4]
    %v5011 = vld [vmem:[#allocation4 + $0xc] sm:$0x4]
    %v5012 = vld [vmem:[#allocation4 + $0x14] sm:$0x4]
    %v5013 = vld [vmem:[#allocation4 + $0x1c] sm:$0x4]
    %v5014 = vld [vmem:[#allocation4 + $0x24] sm:$0x4]
    %v5015 = vld [vmem:[#allocation4 + $0x2c] sm:$0x4]
    %v5016 = vld [vmem:[#allocation4 + $0x34] sm:$0x4]
    %v5017 = vld [vmem:[#allocation4 + $0x3c] sm:$0x4]
    %v5018 = vunpack.c.l.bf16 %v5010
    %v5019 = vunpack.c.l.bf16 %v5011
    %v5020 = vunpack.c.l.bf16 %v5012
    %v5021 = vunpack.c.l.bf16 %v5013
    %v5022 = vunpack.c.l.bf16 %v5014
    %v5023 = vunpack.c.l.bf16 %v5015
    %v5024 = vunpack.c.l.bf16 %v5016
    %v5025 = vunpack.c.l.bf16 %v5017
    %v5026 = vpack.c.bf16 %v4962, %v4962
    %v5027 = vpack.c.bf16 %v4963, %v4963
    %v5028 = vpack.c.bf16 %v4964, %v4964
    %v5029 = vpack.c.bf16 %v4965, %v4965
    %v5030 = vpack.c.bf16 %v4966, %v4966
    %v5031 = vpack.c.bf16 %v4967, %v4967
    %v5032 = vpack.c.bf16 %v4968, %v4968
    %v5033 = vpack.c.bf16 %v4969, %v4969
    %v5034 = vld [vmem:[#allocation7] sm:$0xf]
    %v5035 = vld [vmem:[#allocation7 + $0x4] sm:$0xf]
    %v5036 = vld [vmem:[#allocation7 + $0x8] sm:$0xf]
    %v5037 = vld [vmem:[#allocation7 + $0xc] sm:$0xf]
    %v5046 = vunpack.c.l.b16 %v5026
    %v5047 = vunpack.c.l.b16 %v5027
    %v5048 = vunpack.c.l.b16 %v5028
    %v5049 = vunpack.c.l.b16 %v5029
    %v5050 = vunpack.c.l.b16 %v5030
    %v5051 = vunpack.c.l.b16 %v5031
    %v5052 = vunpack.c.l.b16 %v5032
    %v5053 = vunpack.c.l.b16 %v5033
    %v5054 = vrot.slane %v5046, 4
    %v5055 = vrot.slane %v5047, 3
    %v5056 = vsel %vm448, %v5055, %v5054
    %v5057 = vrot.slane %v5048, 2
    %v5058 = vsel %vm451, %v5057, %v5056
    %v5059 = vrot.slane %v5049, 1
    %v5060 = vsel %vm454, %v5059, %v5058
    %v5061 = vsel %vm457, %v5050, %v5060
    %v5062 = vrot.slane %v5051, 7
    %v5063 = vsel %vm460, %v5062, %v5061
    %v5064 = vrot.slane %v5052, 6
    %v5065 = vsel %vm463, %v5064, %v5063
    %v5066 = vrot.slane %v5053, 5
    %v5067 = vsel %vm466, %v5066, %v5065
    %v5068 = vpack.c.b16 %v5067, %v5067
    %5069 = vrot.lane.b32.xlu0 %v5068, 64
    %v5070 = vpop.permute.xlu0 %5069
    %v5075 = vunpack.c.l.b16 %v5034
    %v5076 = vunpack.c.l.b16 %v5035
    %v5077 = vunpack.c.l.b16 %v5036
    %v5078 = vunpack.c.l.b16 %v5037
    %v5079 = vpack.c.b16 %v5076, %v5075
    %v5080 = vpack.c.b16 %v5078, %v5077
    %v5084 = vsel %vm86, %v5070, 0
    %5086 = vmatprep.subr.bf16.mxu0 0
    %5087 = vmatpush1.bf16.msra.mxu0 %v5079
    %5088 = vmatprep.subr.bf16.mxu0 0
    %5089 = vmatpush1.bf16.msra.mxu0 %v5080
    %5090 = vmatprep.subr.bf16.mxu0 0
    %5091 = vmatpush1.bf16.msra.mxu0 0
    %5092 = vmatprep.subr.bf16.mxu0 0
    %5093 = vmatpush1.bf16.msra.mxu0 0
    %5094 = vmatprep.subr.bf16.mxu0 0
    %5095 = vmatpush1.bf16.msra.mxu0 0
    %5096 = vmatprep.subr.bf16.mxu0 0
    %5097 = vmatpush1.bf16.msra.mxu0 0
    %5098 = vmatprep.subr.bf16.mxu0 0
    %5099 = vmatpush1.bf16.msra.mxu0 0
    %5100 = vmatprep.subr.bf16.mxu0 0
    %5101 = vmatpush1.bf16.msra.mxu0 0
    %5102 = vmatprep.subr.bf16.mxu0 0
    %5103 = vmatpush1.bf16.msra.mxu0 0
    %5104 = vmatprep.subr.bf16.mxu0 0
    %5105 = vmatpush1.bf16.msra.mxu0 0
    %5106 = vmatprep.subr.bf16.mxu0 0
    %5107 = vmatpush1.bf16.msra.mxu0 0
    %5108 = vmatprep.subr.bf16.mxu0 0
    %5109 = vmatpush1.bf16.msra.mxu0 0
    %5110 = vmatprep.subr.bf16.mxu0 0
    %5111 = vmatpush1.bf16.msra.mxu0 0
    %5112 = vmatprep.subr.bf16.mxu0 0
    %5113 = vmatpush1.bf16.msra.mxu0 0
    %5114 = vmatprep.subr.bf16.mxu0 0
    %5115 = vmatpush1.bf16.msra.mxu0 0
    %5116 = vmatprep.subr.bf16.mxu0 0
    %5117 = vmatpush1.bf16.msra.mxu0 0
    %5118 = vmatprep.mubr.bf16.mxu0 0
    %5119 = vmatmul.mubr.bf16.gmra.mrb[0].mxu0 %v5084
    %v5120 = vpop.f32.mrb[0].mxu0
    %v5121 = vadd.f32 0.0, %v5120
    %v5122 = vpop.f32.mrb[0].mxu0
    %v5123 = vpop.f32.mrb[0].mxu0
    %v5124 = vpop.f32.mrb[0].mxu0
    %5125 = vdwg.mxu0
    %v5127 = vrot.slane %v5121, 3
    %v5128 = vrot.slane %v5121, 4
    %v5129 = vrot.slane %v5121, 5
    %v5130 = vrot.slane %v5121, 6
    %v5131 = vrot.slane %v5121, 7
    %v5132 = vrot.slane %v5121, 1
    %v5133 = vrot.slane %v5121, 2
    %v5142 = vadd.f32 %v5018, %v5127
    %v5143 = vadd.f32 %v5019, %v5128
    %v5144 = vadd.f32 %v5020, %v5129
    %v5145 = vadd.f32 %v5021, %v5130
    %v5146 = vadd.f32 %v5022, %v5131
    %v5147 = vadd.f32 %v5023, %v5121
    %v5148 = vadd.f32 %v5024, %v5132
    %v5149 = vadd.f32 %v5025, %v5133
    %v5150 = vmul.f32 %v5142, 0.5
    %v5151 = vmul.f32 %v5143, 0.5
    %v5152 = vmul.f32 %v5144, 0.5
    %v5153 = vmul.f32 %v5145, 0.5
    %v5154 = vmul.f32 %v5146, 0.5
    %v5155 = vmul.f32 %v5147, 0.5
    %v5156 = vmul.f32 %v5148, 0.5
    %v5157 = vmul.f32 %v5149, 0.5
    %v5158 = vtanh.pop %v5150
    %v5159 = vtanh.pop %v5151
    %v5160 = vtanh.pop %v5152
    %v5161 = vtanh.pop %v5153
    %v5162 = vtanh.pop %v5154
    %v5163 = vtanh.pop %v5155
    %v5164 = vtanh.pop %v5156
    %v5165 = vtanh.pop %v5157
    %v5166 = vmul.f32 %v5158, 0.5
    %v5167 = vmul.f32 %v5159, 0.5
    %v5168 = vmul.f32 %v5160, 0.5
    %v5169 = vmul.f32 %v5161, 0.5
    %v5170 = vmul.f32 %v5162, 0.5
    %v5171 = vmul.f32 %v5163, 0.5
    %v5172 = vmul.f32 %v5164, 0.5
    %v5173 = vmul.f32 %v5165, 0.5
    %v5174 = vadd.f32 %v5166, 0.5
    %v5175 = vadd.f32 %v5167, 0.5
    %v5176 = vadd.f32 %v5168, 0.5
    %v5177 = vadd.f32 %v5169, 0.5
    %v5178 = vadd.f32 %v5170, 0.5
    %v5179 = vadd.f32 %v5171, 0.5
    %v5180 = vadd.f32 %v5172, 0.5
    %v5181 = vadd.f32 %v5173, 0.5
    %v5182 = vtanh.pop %v5142
    %v5183 = vtanh.pop %v5143
    %v5184 = vtanh.pop %v5144
    %v5185 = vtanh.pop %v5145
    %v5186 = vtanh.pop %v5146
    %v5187 = vtanh.pop %v5147
    %v5188 = vtanh.pop %v5148
    %v5189 = vtanh.pop %v5149
    %v5198 = vrot.slane %v4914, 7
    %v5199 = vrot.slane %v4915, 7
    %v5200 = vrot.slane %v4916, 7
    %v5201 = vrot.slane %v4917, 7
    %v5202 = vrot.slane %v4918, 7
    %v5203 = vrot.slane %v4919, 7
    %v5204 = vrot.slane %v4920, 7
    %v5205 = vrot.slane %v4921, 7
    %v5214 = vmul.f32 %v5174, %v5198
    %v5215 = vmul.f32 %v5175, %v5199
    %v5216 = vmul.f32 %v5176, %v5200
    %v5217 = vmul.f32 %v5177, %v5201
    %v5218 = vmul.f32 %v5178, %v5202
    %v5219 = vmul.f32 %v5179, %v5203
    %v5220 = vmul.f32 %v5180, %v5204
    %v5221 = vmul.f32 %v5181, %v5205
    %5230 = vrot.lane.b32.xlu0 %v5182, 32
    %v5231 = vpop.permute.xlu0 %5230
    %5232 = vrot.lane.b32.xlu0 %v5183, 32
    %v5233 = vpop.permute.xlu0 %5232
    %5234 = vrot.lane.b32.xlu0 %v5184, 32
    %v5235 = vpop.permute.xlu0 %5234
    %5236 = vrot.lane.b32.xlu0 %v5185, 32
    %v5237 = vpop.permute.xlu0 %5236
    %5238 = vrot.lane.b32.xlu0 %v5186, 32
    %v5239 = vpop.permute.xlu0 %5238
    %5240 = vrot.lane.b32.xlu0 %v5187, 32
    %v5241 = vpop.permute.xlu0 %5240
    %5242 = vrot.lane.b32.xlu0 %v5188, 32
    %v5243 = vpop.permute.xlu0 %5242
    %5244 = vrot.lane.b32.xlu0 %v5189, 32
    %v5245 = vpop.permute.xlu0 %5244
    %v5254 = vmul.f32 %v5174, %v5231
    %v5255 = vmul.f32 %v5175, %v5233
    %v5256 = vmul.f32 %v5176, %v5235
    %v5257 = vmul.f32 %v5177, %v5237
    %v5258 = vmul.f32 %v5178, %v5239
    %v5259 = vmul.f32 %v5179, %v5241
    %v5260 = vmul.f32 %v5180, %v5243
    %v5261 = vmul.f32 %v5181, %v5245
    %5270 = vrot.lane.b32.xlu0 %v5254, 32
    %v5271 = vpop.permute.xlu0 %5270
    %5272 = vrot.lane.b32.xlu0 %v5255, 32
    %v5273 = vpop.permute.xlu0 %5272
    %5274 = vrot.lane.b32.xlu0 %v5256, 32
    %v5275 = vpop.permute.xlu0 %5274
    %5276 = vrot.lane.b32.xlu0 %v5257, 32
    %v5277 = vpop.permute.xlu0 %5276
    %5278 = vrot.lane.b32.xlu0 %v5258, 32
    %v5279 = vpop.permute.xlu0 %5278
    %5280 = vrot.lane.b32.xlu0 %v5259, 32
    %v5281 = vpop.permute.xlu0 %5280
    %5282 = vrot.lane.b32.xlu0 %v5260, 32
    %v5283 = vpop.permute.xlu0 %5282
    %5284 = vrot.lane.b32.xlu0 %v5261, 32
    %v5285 = vpop.permute.xlu0 %5284
    %v5294 = vadd.f32 %v5214, %v5271
    %v5295 = vadd.f32 %v5215, %v5273
    %v5296 = vadd.f32 %v5216, %v5275
    %v5297 = vadd.f32 %v5217, %v5277
    %v5298 = vadd.f32 %v5218, %v5279
    %v5299 = vadd.f32 %v5219, %v5281
    %v5300 = vadd.f32 %v5220, %v5283
    %v5301 = vadd.f32 %v5221, %v5285
    %v5302 = vtanh.pop %v5294
    %v5303 = vtanh.pop %v5295
    %v5304 = vtanh.pop %v5296
    %v5305 = vtanh.pop %v5297
    %v5306 = vtanh.pop %v5298
    %v5307 = vtanh.pop %v5299
    %v5308 = vtanh.pop %v5300
    %v5309 = vtanh.pop %v5301
    %5318 = vrot.lane.b32.xlu0 %v5302, 32
    %v5319 = vpop.permute.xlu0 %5318
    %5320 = vrot.lane.b32.xlu0 %v5303, 32
    %v5321 = vpop.permute.xlu0 %5320
    %5322 = vrot.lane.b32.xlu0 %v5304, 32
    %v5323 = vpop.permute.xlu0 %5322
    %5324 = vrot.lane.b32.xlu0 %v5305, 32
    %v5325 = vpop.permute.xlu0 %5324
    %5326 = vrot.lane.b32.xlu0 %v5306, 32
    %v5327 = vpop.permute.xlu0 %5326
    %5328 = vrot.lane.b32.xlu0 %v5307, 32
    %v5329 = vpop.permute.xlu0 %5328
    %5330 = vrot.lane.b32.xlu0 %v5308, 32
    %v5331 = vpop.permute.xlu0 %5330
    %5332 = vrot.lane.b32.xlu0 %v5309, 32
    %v5333 = vpop.permute.xlu0 %5332
    %v5342 = vmul.f32 %v5174, %v5319
    %v5343 = vmul.f32 %v5175, %v5321
    %v5344 = vmul.f32 %v5176, %v5323
    %v5345 = vmul.f32 %v5177, %v5325
    %v5346 = vmul.f32 %v5178, %v5327
    %v5347 = vmul.f32 %v5179, %v5329
    %v5348 = vmul.f32 %v5180, %v5331
    %v5349 = vmul.f32 %v5181, %v5333
    %5358 = vrot.lane.b32.xlu0 %v5342, 64
    %v5359 = vpop.permute.xlu0 %5358
    %5360 = vrot.lane.b32.xlu0 %v5343, 64
    %v5361 = vpop.permute.xlu0 %5360
    %5362 = vrot.lane.b32.xlu0 %v5344, 64
    %v5363 = vpop.permute.xlu0 %5362
    %5364 = vrot.lane.b32.xlu0 %v5345, 64
    %v5365 = vpop.permute.xlu0 %5364
    %5366 = vrot.lane.b32.xlu0 %v5346, 64
    %v5367 = vpop.permute.xlu0 %5366
    %5368 = vrot.lane.b32.xlu0 %v5347, 64
    %v5369 = vpop.permute.xlu0 %5368
    %5370 = vrot.lane.b32.xlu0 %v5348, 64
    %v5371 = vpop.permute.xlu0 %5370
    %5372 = vrot.lane.b32.xlu0 %v5349, 64
    %v5373 = vpop.permute.xlu0 %5372
    %5382 = vst.msk [vmem:[#allocation9 + $0x8] sm:$0x20] %vm2306, %v5359
    %5383 = vst.msk [vmem:[#allocation9 + $0x18] sm:$0x20] %vm2306, %v5361
    %5384 = vst.msk [vmem:[#allocation9 + $0x28] sm:$0x20] %vm2306, %v5363
    %5385 = vst.msk [vmem:[#allocation9 + $0x38] sm:$0x20] %vm2306, %v5365
    %5386 = vst.msk [vmem:[#allocation9 + $0x48] sm:$0x20] %vm2306, %v5367
    %5387 = vst.msk [vmem:[#allocation9 + $0x58] sm:$0x20] %vm2306, %v5369
    %5388 = vst.msk [vmem:[#allocation9 + $0x68] sm:$0x20] %vm2306, %v5371
    %5389 = vst.msk [vmem:[#allocation9 + $0x78] sm:$0x20] %vm2306, %v5373
    %v5390 = vld [vmem:[#allocation4 + $0x4] sm:$0x8]
    %v5391 = vld [vmem:[#allocation4 + $0xc] sm:$0x8]
    %v5392 = vld [vmem:[#allocation4 + $0x14] sm:$0x8]
    %v5393 = vld [vmem:[#allocation4 + $0x1c] sm:$0x8]
    %v5394 = vld [vmem:[#allocation4 + $0x24] sm:$0x8]
    %v5395 = vld [vmem:[#allocation4 + $0x2c] sm:$0x8]
    %v5396 = vld [vmem:[#allocation4 + $0x34] sm:$0x8]
    %v5397 = vld [vmem:[#allocation4 + $0x3c] sm:$0x8]
    %v5398 = vunpack.c.l.bf16 %v5390
    %v5399 = vunpack.c.l.bf16 %v5391
    %v5400 = vunpack.c.l.bf16 %v5392
    %v5401 = vunpack.c.l.bf16 %v5393
    %v5402 = vunpack.c.l.bf16 %v5394
    %v5403 = vunpack.c.l.bf16 %v5395
    %v5404 = vunpack.c.l.bf16 %v5396
    %v5405 = vunpack.c.l.bf16 %v5397
    %v5406 = vpack.c.bf16 %v5342, %v5342
    %v5407 = vpack.c.bf16 %v5343, %v5343
    %v5408 = vpack.c.bf16 %v5344, %v5344
    %v5409 = vpack.c.bf16 %v5345, %v5345
    %v5410 = vpack.c.bf16 %v5346, %v5346
    %v5411 = vpack.c.bf16 %v5347, %v5347
    %v5412 = vpack.c.bf16 %v5348, %v5348
    %v5413 = vpack.c.bf16 %v5349, %v5349
    %v5414 = vld [vmem:[#allocation7] sm:$0xf]
    %v5415 = vld [vmem:[#allocation7 + $0x4] sm:$0xf]
    %v5416 = vld [vmem:[#allocation7 + $0x8] sm:$0xf]
    %v5417 = vld [vmem:[#allocation7 + $0xc] sm:$0xf]
    %v5426 = vunpack.c.l.b16 %v5406
    %v5427 = vunpack.c.l.b16 %v5407
    %v5428 = vunpack.c.l.b16 %v5408
    %v5429 = vunpack.c.l.b16 %v5409
    %v5430 = vunpack.c.l.b16 %v5410
    %v5431 = vunpack.c.l.b16 %v5411
    %v5432 = vunpack.c.l.b16 %v5412
    %v5433 = vunpack.c.l.b16 %v5413
    %v5434 = vrot.slane %v5426, 5
    %v5435 = vrot.slane %v5427, 4
    %v5436 = vsel %vm448, %v5435, %v5434
    %v5437 = vrot.slane %v5428, 3
    %v5438 = vsel %vm451, %v5437, %v5436
    %v5439 = vrot.slane %v5429, 2
    %v5440 = vsel %vm454, %v5439, %v5438
    %v5441 = vrot.slane %v5430, 1
    %v5442 = vsel %vm457, %v5441, %v5440
    %v5443 = vsel %vm460, %v5431, %v5442
    %v5444 = vrot.slane %v5432, 7
    %v5445 = vsel %vm463, %v5444, %v5443
    %v5446 = vrot.slane %v5433, 6
    %v5447 = vsel %vm466, %v5446, %v5445
    %v5448 = vpack.c.b16 %v5447, %v5447
    %5449 = vrot.lane.b32.xlu0 %v5448, 64
    %v5450 = vpop.permute.xlu0 %5449
    %v5455 = vunpack.c.l.b16 %v5414
    %v5456 = vunpack.c.l.b16 %v5415
    %v5457 = vunpack.c.l.b16 %v5416
    %v5458 = vunpack.c.l.b16 %v5417
    %v5459 = vpack.c.b16 %v5456, %v5455
    %v5460 = vpack.c.b16 %v5458, %v5457
    %v5464 = vsel %vm86, %v5450, 0
    %5466 = vmatprep.subr.bf16.mxu0 0
    %5467 = vmatpush1.bf16.msra.mxu0 %v5459
    %5468 = vmatprep.subr.bf16.mxu0 0
    %5469 = vmatpush1.bf16.msra.mxu0 %v5460
    %5470 = vmatprep.subr.bf16.mxu0 0
    %5471 = vmatpush1.bf16.msra.mxu0 0
    %5472 = vmatprep.subr.bf16.mxu0 0
    %5473 = vmatpush1.bf16.msra.mxu0 0
    %5474 = vmatprep.subr.bf16.mxu0 0
    %5475 = vmatpush1.bf16.msra.mxu0 0
    %5476 = vmatprep.subr.bf16.mxu0 0
    %5477 = vmatpush1.bf16.msra.mxu0 0
    %5478 = vmatprep.subr.bf16.mxu0 0
    %5479 = vmatpush1.bf16.msra.mxu0 0
    %5480 = vmatprep.subr.bf16.mxu0 0
    %5481 = vmatpush1.bf16.msra.mxu0 0
    %5482 = vmatprep.subr.bf16.mxu0 0
    %5483 = vmatpush1.bf16.msra.mxu0 0
    %5484 = vmatprep.subr.bf16.mxu0 0
    %5485 = vmatpush1.bf16.msra.mxu0 0
    %5486 = vmatprep.subr.bf16.mxu0 0
    %5487 = vmatpush1.bf16.msra.mxu0 0
    %5488 = vmatprep.subr.bf16.mxu0 0
    %5489 = vmatpush1.bf16.msra.mxu0 0
    %5490 = vmatprep.subr.bf16.mxu0 0
    %5491 = vmatpush1.bf16.msra.mxu0 0
    %5492 = vmatprep.subr.bf16.mxu0 0
    %5493 = vmatpush1.bf16.msra.mxu0 0
    %5494 = vmatprep.subr.bf16.mxu0 0
    %5495 = vmatpush1.bf16.msra.mxu0 0
    %5496 = vmatprep.subr.bf16.mxu0 0
    %5497 = vmatpush1.bf16.msra.mxu0 0
    %5498 = vmatprep.mubr.bf16.mxu0 0
    %5499 = vmatmul.mubr.bf16.gmra.mrb[0].mxu0 %v5464
    %v5500 = vpop.f32.mrb[0].mxu0
    %v5501 = vadd.f32 0.0, %v5500
    %v5502 = vpop.f32.mrb[0].mxu0
    %v5503 = vpop.f32.mrb[0].mxu0
    %v5504 = vpop.f32.mrb[0].mxu0
    %5505 = vdwg.mxu0
    %v5507 = vrot.slane %v5501, 2
    %v5508 = vrot.slane %v5501, 3
    %v5509 = vrot.slane %v5501, 4
    %v5510 = vrot.slane %v5501, 5
    %v5511 = vrot.slane %v5501, 6
    %v5512 = vrot.slane %v5501, 7
    %v5513 = vrot.slane %v5501, 1
    %v5522 = vadd.f32 %v5398, %v5507
    %v5523 = vadd.f32 %v5399, %v5508
    %v5524 = vadd.f32 %v5400, %v5509
    %v5525 = vadd.f32 %v5401, %v5510
    %v5526 = vadd.f32 %v5402, %v5511
    %v5527 = vadd.f32 %v5403, %v5512
    %v5528 = vadd.f32 %v5404, %v5501
    %v5529 = vadd.f32 %v5405, %v5513
    %v5530 = vmul.f32 %v5522, 0.5
    %v5531 = vmul.f32 %v5523, 0.5
    %v5532 = vmul.f32 %v5524, 0.5
    %v5533 = vmul.f32 %v5525, 0.5
    %v5534 = vmul.f32 %v5526, 0.5
    %v5535 = vmul.f32 %v5527, 0.5
    %v5536 = vmul.f32 %v5528, 0.5
    %v5537 = vmul.f32 %v5529, 0.5
    %v5538 = vtanh.pop %v5530
    %v5539 = vtanh.pop %v5531
    %v5540 = vtanh.pop %v5532
    %v5541 = vtanh.pop %v5533
    %v5542 = vtanh.pop %v5534
    %v5543 = vtanh.pop %v5535
    %v5544 = vtanh.pop %v5536
    %v5545 = vtanh.pop %v5537
    %v5546 = vmul.f32 %v5538, 0.5
    %v5547 = vmul.f32 %v5539, 0.5
    %v5548 = vmul.f32 %v5540, 0.5
    %v5549 = vmul.f32 %v5541, 0.5
    %v5550 = vmul.f32 %v5542, 0.5
    %v5551 = vmul.f32 %v5543, 0.5
    %v5552 = vmul.f32 %v5544, 0.5
    %v5553 = vmul.f32 %v5545, 0.5
    %v5554 = vadd.f32 %v5546, 0.5
    %v5555 = vadd.f32 %v5547, 0.5
    %v5556 = vadd.f32 %v5548, 0.5
    %v5557 = vadd.f32 %v5549, 0.5
    %v5558 = vadd.f32 %v5550, 0.5
    %v5559 = vadd.f32 %v5551, 0.5
    %v5560 = vadd.f32 %v5552, 0.5
    %v5561 = vadd.f32 %v5553, 0.5
    %v5562 = vtanh.pop %v5522
    %v5563 = vtanh.pop %v5523
    %v5564 = vtanh.pop %v5524
    %v5565 = vtanh.pop %v5525
    %v5566 = vtanh.pop %v5526
    %v5567 = vtanh.pop %v5527
    %v5568 = vtanh.pop %v5528
    %v5569 = vtanh.pop %v5529
    %v5578 = vrot.slane %v5294, 7
    %v5579 = vrot.slane %v5295, 7
    %v5580 = vrot.slane %v5296, 7
    %v5581 = vrot.slane %v5297, 7
    %v5582 = vrot.slane %v5298, 7
    %v5583 = vrot.slane %v5299, 7
    %v5584 = vrot.slane %v5300, 7
    %v5585 = vrot.slane %v5301, 7
    %v5594 = vmul.f32 %v5554, %v5578
    %v5595 = vmul.f32 %v5555, %v5579
    %v5596 = vmul.f32 %v5556, %v5580
    %v5597 = vmul.f32 %v5557, %v5581
    %v5598 = vmul.f32 %v5558, %v5582
    %v5599 = vmul.f32 %v5559, %v5583
    %v5600 = vmul.f32 %v5560, %v5584
    %v5601 = vmul.f32 %v5561, %v5585
    %5610 = vrot.lane.b32.xlu0 %v5562, 32
    %v5611 = vpop.permute.xlu0 %5610
    %5612 = vrot.lane.b32.xlu0 %v5563, 32
    %v5613 = vpop.permute.xlu0 %5612
    %5614 = vrot.lane.b32.xlu0 %v5564, 32
    %v5615 = vpop.permute.xlu0 %5614
    %5616 = vrot.lane.b32.xlu0 %v5565, 32
    %v5617 = vpop.permute.xlu0 %5616
    %5618 = vrot.lane.b32.xlu0 %v5566, 32
    %v5619 = vpop.permute.xlu0 %5618
    %5620 = vrot.lane.b32.xlu0 %v5567, 32
    %v5621 = vpop.permute.xlu0 %5620
    %5622 = vrot.lane.b32.xlu0 %v5568, 32
    %v5623 = vpop.permute.xlu0 %5622
    %5624 = vrot.lane.b32.xlu0 %v5569, 32
    %v5625 = vpop.permute.xlu0 %5624
    %v5634 = vmul.f32 %v5554, %v5611
    %v5635 = vmul.f32 %v5555, %v5613
    %v5636 = vmul.f32 %v5556, %v5615
    %v5637 = vmul.f32 %v5557, %v5617
    %v5638 = vmul.f32 %v5558, %v5619
    %v5639 = vmul.f32 %v5559, %v5621
    %v5640 = vmul.f32 %v5560, %v5623
    %v5641 = vmul.f32 %v5561, %v5625
    %5650 = vrot.lane.b32.xlu0 %v5634, 32
    %v5651 = vpop.permute.xlu0 %5650
    %5652 = vrot.lane.b32.xlu0 %v5635, 32
    %v5653 = vpop.permute.xlu0 %5652
    %5654 = vrot.lane.b32.xlu0 %v5636, 32
    %v5655 = vpop.permute.xlu0 %5654
    %5656 = vrot.lane.b32.xlu0 %v5637, 32
    %v5657 = vpop.permute.xlu0 %5656
    %5658 = vrot.lane.b32.xlu0 %v5638, 32
    %v5659 = vpop.permute.xlu0 %5658
    %5660 = vrot.lane.b32.xlu0 %v5639, 32
    %v5661 = vpop.permute.xlu0 %5660
    %5662 = vrot.lane.b32.xlu0 %v5640, 32
    %v5663 = vpop.permute.xlu0 %5662
    %5664 = vrot.lane.b32.xlu0 %v5641, 32
    %v5665 = vpop.permute.xlu0 %5664
    %v5674 = vadd.f32 %v5594, %v5651
    %v5675 = vadd.f32 %v5595, %v5653
    %v5676 = vadd.f32 %v5596, %v5655
    %v5677 = vadd.f32 %v5597, %v5657
    %v5678 = vadd.f32 %v5598, %v5659
    %v5679 = vadd.f32 %v5599, %v5661
    %v5680 = vadd.f32 %v5600, %v5663
    %v5681 = vadd.f32 %v5601, %v5665
    %v5682 = vtanh.pop %v5674
    %v5683 = vtanh.pop %v5675
    %v5684 = vtanh.pop %v5676
    %v5685 = vtanh.pop %v5677
    %v5686 = vtanh.pop %v5678
    %v5687 = vtanh.pop %v5679
    %v5688 = vtanh.pop %v5680
    %v5689 = vtanh.pop %v5681
    %5698 = vrot.lane.b32.xlu0 %v5682, 32
    %v5699 = vpop.permute.xlu0 %5698
    %5700 = vrot.lane.b32.xlu0 %v5683, 32
    %v5701 = vpop.permute.xlu0 %5700
    %5702 = vrot.lane.b32.xlu0 %v5684, 32
    %v5703 = vpop.permute.xlu0 %5702
    %5704 = vrot.lane.b32.xlu0 %v5685, 32
    %v5705 = vpop.permute.xlu0 %5704
    %5706 = vrot.lane.b32.xlu0 %v5686, 32
    %v5707 = vpop.permute.xlu0 %5706
    %5708 = vrot.lane.b32.xlu0 %v5687, 32
    %v5709 = vpop.permute.xlu0 %5708
    %5710 = vrot.lane.b32.xlu0 %v5688, 32
    %v5711 = vpop.permute.xlu0 %5710
    %5712 = vrot.lane.b32.xlu0 %v5689, 32
    %v5713 = vpop.permute.xlu0 %5712
    %v5722 = vmul.f32 %v5554, %v5699
    %v5723 = vmul.f32 %v5555, %v5701
    %v5724 = vmul.f32 %v5556, %v5703
    %v5725 = vmul.f32 %v5557, %v5705
    %v5726 = vmul.f32 %v5558, %v5707
    %v5727 = vmul.f32 %v5559, %v5709
    %v5728 = vmul.f32 %v5560, %v5711
    %v5729 = vmul.f32 %v5561, %v5713
    %5738 = vrot.lane.b32.xlu0 %v5722, 64
    %v5739 = vpop.permute.xlu0 %5738
    %5740 = vrot.lane.b32.xlu0 %v5723, 64
    %v5741 = vpop.permute.xlu0 %5740
    %5742 = vrot.lane.b32.xlu0 %v5724, 64
    %v5743 = vpop.permute.xlu0 %5742
    %5744 = vrot.lane.b32.xlu0 %v5725, 64
    %v5745 = vpop.permute.xlu0 %5744
    %5746 = vrot.lane.b32.xlu0 %v5726, 64
    %v5747 = vpop.permute.xlu0 %5746
    %5748 = vrot.lane.b32.xlu0 %v5727, 64
    %v5749 = vpop.permute.xlu0 %5748
    %5750 = vrot.lane.b32.xlu0 %v5728, 64
    %v5751 = vpop.permute.xlu0 %5750
    %5752 = vrot.lane.b32.xlu0 %v5729, 64
    %v5753 = vpop.permute.xlu0 %5752
    %5762 = vst.msk [vmem:[#allocation9 + $0x8] sm:$0x40] %vm2687, %v5739
    %5763 = vst.msk [vmem:[#allocation9 + $0x18] sm:$0x40] %vm2687, %v5741
    %5764 = vst.msk [vmem:[#allocation9 + $0x28] sm:$0x40] %vm2687, %v5743
    %5765 = vst.msk [vmem:[#allocation9 + $0x38] sm:$0x40] %vm2687, %v5745
    %5766 = vst.msk [vmem:[#allocation9 + $0x48] sm:$0x40] %vm2687, %v5747
    %5767 = vst.msk [vmem:[#allocation9 + $0x58] sm:$0x40] %vm2687, %v5749
    %5768 = vst.msk [vmem:[#allocation9 + $0x68] sm:$0x40] %vm2687, %v5751
    %5769 = vst.msk [vmem:[#allocation9 + $0x78] sm:$0x40] %vm2687, %v5753
    %v5770 = vld [vmem:[#allocation4 + $0x4] sm:$0x8]
    %v5771 = vld [vmem:[#allocation4 + $0xc] sm:$0x8]
    %v5772 = vld [vmem:[#allocation4 + $0x14] sm:$0x8]
    %v5773 = vld [vmem:[#allocation4 + $0x1c] sm:$0x8]
    %v5774 = vld [vmem:[#allocation4 + $0x24] sm:$0x8]
    %v5775 = vld [vmem:[#allocation4 + $0x2c] sm:$0x8]
    %v5776 = vld [vmem:[#allocation4 + $0x34] sm:$0x8]
    %v5777 = vld [vmem:[#allocation4 + $0x3c] sm:$0x8]
    %v5778 = vunpack.c.l.bf16 %v5770
    %v5779 = vunpack.c.l.bf16 %v5771
    %v5780 = vunpack.c.l.bf16 %v5772
    %v5781 = vunpack.c.l.bf16 %v5773
    %v5782 = vunpack.c.l.bf16 %v5774
    %v5783 = vunpack.c.l.bf16 %v5775
    %v5784 = vunpack.c.l.bf16 %v5776
    %v5785 = vunpack.c.l.bf16 %v5777
    %v5786 = vpack.c.bf16 %v5722, %v5722
    %v5787 = vpack.c.bf16 %v5723, %v5723
    %v5788 = vpack.c.bf16 %v5724, %v5724
    %v5789 = vpack.c.bf16 %v5725, %v5725
    %v5790 = vpack.c.bf16 %v5726, %v5726
    %v5791 = vpack.c.bf16 %v5727, %v5727
    %v5792 = vpack.c.bf16 %v5728, %v5728
    %v5793 = vpack.c.bf16 %v5729, %v5729
    %v5794 = vld [vmem:[#allocation7] sm:$0xf]
    %v5795 = vld [vmem:[#allocation7 + $0x4] sm:$0xf]
    %v5796 = vld [vmem:[#allocation7 + $0x8] sm:$0xf]
    %v5797 = vld [vmem:[#allocation7 + $0xc] sm:$0xf]
    %v5806 = vunpack.c.l.b16 %v5786
    %v5807 = vunpack.c.l.b16 %v5787
    %v5808 = vunpack.c.l.b16 %v5788
    %v5809 = vunpack.c.l.b16 %v5789
    %v5810 = vunpack.c.l.b16 %v5790
    %v5811 = vunpack.c.l.b16 %v5791
    %v5812 = vunpack.c.l.b16 %v5792
    %v5813 = vunpack.c.l.b16 %v5793
    %v5814 = vrot.slane %v5806, 6
    %v5815 = vrot.slane %v5807, 5
    %v5816 = vsel %vm448, %v5815, %v5814
    %v5817 = vrot.slane %v5808, 4
    %v5818 = vsel %vm451, %v5817, %v5816
    %v5819 = vrot.slane %v5809, 3
    %v5820 = vsel %vm454, %v5819, %v5818
    %v5821 = vrot.slane %v5810, 2
    %v5822 = vsel %vm457, %v5821, %v5820
    %v5823 = vrot.slane %v5811, 1
    %v5824 = vsel %vm460, %v5823, %v5822
    %v5825 = vsel %vm463, %v5812, %v5824
    %v5826 = vrot.slane %v5813, 7
    %v5827 = vsel %vm466, %v5826, %v5825
    %v5828 = vpack.c.b16 %v5827, %v5827
    %5829 = vrot.lane.b32.xlu0 %v5828, 64
    %v5830 = vpop.permute.xlu0 %5829
    %v5835 = vunpack.c.l.b16 %v5794
    %v5836 = vunpack.c.l.b16 %v5795
    %v5837 = vunpack.c.l.b16 %v5796
    %v5838 = vunpack.c.l.b16 %v5797
    %v5839 = vpack.c.b16 %v5836, %v5835
    %v5840 = vpack.c.b16 %v5838, %v5837
    %v5844 = vsel %vm86, %v5830, 0
    %5846 = vmatprep.subr.bf16.mxu0 0
    %5847 = vmatpush1.bf16.msra.mxu0 %v5839
    %5848 = vmatprep.subr.bf16.mxu0 0
    %5849 = vmatpush1.bf16.msra.mxu0 %v5840
    %5850 = vmatprep.subr.bf16.mxu0 0
    %5851 = vmatpush1.bf16.msra.mxu0 0
    %5852 = vmatprep.subr.bf16.mxu0 0
    %5853 = vmatpush1.bf16.msra.mxu0 0
    %5854 = vmatprep.subr.bf16.mxu0 0
    %5855 = vmatpush1.bf16.msra.mxu0 0
    %5856 = vmatprep.subr.bf16.mxu0 0
    %5857 = vmatpush1.bf16.msra.mxu0 0
    %5858 = vmatprep.subr.bf16.mxu0 0
    %5859 = vmatpush1.bf16.msra.mxu0 0
    %5860 = vmatprep.subr.bf16.mxu0 0
    %5861 = vmatpush1.bf16.msra.mxu0 0
    %5862 = vmatprep.subr.bf16.mxu0 0
    %5863 = vmatpush1.bf16.msra.mxu0 0
    %5864 = vmatprep.subr.bf16.mxu0 0
    %5865 = vmatpush1.bf16.msra.mxu0 0
    %5866 = vmatprep.subr.bf16.mxu0 0
    %5867 = vmatpush1.bf16.msra.mxu0 0
    %5868 = vmatprep.subr.bf16.mxu0 0
    %5869 = vmatpush1.bf16.msra.mxu0 0
    %5870 = vmatprep.subr.bf16.mxu0 0
    %5871 = vmatpush1.bf16.msra.mxu0 0
    %5872 = vmatprep.subr.bf16.mxu0 0
    %5873 = vmatpush1.bf16.msra.mxu0 0
    %5874 = vmatprep.subr.bf16.mxu0 0
    %5875 = vmatpush1.bf16.msra.mxu0 0
    %5876 = vmatprep.subr.bf16.mxu0 0
    %5877 = vmatpush1.bf16.msra.mxu0 0
    %5878 = vmatprep.mubr.bf16.mxu0 0
    %5879 = vmatmul.mubr.bf16.gmra.mrb[0].mxu0 %v5844
    %v5880 = vpop.f32.mrb[0].mxu0
    %v5881 = vadd.f32 0.0, %v5880
    %v5882 = vpop.f32.mrb[0].mxu0
    %v5883 = vpop.f32.mrb[0].mxu0
    %v5884 = vpop.f32.mrb[0].mxu0
    %5885 = vdwg.mxu0
    %v5887 = vrot.slane %v5881, 1
    %v5888 = vrot.slane %v5881, 2
    %v5889 = vrot.slane %v5881, 3
    %v5890 = vrot.slane %v5881, 4
    %v5891 = vrot.slane %v5881, 5
    %v5892 = vrot.slane %v5881, 6
    %v5893 = vrot.slane %v5881, 7
    %v5902 = vadd.f32 %v5778, %v5887
    %v5903 = vadd.f32 %v5779, %v5888
    %v5904 = vadd.f32 %v5780, %v5889
    %v5905 = vadd.f32 %v5781, %v5890
    %v5906 = vadd.f32 %v5782, %v5891
    %v5907 = vadd.f32 %v5783, %v5892
    %v5908 = vadd.f32 %v5784, %v5893
    %v5909 = vadd.f32 %v5785, %v5881
    %v5910 = vmul.f32 %v5902, 0.5
    %v5911 = vmul.f32 %v5903, 0.5
    %v5912 = vmul.f32 %v5904, 0.5
    %v5913 = vmul.f32 %v5905, 0.5
    %v5914 = vmul.f32 %v5906, 0.5
    %v5915 = vmul.f32 %v5907, 0.5
    %v5916 = vmul.f32 %v5908, 0.5
    %v5917 = vmul.f32 %v5909, 0.5
    %v5918 = vtanh.pop %v5910
    %v5919 = vtanh.pop %v5911
    %v5920 = vtanh.pop %v5912
    %v5921 = vtanh.pop %v5913
    %v5922 = vtanh.pop %v5914
    %v5923 = vtanh.pop %v5915
    %v5924 = vtanh.pop %v5916
    %v5925 = vtanh.pop %v5917
    %v5926 = vmul.f32 %v5918, 0.5
    %v5927 = vmul.f32 %v5919, 0.5
    %v5928 = vmul.f32 %v5920, 0.5
    %v5929 = vmul.f32 %v5921, 0.5
    %v5930 = vmul.f32 %v5922, 0.5
    %v5931 = vmul.f32 %v5923, 0.5
    %v5932 = vmul.f32 %v5924, 0.5
    %v5933 = vmul.f32 %v5925, 0.5
    %v5934 = vadd.f32 %v5926, 0.5
    %v5935 = vadd.f32 %v5927, 0.5
    %v5936 = vadd.f32 %v5928, 0.5
    %v5937 = vadd.f32 %v5929, 0.5
    %v5938 = vadd.f32 %v5930, 0.5
    %v5939 = vadd.f32 %v5931, 0.5
    %v5940 = vadd.f32 %v5932, 0.5
    %v5941 = vadd.f32 %v5933, 0.5
    %v5942 = vtanh.pop %v5902
    %v5943 = vtanh.pop %v5903
    %v5944 = vtanh.pop %v5904
    %v5945 = vtanh.pop %v5905
    %v5946 = vtanh.pop %v5906
    %v5947 = vtanh.pop %v5907
    %v5948 = vtanh.pop %v5908
    %v5949 = vtanh.pop %v5909
    %v5958 = vrot.slane %v5674, 7
    %v5959 = vrot.slane %v5675, 7
    %v5960 = vrot.slane %v5676, 7
    %v5961 = vrot.slane %v5677, 7
    %v5962 = vrot.slane %v5678, 7
    %v5963 = vrot.slane %v5679, 7
    %v5964 = vrot.slane %v5680, 7
    %v5965 = vrot.slane %v5681, 7
    %v5974 = vmul.f32 %v5934, %v5958
    %v5975 = vmul.f32 %v5935, %v5959
    %v5976 = vmul.f32 %v5936, %v5960
    %v5977 = vmul.f32 %v5937, %v5961
    %v5978 = vmul.f32 %v5938, %v5962
    %v5979 = vmul.f32 %v5939, %v5963
    %v5980 = vmul.f32 %v5940, %v5964
    %v5981 = vmul.f32 %v5941, %v5965
    %5990 = vrot.lane.b32.xlu0 %v5942, 32
    %v5991 = vpop.permute.xlu0 %5990
    %5992 = vrot.lane.b32.xlu0 %v5943, 32
    %v5993 = vpop.permute.xlu0 %5992
    %5994 = vrot.lane.b32.xlu0 %v5944, 32
    %v5995 = vpop.permute.xlu0 %5994
    %5996 = vrot.lane.b32.xlu0 %v5945, 32
    %v5997 = vpop.permute.xlu0 %5996
    %5998 = vrot.lane.b32.xlu0 %v5946, 32
    %v5999 = vpop.permute.xlu0 %5998
    %6000 = vrot.lane.b32.xlu0 %v5947, 32
    %v6001 = vpop.permute.xlu0 %6000
    %6002 = vrot.lane.b32.xlu0 %v5948, 32
    %v6003 = vpop.permute.xlu0 %6002
    %6004 = vrot.lane.b32.xlu0 %v5949, 32
    %v6005 = vpop.permute.xlu0 %6004
    %v6014 = vmul.f32 %v5934, %v5991
    %v6015 = vmul.f32 %v5935, %v5993
    %v6016 = vmul.f32 %v5936, %v5995
    %v6017 = vmul.f32 %v5937, %v5997
    %v6018 = vmul.f32 %v5938, %v5999
    %v6019 = vmul.f32 %v5939, %v6001
    %v6020 = vmul.f32 %v5940, %v6003
    %v6021 = vmul.f32 %v5941, %v6005
    %6030 = vrot.lane.b32.xlu0 %v6014, 32
    %v6031 = vpop.permute.xlu0 %6030
    %6032 = vrot.lane.b32.xlu0 %v6015, 32
    %v6033 = vpop.permute.xlu0 %6032
    %6034 = vrot.lane.b32.xlu0 %v6016, 32
    %v6035 = vpop.permute.xlu0 %6034
    %6036 = vrot.lane.b32.xlu0 %v6017, 32
    %v6037 = vpop.permute.xlu0 %6036
    %6038 = vrot.lane.b32.xlu0 %v6018, 32
    %v6039 = vpop.permute.xlu0 %6038
    %6040 = vrot.lane.b32.xlu0 %v6019, 32
    %v6041 = vpop.permute.xlu0 %6040
    %6042 = vrot.lane.b32.xlu0 %v6020, 32
    %v6043 = vpop.permute.xlu0 %6042
    %6044 = vrot.lane.b32.xlu0 %v6021, 32
    %v6045 = vpop.permute.xlu0 %6044
    %v6054 = vadd.f32 %v5974, %v6031
    %v6055 = vadd.f32 %v5975, %v6033
    %v6056 = vadd.f32 %v5976, %v6035
    %v6057 = vadd.f32 %v5977, %v6037
    %v6058 = vadd.f32 %v5978, %v6039
    %v6059 = vadd.f32 %v5979, %v6041
    %v6060 = vadd.f32 %v5980, %v6043
    %v6061 = vadd.f32 %v5981, %v6045
    %v6062 = vtanh.pop %v6054
    %v6063 = vtanh.pop %v6055
    %v6064 = vtanh.pop %v6056
    %v6065 = vtanh.pop %v6057
    %v6066 = vtanh.pop %v6058
    %v6067 = vtanh.pop %v6059
    %v6068 = vtanh.pop %v6060
    %v6069 = vtanh.pop %v6061
    %6078 = vrot.lane.b32.xlu0 %v6062, 32
    %v6079 = vpop.permute.xlu0 %6078
    %6080 = vrot.lane.b32.xlu0 %v6063, 32
    %v6081 = vpop.permute.xlu0 %6080
    %6082 = vrot.lane.b32.xlu0 %v6064, 32
    %v6083 = vpop.permute.xlu0 %6082
    %6084 = vrot.lane.b32.xlu0 %v6065, 32
    %v6085 = vpop.permute.xlu0 %6084
    %6086 = vrot.lane.b32.xlu0 %v6066, 32
    %v6087 = vpop.permute.xlu0 %6086
    %6088 = vrot.lane.b32.xlu0 %v6067, 32
    %v6089 = vpop.permute.xlu0 %6088
    %6090 = vrot.lane.b32.xlu0 %v6068, 32
    %v6091 = vpop.permute.xlu0 %6090
    %6092 = vrot.lane.b32.xlu0 %v6069, 32
    %v6093 = vpop.permute.xlu0 %6092
    %v6102 = vmul.f32 %v5934, %v6079
    %v6103 = vmul.f32 %v5935, %v6081
    %v6104 = vmul.f32 %v5936, %v6083
    %v6105 = vmul.f32 %v5937, %v6085
    %v6106 = vmul.f32 %v5938, %v6087
    %v6107 = vmul.f32 %v5939, %v6089
    %v6108 = vmul.f32 %v5940, %v6091
    %v6109 = vmul.f32 %v5941, %v6093
    %6118 = vrot.lane.b32.xlu0 %v6102, 64
    %v6119 = vpop.permute.xlu0 %6118
    %6120 = vrot.lane.b32.xlu0 %v6103, 64
    %v6121 = vpop.permute.xlu0 %6120
    %6122 = vrot.lane.b32.xlu0 %v6104, 64
    %v6123 = vpop.permute.xlu0 %6122
    %6124 = vrot.lane.b32.xlu0 %v6105, 64
    %v6125 = vpop.permute.xlu0 %6124
    %6126 = vrot.lane.b32.xlu0 %v6106, 64
    %v6127 = vpop.permute.xlu0 %6126
    %6128 = vrot.lane.b32.xlu0 %v6107, 64
    %v6129 = vpop.permute.xlu0 %6128
    %6130 = vrot.lane.b32.xlu0 %v6108, 64
    %v6131 = vpop.permute.xlu0 %6130
    %6132 = vrot.lane.b32.xlu0 %v6109, 64
    %v6133 = vpop.permute.xlu0 %6132
    %6142 = vst.msk [vmem:[#allocation9 + $0x8] sm:$0x80] %vm3068, %v6119
    %6143 = vst.msk [vmem:[#allocation9 + $0x18] sm:$0x80] %vm3068, %v6121
    %6144 = vst.msk [vmem:[#allocation9 + $0x28] sm:$0x80] %vm3068, %v6123
    %6145 = vst.msk [vmem:[#allocation9 + $0x38] sm:$0x80] %vm3068, %v6125
    %6146 = vst.msk [vmem:[#allocation9 + $0x48] sm:$0x80] %vm3068, %v6127
    %6147 = vst.msk [vmem:[#allocation9 + $0x58] sm:$0x80] %vm3068, %v6129
    %6148 = vst.msk [vmem:[#allocation9 + $0x68] sm:$0x80] %vm3068, %v6131
    %6149 = vst.msk [vmem:[#allocation9 + $0x78] sm:$0x80] %vm3068, %v6133
    %v6150 = vrot.slane %v6103, 7
    %v6151 = vrot.slane %v6104, 6
    %v6152 = vsel %vm448, %v6151, %v6150
    %v6153 = vrot.slane %v6105, 5
    %v6154 = vsel %vm451, %v6153, %v6152
    %v6155 = vrot.slane %v6106, 4
    %v6156 = vsel %vm454, %v6155, %v6154
    %v6157 = vrot.slane %v6107, 3
    %v6158 = vsel %vm457, %v6157, %v6156
    %v6159 = vrot.slane %v6108, 2
    %v6160 = vsel %vm460, %v6159, %v6158
    %v6161 = vrot.slane %v6109, 1
    %v6162 = vsel %vm463, %v6161, %v6160
    %6163 = vrot.lane.b32.xlu0 %v6162, 64
    %v6164 = vpop.permute.xlu0 %6163
    %6166 = vst.msk [vmem:[#allocation2 - $0x7] sm:$0x80] %vm3068, %v6119
    %vm6167 = vcmask 260096
    %6168 = vst.msk [vmem:[#allocation2 + $0x1] sm:$0x7f] %vm6167, %v6164
    %v6177 = vrot.slane %v6055, 7
    %v6178 = vrot.slane %v6056, 6
    %v6179 = vsel %vm448, %v6178, %v6177
    %v6180 = vrot.slane %v6057, 5
    %v6181 = vsel %vm451, %v6180, %v6179
    %v6182 = vrot.slane %v6058, 4
    %v6183 = vsel %vm454, %v6182, %v6181
    %v6184 = vrot.slane %v6059, 3
    %v6185 = vsel %vm457, %v6184, %v6183
    %v6186 = vrot.slane %v6060, 2
    %v6187 = vsel %vm460, %v6186, %v6185
    %v6188 = vrot.slane %v6061, 1
    %v6189 = vsel %vm463, %v6188, %v6187
    %6190 = vrot.lane.b32.xlu0 %v6054, 96
    %v6191 = vpop.permute.xlu0 %6190
    %6192 = vrot.lane.b32.xlu0 %v6189, 96
    %v6193 = vpop.permute.xlu0 %6192
    %6196 = vst.msk [vmem:[#allocation3 - $0x7] sm:$0x80] %vm3068, %v6191
    %6197 = vst.msk [vmem:[#allocation3 + $0x1] sm:$0x7f] %vm6167, %v6193
    // Predicated region
    $region26: #{tpu_custom_call.1} parent=1 // pred_check
      _
    $region27: #{tpu_custom_call.1} parent=1 // pred_check_branch
      %6199 = sbr.rel (0) target = $region29
    $region28: #{tpu_custom_call.1} parent=1 // pred_region
      %s6201 = ssub.s32 2048, 2048
      %6202 = vsyncadd [#allocation6], %s6201
      %s6203 = sshll.u32 [#allocation9], 4
      %s6204 = int_to_ptr.vmem [resolvable:$true] %s6203
      %6209 = dma.vmem_to_hbm [thread:$0]  %s6204, 2048, %s2, [#allocation6], 128, 128, 8
    $region29: #{tpu_custom_call.1} parent=1 // pred_fallthru
      _
    // Predicated region
    $region30: #{tpu_custom_call.1} parent=1 // pred_check
      _
    $region31: #{tpu_custom_call.1} parent=1 // pred_check_branch
      %6211 = sbr.rel (0) target = $region33
    $region32: #{tpu_custom_call.1} parent=1 // pred_region
      %s6213 = ssub.s32 128, 128
      %6214 = vsyncadd [#allocation11], %s6213
      %s6216 = sshll.u32 [#allocation10], 4
      %s6217 = int_to_ptr.vmem [resolvable:$true] %s6216
      %6219 = dma.vmem_to_hbm [thread:$0]  %s6217, 128, %s3, [#allocation11]
    $region33: #{tpu_custom_call.1} parent=1 // pred_fallthru
      _
    // Predicated region
    $region34: #{tpu_custom_call.1} parent=1 // pred_check
      _
    $region35: #{tpu_custom_call.1} parent=1 // pred_check_branch
      %6221 = sbr.rel (0) target = $region37
    $region36: #{tpu_custom_call.1} parent=1 // pred_region
      %6222 = dma.done [#allocation6], 2048
    $region37: #{tpu_custom_call.1} parent=1 // pred_fallthru
      _
    // Predicated region
    $region38: #{tpu_custom_call.1} parent=1 // pred_check
      _
    $region39: #{tpu_custom_call.1} parent=1 // pred_check_branch
      %6224 = sbr.rel (0) target = $region41
    $region40: #{tpu_custom_call.1} parent=1 // pred_region
      %6225 = dma.done [#allocation11], 128
    $region41: #{tpu_custom_call.1} parent=1 // pred_fallthru
      _
    %6226 = vsyncpa [#allocation5], 1
    %6227 = vsyncpa [#allocation8], 1
    %6228 = vsyncpa [#allocation6], 1
    %6229 = vsyncpa [#allocation11], 1

</llo_original>
